<compile_context>
chip_gen: v5e
topology: v5e:2x2
jax: 0.10.0
libtpu: 0.0.40
codegen_flags: <defaults>
</compile_context>

<pallas_src>
import jax
import jax.numpy as jnp
from jax.experimental import pallas as pl
from jax.experimental.pallas import tpu as pltpu

KS = 25   # spatial attention conv kernel size (nn.Conv2d(2, 1, 25, padding=12))
PAD = 12  # spatial attention conv padding


# ------------------------------ Fused CBAM kernel ------------------------------
def _cbam_fused_kernel(x_ref, w1t_ref, w2_ref, kavg_ref, kmax_ref, out_ref):
    """Fused CBAM forward for one image.

    x_ref:    (C, H*W)    activation (lane-dense: H*W on lanes)
    w1t_ref:  (C, Cr)     transpose of Conv2d(C, Cr, 1) weight
    w2_ref:   (C, Cr)     Conv2d(Cr, C, 1) weight
    kavg_ref: (H*W, H*W)  Toeplitz matrix of the 25x25 conv, avg channel
    kmax_ref: (H*W, H*W)  Toeplitz matrix of the 25x25 conv, max channel
    out_ref:  (C, H*W)
    """
    xf = x_ref[...].astype(jnp.float32)                          # (C, HW)

    # --- channel attention: AdaptiveAvgPool2d(1) -> 1x1 convs -> sigmoid ---
    pooled = jnp.mean(xf, axis=1, keepdims=True)                 # (C, 1)
    # C and Cr are tiny here (32, 2): broadcast-multiply + reduce on the VPU.
    # TODO(synk): at production channel counts (C >= 256, Cr >= 16) switch the
    # two 1x1-conv layers to jnp.dot(..., preferred_element_type=f32) (MXU).
    hidden = jnp.maximum(
        jnp.sum(w1t_ref[...] * pooled, axis=0, keepdims=True), 0.0)   # (1, Cr)
    ca = jax.nn.sigmoid(
        jnp.sum(w2_ref[...] * hidden, axis=1, keepdims=True))         # (C, 1)
    xca = xf * ca                                                      # (C, HW)

    # --- spatial attention ---
    avg = jnp.mean(xca, axis=0, keepdims=True)                   # (1, HW)
    mx = jnp.max(xca, axis=0, keepdims=True)                     # (1, HW)
    # Zero-padded 25x25 cross-correlation as MXU matmuls against the
    # precomputed Toeplitz matrices (one per conv input channel).
    sa_logit = (jnp.dot(avg, kavg_ref[...], preferred_element_type=jnp.float32)
                + jnp.dot(mx, kmax_ref[...], preferred_element_type=jnp.float32))
    sa = jax.nn.sigmoid(sa_logit)                                # (1, HW)

    out_ref[...] = (xca * sa).astype(out_ref.dtype)


# ------------------------- Host-side conv-matrix builder -------------------------
def _spatial_conv_toeplitz(wsp, H, W):
    """(2, KS, KS) conv weight -> two (H*W, H*W) doubly-blocked Toeplitz matrices.

    k[ch][i*W + j, h*W + w] = wsp[ch, i - h + PAD, j - w + PAD] when the tap
    offset lies inside the 25x25 window, else 0.  feat_flat @ k equals the
    zero-padded 25x25 cross-correlation of feat (PyTorch Conv2d, no bias).
    """
    r = jnp.arange(H)
    c = jnp.arange(W)
    dh = r[:, None] - r[None, :] + PAD               # (H_in, H_out)
    dw = c[:, None] - c[None, :] + PAD               # (W_in, W_out)
    vh = (dh >= 0) & (dh < KS)
    vw = (dw >= 0) & (dw < KS)
    dhc = jnp.clip(dh, 0, KS - 1)
    dwc = jnp.clip(dw, 0, KS - 1)
    taps = wsp[:, dhc[:, None, :, None], dwc[None, :, None, :]]  # (2,Hin,Win,Hout,Wout)
    mask = (vh[:, None, :, None] & vw[None, :, None, :]).astype(wsp.dtype)
    taps = taps * mask[None]
    k = taps.reshape(2, H * W, H * W)
    return k[0], k[1]


# ----------------------------------- Wrapper -----------------------------------
@jax.jit
def cbam_pallas(x_nchw, w1, w2, wsp):
    """x_nchw: (N, C, H, W); w1: (Cr, C); w2: (C, Cr); wsp: (2, KS, KS)."""
    N, C, H, W = x_nchw.shape
    Cr = w1.shape[0]
    HW = H * W

    # Lane-dense view: (N, C, H*W). Contiguous reshape -> no data movement.
    x_flat = x_nchw.reshape(N, C, HW)
    w1t = jnp.transpose(w1).astype(jnp.float32)      # (C, Cr)
    w2f = w2.astype(jnp.float32)                     # (C, Cr)
    kavg, kmax = _spatial_conv_toeplitz(wsp.astype(jnp.float32), H, W)

    # TODO(synk): the dense (H*W, H*W) conv matrices are only practical for
    # small feature maps (<= ~64x64).  For large maps, switch the spatial conv
    # to the per-row banded-Toeplitz form ((W+2*PAD, W) matrices accumulated
    # over the 25 vertical taps against an (H+2*PAD, W+2*PAD) VMEM scratch).
    # TODO(synk): when N gives < 4-8 grid steps, add a channel/row tile grid
    # axis so both v7x TensorCores get pipelined work.

    itemsize = jnp.dtype(x_nchw.dtype).itemsize
    vmem_est = (2 * 2 * C * HW * itemsize        # x / out blocks, double-buffered
                + 2 * 2 * HW * HW * 4            # the two Toeplitz matrices
                + 6 * C * HW * 4                 # f32 temporaries (xf, xca, ...)
                + (4 << 20))                     # headroom
    vmem_limit = int(min(max(vmem_est, 16 << 20), 48 << 20))

    out_flat = pl.pallas_call(
        _cbam_fused_kernel,
        out_shape=jax.ShapeDtypeStruct((N, C, HW), x_nchw.dtype),
        grid=(N,),
        in_specs=[pl.BlockSpec((None, C, HW), lambda n: (n, 0, 0)),
                  pl.BlockSpec((C, Cr), lambda n: (0, 0)),
                  pl.BlockSpec((C, Cr), lambda n: (0, 0)),
                  pl.BlockSpec((HW, HW), lambda n: (0, 0)),
                  pl.BlockSpec((HW, HW), lambda n: (0, 0))],
        out_specs=pl.BlockSpec((None, C, HW), lambda n: (n, 0, 0)),
        compiler_params=pltpu.CompilerParams(
            dimension_semantics=("parallel",),
            vmem_limit_bytes=vmem_limit),
    )(x_flat, w1t, w2f, kavg, kmax)

    return out_flat.reshape(N, C, H, W)


# ------------------------------ Pure-JAX reference ------------------------------
def cbam_ref(x, w1, w2, wsp):
    hi = jax.lax.Precision.HIGHEST
    pooled = jnp.mean(x, axis=(2, 3), keepdims=True)                            # (N,C,1,1)
    h = jnp.maximum(jnp.einsum('rc,ncij->nrij', w1, pooled, precision=hi), 0.0)
    ca = jax.nn.sigmoid(jnp.einsum('cr,nrij->ncij', w2, h, precision=hi))
    x1 = x * ca
    avg = jnp.mean(x1, axis=1, keepdims=True)
    mx = jnp.max(x1, axis=1, keepdims=True)
    feat = jnp.concatenate([avg, mx], axis=1)                                    # (N,2,H,W)
    sa = jax.nn.sigmoid(jax.lax.conv_general_dilated(
        feat, wsp[None], window_strides=(1, 1),
        padding=((PAD, PAD), (PAD, PAD)),
        dimension_numbers=('NCHW', 'OIHW', 'NCHW'), precision=hi))
    return x1 * sa


if __name__ == "__main__":
    N, C, H, W = 2, 32, 16, 16
    reduction = 16
    Cr = C // reduction

    key = jax.random.PRNGKey(0)
    kx, k1, k2, k3 = jax.random.split(key, 4)
    x = jax.random.normal(kx, (N, C, H, W), jnp.float32)
    # Deterministic synthetic parameters (shapes from CBAM.__init__, bias=False):
    w1 = 0.2 * jax.random.normal(k1, (Cr, C), jnp.float32)        # Conv2d(C, C//r, 1)
    w2 = 0.2 * jax.random.normal(k2, (C, Cr), jnp.float32)        # Conv2d(C//r, C, 1)
    wsp = 0.05 * jax.random.normal(k3, (2, KS, KS), jnp.float32)  # Conv2d(2, 1, 25, pad=12)

    out = jax.block_until_ready(cbam_pallas(x, w1, w2, wsp))
    ref = jax.block_until_ready(cbam_ref(x, w1, w2, wsp))

    assert out.shape == (N, C, H, W) and out.dtype == x.dtype
    err = jnp.max(jnp.abs(out - ref))
    if not jnp.allclose(out, ref, rtol=2e-3, atol=2e-3):
        raise AssertionError(f"mismatch vs reference, max abs err = {err}")
    print("KERNEL_OK")
</pallas_src>

<mosaic_0001>
module attributes {stable_mosaic.version = 11 : i64} {
  func.func @_cbam_fused_kernel(%arg0: i32, %arg1: memref<1x32x256xf32, #tpu.memory_space<vmem>>, %arg2: memref<32x2xf32, #tpu.memory_space<vmem>>, %arg3: memref<32x2xf32, #tpu.memory_space<vmem>>, %arg4: memref<256x256xf32, #tpu.memory_space<vmem>>, %arg5: memref<256x256xf32, #tpu.memory_space<vmem>>, %arg6: memref<1x32x256xf32, #tpu.memory_space<vmem>>) attributes {dimension_semantics = [#tpu.dimension_semantics<parallel>], iteration_bounds = array<i64: 2>, scalar_prefetch = 0 : i64, scratch_operands = 0 : i64, tpu.core_type = #tpu.core_type<tc>, window_params = [{transform_indices = @transform_0, window_bounds = array<i64: 1, 32, 256>}, {pipeline_mode = #tpu.pipeline_mode<synchronous>, transform_indices = @transform_1, window_bounds = array<i64: 32, 2>}, {pipeline_mode = #tpu.pipeline_mode<synchronous>, transform_indices = @transform_2, window_bounds = array<i64: 32, 2>}, {pipeline_mode = #tpu.pipeline_mode<synchronous>, transform_indices = @transform_3, window_bounds = array<i64: 256, 256>}, {pipeline_mode = #tpu.pipeline_mode<synchronous>, transform_indices = @transform_4, window_bounds = array<i64: 256, 256>}, {transform_indices = @transform_5, window_bounds = array<i64: 1, 32, 256>}]} {
    %c0 = arith.constant 0 : index
    %c0_0 = arith.constant 0 : index
    %c0_1 = arith.constant 0 : index
    %0 = vector.load %arg1[%c0, %c0_0, %c0_1] : memref<1x32x256xf32, #tpu.memory_space<vmem>>, vector<1x32x256xf32>
    %1 = vector.shape_cast %0 : vector<1x32x256xf32> to vector<32x256xf32>
    %cst = arith.constant dense<0.000000e+00> : vector<32xf32>
    %2 = vector.multi_reduction <add>, %1, %cst [1] : vector<32x256xf32> to vector<32xf32>
    %3 = vector.shape_cast %2 : vector<32xf32> to vector<32x1xf32>
    %cst_2 = arith.constant 2.560000e+02 : f32
    %4 = vector.broadcast %cst_2 : f32 to vector<32x1xf32>
    %5 = arith.divf %3, %4 : vector<32x1xf32>
    %c0_3 = arith.constant 0 : index
    %c0_4 = arith.constant 0 : index
    %6 = vector.load %arg2[%c0_3, %c0_4] : memref<32x2xf32, #tpu.memory_space<vmem>>, vector<32x2xf32>
    %7 = vector.broadcast %5 : vector<32x1xf32> to vector<32x2xf32>
    %8 = arith.mulf %6, %7 : vector<32x2xf32>
    %cst_5 = arith.constant dense<0.000000e+00> : vector<2xf32>
    %9 = vector.multi_reduction <add>, %8, %cst_5 [0] : vector<32x2xf32> to vector<2xf32>
    %10 = vector.shape_cast %9 : vector<2xf32> to vector<1x2xf32>
    %cst_6 = arith.constant 0.000000e+00 : f32
    %11 = vector.broadcast %cst_6 : f32 to vector<1x2xf32>
    %12 = arith.maximumf %10, %11 : vector<1x2xf32>
    %c0_7 = arith.constant 0 : index
    %c0_8 = arith.constant 0 : index
    %13 = vector.load %arg3[%c0_7, %c0_8] : memref<32x2xf32, #tpu.memory_space<vmem>>, vector<32x2xf32>
    %14 = vector.broadcast %12 : vector<1x2xf32> to vector<32x2xf32>
    %15 = arith.mulf %13, %14 : vector<32x2xf32>
    %cst_9 = arith.constant dense<0.000000e+00> : vector<32xf32>
    %16 = vector.multi_reduction <add>, %15, %cst_9 [1] : vector<32x2xf32> to vector<32xf32>
    %17 = vector.shape_cast %16 : vector<32xf32> to vector<32x1xf32>
    %18 = arith.negf %17 : vector<32x1xf32>
    %19 = math.exp %18 : vector<32x1xf32>
    %cst_10 = arith.constant 1.000000e+00 : f32
    %20 = vector.broadcast %cst_10 : f32 to vector<32x1xf32>
    %21 = arith.addf %20, %19 : vector<32x1xf32>
    %22 = arith.divf %20, %21 : vector<32x1xf32>
    %23 = vector.broadcast %22 : vector<32x1xf32> to vector<32x256xf32>
    %24 = arith.mulf %1, %23 : vector<32x256xf32>
    %cst_11 = arith.constant dense<0.000000e+00> : vector<256xf32>
    %25 = vector.multi_reduction <add>, %24, %cst_11 [0] : vector<32x256xf32> to vector<256xf32>
    %26 = vector.shape_cast %25 : vector<256xf32> to vector<1x256xf32>
    %cst_12 = arith.constant 3.200000e+01 : f32
    %27 = vector.broadcast %cst_12 : f32 to vector<1x256xf32>
    %28 = arith.divf %26, %27 : vector<1x256xf32>
    %cst_13 = arith.constant dense<0xFF800000> : vector<256xf32>
    %29 = vector.multi_reduction <maximumf>, %24, %cst_13 [0] : vector<32x256xf32> to vector<256xf32>
    %30 = vector.shape_cast %29 : vector<256xf32> to vector<1x256xf32>
    %c0_14 = arith.constant 0 : index
    %c0_15 = arith.constant 0 : index
    %31 = vector.load %arg4[%c0_14, %c0_15] : memref<256x256xf32, #tpu.memory_space<vmem>>, vector<256x256xf32>
    %cst_16 = arith.constant dense<0.000000e+00> : vector<1x256xf32>
    %32 = tpu.matmul %28, %31, %cst_16 {dimension_numbers = #tpu.dot_dimension_numbers<[1], [0], [0], [1], [0, 0, 1, 1], [], []>} : vector<1x256xf32>, vector<256x256xf32>, vector<1x256xf32> -> vector<1x256xf32>
    %c0_17 = arith.constant 0 : index
    %c0_18 = arith.constant 0 : index
    %33 = vector.load %arg5[%c0_17, %c0_18] : memref<256x256xf32, #tpu.memory_space<vmem>>, vector<256x256xf32>
    %cst_19 = arith.constant dense<0.000000e+00> : vector<1x256xf32>
    %34 = tpu.matmul %30, %33, %cst_19 {dimension_numbers = #tpu.dot_dimension_numbers<[1], [0], [0], [1], [0, 0, 1, 1], [], []>} : vector<1x256xf32>, vector<256x256xf32>, vector<1x256xf32> -> vector<1x256xf32>
    %35 = arith.addf %32, %34 : vector<1x256xf32>
    %36 = arith.negf %35 : vector<1x256xf32>
    %37 = math.exp %36 : vector<1x256xf32>
    %cst_20 = arith.constant 1.000000e+00 : f32
    %38 = vector.broadcast %cst_20 : f32 to vector<1x256xf32>
    %39 = arith.addf %38, %37 : vector<1x256xf32>
    %40 = arith.divf %38, %39 : vector<1x256xf32>
    %41 = vector.broadcast %40 : vector<1x256xf32> to vector<32x256xf32>
    %42 = arith.mulf %24, %41 : vector<32x256xf32>
    %c0_21 = arith.constant 0 : index
    %c0_22 = arith.constant 0 : index
    %c0_23 = arith.constant 0 : index
    %43 = vector.load %arg6[%c0_21, %c0_22, %c0_23] : memref<1x32x256xf32, #tpu.memory_space<vmem>>, vector<1x32x256xf32>
    %44 = vector.shape_cast %43 : vector<1x32x256xf32> to vector<32x256xf32>
    %45 = vector.shape_cast %42 : vector<32x256xf32> to vector<1x32x256xf32>
    tpu.vector_store %arg6[%c0_21, %c0_22, %c0_23], %45 {strides = array<i32>} : memref<1x32x256xf32, #tpu.memory_space<vmem>>, vector<1x32x256xf32>,
    return
  }
  func.func @transform_0(%arg0: i32) -> (i32, i32, i32) {
    %c0_i32 = arith.constant 0 : i32
    %c0_i32_0 = arith.constant 0 : i32
    %c0_i32_1 = arith.constant 0 : i32
    return %arg0, %c0_i32, %c0_i32_0 : i32, i32, i32
  }
  func.func @transform_1(%arg0: i32) -> (i32, i32) {
    %c0_i32 = arith.constant 0 : i32
    %c0_i32_0 = arith.constant 0 : i32
    %c0_i32_1 = arith.constant 0 : i32
    return %c0_i32, %c0_i32_0 : i32, i32
  }
  func.func @transform_2(%arg0: i32) -> (i32, i32) {
    %c0_i32 = arith.constant 0 : i32
    %c0_i32_0 = arith.constant 0 : i32
    %c0_i32_1 = arith.constant 0 : i32
    return %c0_i32, %c0_i32_0 : i32, i32
  }
  func.func @transform_3(%arg0: i32) -> (i32, i32) {
    %c0_i32 = arith.constant 0 : i32
    %c0_i32_0 = arith.constant 0 : i32
    %c0_i32_1 = arith.constant 0 : i32
    return %c0_i32, %c0_i32_0 : i32, i32
  }
  func.func @transform_4(%arg0: i32) -> (i32, i32) {
    %c0_i32 = arith.constant 0 : i32
    %c0_i32_0 = arith.constant 0 : i32
    %c0_i32_1 = arith.constant 0 : i32
    return %c0_i32, %c0_i32_0 : i32, i32
  }
  func.func @transform_5(%arg0: i32) -> (i32, i32, i32) {
    %c0_i32 = arith.constant 0 : i32
    %c0_i32_0 = arith.constant 0 : i32
    %c0_i32_1 = arith.constant 0 : i32
    return %arg0, %c0_i32, %c0_i32_0 : i32, i32, i32
  }
}

</mosaic_0001>

<llo_original>
// kernel: squeeze.2
$region0: #{squeeze.2}
  %s0 = inlined_call_operand.vmem [shape: f32[1,16,16,16,16], index: 0, kind: input, shape index: {}]
  %s1 = inlined_call_operand.vmem [shape: f32[256,256], index: 1, kind: output, shape index: {}]
  %v2 = vld [vmem:[%s0] ss:$8 sm:$0xf]
  %v3 = vld [vmem:[%s0] ss:$8 sm:$0xf0]
  %vm4 = vcmask 1047556
  %v5 = vsel %vm4, %v3, %v2
  %vm6 = vcmask 130048
  %7 = vst.msk [vmem:[%s1] ss:$8 sm:$0x3] %vm6, %v5
  %s8 = scalar_lea.vmem %s1, 4294967281
  %9 = vst.msk [vmem:[%s8] ss:$8 sm:$0xc] %vm6, %v5
  %s10 = scalar_lea.vmem %s1, 4294967266
  %11 = vst.msk [vmem:[%s10] ss:$8 sm:$0x30] %vm6, %v5
  %s12 = scalar_lea.vmem %s1, 4294967251
  %13 = vst.msk [vmem:[%s12] ss:$8 sm:$0xc0] %vm6, %v5
  %s14 = scalar_lea.vmem %s0, 64
  %v15 = vld [vmem:[%s14] ss:$8 sm:$0xf]
  %s16 = scalar_lea.vmem %s0, 64
  %v17 = vld [vmem:[%s16] ss:$8 sm:$0xf0]
  %vm18 = vcmask 1047556
  %v19 = vsel %vm18, %v17, %v15
  %vm20 = vcmask 130048
  %s21 = scalar_lea.vmem %s1, 4
  %22 = vst.msk [vmem:[%s21] ss:$8 sm:$0x3] %vm20, %v19
  %s23 = scalar_lea.vmem %s1, 4294967285
  %24 = vst.msk [vmem:[%s23] ss:$8 sm:$0xc] %vm20, %v19
  %s25 = scalar_lea.vmem %s1, 4294967270
  %26 = vst.msk [vmem:[%s25] ss:$8 sm:$0x30] %vm20, %v19
  %s27 = scalar_lea.vmem %s1, 4294967255
  %28 = vst.msk [vmem:[%s27] ss:$8 sm:$0xc0] %vm20, %v19
  %s29 = scalar_lea.vmem %s0, 128
  %v30 = vld [vmem:[%s29] ss:$8 sm:$0xf]
  %s31 = scalar_lea.vmem %s0, 128
  %v32 = vld [vmem:[%s31] ss:$8 sm:$0xf0]
  %vm33 = vcmask 1047556
  %v34 = vsel %vm33, %v32, %v30
  %vm35 = vcmask 130048
  %s36 = scalar_lea.vmem %s1, 16
  %37 = vst.msk [vmem:[%s36] ss:$8 sm:$0x3] %vm35, %v34
  %s38 = scalar_lea.vmem %s1, 1
  %39 = vst.msk [vmem:[%s38] ss:$8 sm:$0xc] %vm35, %v34
  %s40 = scalar_lea.vmem %s1, 4294967282
  %41 = vst.msk [vmem:[%s40] ss:$8 sm:$0x30] %vm35, %v34
  %s42 = scalar_lea.vmem %s1, 4294967267
  %43 = vst.msk [vmem:[%s42] ss:$8 sm:$0xc0] %vm35, %v34
  %s44 = scalar_lea.vmem %s0, 192
  %v45 = vld [vmem:[%s44] ss:$8 sm:$0xf]
  %s46 = scalar_lea.vmem %s0, 192
  %v47 = vld [vmem:[%s46] ss:$8 sm:$0xf0]
  %vm48 = vcmask 1047556
  %v49 = vsel %vm48, %v47, %v45
  %vm50 = vcmask 130048
  %s51 = scalar_lea.vmem %s1, 20
  %52 = vst.msk [vmem:[%s51] ss:$8 sm:$0x3] %vm50, %v49
  %s53 = scalar_lea.vmem %s1, 5
  %54 = vst.msk [vmem:[%s53] ss:$8 sm:$0xc] %vm50, %v49
  %s55 = scalar_lea.vmem %s1, 4294967286
  %56 = vst.msk [vmem:[%s55] ss:$8 sm:$0x30] %vm50, %v49
  %s57 = scalar_lea.vmem %s1, 4294967271
  %58 = vst.msk [vmem:[%s57] ss:$8 sm:$0xc0] %vm50, %v49
  %s59 = scalar_lea.vmem %s0, 256
  %v60 = vld [vmem:[%s59] ss:$8 sm:$0xf]
  %s61 = scalar_lea.vmem %s0, 256
  %v62 = vld [vmem:[%s61] ss:$8 sm:$0xf0]
  %vm63 = vcmask 1047556
  %v64 = vsel %vm63, %v62, %v60
  %vm65 = vcmask 130048
  %s66 = scalar_lea.vmem %s1, 32
  %67 = vst.msk [vmem:[%s66] ss:$8 sm:$0x3] %vm65, %v64
  %s68 = scalar_lea.vmem %s1, 17
  %69 = vst.msk [vmem:[%s68] ss:$8 sm:$0xc] %vm65, %v64
  %s70 = scalar_lea.vmem %s1, 2
  %71 = vst.msk [vmem:[%s70] ss:$8 sm:$0x30] %vm65, %v64
  %s72 = scalar_lea.vmem %s1, 4294967283
  %73 = vst.msk [vmem:[%s72] ss:$8 sm:$0xc0] %vm65, %v64
  %s74 = scalar_lea.vmem %s0, 320
  %v75 = vld [vmem:[%s74] ss:$8 sm:$0xf]
  %s76 = scalar_lea.vmem %s0, 320
  %v77 = vld [vmem:[%s76] ss:$8 sm:$0xf0]
  %vm78 = vcmask 1047556
  %v79 = vsel %vm78, %v77, %v75
  %vm80 = vcmask 130048
  %s81 = scalar_lea.vmem %s1, 36
  %82 = vst.msk [vmem:[%s81] ss:$8 sm:$0x3] %vm80, %v79
  %s83 = scalar_lea.vmem %s1, 21
  %84 = vst.msk [vmem:[%s83] ss:$8 sm:$0xc] %vm80, %v79
  %s85 = scalar_lea.vmem %s1, 6
  %86 = vst.msk [vmem:[%s85] ss:$8 sm:$0x30] %vm80, %v79
  %s87 = scalar_lea.vmem %s1, 4294967287
  %88 = vst.msk [vmem:[%s87] ss:$8 sm:$0xc0] %vm80, %v79
  %s89 = scalar_lea.vmem %s0, 384
  %v90 = vld [vmem:[%s89] ss:$8 sm:$0xf]
  %s91 = scalar_lea.vmem %s0, 384
  %v92 = vld [vmem:[%s91] ss:$8 sm:$0xf0]
  %vm93 = vcmask 1047556
  %v94 = vsel %vm93, %v92, %v90
  %vm95 = vcmask 130048
  %s96 = scalar_lea.vmem %s1, 48
  %97 = vst.msk [vmem:[%s96] ss:$8 sm:$0x3] %vm95, %v94
  %s98 = scalar_lea.vmem %s1, 33
  %99 = vst.msk [vmem:[%s98] ss:$8 sm:$0xc] %vm95, %v94
  %s100 = scalar_lea.vmem %s1, 18
  %101 = vst.msk [vmem:[%s100] ss:$8 sm:$0x30] %vm95, %v94
  %s102 = scalar_lea.vmem %s1, 3
  %103 = vst.msk [vmem:[%s102] ss:$8 sm:$0xc0] %vm95, %v94
  %s104 = scalar_lea.vmem %s0, 448
  %v105 = vld [vmem:[%s104] ss:$8 sm:$0xf]
  %s106 = scalar_lea.vmem %s0, 448
  %v107 = vld [vmem:[%s106] ss:$8 sm:$0xf0]
  %vm108 = vcmask 1047556
  %v109 = vsel %vm108, %v107, %v105
  %vm110 = vcmask 130048
  %s111 = scalar_lea.vmem %s1, 52
  %112 = vst.msk [vmem:[%s111] ss:$8 sm:$0x3] %vm110, %v109
  %s113 = scalar_lea.vmem %s1, 37
  %114 = vst.msk [vmem:[%s113] ss:$8 sm:$0xc] %vm110, %v109
  %s115 = scalar_lea.vmem %s1, 22
  %116 = vst.msk [vmem:[%s115] ss:$8 sm:$0x30] %vm110, %v109
  %s117 = scalar_lea.vmem %s1, 7
  %118 = vst.msk [vmem:[%s117] ss:$8 sm:$0xc0] %vm110, %v109
  %s119 = scalar_lea.vmem %s0, 512
  %v120 = vld [vmem:[%s119] ss:$8 sm:$0xf]
  %s121 = scalar_lea.vmem %s0, 512
  %v122 = vld [vmem:[%s121] ss:$8 sm:$0xf0]
  %vm123 = vcmask 1047556
  %v124 = vsel %vm123, %v122, %v120
  %vm125 = vcmask 130048
  %s126 = scalar_lea.vmem %s1, 64
  %127 = vst.msk [vmem:[%s126] ss:$8 sm:$0x3] %vm125, %v124
  %s128 = scalar_lea.vmem %s1, 49
  %129 = vst.msk [vmem:[%s128] ss:$8 sm:$0xc] %vm125, %v124
  %s130 = scalar_lea.vmem %s1, 34
  %131 = vst.msk [vmem:[%s130] ss:$8 sm:$0x30] %vm125, %v124
  %s132 = scalar_lea.vmem %s1, 19
  %133 = vst.msk [vmem:[%s132] ss:$8 sm:$0xc0] %vm125, %v124
  %s134 = scalar_lea.vmem %s0, 576
  %v135 = vld [vmem:[%s134] ss:$8 sm:$0xf]
  %s136 = scalar_lea.vmem %s0, 576
  %v137 = vld [vmem:[%s136] ss:$8 sm:$0xf0]
  %vm138 = vcmask 1047556
  %v139 = vsel %vm138, %v137, %v135
  %vm140 = vcmask 130048
  %s141 = scalar_lea.vmem %s1, 68
  %142 = vst.msk [vmem:[%s141] ss:$8 sm:$0x3] %vm140, %v139
  %s143 = scalar_lea.vmem %s1, 53
  %144 = vst.msk [vmem:[%s143] ss:$8 sm:$0xc] %vm140, %v139
  %s145 = scalar_lea.vmem %s1, 38
  %146 = vst.msk [vmem:[%s145] ss:$8 sm:$0x30] %vm140, %v139
  %s147 = scalar_lea.vmem %s1, 23
  %148 = vst.msk [vmem:[%s147] ss:$8 sm:$0xc0] %vm140, %v139
  %s149 = scalar_lea.vmem %s0, 640
  %v150 = vld [vmem:[%s149] ss:$8 sm:$0xf]
  %s151 = scalar_lea.vmem %s0, 640
  %v152 = vld [vmem:[%s151] ss:$8 sm:$0xf0]
  %vm153 = vcmask 1047556
  %v154 = vsel %vm153, %v152, %v150
  %vm155 = vcmask 130048
  %s156 = scalar_lea.vmem %s1, 80
  %157 = vst.msk [vmem:[%s156] ss:$8 sm:$0x3] %vm155, %v154
  %s158 = scalar_lea.vmem %s1, 65
  %159 = vst.msk [vmem:[%s158] ss:$8 sm:$0xc] %vm155, %v154
  %s160 = scalar_lea.vmem %s1, 50
  %161 = vst.msk [vmem:[%s160] ss:$8 sm:$0x30] %vm155, %v154
  %s162 = scalar_lea.vmem %s1, 35
  %163 = vst.msk [vmem:[%s162] ss:$8 sm:$0xc0] %vm155, %v154
  %s164 = scalar_lea.vmem %s0, 704
  %v165 = vld [vmem:[%s164] ss:$8 sm:$0xf]
  %s166 = scalar_lea.vmem %s0, 704
  %v167 = vld [vmem:[%s166] ss:$8 sm:$0xf0]
  %vm168 = vcmask 1047556
  %v169 = vsel %vm168, %v167, %v165
  %vm170 = vcmask 130048
  %s171 = scalar_lea.vmem %s1, 84
  %172 = vst.msk [vmem:[%s171] ss:$8 sm:$0x3] %vm170, %v169
  %s173 = scalar_lea.vmem %s1, 69
  %174 = vst.msk [vmem:[%s173] ss:$8 sm:$0xc] %vm170, %v169
  %s175 = scalar_lea.vmem %s1, 54
  %176 = vst.msk [vmem:[%s175] ss:$8 sm:$0x30] %vm170, %v169
  %s177 = scalar_lea.vmem %s1, 39
  %178 = vst.msk [vmem:[%s177] ss:$8 sm:$0xc0] %vm170, %v169
  %s179 = scalar_lea.vmem %s0, 768
  %v180 = vld [vmem:[%s179] ss:$8 sm:$0xf]
  %s181 = scalar_lea.vmem %s0, 768
  %v182 = vld [vmem:[%s181] ss:$8 sm:$0xf0]
  %vm183 = vcmask 1047556
  %v184 = vsel %vm183, %v182, %v180
  %vm185 = vcmask 130048
  %s186 = scalar_lea.vmem %s1, 96
  %187 = vst.msk [vmem:[%s186] ss:$8 sm:$0x3] %vm185, %v184
  %s188 = scalar_lea.vmem %s1, 81
  %189 = vst.msk [vmem:[%s188] ss:$8 sm:$0xc] %vm185, %v184
  %s190 = scalar_lea.vmem %s1, 66
  %191 = vst.msk [vmem:[%s190] ss:$8 sm:$0x30] %vm185, %v184
  %s192 = scalar_lea.vmem %s1, 51
  %193 = vst.msk [vmem:[%s192] ss:$8 sm:$0xc0] %vm185, %v184
  %s194 = scalar_lea.vmem %s0, 832
  %v195 = vld [vmem:[%s194] ss:$8 sm:$0xf]
  %s196 = scalar_lea.vmem %s0, 832
  %v197 = vld [vmem:[%s196] ss:$8 sm:$0xf0]
  %vm198 = vcmask 1047556
  %v199 = vsel %vm198, %v197, %v195
  %vm200 = vcmask 130048
  %s201 = scalar_lea.vmem %s1, 100
  %202 = vst.msk [vmem:[%s201] ss:$8 sm:$0x3] %vm200, %v199
  %s203 = scalar_lea.vmem %s1, 85
  %204 = vst.msk [vmem:[%s203] ss:$8 sm:$0xc] %vm200, %v199
  %s205 = scalar_lea.vmem %s1, 70
  %206 = vst.msk [vmem:[%s205] ss:$8 sm:$0x30] %vm200, %v199
  %s207 = scalar_lea.vmem %s1, 55
  %208 = vst.msk [vmem:[%s207] ss:$8 sm:$0xc0] %vm200, %v199
  %s209 = scalar_lea.vmem %s0, 896
  %v210 = vld [vmem:[%s209] ss:$8 sm:$0xf]
  %s211 = scalar_lea.vmem %s0, 896
  %v212 = vld [vmem:[%s211] ss:$8 sm:$0xf0]
  %vm213 = vcmask 1047556
  %v214 = vsel %vm213, %v212, %v210
  %vm215 = vcmask 130048
  %s216 = scalar_lea.vmem %s1, 112
  %217 = vst.msk [vmem:[%s216] ss:$8 sm:$0x3] %vm215, %v214
  %s218 = scalar_lea.vmem %s1, 97
  %219 = vst.msk [vmem:[%s218] ss:$8 sm:$0xc] %vm215, %v214
  %s220 = scalar_lea.vmem %s1, 82
  %221 = vst.msk [vmem:[%s220] ss:$8 sm:$0x30] %vm215, %v214
  %s222 = scalar_lea.vmem %s1, 67
  %223 = vst.msk [vmem:[%s222] ss:$8 sm:$0xc0] %vm215, %v214
  %s224 = scalar_lea.vmem %s0, 960
  %v225 = vld [vmem:[%s224] ss:$8 sm:$0xf]
  %s226 = scalar_lea.vmem %s0, 960
  %v227 = vld [vmem:[%s226] ss:$8 sm:$0xf0]
  %vm228 = vcmask 1047556
  %v229 = vsel %vm228, %v227, %v225
  %vm230 = vcmask 130048
  %s231 = scalar_lea.vmem %s1, 116
  %232 = vst.msk [vmem:[%s231] ss:$8 sm:$0x3] %vm230, %v229
  %s233 = scalar_lea.vmem %s1, 101
  %234 = vst.msk [vmem:[%s233] ss:$8 sm:$0xc] %vm230, %v229
  %s235 = scalar_lea.vmem %s1, 86
  %236 = vst.msk [vmem:[%s235] ss:$8 sm:$0x30] %vm230, %v229
  %s237 = scalar_lea.vmem %s1, 71
  %238 = vst.msk [vmem:[%s237] ss:$8 sm:$0xc0] %vm230, %v229
  %s239 = scalar_lea.vmem %s0, 1024
  %v240 = vld [vmem:[%s239] ss:$8 sm:$0xf]
  %s241 = scalar_lea.vmem %s0, 1024
  %v242 = vld [vmem:[%s241] ss:$8 sm:$0xf0]
  %vm243 = vcmask 1047556
  %v244 = vsel %vm243, %v242, %v240
  %vm245 = vcmask 130048
  %s246 = scalar_lea.vmem %s1, 128
  %247 = vst.msk [vmem:[%s246] ss:$8 sm:$0x3] %vm245, %v244
  %s248 = scalar_lea.vmem %s1, 113
  %249 = vst.msk [vmem:[%s248] ss:$8 sm:$0xc] %vm245, %v244
  %s250 = scalar_lea.vmem %s1, 98
  %251 = vst.msk [vmem:[%s250] ss:$8 sm:$0x30] %vm245, %v244
  %s252 = scalar_lea.vmem %s1, 83
  %253 = vst.msk [vmem:[%s252] ss:$8 sm:$0xc0] %vm245, %v244
  %s254 = scalar_lea.vmem %s0, 1088
  %v255 = vld [vmem:[%s254] ss:$8 sm:$0xf]
  %s256 = scalar_lea.vmem %s0, 1088
  %v257 = vld [vmem:[%s256] ss:$8 sm:$0xf0]
  %vm258 = vcmask 1047556
  %v259 = vsel %vm258, %v257, %v255
  %vm260 = vcmask 130048
  %s261 = scalar_lea.vmem %s1, 132
  %262 = vst.msk [vmem:[%s261] ss:$8 sm:$0x3] %vm260, %v259
  %s263 = scalar_lea.vmem %s1, 117
  %264 = vst.msk [vmem:[%s263] ss:$8 sm:$0xc] %vm260, %v259
  %s265 = scalar_lea.vmem %s1, 102
  %266 = vst.msk [vmem:[%s265] ss:$8 sm:$0x30] %vm260, %v259
  %s267 = scalar_lea.vmem %s1, 87
  %268 = vst.msk [vmem:[%s267] ss:$8 sm:$0xc0] %vm260, %v259
  %s269 = scalar_lea.vmem %s0, 1152
  %v270 = vld [vmem:[%s269] ss:$8 sm:$0xf]
  %s271 = scalar_lea.vmem %s0, 1152
  %v272 = vld [vmem:[%s271] ss:$8 sm:$0xf0]
  %vm273 = vcmask 1047556
  %v274 = vsel %vm273, %v272, %v270
  %vm275 = vcmask 130048
  %s276 = scalar_lea.vmem %s1, 144
  %277 = vst.msk [vmem:[%s276] ss:$8 sm:$0x3] %vm275, %v274
  %s278 = scalar_lea.vmem %s1, 129
  %279 = vst.msk [vmem:[%s278] ss:$8 sm:$0xc] %vm275, %v274
  %s280 = scalar_lea.vmem %s1, 114
  %281 = vst.msk [vmem:[%s280] ss:$8 sm:$0x30] %vm275, %v274
  %s282 = scalar_lea.vmem %s1, 99
  %283 = vst.msk [vmem:[%s282] ss:$8 sm:$0xc0] %vm275, %v274
  %s284 = scalar_lea.vmem %s0, 1216
  %v285 = vld [vmem:[%s284] ss:$8 sm:$0xf]
  %s286 = scalar_lea.vmem %s0, 1216
  %v287 = vld [vmem:[%s286] ss:$8 sm:$0xf0]
  %vm288 = vcmask 1047556
  %v289 = vsel %vm288, %v287, %v285
  %vm290 = vcmask 130048
  %s291 = scalar_lea.vmem %s1, 148
  %292 = vst.msk [vmem:[%s291] ss:$8 sm:$0x3] %vm290, %v289
  %s293 = scalar_lea.vmem %s1, 133
  %294 = vst.msk [vmem:[%s293] ss:$8 sm:$0xc] %vm290, %v289
  %s295 = scalar_lea.vmem %s1, 118
  %296 = vst.msk [vmem:[%s295] ss:$8 sm:$0x30] %vm290, %v289
  %s297 = scalar_lea.vmem %s1, 103
  %298 = vst.msk [vmem:[%s297] ss:$8 sm:$0xc0] %vm290, %v289
  %s299 = scalar_lea.vmem %s0, 1280
  %v300 = vld [vmem:[%s299] ss:$8 sm:$0xf]
  %s301 = scalar_lea.vmem %s0, 1280
  %v302 = vld [vmem:[%s301] ss:$8 sm:$0xf0]
  %vm303 = vcmask 1047556
  %v304 = vsel %vm303, %v302, %v300
  %vm305 = vcmask 130048
  %s306 = scalar_lea.vmem %s1, 160
  %307 = vst.msk [vmem:[%s306] ss:$8 sm:$0x3] %vm305, %v304
  %s308 = scalar_lea.vmem %s1, 145
  %309 = vst.msk [vmem:[%s308] ss:$8 sm:$0xc] %vm305, %v304
  %s310 = scalar_lea.vmem %s1, 130
  %311 = vst.msk [vmem:[%s310] ss:$8 sm:$0x30] %vm305, %v304
  %s312 = scalar_lea.vmem %s1, 115
  %313 = vst.msk [vmem:[%s312] ss:$8 sm:$0xc0] %vm305, %v304
  %s314 = scalar_lea.vmem %s0, 1344
  %v315 = vld [vmem:[%s314] ss:$8 sm:$0xf]
  %s316 = scalar_lea.vmem %s0, 1344
  %v317 = vld [vmem:[%s316] ss:$8 sm:$0xf0]
  %vm318 = vcmask 1047556
  %v319 = vsel %vm318, %v317, %v315
  %vm320 = vcmask 130048
  %s321 = scalar_lea.vmem %s1, 164
  %322 = vst.msk [vmem:[%s321] ss:$8 sm:$0x3] %vm320, %v319
  %s323 = scalar_lea.vmem %s1, 149
  %324 = vst.msk [vmem:[%s323] ss:$8 sm:$0xc] %vm320, %v319
  %s325 = scalar_lea.vmem %s1, 134
  %326 = vst.msk [vmem:[%s325] ss:$8 sm:$0x30] %vm320, %v319
  %s327 = scalar_lea.vmem %s1, 119
  %328 = vst.msk [vmem:[%s327] ss:$8 sm:$0xc0] %vm320, %v319
  %s329 = scalar_lea.vmem %s0, 1408
  %v330 = vld [vmem:[%s329] ss:$8 sm:$0xf]
  %s331 = scalar_lea.vmem %s0, 1408
  %v332 = vld [vmem:[%s331] ss:$8 sm:$0xf0]
  %vm333 = vcmask 1047556
  %v334 = vsel %vm333, %v332, %v330
  %vm335 = vcmask 130048
  %s336 = scalar_lea.vmem %s1, 176
  %337 = vst.msk [vmem:[%s336] ss:$8 sm:$0x3] %vm335, %v334
  %s338 = scalar_lea.vmem %s1, 161
  %339 = vst.msk [vmem:[%s338] ss:$8 sm:$0xc] %vm335, %v334
  %s340 = scalar_lea.vmem %s1, 146
  %341 = vst.msk [vmem:[%s340] ss:$8 sm:$0x30] %vm335, %v334
  %s342 = scalar_lea.vmem %s1, 131
  %343 = vst.msk [vmem:[%s342] ss:$8 sm:$0xc0] %vm335, %v334
  %s344 = scalar_lea.vmem %s0, 1472
  %v345 = vld [vmem:[%s344] ss:$8 sm:$0xf]
  %s346 = scalar_lea.vmem %s0, 1472
  %v347 = vld [vmem:[%s346] ss:$8 sm:$0xf0]
  %vm348 = vcmask 1047556
  %v349 = vsel %vm348, %v347, %v345
  %vm350 = vcmask 130048
  %s351 = scalar_lea.vmem %s1, 180
  %352 = vst.msk [vmem:[%s351] ss:$8 sm:$0x3] %vm350, %v349
  %s353 = scalar_lea.vmem %s1, 165
  %354 = vst.msk [vmem:[%s353] ss:$8 sm:$0xc] %vm350, %v349
  %s355 = scalar_lea.vmem %s1, 150
  %356 = vst.msk [vmem:[%s355] ss:$8 sm:$0x30] %vm350, %v349
  %s357 = scalar_lea.vmem %s1, 135
  %358 = vst.msk [vmem:[%s357] ss:$8 sm:$0xc0] %vm350, %v349
  %s359 = scalar_lea.vmem %s0, 1536
  %v360 = vld [vmem:[%s359] ss:$8 sm:$0xf]
  %s361 = scalar_lea.vmem %s0, 1536
  %v362 = vld [vmem:[%s361] ss:$8 sm:$0xf0]
  %vm363 = vcmask 1047556
  %v364 = vsel %vm363, %v362, %v360
  %vm365 = vcmask 130048
  %s366 = scalar_lea.vmem %s1, 192
  %367 = vst.msk [vmem:[%s366] ss:$8 sm:$0x3] %vm365, %v364
  %s368 = scalar_lea.vmem %s1, 177
  %369 = vst.msk [vmem:[%s368] ss:$8 sm:$0xc] %vm365, %v364
  %s370 = scalar_lea.vmem %s1, 162
  %371 = vst.msk [vmem:[%s370] ss:$8 sm:$0x30] %vm365, %v364
  %s372 = scalar_lea.vmem %s1, 147
  %373 = vst.msk [vmem:[%s372] ss:$8 sm:$0xc0] %vm365, %v364
  %s374 = scalar_lea.vmem %s0, 1600
  %v375 = vld [vmem:[%s374] ss:$8 sm:$0xf]
  %s376 = scalar_lea.vmem %s0, 1600
  %v377 = vld [vmem:[%s376] ss:$8 sm:$0xf0]
  %vm378 = vcmask 1047556
  %v379 = vsel %vm378, %v377, %v375
  %vm380 = vcmask 130048
  %s381 = scalar_lea.vmem %s1, 196
  %382 = vst.msk [vmem:[%s381] ss:$8 sm:$0x3] %vm380, %v379
  %s383 = scalar_lea.vmem %s1, 181
  %384 = vst.msk [vmem:[%s383] ss:$8 sm:$0xc] %vm380, %v379
  %s385 = scalar_lea.vmem %s1, 166
  %386 = vst.msk [vmem:[%s385] ss:$8 sm:$0x30] %vm380, %v379
  %s387 = scalar_lea.vmem %s1, 151
  %388 = vst.msk [vmem:[%s387] ss:$8 sm:$0xc0] %vm380, %v379
  %s389 = scalar_lea.vmem %s0, 1664
  %v390 = vld [vmem:[%s389] ss:$8 sm:$0xf]
  %s391 = scalar_lea.vmem %s0, 1664
  %v392 = vld [vmem:[%s391] ss:$8 sm:$0xf0]
  %vm393 = vcmask 1047556
  %v394 = vsel %vm393, %v392, %v390
  %vm395 = vcmask 130048
  %s396 = scalar_lea.vmem %s1, 208
  %397 = vst.msk [vmem:[%s396] ss:$8 sm:$0x3] %vm395, %v394
  %s398 = scalar_lea.vmem %s1, 193
  %399 = vst.msk [vmem:[%s398] ss:$8 sm:$0xc] %vm395, %v394
  %s400 = scalar_lea.vmem %s1, 178
  %401 = vst.msk [vmem:[%s400] ss:$8 sm:$0x30] %vm395, %v394
  %s402 = scalar_lea.vmem %s1, 163
  %403 = vst.msk [vmem:[%s402] ss:$8 sm:$0xc0] %vm395, %v394
  %s404 = scalar_lea.vmem %s0, 1728
  %v405 = vld [vmem:[%s404] ss:$8 sm:$0xf]
  %s406 = scalar_lea.vmem %s0, 1728
  %v407 = vld [vmem:[%s406] ss:$8 sm:$0xf0]
  %vm408 = vcmask 1047556
  %v409 = vsel %vm408, %v407, %v405
  %vm410 = vcmask 130048
  %s411 = scalar_lea.vmem %s1, 212
  %412 = vst.msk [vmem:[%s411] ss:$8 sm:$0x3] %vm410, %v409
  %s413 = scalar_lea.vmem %s1, 197
  %414 = vst.msk [vmem:[%s413] ss:$8 sm:$0xc] %vm410, %v409
  %s415 = scalar_lea.vmem %s1, 182
  %416 = vst.msk [vmem:[%s415] ss:$8 sm:$0x30] %vm410, %v409
  %s417 = scalar_lea.vmem %s1, 167
  %418 = vst.msk [vmem:[%s417] ss:$8 sm:$0xc0] %vm410, %v409
  %s419 = scalar_lea.vmem %s0, 1792
  %v420 = vld [vmem:[%s419] ss:$8 sm:$0xf]
  %s421 = scalar_lea.vmem %s0, 1792
  %v422 = vld [vmem:[%s421] ss:$8 sm:$0xf0]
  %vm423 = vcmask 1047556
  %v424 = vsel %vm423, %v422, %v420
  %vm425 = vcmask 130048
  %s426 = scalar_lea.vmem %s1, 224
  %427 = vst.msk [vmem:[%s426] ss:$8 sm:$0x3] %vm425, %v424
  %s428 = scalar_lea.vmem %s1, 209
  %429 = vst.msk [vmem:[%s428] ss:$8 sm:$0xc] %vm425, %v424
  %s430 = scalar_lea.vmem %s1, 194
  %431 = vst.msk [vmem:[%s430] ss:$8 sm:$0x30] %vm425, %v424
  %s432 = scalar_lea.vmem %s1, 179
  %433 = vst.msk [vmem:[%s432] ss:$8 sm:$0xc0] %vm425, %v424
  %s434 = scalar_lea.vmem %s0, 1856
  %v435 = vld [vmem:[%s434] ss:$8 sm:$0xf]
  %s436 = scalar_lea.vmem %s0, 1856
  %v437 = vld [vmem:[%s436] ss:$8 sm:$0xf0]
  %vm438 = vcmask 1047556
  %v439 = vsel %vm438, %v437, %v435
  %vm440 = vcmask 130048
  %s441 = scalar_lea.vmem %s1, 228
  %442 = vst.msk [vmem:[%s441] ss:$8 sm:$0x3] %vm440, %v439
  %s443 = scalar_lea.vmem %s1, 213
  %444 = vst.msk [vmem:[%s443] ss:$8 sm:$0xc] %vm440, %v439
  %s445 = scalar_lea.vmem %s1, 198
  %446 = vst.msk [vmem:[%s445] ss:$8 sm:$0x30] %vm440, %v439
  %s447 = scalar_lea.vmem %s1, 183
  %448 = vst.msk [vmem:[%s447] ss:$8 sm:$0xc0] %vm440, %v439
  %s449 = scalar_lea.vmem %s0, 1920
  %v450 = vld [vmem:[%s449] ss:$8 sm:$0xf]
  %s451 = scalar_lea.vmem %s0, 1920
  %v452 = vld [vmem:[%s451] ss:$8 sm:$0xf0]
  %vm453 = vcmask 1047556
  %v454 = vsel %vm453, %v452, %v450
  %vm455 = vcmask 130048
  %s456 = scalar_lea.vmem %s1, 240
  %457 = vst.msk [vmem:[%s456] ss:$8 sm:$0x3] %vm455, %v454
  %s458 = scalar_lea.vmem %s1, 225
  %459 = vst.msk [vmem:[%s458] ss:$8 sm:$0xc] %vm455, %v454
  %s460 = scalar_lea.vmem %s1, 210
  %461 = vst.msk [vmem:[%s460] ss:$8 sm:$0x30] %vm455, %v454
  %s462 = scalar_lea.vmem %s1, 195
  %463 = vst.msk [vmem:[%s462] ss:$8 sm:$0xc0] %vm455, %v454
  %s464 = scalar_lea.vmem %s0, 1984
  %v465 = vld [vmem:[%s464] ss:$8 sm:$0xf]
  %s466 = scalar_lea.vmem %s0, 1984
  %v467 = vld [vmem:[%s466] ss:$8 sm:$0xf0]
  %vm468 = vcmask 1047556
  %v469 = vsel %vm468, %v467, %v465
  %vm470 = vcmask 130048
  %s471 = scalar_lea.vmem %s1, 244
  %472 = vst.msk [vmem:[%s471] ss:$8 sm:$0x3] %vm470, %v469
  %s473 = scalar_lea.vmem %s1, 229
  %474 = vst.msk [vmem:[%s473] ss:$8 sm:$0xc] %vm470, %v469
  %s475 = scalar_lea.vmem %s1, 214
  %476 = vst.msk [vmem:[%s475] ss:$8 sm:$0x30] %vm470, %v469
  %s477 = scalar_lea.vmem %s1, 199
  %478 = vst.msk [vmem:[%s477] ss:$8 sm:$0xc0] %vm470, %v469
  %s479 = scalar_lea.vmem %s0, 2048
  %v480 = vld [vmem:[%s479] ss:$8 sm:$0xf]
  %s481 = scalar_lea.vmem %s0, 2048
  %v482 = vld [vmem:[%s481] ss:$8 sm:$0xf0]
  %vm483 = vcmask 1047556
  %v484 = vsel %vm483, %v482, %v480
  %vm485 = vcmask 130048
  %s486 = scalar_lea.vmem %s1, 256
  %487 = vst.msk [vmem:[%s486] ss:$8 sm:$0x3] %vm485, %v484
  %s488 = scalar_lea.vmem %s1, 241
  %489 = vst.msk [vmem:[%s488] ss:$8 sm:$0xc] %vm485, %v484
  %s490 = scalar_lea.vmem %s1, 226
  %491 = vst.msk [vmem:[%s490] ss:$8 sm:$0x30] %vm485, %v484
  %s492 = scalar_lea.vmem %s1, 211
  %493 = vst.msk [vmem:[%s492] ss:$8 sm:$0xc0] %vm485, %v484
  %s494 = scalar_lea.vmem %s0, 2112
  %v495 = vld [vmem:[%s494] ss:$8 sm:$0xf]
  %s496 = scalar_lea.vmem %s0, 2112
  %v497 = vld [vmem:[%s496] ss:$8 sm:$0xf0]
  %vm498 = vcmask 1047556
  %v499 = vsel %vm498, %v497, %v495
  %vm500 = vcmask 130048
  %s501 = scalar_lea.vmem %s1, 260
  %502 = vst.msk [vmem:[%s501] ss:$8 sm:$0x3] %vm500, %v499
  %s503 = scalar_lea.vmem %s1, 245
  %504 = vst.msk [vmem:[%s503] ss:$8 sm:$0xc] %vm500, %v499
  %s505 = scalar_lea.vmem %s1, 230
  %506 = vst.msk [vmem:[%s505] ss:$8 sm:$0x30] %vm500, %v499
  %s507 = scalar_lea.vmem %s1, 215
  %508 = vst.msk [vmem:[%s507] ss:$8 sm:$0xc0] %vm500, %v499
  %s509 = scalar_lea.vmem %s0, 2176
  %v510 = vld [vmem:[%s509] ss:$8 sm:$0xf]
  %s511 = scalar_lea.vmem %s0, 2176
  %v512 = vld [vmem:[%s511] ss:$8 sm:$0xf0]
  %vm513 = vcmask 1047556
  %v514 = vsel %vm513, %v512, %v510
  %vm515 = vcmask 130048
  %s516 = scalar_lea.vmem %s1, 272
  %517 = vst.msk [vmem:[%s516] ss:$8 sm:$0x3] %vm515, %v514
  %s518 = scalar_lea.vmem %s1, 257
  %519 = vst.msk [vmem:[%s518] ss:$8 sm:$0xc] %vm515, %v514
  %s520 = scalar_lea.vmem %s1, 242
  %521 = vst.msk [vmem:[%s520] ss:$8 sm:$0x30] %vm515, %v514
  %s522 = scalar_lea.vmem %s1, 227
  %523 = vst.msk [vmem:[%s522] ss:$8 sm:$0xc0] %vm515, %v514
  %s524 = scalar_lea.vmem %s0, 2240
  %v525 = vld [vmem:[%s524] ss:$8 sm:$0xf]
  %s526 = scalar_lea.vmem %s0, 2240
  %v527 = vld [vmem:[%s526] ss:$8 sm:$0xf0]
  %vm528 = vcmask 1047556
  %v529 = vsel %vm528, %v527, %v525
  %vm530 = vcmask 130048
  %s531 = scalar_lea.vmem %s1, 276
  %532 = vst.msk [vmem:[%s531] ss:$8 sm:$0x3] %vm530, %v529
  %s533 = scalar_lea.vmem %s1, 261
  %534 = vst.msk [vmem:[%s533] ss:$8 sm:$0xc] %vm530, %v529
  %s535 = scalar_lea.vmem %s1, 246
  %536 = vst.msk [vmem:[%s535] ss:$8 sm:$0x30] %vm530, %v529
  %s537 = scalar_lea.vmem %s1, 231
  %538 = vst.msk [vmem:[%s537] ss:$8 sm:$0xc0] %vm530, %v529
  %s539 = scalar_lea.vmem %s0, 2304
  %v540 = vld [vmem:[%s539] ss:$8 sm:$0xf]
  %s541 = scalar_lea.vmem %s0, 2304
  %v542 = vld [vmem:[%s541] ss:$8 sm:$0xf0]
  %vm543 = vcmask 1047556
  %v544 = vsel %vm543, %v542, %v540
  %vm545 = vcmask 130048
  %s546 = scalar_lea.vmem %s1, 288
  %547 = vst.msk [vmem:[%s546] ss:$8 sm:$0x3] %vm545, %v544
  %s548 = scalar_lea.vmem %s1, 273
  %549 = vst.msk [vmem:[%s548] ss:$8 sm:$0xc] %vm545, %v544
  %s550 = scalar_lea.vmem %s1, 258
  %551 = vst.msk [vmem:[%s550] ss:$8 sm:$0x30] %vm545, %v544
  %s552 = scalar_lea.vmem %s1, 243
  %553 = vst.msk [vmem:[%s552] ss:$8 sm:$0xc0] %vm545, %v544
  %s554 = scalar_lea.vmem %s0, 2368
  %v555 = vld [vmem:[%s554] ss:$8 sm:$0xf]
  %s556 = scalar_lea.vmem %s0, 2368
  %v557 = vld [vmem:[%s556] ss:$8 sm:$0xf0]
  %vm558 = vcmask 1047556
  %v559 = vsel %vm558, %v557, %v555
  %vm560 = vcmask 130048
  %s561 = scalar_lea.vmem %s1, 292
  %562 = vst.msk [vmem:[%s561] ss:$8 sm:$0x3] %vm560, %v559
  %s563 = scalar_lea.vmem %s1, 277
  %564 = vst.msk [vmem:[%s563] ss:$8 sm:$0xc] %vm560, %v559
  %s565 = scalar_lea.vmem %s1, 262
  %566 = vst.msk [vmem:[%s565] ss:$8 sm:$0x30] %vm560, %v559
  %s567 = scalar_lea.vmem %s1, 247
  %568 = vst.msk [vmem:[%s567] ss:$8 sm:$0xc0] %vm560, %v559
  %s569 = scalar_lea.vmem %s0, 2432
  %v570 = vld [vmem:[%s569] ss:$8 sm:$0xf]
  %s571 = scalar_lea.vmem %s0, 2432
  %v572 = vld [vmem:[%s571] ss:$8 sm:$0xf0]
  %vm573 = vcmask 1047556
  %v574 = vsel %vm573, %v572, %v570
  %vm575 = vcmask 130048
  %s576 = scalar_lea.vmem %s1, 304
  %577 = vst.msk [vmem:[%s576] ss:$8 sm:$0x3] %vm575, %v574
  %s578 = scalar_lea.vmem %s1, 289
  %579 = vst.msk [vmem:[%s578] ss:$8 sm:$0xc] %vm575, %v574
  %s580 = scalar_lea.vmem %s1, 274
  %581 = vst.msk [vmem:[%s580] ss:$8 sm:$0x30] %vm575, %v574
  %s582 = scalar_lea.vmem %s1, 259
  %583 = vst.msk [vmem:[%s582] ss:$8 sm:$0xc0] %vm575, %v574
  %s584 = scalar_lea.vmem %s0, 2496
  %v585 = vld [vmem:[%s584] ss:$8 sm:$0xf]
  %s586 = scalar_lea.vmem %s0, 2496
  %v587 = vld [vmem:[%s586] ss:$8 sm:$0xf0]
  %vm588 = vcmask 1047556
  %v589 = vsel %vm588, %v587, %v585
  %vm590 = vcmask 130048
  %s591 = scalar_lea.vmem %s1, 308
  %592 = vst.msk [vmem:[%s591] ss:$8 sm:$0x3] %vm590, %v589
  %s593 = scalar_lea.vmem %s1, 293
  %594 = vst.msk [vmem:[%s593] ss:$8 sm:$0xc] %vm590, %v589
  %s595 = scalar_lea.vmem %s1, 278
  %596 = vst.msk [vmem:[%s595] ss:$8 sm:$0x30] %vm590, %v589
  %s597 = scalar_lea.vmem %s1, 263
  %598 = vst.msk [vmem:[%s597] ss:$8 sm:$0xc0] %vm590, %v589
  %s599 = scalar_lea.vmem %s0, 2560
  %v600 = vld [vmem:[%s599] ss:$8 sm:$0xf]
  %s601 = scalar_lea.vmem %s0, 2560
  %v602 = vld [vmem:[%s601] ss:$8 sm:$0xf0]
  %vm603 = vcmask 1047556
  %v604 = vsel %vm603, %v602, %v600
  %vm605 = vcmask 130048
  %s606 = scalar_lea.vmem %s1, 320
  %607 = vst.msk [vmem:[%s606] ss:$8 sm:$0x3] %vm605, %v604
  %s608 = scalar_lea.vmem %s1, 305
  %609 = vst.msk [vmem:[%s608] ss:$8 sm:$0xc] %vm605, %v604
  %s610 = scalar_lea.vmem %s1, 290
  %611 = vst.msk [vmem:[%s610] ss:$8 sm:$0x30] %vm605, %v604
  %s612 = scalar_lea.vmem %s1, 275
  %613 = vst.msk [vmem:[%s612] ss:$8 sm:$0xc0] %vm605, %v604
  %s614 = scalar_lea.vmem %s0, 2624
  %v615 = vld [vmem:[%s614] ss:$8 sm:$0xf]
  %s616 = scalar_lea.vmem %s0, 2624
  %v617 = vld [vmem:[%s616] ss:$8 sm:$0xf0]
  %vm618 = vcmask 1047556
  %v619 = vsel %vm618, %v617, %v615
  %vm620 = vcmask 130048
  %s621 = scalar_lea.vmem %s1, 324
  %622 = vst.msk [vmem:[%s621] ss:$8 sm:$0x3] %vm620, %v619
  %s623 = scalar_lea.vmem %s1, 309
  %624 = vst.msk [vmem:[%s623] ss:$8 sm:$0xc] %vm620, %v619
  %s625 = scalar_lea.vmem %s1, 294
  %626 = vst.msk [vmem:[%s625] ss:$8 sm:$0x30] %vm620, %v619
  %s627 = scalar_lea.vmem %s1, 279
  %628 = vst.msk [vmem:[%s627] ss:$8 sm:$0xc0] %vm620, %v619
  %s629 = scalar_lea.vmem %s0, 2688
  %v630 = vld [vmem:[%s629] ss:$8 sm:$0xf]
  %s631 = scalar_lea.vmem %s0, 2688
  %v632 = vld [vmem:[%s631] ss:$8 sm:$0xf0]
  %vm633 = vcmask 1047556
  %v634 = vsel %vm633, %v632, %v630
  %vm635 = vcmask 130048
  %s636 = scalar_lea.vmem %s1, 336
  %637 = vst.msk [vmem:[%s636] ss:$8 sm:$0x3] %vm635, %v634
  %s638 = scalar_lea.vmem %s1, 321
  %639 = vst.msk [vmem:[%s638] ss:$8 sm:$0xc] %vm635, %v634
  %s640 = scalar_lea.vmem %s1, 306
  %641 = vst.msk [vmem:[%s640] ss:$8 sm:$0x30] %vm635, %v634
  %s642 = scalar_lea.vmem %s1, 291
  %643 = vst.msk [vmem:[%s642] ss:$8 sm:$0xc0] %vm635, %v634
  %s644 = scalar_lea.vmem %s0, 2752
  %v645 = vld [vmem:[%s644] ss:$8 sm:$0xf]
  %s646 = scalar_lea.vmem %s0, 2752
  %v647 = vld [vmem:[%s646] ss:$8 sm:$0xf0]
  %vm648 = vcmask 1047556
  %v649 = vsel %vm648, %v647, %v645
  %vm650 = vcmask 130048
  %s651 = scalar_lea.vmem %s1, 340
  %652 = vst.msk [vmem:[%s651] ss:$8 sm:$0x3] %vm650, %v649
  %s653 = scalar_lea.vmem %s1, 325
  %654 = vst.msk [vmem:[%s653] ss:$8 sm:$0xc] %vm650, %v649
  %s655 = scalar_lea.vmem %s1, 310
  %656 = vst.msk [vmem:[%s655] ss:$8 sm:$0x30] %vm650, %v649
  %s657 = scalar_lea.vmem %s1, 295
  %658 = vst.msk [vmem:[%s657] ss:$8 sm:$0xc0] %vm650, %v649
  %s659 = scalar_lea.vmem %s0, 2816
  %v660 = vld [vmem:[%s659] ss:$8 sm:$0xf]
  %s661 = scalar_lea.vmem %s0, 2816
  %v662 = vld [vmem:[%s661] ss:$8 sm:$0xf0]
  %vm663 = vcmask 1047556
  %v664 = vsel %vm663, %v662, %v660
  %vm665 = vcmask 130048
  %s666 = scalar_lea.vmem %s1, 352
  %667 = vst.msk [vmem:[%s666] ss:$8 sm:$0x3] %vm665, %v664
  %s668 = scalar_lea.vmem %s1, 337
  %669 = vst.msk [vmem:[%s668] ss:$8 sm:$0xc] %vm665, %v664
  %s670 = scalar_lea.vmem %s1, 322
  %671 = vst.msk [vmem:[%s670] ss:$8 sm:$0x30] %vm665, %v664
  %s672 = scalar_lea.vmem %s1, 307
  %673 = vst.msk [vmem:[%s672] ss:$8 sm:$0xc0] %vm665, %v664
  %s674 = scalar_lea.vmem %s0, 2880
  %v675 = vld [vmem:[%s674] ss:$8 sm:$0xf]
  %s676 = scalar_lea.vmem %s0, 2880
  %v677 = vld [vmem:[%s676] ss:$8 sm:$0xf0]
  %vm678 = vcmask 1047556
  %v679 = vsel %vm678, %v677, %v675
  %vm680 = vcmask 130048
  %s681 = scalar_lea.vmem %s1, 356
  %682 = vst.msk [vmem:[%s681] ss:$8 sm:$0x3] %vm680, %v679
  %s683 = scalar_lea.vmem %s1, 341
  %684 = vst.msk [vmem:[%s683] ss:$8 sm:$0xc] %vm680, %v679
  %s685 = scalar_lea.vmem %s1, 326
  %686 = vst.msk [vmem:[%s685] ss:$8 sm:$0x30] %vm680, %v679
  %s687 = scalar_lea.vmem %s1, 311
  %688 = vst.msk [vmem:[%s687] ss:$8 sm:$0xc0] %vm680, %v679
  %s689 = scalar_lea.vmem %s0, 2944
  %v690 = vld [vmem:[%s689] ss:$8 sm:$0xf]
  %s691 = scalar_lea.vmem %s0, 2944
  %v692 = vld [vmem:[%s691] ss:$8 sm:$0xf0]
  %vm693 = vcmask 1047556
  %v694 = vsel %vm693, %v692, %v690
  %vm695 = vcmask 130048
  %s696 = scalar_lea.vmem %s1, 368
  %697 = vst.msk [vmem:[%s696] ss:$8 sm:$0x3] %vm695, %v694
  %s698 = scalar_lea.vmem %s1, 353
  %699 = vst.msk [vmem:[%s698] ss:$8 sm:$0xc] %vm695, %v694
  %s700 = scalar_lea.vmem %s1, 338
  %701 = vst.msk [vmem:[%s700] ss:$8 sm:$0x30] %vm695, %v694
  %s702 = scalar_lea.vmem %s1, 323
  %703 = vst.msk [vmem:[%s702] ss:$8 sm:$0xc0] %vm695, %v694
  %s704 = scalar_lea.vmem %s0, 3008
  %v705 = vld [vmem:[%s704] ss:$8 sm:$0xf]
  %s706 = scalar_lea.vmem %s0, 3008
  %v707 = vld [vmem:[%s706] ss:$8 sm:$0xf0]
  %vm708 = vcmask 1047556
  %v709 = vsel %vm708, %v707, %v705
  %vm710 = vcmask 130048
  %s711 = scalar_lea.vmem %s1, 372
  %712 = vst.msk [vmem:[%s711] ss:$8 sm:$0x3] %vm710, %v709
  %s713 = scalar_lea.vmem %s1, 357
  %714 = vst.msk [vmem:[%s713] ss:$8 sm:$0xc] %vm710, %v709
  %s715 = scalar_lea.vmem %s1, 342
  %716 = vst.msk [vmem:[%s715] ss:$8 sm:$0x30] %vm710, %v709
  %s717 = scalar_lea.vmem %s1, 327
  %718 = vst.msk [vmem:[%s717] ss:$8 sm:$0xc0] %vm710, %v709
  %s719 = scalar_lea.vmem %s0, 3072
  %v720 = vld [vmem:[%s719] ss:$8 sm:$0xf]
  %s721 = scalar_lea.vmem %s0, 3072
  %v722 = vld [vmem:[%s721] ss:$8 sm:$0xf0]
  %vm723 = vcmask 1047556
  %v724 = vsel %vm723, %v722, %v720
  %vm725 = vcmask 130048
  %s726 = scalar_lea.vmem %s1, 384
  %727 = vst.msk [vmem:[%s726] ss:$8 sm:$0x3] %vm725, %v724
  %s728 = scalar_lea.vmem %s1, 369
  %729 = vst.msk [vmem:[%s728] ss:$8 sm:$0xc] %vm725, %v724
  %s730 = scalar_lea.vmem %s1, 354
  %731 = vst.msk [vmem:[%s730] ss:$8 sm:$0x30] %vm725, %v724
  %s732 = scalar_lea.vmem %s1, 339
  %733 = vst.msk [vmem:[%s732] ss:$8 sm:$0xc0] %vm725, %v724
  %s734 = scalar_lea.vmem %s0, 3136
  %v735 = vld [vmem:[%s734] ss:$8 sm:$0xf]
  %s736 = scalar_lea.vmem %s0, 3136
  %v737 = vld [vmem:[%s736] ss:$8 sm:$0xf0]
  %vm738 = vcmask 1047556
  %v739 = vsel %vm738, %v737, %v735
  %vm740 = vcmask 130048
  %s741 = scalar_lea.vmem %s1, 388
  %742 = vst.msk [vmem:[%s741] ss:$8 sm:$0x3] %vm740, %v739
  %s743 = scalar_lea.vmem %s1, 373
  %744 = vst.msk [vmem:[%s743] ss:$8 sm:$0xc] %vm740, %v739
  %s745 = scalar_lea.vmem %s1, 358
  %746 = vst.msk [vmem:[%s745] ss:$8 sm:$0x30] %vm740, %v739
  %s747 = scalar_lea.vmem %s1, 343
  %748 = vst.msk [vmem:[%s747] ss:$8 sm:$0xc0] %vm740, %v739
  %s749 = scalar_lea.vmem %s0, 3200
  %v750 = vld [vmem:[%s749] ss:$8 sm:$0xf]
  %s751 = scalar_lea.vmem %s0, 3200
  %v752 = vld [vmem:[%s751] ss:$8 sm:$0xf0]
  %vm753 = vcmask 1047556
  %v754 = vsel %vm753, %v752, %v750
  %vm755 = vcmask 130048
  %s756 = scalar_lea.vmem %s1, 400
  %757 = vst.msk [vmem:[%s756] ss:$8 sm:$0x3] %vm755, %v754
  %s758 = scalar_lea.vmem %s1, 385
  %759 = vst.msk [vmem:[%s758] ss:$8 sm:$0xc] %vm755, %v754
  %s760 = scalar_lea.vmem %s1, 370
  %761 = vst.msk [vmem:[%s760] ss:$8 sm:$0x30] %vm755, %v754
  %s762 = scalar_lea.vmem %s1, 355
  %763 = vst.msk [vmem:[%s762] ss:$8 sm:$0xc0] %vm755, %v754
  %s764 = scalar_lea.vmem %s0, 3264
  %v765 = vld [vmem:[%s764] ss:$8 sm:$0xf]
  %s766 = scalar_lea.vmem %s0, 3264
  %v767 = vld [vmem:[%s766] ss:$8 sm:$0xf0]
  %vm768 = vcmask 1047556
  %v769 = vsel %vm768, %v767, %v765
  %vm770 = vcmask 130048
  %s771 = scalar_lea.vmem %s1, 404
  %772 = vst.msk [vmem:[%s771] ss:$8 sm:$0x3] %vm770, %v769
  %s773 = scalar_lea.vmem %s1, 389
  %774 = vst.msk [vmem:[%s773] ss:$8 sm:$0xc] %vm770, %v769
  %s775 = scalar_lea.vmem %s1, 374
  %776 = vst.msk [vmem:[%s775] ss:$8 sm:$0x30] %vm770, %v769
  %s777 = scalar_lea.vmem %s1, 359
  %778 = vst.msk [vmem:[%s777] ss:$8 sm:$0xc0] %vm770, %v769
  %s779 = scalar_lea.vmem %s0, 3328
  %v780 = vld [vmem:[%s779] ss:$8 sm:$0xf]
  %s781 = scalar_lea.vmem %s0, 3328
  %v782 = vld [vmem:[%s781] ss:$8 sm:$0xf0]
  %vm783 = vcmask 1047556
  %v784 = vsel %vm783, %v782, %v780
  %vm785 = vcmask 130048
  %s786 = scalar_lea.vmem %s1, 416
  %787 = vst.msk [vmem:[%s786] ss:$8 sm:$0x3] %vm785, %v784
  %s788 = scalar_lea.vmem %s1, 401
  %789 = vst.msk [vmem:[%s788] ss:$8 sm:$0xc] %vm785, %v784
  %s790 = scalar_lea.vmem %s1, 386
  %791 = vst.msk [vmem:[%s790] ss:$8 sm:$0x30] %vm785, %v784
  %s792 = scalar_lea.vmem %s1, 371
  %793 = vst.msk [vmem:[%s792] ss:$8 sm:$0xc0] %vm785, %v784
  %s794 = scalar_lea.vmem %s0, 3392
  %v795 = vld [vmem:[%s794] ss:$8 sm:$0xf]
  %s796 = scalar_lea.vmem %s0, 3392
  %v797 = vld [vmem:[%s796] ss:$8 sm:$0xf0]
  %vm798 = vcmask 1047556
  %v799 = vsel %vm798, %v797, %v795
  %vm800 = vcmask 130048
  %s801 = scalar_lea.vmem %s1, 420
  %802 = vst.msk [vmem:[%s801] ss:$8 sm:$0x3] %vm800, %v799
  %s803 = scalar_lea.vmem %s1, 405
  %804 = vst.msk [vmem:[%s803] ss:$8 sm:$0xc] %vm800, %v799
  %s805 = scalar_lea.vmem %s1, 390
  %806 = vst.msk [vmem:[%s805] ss:$8 sm:$0x30] %vm800, %v799
  %s807 = scalar_lea.vmem %s1, 375
  %808 = vst.msk [vmem:[%s807] ss:$8 sm:$0xc0] %vm800, %v799
  %s809 = scalar_lea.vmem %s0, 3456
  %v810 = vld [vmem:[%s809] ss:$8 sm:$0xf]
  %s811 = scalar_lea.vmem %s0, 3456
  %v812 = vld [vmem:[%s811] ss:$8 sm:$0xf0]
  %vm813 = vcmask 1047556
  %v814 = vsel %vm813, %v812, %v810
  %vm815 = vcmask 130048
  %s816 = scalar_lea.vmem %s1, 432
  %817 = vst.msk [vmem:[%s816] ss:$8 sm:$0x3] %vm815, %v814
  %s818 = scalar_lea.vmem %s1, 417
  %819 = vst.msk [vmem:[%s818] ss:$8 sm:$0xc] %vm815, %v814
  %s820 = scalar_lea.vmem %s1, 402
  %821 = vst.msk [vmem:[%s820] ss:$8 sm:$0x30] %vm815, %v814
  %s822 = scalar_lea.vmem %s1, 387
  %823 = vst.msk [vmem:[%s822] ss:$8 sm:$0xc0] %vm815, %v814
  %s824 = scalar_lea.vmem %s0, 3520
  %v825 = vld [vmem:[%s824] ss:$8 sm:$0xf]
  %s826 = scalar_lea.vmem %s0, 3520
  %v827 = vld [vmem:[%s826] ss:$8 sm:$0xf0]
  %vm828 = vcmask 1047556
  %v829 = vsel %vm828, %v827, %v825
  %vm830 = vcmask 130048
  %s831 = scalar_lea.vmem %s1, 436
  %832 = vst.msk [vmem:[%s831] ss:$8 sm:$0x3] %vm830, %v829
  %s833 = scalar_lea.vmem %s1, 421
  %834 = vst.msk [vmem:[%s833] ss:$8 sm:$0xc] %vm830, %v829
  %s835 = scalar_lea.vmem %s1, 406
  %836 = vst.msk [vmem:[%s835] ss:$8 sm:$0x30] %vm830, %v829
  %s837 = scalar_lea.vmem %s1, 391
  %838 = vst.msk [vmem:[%s837] ss:$8 sm:$0xc0] %vm830, %v829
  %s839 = scalar_lea.vmem %s0, 3584
  %v840 = vld [vmem:[%s839] ss:$8 sm:$0xf]
  %s841 = scalar_lea.vmem %s0, 3584
  %v842 = vld [vmem:[%s841] ss:$8 sm:$0xf0]
  %vm843 = vcmask 1047556
  %v844 = vsel %vm843, %v842, %v840
  %vm845 = vcmask 130048
  %s846 = scalar_lea.vmem %s1, 448
  %847 = vst.msk [vmem:[%s846] ss:$8 sm:$0x3] %vm845, %v844
  %s848 = scalar_lea.vmem %s1, 433
  %849 = vst.msk [vmem:[%s848] ss:$8 sm:$0xc] %vm845, %v844
  %s850 = scalar_lea.vmem %s1, 418
  %851 = vst.msk [vmem:[%s850] ss:$8 sm:$0x30] %vm845, %v844
  %s852 = scalar_lea.vmem %s1, 403
  %853 = vst.msk [vmem:[%s852] ss:$8 sm:$0xc0] %vm845, %v844
  %s854 = scalar_lea.vmem %s0, 3648
  %v855 = vld [vmem:[%s854] ss:$8 sm:$0xf]
  %s856 = scalar_lea.vmem %s0, 3648
  %v857 = vld [vmem:[%s856] ss:$8 sm:$0xf0]
  %vm858 = vcmask 1047556
  %v859 = vsel %vm858, %v857, %v855
  %vm860 = vcmask 130048
  %s861 = scalar_lea.vmem %s1, 452
  %862 = vst.msk [vmem:[%s861] ss:$8 sm:$0x3] %vm860, %v859
  %s863 = scalar_lea.vmem %s1, 437
  %864 = vst.msk [vmem:[%s863] ss:$8 sm:$0xc] %vm860, %v859
  %s865 = scalar_lea.vmem %s1, 422
  %866 = vst.msk [vmem:[%s865] ss:$8 sm:$0x30] %vm860, %v859
  %s867 = scalar_lea.vmem %s1, 407
  %868 = vst.msk [vmem:[%s867] ss:$8 sm:$0xc0] %vm860, %v859
  %s869 = scalar_lea.vmem %s0, 3712
  %v870 = vld [vmem:[%s869] ss:$8 sm:$0xf]
  %s871 = scalar_lea.vmem %s0, 3712
  %v872 = vld [vmem:[%s871] ss:$8 sm:$0xf0]
  %vm873 = vcmask 1047556
  %v874 = vsel %vm873, %v872, %v870
  %vm875 = vcmask 130048
  %s876 = scalar_lea.vmem %s1, 464
  %877 = vst.msk [vmem:[%s876] ss:$8 sm:$0x3] %vm875, %v874
  %s878 = scalar_lea.vmem %s1, 449
  %879 = vst.msk [vmem:[%s878] ss:$8 sm:$0xc] %vm875, %v874
  %s880 = scalar_lea.vmem %s1, 434
  %881 = vst.msk [vmem:[%s880] ss:$8 sm:$0x30] %vm875, %v874
  %s882 = scalar_lea.vmem %s1, 419
  %883 = vst.msk [vmem:[%s882] ss:$8 sm:$0xc0] %vm875, %v874
  %s884 = scalar_lea.vmem %s0, 3776
  %v885 = vld [vmem:[%s884] ss:$8 sm:$0xf]
  %s886 = scalar_lea.vmem %s0, 3776
  %v887 = vld [vmem:[%s886] ss:$8 sm:$0xf0]
  %vm888 = vcmask 1047556
  %v889 = vsel %vm888, %v887, %v885
  %vm890 = vcmask 130048
  %s891 = scalar_lea.vmem %s1, 468
  %892 = vst.msk [vmem:[%s891] ss:$8 sm:$0x3] %vm890, %v889
  %s893 = scalar_lea.vmem %s1, 453
  %894 = vst.msk [vmem:[%s893] ss:$8 sm:$0xc] %vm890, %v889
  %s895 = scalar_lea.vmem %s1, 438
  %896 = vst.msk [vmem:[%s895] ss:$8 sm:$0x30] %vm890, %v889
  %s897 = scalar_lea.vmem %s1, 423
  %898 = vst.msk [vmem:[%s897] ss:$8 sm:$0xc0] %vm890, %v889
  %s899 = scalar_lea.vmem %s0, 3840
  %v900 = vld [vmem:[%s899] ss:$8 sm:$0xf]
  %s901 = scalar_lea.vmem %s0, 3840
  %v902 = vld [vmem:[%s901] ss:$8 sm:$0xf0]
  %vm903 = vcmask 1047556
  %v904 = vsel %vm903, %v902, %v900
  %vm905 = vcmask 130048
  %s906 = scalar_lea.vmem %s1, 480
  %907 = vst.msk [vmem:[%s906] ss:$8 sm:$0x3] %vm905, %v904
  %s908 = scalar_lea.vmem %s1, 465
  %909 = vst.msk [vmem:[%s908] ss:$8 sm:$0xc] %vm905, %v904
  %s910 = scalar_lea.vmem %s1, 450
  %911 = vst.msk [vmem:[%s910] ss:$8 sm:$0x30] %vm905, %v904
  %s912 = scalar_lea.vmem %s1, 435
  %913 = vst.msk [vmem:[%s912] ss:$8 sm:$0xc0] %vm905, %v904
  %s914 = scalar_lea.vmem %s0, 3904
  %v915 = vld [vmem:[%s914] ss:$8 sm:$0xf]
  %s916 = scalar_lea.vmem %s0, 3904
  %v917 = vld [vmem:[%s916] ss:$8 sm:$0xf0]
  %vm918 = vcmask 1047556
  %v919 = vsel %vm918, %v917, %v915
  %vm920 = vcmask 130048
  %s921 = scalar_lea.vmem %s1, 484
  %922 = vst.msk [vmem:[%s921] ss:$8 sm:$0x3] %vm920, %v919
  %s923 = scalar_lea.vmem %s1, 469
  %924 = vst.msk [vmem:[%s923] ss:$8 sm:$0xc] %vm920, %v919
  %s925 = scalar_lea.vmem %s1, 454
  %926 = vst.msk [vmem:[%s925] ss:$8 sm:$0x30] %vm920, %v919
  %s927 = scalar_lea.vmem %s1, 439
  %928 = vst.msk [vmem:[%s927] ss:$8 sm:$0xc0] %vm920, %v919
  %s929 = scalar_lea.vmem %s0, 3968
  %v930 = vld [vmem:[%s929] ss:$8 sm:$0xf]
  %s931 = scalar_lea.vmem %s0, 3968
  %v932 = vld [vmem:[%s931] ss:$8 sm:$0xf0]
  %vm933 = vcmask 1047556
  %v934 = vsel %vm933, %v932, %v930
  %vm935 = vcmask 130048
  %s936 = scalar_lea.vmem %s1, 496
  %937 = vst.msk [vmem:[%s936] ss:$8 sm:$0x3] %vm935, %v934
  %s938 = scalar_lea.vmem %s1, 481
  %939 = vst.msk [vmem:[%s938] ss:$8 sm:$0xc] %vm935, %v934
  %s940 = scalar_lea.vmem %s1, 466
  %941 = vst.msk [vmem:[%s940] ss:$8 sm:$0x30] %vm935, %v934
  %s942 = scalar_lea.vmem %s1, 451
  %943 = vst.msk [vmem:[%s942] ss:$8 sm:$0xc0] %vm935, %v934
  %s944 = scalar_lea.vmem %s0, 4032
  %v945 = vld [vmem:[%s944] ss:$8 sm:$0xf]
  %s946 = scalar_lea.vmem %s0, 4032
  %v947 = vld [vmem:[%s946] ss:$8 sm:$0xf0]
  %vm948 = vcmask 1047556
  %v949 = vsel %vm948, %v947, %v945
  %vm950 = vcmask 130048
  %s951 = scalar_lea.vmem %s1, 500
  %952 = vst.msk [vmem:[%s951] ss:$8 sm:$0x3] %vm950, %v949
  %s953 = scalar_lea.vmem %s1, 485
  %954 = vst.msk [vmem:[%s953] ss:$8 sm:$0xc] %vm950, %v949
  %s955 = scalar_lea.vmem %s1, 470
  %956 = vst.msk [vmem:[%s955] ss:$8 sm:$0x30] %vm950, %v949
  %s957 = scalar_lea.vmem %s1, 455
  %958 = vst.msk [vmem:[%s957] ss:$8 sm:$0xc0] %vm950, %v949
  %s959 = scalar_lea.vmem %s0, 7
  %s960 = smov 3
  %v961 = vld [vmem:[%s959] ss:$16 sm:%s960]
  %s962 = scalar_lea.vmem %s0, 7
  %s963 = smov 12
  %v964 = vld [vmem:[%s962] ss:$16 sm:%s963]
  %vm965 = vcmask 1043458
  %v966 = vsel %vm965, %v964, %v961
  %s967 = scalar_lea.vmem %s0, 7
  %s968 = smov 48
  %v969 = vld [vmem:[%s967] ss:$16 sm:%s968]
  %vm970 = vcmask 1045508
  %v971 = vsel %vm970, %v969, %v966
  %s972 = scalar_lea.vmem %s0, 7
  %s973 = smov 192
  %v974 = vld [vmem:[%s972] ss:$16 sm:%s973]
  %vm975 = vcmask 1047558
  %v976 = vsel %vm975, %v974, %v971
  %977 = vrot.lane.b32.xlu0 %v976, 112
  %v978 = vpop.permute.xlu0 %977
  %vm979 = vcmask 1048448
  %980 = vst.msk [vmem:[%s1] sm:$0xff] %vm979, %v978
  %s981 = scalar_lea.vmem %s0, 263
  %s982 = smov 3
  %v983 = vld [vmem:[%s981] ss:$16 sm:%s982]
  %s984 = scalar_lea.vmem %s0, 263
  %s985 = smov 12
  %v986 = vld [vmem:[%s984] ss:$16 sm:%s985]
  %vm987 = vcmask 1043458
  %v988 = vsel %vm987, %v986, %v983
  %s989 = scalar_lea.vmem %s0, 263
  %s990 = smov 48
  %v991 = vld [vmem:[%s989] ss:$16 sm:%s990]
  %vm992 = vcmask 1045508
  %v993 = vsel %vm992, %v991, %v988
  %s994 = scalar_lea.vmem %s0, 263
  %s995 = smov 192
  %v996 = vld [vmem:[%s994] ss:$16 sm:%s995]
  %vm997 = vcmask 1047558
  %v998 = vsel %vm997, %v996, %v993
  %999 = vrot.lane.b32.xlu0 %v998, 112
  %v1000 = vpop.permute.xlu0 %999
  %vm1001 = vcmask 1048448
  %s1002 = scalar_lea.vmem %s1, 32
  %1003 = vst.msk [vmem:[%s1002] sm:$0xff] %vm1001, %v1000
  %s1004 = scalar_lea.vmem %s0, 519
  %s1005 = smov 3
  %v1006 = vld [vmem:[%s1004] ss:$16 sm:%s1005]
  %s1007 = scalar_lea.vmem %s0, 519
  %s1008 = smov 12
  %v1009 = vld [vmem:[%s1007] ss:$16 sm:%s1008]
  %vm1010 = vcmask 1043458
  %v1011 = vsel %vm1010, %v1009, %v1006
  %s1012 = scalar_lea.vmem %s0, 519
  %s1013 = smov 48
  %v1014 = vld [vmem:[%s1012] ss:$16 sm:%s1013]
  %vm1015 = vcmask 1045508
  %v1016 = vsel %vm1015, %v1014, %v1011
  %s1017 = scalar_lea.vmem %s0, 519
  %s1018 = smov 192
  %v1019 = vld [vmem:[%s1017] ss:$16 sm:%s1018]
  %vm1020 = vcmask 1047558
  %v1021 = vsel %vm1020, %v1019, %v1016
  %1022 = vrot.lane.b32.xlu0 %v1021, 112
  %v1023 = vpop.permute.xlu0 %1022
  %vm1024 = vcmask 1048448
  %s1025 = scalar_lea.vmem %s1, 64
  %1026 = vst.msk [vmem:[%s1025] sm:$0xff] %vm1024, %v1023
  %s1027 = scalar_lea.vmem %s0, 775
  %s1028 = smov 3
  %v1029 = vld [vmem:[%s1027] ss:$16 sm:%s1028]
  %s1030 = scalar_lea.vmem %s0, 775
  %s1031 = smov 12
  %v1032 = vld [vmem:[%s1030] ss:$16 sm:%s1031]
  %vm1033 = vcmask 1043458
  %v1034 = vsel %vm1033, %v1032, %v1029
  %s1035 = scalar_lea.vmem %s0, 775
  %s1036 = smov 48
  %v1037 = vld [vmem:[%s1035] ss:$16 sm:%s1036]
  %vm1038 = vcmask 1045508
  %v1039 = vsel %vm1038, %v1037, %v1034
  %s1040 = scalar_lea.vmem %s0, 775
  %s1041 = smov 192
  %v1042 = vld [vmem:[%s1040] ss:$16 sm:%s1041]
  %vm1043 = vcmask 1047558
  %v1044 = vsel %vm1043, %v1042, %v1039
  %1045 = vrot.lane.b32.xlu0 %v1044, 112
  %v1046 = vpop.permute.xlu0 %1045
  %vm1047 = vcmask 1048448
  %s1048 = scalar_lea.vmem %s1, 96
  %1049 = vst.msk [vmem:[%s1048] sm:$0xff] %vm1047, %v1046
  %s1050 = scalar_lea.vmem %s0, 1031
  %s1051 = smov 3
  %v1052 = vld [vmem:[%s1050] ss:$16 sm:%s1051]
  %s1053 = scalar_lea.vmem %s0, 1031
  %s1054 = smov 12
  %v1055 = vld [vmem:[%s1053] ss:$16 sm:%s1054]
  %vm1056 = vcmask 1043458
  %v1057 = vsel %vm1056, %v1055, %v1052
  %s1058 = scalar_lea.vmem %s0, 1031
  %s1059 = smov 48
  %v1060 = vld [vmem:[%s1058] ss:$16 sm:%s1059]
  %vm1061 = vcmask 1045508
  %v1062 = vsel %vm1061, %v1060, %v1057
  %s1063 = scalar_lea.vmem %s0, 1031
  %s1064 = smov 192
  %v1065 = vld [vmem:[%s1063] ss:$16 sm:%s1064]
  %vm1066 = vcmask 1047558
  %v1067 = vsel %vm1066, %v1065, %v1062
  %1068 = vrot.lane.b32.xlu0 %v1067, 112
  %v1069 = vpop.permute.xlu0 %1068
  %vm1070 = vcmask 1048448
  %s1071 = scalar_lea.vmem %s1, 128
  %1072 = vst.msk [vmem:[%s1071] sm:$0xff] %vm1070, %v1069
  %s1073 = scalar_lea.vmem %s0, 1287
  %s1074 = smov 3
  %v1075 = vld [vmem:[%s1073] ss:$16 sm:%s1074]
  %s1076 = scalar_lea.vmem %s0, 1287
  %s1077 = smov 12
  %v1078 = vld [vmem:[%s1076] ss:$16 sm:%s1077]
  %vm1079 = vcmask 1043458
  %v1080 = vsel %vm1079, %v1078, %v1075
  %s1081 = scalar_lea.vmem %s0, 1287
  %s1082 = smov 48
  %v1083 = vld [vmem:[%s1081] ss:$16 sm:%s1082]
  %vm1084 = vcmask 1045508
  %v1085 = vsel %vm1084, %v1083, %v1080
  %s1086 = scalar_lea.vmem %s0, 1287
  %s1087 = smov 192
  %v1088 = vld [vmem:[%s1086] ss:$16 sm:%s1087]
  %vm1089 = vcmask 1047558
  %v1090 = vsel %vm1089, %v1088, %v1085
  %1091 = vrot.lane.b32.xlu0 %v1090, 112
  %v1092 = vpop.permute.xlu0 %1091
  %vm1093 = vcmask 1048448
  %s1094 = scalar_lea.vmem %s1, 160
  %1095 = vst.msk [vmem:[%s1094] sm:$0xff] %vm1093, %v1092
  %s1096 = scalar_lea.vmem %s0, 1543
  %s1097 = smov 3
  %v1098 = vld [vmem:[%s1096] ss:$16 sm:%s1097]
  %s1099 = scalar_lea.vmem %s0, 1543
  %s1100 = smov 12
  %v1101 = vld [vmem:[%s1099] ss:$16 sm:%s1100]
  %vm1102 = vcmask 1043458
  %v1103 = vsel %vm1102, %v1101, %v1098
  %s1104 = scalar_lea.vmem %s0, 1543
  %s1105 = smov 48
  %v1106 = vld [vmem:[%s1104] ss:$16 sm:%s1105]
  %vm1107 = vcmask 1045508
  %v1108 = vsel %vm1107, %v1106, %v1103
  %s1109 = scalar_lea.vmem %s0, 1543
  %s1110 = smov 192
  %v1111 = vld [vmem:[%s1109] ss:$16 sm:%s1110]
  %vm1112 = vcmask 1047558
  %v1113 = vsel %vm1112, %v1111, %v1108
  %1114 = vrot.lane.b32.xlu0 %v1113, 112
  %v1115 = vpop.permute.xlu0 %1114
  %vm1116 = vcmask 1048448
  %s1117 = scalar_lea.vmem %s1, 192
  %1118 = vst.msk [vmem:[%s1117] sm:$0xff] %vm1116, %v1115
  %s1119 = scalar_lea.vmem %s0, 1799
  %s1120 = smov 3
  %v1121 = vld [vmem:[%s1119] ss:$16 sm:%s1120]
  %s1122 = scalar_lea.vmem %s0, 1799
  %s1123 = smov 12
  %v1124 = vld [vmem:[%s1122] ss:$16 sm:%s1123]
  %vm1125 = vcmask 1043458
  %v1126 = vsel %vm1125, %v1124, %v1121
  %s1127 = scalar_lea.vmem %s0, 1799
  %s1128 = smov 48
  %v1129 = vld [vmem:[%s1127] ss:$16 sm:%s1128]
  %vm1130 = vcmask 1045508
  %v1131 = vsel %vm1130, %v1129, %v1126
  %s1132 = scalar_lea.vmem %s0, 1799
  %s1133 = smov 192
  %v1134 = vld [vmem:[%s1132] ss:$16 sm:%s1133]
  %vm1135 = vcmask 1047558
  %v1136 = vsel %vm1135, %v1134, %v1131
  %1137 = vrot.lane.b32.xlu0 %v1136, 112
  %v1138 = vpop.permute.xlu0 %1137
  %vm1139 = vcmask 1048448
  %s1140 = scalar_lea.vmem %s1, 224
  %1141 = vst.msk [vmem:[%s1140] sm:$0xff] %vm1139, %v1138
  %s1142 = scalar_lea.vmem %s0, 2055
  %s1143 = smov 3
  %v1144 = vld [vmem:[%s1142] ss:$16 sm:%s1143]
  %s1145 = scalar_lea.vmem %s0, 2055
  %s1146 = smov 12
  %v1147 = vld [vmem:[%s1145] ss:$16 sm:%s1146]
  %vm1148 = vcmask 1043458
  %v1149 = vsel %vm1148, %v1147, %v1144
  %s1150 = scalar_lea.vmem %s0, 2055
  %s1151 = smov 48
  %v1152 = vld [vmem:[%s1150] ss:$16 sm:%s1151]
  %vm1153 = vcmask 1045508
  %v1154 = vsel %vm1153, %v1152, %v1149
  %s1155 = scalar_lea.vmem %s0, 2055
  %s1156 = smov 192
  %v1157 = vld [vmem:[%s1155] ss:$16 sm:%s1156]
  %vm1158 = vcmask 1047558
  %v1159 = vsel %vm1158, %v1157, %v1154
  %1160 = vrot.lane.b32.xlu0 %v1159, 112
  %v1161 = vpop.permute.xlu0 %1160
  %vm1162 = vcmask 1048448
  %s1163 = scalar_lea.vmem %s1, 256
  %1164 = vst.msk [vmem:[%s1163] sm:$0xff] %vm1162, %v1161
  %s1165 = scalar_lea.vmem %s0, 2311
  %s1166 = smov 3
  %v1167 = vld [vmem:[%s1165] ss:$16 sm:%s1166]
  %s1168 = scalar_lea.vmem %s0, 2311
  %s1169 = smov 12
  %v1170 = vld [vmem:[%s1168] ss:$16 sm:%s1169]
  %vm1171 = vcmask 1043458
  %v1172 = vsel %vm1171, %v1170, %v1167
  %s1173 = scalar_lea.vmem %s0, 2311
  %s1174 = smov 48
  %v1175 = vld [vmem:[%s1173] ss:$16 sm:%s1174]
  %vm1176 = vcmask 1045508
  %v1177 = vsel %vm1176, %v1175, %v1172
  %s1178 = scalar_lea.vmem %s0, 2311
  %s1179 = smov 192
  %v1180 = vld [vmem:[%s1178] ss:$16 sm:%s1179]
  %vm1181 = vcmask 1047558
  %v1182 = vsel %vm1181, %v1180, %v1177
  %1183 = vrot.lane.b32.xlu0 %v1182, 112
  %v1184 = vpop.permute.xlu0 %1183
  %vm1185 = vcmask 1048448
  %s1186 = scalar_lea.vmem %s1, 288
  %1187 = vst.msk [vmem:[%s1186] sm:$0xff] %vm1185, %v1184
  %s1188 = scalar_lea.vmem %s0, 2567
  %s1189 = smov 3
  %v1190 = vld [vmem:[%s1188] ss:$16 sm:%s1189]
  %s1191 = scalar_lea.vmem %s0, 2567
  %s1192 = smov 12
  %v1193 = vld [vmem:[%s1191] ss:$16 sm:%s1192]
  %vm1194 = vcmask 1043458
  %v1195 = vsel %vm1194, %v1193, %v1190
  %s1196 = scalar_lea.vmem %s0, 2567
  %s1197 = smov 48
  %v1198 = vld [vmem:[%s1196] ss:$16 sm:%s1197]
  %vm1199 = vcmask 1045508
  %v1200 = vsel %vm1199, %v1198, %v1195
  %s1201 = scalar_lea.vmem %s0, 2567
  %s1202 = smov 192
  %v1203 = vld [vmem:[%s1201] ss:$16 sm:%s1202]
  %vm1204 = vcmask 1047558
  %v1205 = vsel %vm1204, %v1203, %v1200
  %1206 = vrot.lane.b32.xlu0 %v1205, 112
  %v1207 = vpop.permute.xlu0 %1206
  %vm1208 = vcmask 1048448
  %s1209 = scalar_lea.vmem %s1, 320
  %1210 = vst.msk [vmem:[%s1209] sm:$0xff] %vm1208, %v1207
  %s1211 = scalar_lea.vmem %s0, 2823
  %s1212 = smov 3
  %v1213 = vld [vmem:[%s1211] ss:$16 sm:%s1212]
  %s1214 = scalar_lea.vmem %s0, 2823
  %s1215 = smov 12
  %v1216 = vld [vmem:[%s1214] ss:$16 sm:%s1215]
  %vm1217 = vcmask 1043458
  %v1218 = vsel %vm1217, %v1216, %v1213
  %s1219 = scalar_lea.vmem %s0, 2823
  %s1220 = smov 48
  %v1221 = vld [vmem:[%s1219] ss:$16 sm:%s1220]
  %vm1222 = vcmask 1045508
  %v1223 = vsel %vm1222, %v1221, %v1218
  %s1224 = scalar_lea.vmem %s0, 2823
  %s1225 = smov 192
  %v1226 = vld [vmem:[%s1224] ss:$16 sm:%s1225]
  %vm1227 = vcmask 1047558
  %v1228 = vsel %vm1227, %v1226, %v1223
  %1229 = vrot.lane.b32.xlu0 %v1228, 112
  %v1230 = vpop.permute.xlu0 %1229
  %vm1231 = vcmask 1048448
  %s1232 = scalar_lea.vmem %s1, 352
  %1233 = vst.msk [vmem:[%s1232] sm:$0xff] %vm1231, %v1230
  %s1234 = scalar_lea.vmem %s0, 3079
  %s1235 = smov 3
  %v1236 = vld [vmem:[%s1234] ss:$16 sm:%s1235]
  %s1237 = scalar_lea.vmem %s0, 3079
  %s1238 = smov 12
  %v1239 = vld [vmem:[%s1237] ss:$16 sm:%s1238]
  %vm1240 = vcmask 1043458
  %v1241 = vsel %vm1240, %v1239, %v1236
  %s1242 = scalar_lea.vmem %s0, 3079
  %s1243 = smov 48
  %v1244 = vld [vmem:[%s1242] ss:$16 sm:%s1243]
  %vm1245 = vcmask 1045508
  %v1246 = vsel %vm1245, %v1244, %v1241
  %s1247 = scalar_lea.vmem %s0, 3079
  %s1248 = smov 192
  %v1249 = vld [vmem:[%s1247] ss:$16 sm:%s1248]
  %vm1250 = vcmask 1047558
  %v1251 = vsel %vm1250, %v1249, %v1246
  %1252 = vrot.lane.b32.xlu0 %v1251, 112
  %v1253 = vpop.permute.xlu0 %1252
  %vm1254 = vcmask 1048448
  %s1255 = scalar_lea.vmem %s1, 384
  %1256 = vst.msk [vmem:[%s1255] sm:$0xff] %vm1254, %v1253
  %s1257 = scalar_lea.vmem %s0, 3335
  %s1258 = smov 3
  %v1259 = vld [vmem:[%s1257] ss:$16 sm:%s1258]
  %s1260 = scalar_lea.vmem %s0, 3335
  %s1261 = smov 12
  %v1262 = vld [vmem:[%s1260] ss:$16 sm:%s1261]
  %vm1263 = vcmask 1043458
  %v1264 = vsel %vm1263, %v1262, %v1259
  %s1265 = scalar_lea.vmem %s0, 3335
  %s1266 = smov 48
  %v1267 = vld [vmem:[%s1265] ss:$16 sm:%s1266]
  %vm1268 = vcmask 1045508
  %v1269 = vsel %vm1268, %v1267, %v1264
  %s1270 = scalar_lea.vmem %s0, 3335
  %s1271 = smov 192
  %v1272 = vld [vmem:[%s1270] ss:$16 sm:%s1271]
  %vm1273 = vcmask 1047558
  %v1274 = vsel %vm1273, %v1272, %v1269
  %1275 = vrot.lane.b32.xlu0 %v1274, 112
  %v1276 = vpop.permute.xlu0 %1275
  %vm1277 = vcmask 1048448
  %s1278 = scalar_lea.vmem %s1, 416
  %1279 = vst.msk [vmem:[%s1278] sm:$0xff] %vm1277, %v1276
  %s1280 = scalar_lea.vmem %s0, 3591
  %s1281 = smov 3
  %v1282 = vld [vmem:[%s1280] ss:$16 sm:%s1281]
  %s1283 = scalar_lea.vmem %s0, 3591
  %s1284 = smov 12
  %v1285 = vld [vmem:[%s1283] ss:$16 sm:%s1284]
  %vm1286 = vcmask 1043458
  %v1287 = vsel %vm1286, %v1285, %v1282
  %s1288 = scalar_lea.vmem %s0, 3591
  %s1289 = smov 48
  %v1290 = vld [vmem:[%s1288] ss:$16 sm:%s1289]
  %vm1291 = vcmask 1045508
  %v1292 = vsel %vm1291, %v1290, %v1287
  %s1293 = scalar_lea.vmem %s0, 3591
  %s1294 = smov 192
  %v1295 = vld [vmem:[%s1293] ss:$16 sm:%s1294]
  %vm1296 = vcmask 1047558
  %v1297 = vsel %vm1296, %v1295, %v1292
  %1298 = vrot.lane.b32.xlu0 %v1297, 112
  %v1299 = vpop.permute.xlu0 %1298
  %vm1300 = vcmask 1048448
  %s1301 = scalar_lea.vmem %s1, 448
  %1302 = vst.msk [vmem:[%s1301] sm:$0xff] %vm1300, %v1299
  %s1303 = scalar_lea.vmem %s0, 3847
  %s1304 = smov 3
  %v1305 = vld [vmem:[%s1303] ss:$16 sm:%s1304]
  %s1306 = scalar_lea.vmem %s0, 3847
  %s1307 = smov 12
  %v1308 = vld [vmem:[%s1306] ss:$16 sm:%s1307]
  %vm1309 = vcmask 1043458
  %v1310 = vsel %vm1309, %v1308, %v1305
  %s1311 = scalar_lea.vmem %s0, 3847
  %s1312 = smov 48
  %v1313 = vld [vmem:[%s1311] ss:$16 sm:%s1312]
  %vm1314 = vcmask 1045508
  %v1315 = vsel %vm1314, %v1313, %v1310
  %s1316 = scalar_lea.vmem %s0, 3847
  %s1317 = smov 192
  %v1318 = vld [vmem:[%s1316] ss:$16 sm:%s1317]
  %vm1319 = vcmask 1047558
  %v1320 = vsel %vm1319, %v1318, %v1315
  %1321 = vrot.lane.b32.xlu0 %v1320, 112
  %v1322 = vpop.permute.xlu0 %1321
  %vm1323 = vcmask 1048448
  %s1324 = scalar_lea.vmem %s1, 480
  %1325 = vst.msk [vmem:[%s1324] sm:$0xff] %vm1323, %v1322
  %s1326 = scalar_lea.vmem %s0, 15
  %s1327 = smov 3
  %v1328 = vld [vmem:[%s1326] ss:$16 sm:%s1327]
  %s1329 = scalar_lea.vmem %s0, 15
  %s1330 = smov 12
  %v1331 = vld [vmem:[%s1329] ss:$16 sm:%s1330]
  %vm1332 = vcmask 1043458
  %v1333 = vsel %vm1332, %v1331, %v1328
  %s1334 = scalar_lea.vmem %s0, 15
  %s1335 = smov 48
  %v1336 = vld [vmem:[%s1334] ss:$16 sm:%s1335]
  %vm1337 = vcmask 1045508
  %v1338 = vsel %vm1337, %v1336, %v1333
  %s1339 = scalar_lea.vmem %s0, 15
  %s1340 = smov 192
  %v1341 = vld [vmem:[%s1339] ss:$16 sm:%s1340]
  %vm1342 = vcmask 1047558
  %v1343 = vsel %vm1342, %v1341, %v1338
  %1344 = vrot.lane.b32.xlu0 %v1343, 112
  %v1345 = vpop.permute.xlu0 %1344
  %vm1346 = vcmask 1048448
  %s1347 = scalar_lea.vmem %s1, 8
  %1348 = vst.msk [vmem:[%s1347] sm:$0xff] %vm1346, %v1345
  %s1349 = scalar_lea.vmem %s0, 271
  %s1350 = smov 3
  %v1351 = vld [vmem:[%s1349] ss:$16 sm:%s1350]
  %s1352 = scalar_lea.vmem %s0, 271
  %s1353 = smov 12
  %v1354 = vld [vmem:[%s1352] ss:$16 sm:%s1353]
  %vm1355 = vcmask 1043458
  %v1356 = vsel %vm1355, %v1354, %v1351
  %s1357 = scalar_lea.vmem %s0, 271
  %s1358 = smov 48
  %v1359 = vld [vmem:[%s1357] ss:$16 sm:%s1358]
  %vm1360 = vcmask 1045508
  %v1361 = vsel %vm1360, %v1359, %v1356
  %s1362 = scalar_lea.vmem %s0, 271
  %s1363 = smov 192
  %v1364 = vld [vmem:[%s1362] ss:$16 sm:%s1363]
  %vm1365 = vcmask 1047558
  %v1366 = vsel %vm1365, %v1364, %v1361
  %1367 = vrot.lane.b32.xlu0 %v1366, 112
  %v1368 = vpop.permute.xlu0 %1367
  %vm1369 = vcmask 1048448
  %s1370 = scalar_lea.vmem %s1, 40
  %1371 = vst.msk [vmem:[%s1370] sm:$0xff] %vm1369, %v1368
  %s1372 = scalar_lea.vmem %s0, 527
  %s1373 = smov 3
  %v1374 = vld [vmem:[%s1372] ss:$16 sm:%s1373]
  %s1375 = scalar_lea.vmem %s0, 527
  %s1376 = smov 12
  %v1377 = vld [vmem:[%s1375] ss:$16 sm:%s1376]
  %vm1378 = vcmask 1043458
  %v1379 = vsel %vm1378, %v1377, %v1374
  %s1380 = scalar_lea.vmem %s0, 527
  %s1381 = smov 48
  %v1382 = vld [vmem:[%s1380] ss:$16 sm:%s1381]
  %vm1383 = vcmask 1045508
  %v1384 = vsel %vm1383, %v1382, %v1379
  %s1385 = scalar_lea.vmem %s0, 527
  %s1386 = smov 192
  %v1387 = vld [vmem:[%s1385] ss:$16 sm:%s1386]
  %vm1388 = vcmask 1047558
  %v1389 = vsel %vm1388, %v1387, %v1384
  %1390 = vrot.lane.b32.xlu0 %v1389, 112
  %v1391 = vpop.permute.xlu0 %1390
  %vm1392 = vcmask 1048448
  %s1393 = scalar_lea.vmem %s1, 72
  %1394 = vst.msk [vmem:[%s1393] sm:$0xff] %vm1392, %v1391
  %s1395 = scalar_lea.vmem %s0, 783
  %s1396 = smov 3
  %v1397 = vld [vmem:[%s1395] ss:$16 sm:%s1396]
  %s1398 = scalar_lea.vmem %s0, 783
  %s1399 = smov 12
  %v1400 = vld [vmem:[%s1398] ss:$16 sm:%s1399]
  %vm1401 = vcmask 1043458
  %v1402 = vsel %vm1401, %v1400, %v1397
  %s1403 = scalar_lea.vmem %s0, 783
  %s1404 = smov 48
  %v1405 = vld [vmem:[%s1403] ss:$16 sm:%s1404]
  %vm1406 = vcmask 1045508
  %v1407 = vsel %vm1406, %v1405, %v1402
  %s1408 = scalar_lea.vmem %s0, 783
  %s1409 = smov 192
  %v1410 = vld [vmem:[%s1408] ss:$16 sm:%s1409]
  %vm1411 = vcmask 1047558
  %v1412 = vsel %vm1411, %v1410, %v1407
  %1413 = vrot.lane.b32.xlu0 %v1412, 112
  %v1414 = vpop.permute.xlu0 %1413
  %vm1415 = vcmask 1048448
  %s1416 = scalar_lea.vmem %s1, 104
  %1417 = vst.msk [vmem:[%s1416] sm:$0xff] %vm1415, %v1414
  %s1418 = scalar_lea.vmem %s0, 1039
  %s1419 = smov 3
  %v1420 = vld [vmem:[%s1418] ss:$16 sm:%s1419]
  %s1421 = scalar_lea.vmem %s0, 1039
  %s1422 = smov 12
  %v1423 = vld [vmem:[%s1421] ss:$16 sm:%s1422]
  %vm1424 = vcmask 1043458
  %v1425 = vsel %vm1424, %v1423, %v1420
  %s1426 = scalar_lea.vmem %s0, 1039
  %s1427 = smov 48
  %v1428 = vld [vmem:[%s1426] ss:$16 sm:%s1427]
  %vm1429 = vcmask 1045508
  %v1430 = vsel %vm1429, %v1428, %v1425
  %s1431 = scalar_lea.vmem %s0, 1039
  %s1432 = smov 192
  %v1433 = vld [vmem:[%s1431] ss:$16 sm:%s1432]
  %vm1434 = vcmask 1047558
  %v1435 = vsel %vm1434, %v1433, %v1430
  %1436 = vrot.lane.b32.xlu0 %v1435, 112
  %v1437 = vpop.permute.xlu0 %1436
  %vm1438 = vcmask 1048448
  %s1439 = scalar_lea.vmem %s1, 136
  %1440 = vst.msk [vmem:[%s1439] sm:$0xff] %vm1438, %v1437
  %s1441 = scalar_lea.vmem %s0, 1295
  %s1442 = smov 3
  %v1443 = vld [vmem:[%s1441] ss:$16 sm:%s1442]
  %s1444 = scalar_lea.vmem %s0, 1295
  %s1445 = smov 12
  %v1446 = vld [vmem:[%s1444] ss:$16 sm:%s1445]
  %vm1447 = vcmask 1043458
  %v1448 = vsel %vm1447, %v1446, %v1443
  %s1449 = scalar_lea.vmem %s0, 1295
  %s1450 = smov 48
  %v1451 = vld [vmem:[%s1449] ss:$16 sm:%s1450]
  %vm1452 = vcmask 1045508
  %v1453 = vsel %vm1452, %v1451, %v1448
  %s1454 = scalar_lea.vmem %s0, 1295
  %s1455 = smov 192
  %v1456 = vld [vmem:[%s1454] ss:$16 sm:%s1455]
  %vm1457 = vcmask 1047558
  %v1458 = vsel %vm1457, %v1456, %v1453
  %1459 = vrot.lane.b32.xlu0 %v1458, 112
  %v1460 = vpop.permute.xlu0 %1459
  %vm1461 = vcmask 1048448
  %s1462 = scalar_lea.vmem %s1, 168
  %1463 = vst.msk [vmem:[%s1462] sm:$0xff] %vm1461, %v1460
  %s1464 = scalar_lea.vmem %s0, 1551
  %s1465 = smov 3
  %v1466 = vld [vmem:[%s1464] ss:$16 sm:%s1465]
  %s1467 = scalar_lea.vmem %s0, 1551
  %s1468 = smov 12
  %v1469 = vld [vmem:[%s1467] ss:$16 sm:%s1468]
  %vm1470 = vcmask 1043458
  %v1471 = vsel %vm1470, %v1469, %v1466
  %s1472 = scalar_lea.vmem %s0, 1551
  %s1473 = smov 48
  %v1474 = vld [vmem:[%s1472] ss:$16 sm:%s1473]
  %vm1475 = vcmask 1045508
  %v1476 = vsel %vm1475, %v1474, %v1471
  %s1477 = scalar_lea.vmem %s0, 1551
  %s1478 = smov 192
  %v1479 = vld [vmem:[%s1477] ss:$16 sm:%s1478]
  %vm1480 = vcmask 1047558
  %v1481 = vsel %vm1480, %v1479, %v1476
  %1482 = vrot.lane.b32.xlu0 %v1481, 112
  %v1483 = vpop.permute.xlu0 %1482
  %vm1484 = vcmask 1048448
  %s1485 = scalar_lea.vmem %s1, 200
  %1486 = vst.msk [vmem:[%s1485] sm:$0xff] %vm1484, %v1483
  %s1487 = scalar_lea.vmem %s0, 1807
  %s1488 = smov 3
  %v1489 = vld [vmem:[%s1487] ss:$16 sm:%s1488]
  %s1490 = scalar_lea.vmem %s0, 1807
  %s1491 = smov 12
  %v1492 = vld [vmem:[%s1490] ss:$16 sm:%s1491]
  %vm1493 = vcmask 1043458
  %v1494 = vsel %vm1493, %v1492, %v1489
  %s1495 = scalar_lea.vmem %s0, 1807
  %s1496 = smov 48
  %v1497 = vld [vmem:[%s1495] ss:$16 sm:%s1496]
  %vm1498 = vcmask 1045508
  %v1499 = vsel %vm1498, %v1497, %v1494
  %s1500 = scalar_lea.vmem %s0, 1807
  %s1501 = smov 192
  %v1502 = vld [vmem:[%s1500] ss:$16 sm:%s1501]
  %vm1503 = vcmask 1047558
  %v1504 = vsel %vm1503, %v1502, %v1499
  %1505 = vrot.lane.b32.xlu0 %v1504, 112
  %v1506 = vpop.permute.xlu0 %1505
  %vm1507 = vcmask 1048448
  %s1508 = scalar_lea.vmem %s1, 232
  %1509 = vst.msk [vmem:[%s1508] sm:$0xff] %vm1507, %v1506
  %s1510 = scalar_lea.vmem %s0, 2063
  %s1511 = smov 3
  %v1512 = vld [vmem:[%s1510] ss:$16 sm:%s1511]
  %s1513 = scalar_lea.vmem %s0, 2063
  %s1514 = smov 12
  %v1515 = vld [vmem:[%s1513] ss:$16 sm:%s1514]
  %vm1516 = vcmask 1043458
  %v1517 = vsel %vm1516, %v1515, %v1512
  %s1518 = scalar_lea.vmem %s0, 2063
  %s1519 = smov 48
  %v1520 = vld [vmem:[%s1518] ss:$16 sm:%s1519]
  %vm1521 = vcmask 1045508
  %v1522 = vsel %vm1521, %v1520, %v1517
  %s1523 = scalar_lea.vmem %s0, 2063
  %s1524 = smov 192
  %v1525 = vld [vmem:[%s1523] ss:$16 sm:%s1524]
  %vm1526 = vcmask 1047558
  %v1527 = vsel %vm1526, %v1525, %v1522
  %1528 = vrot.lane.b32.xlu0 %v1527, 112
  %v1529 = vpop.permute.xlu0 %1528
  %vm1530 = vcmask 1048448
  %s1531 = scalar_lea.vmem %s1, 264
  %1532 = vst.msk [vmem:[%s1531] sm:$0xff] %vm1530, %v1529
  %s1533 = scalar_lea.vmem %s0, 2319
  %s1534 = smov 3
  %v1535 = vld [vmem:[%s1533] ss:$16 sm:%s1534]
  %s1536 = scalar_lea.vmem %s0, 2319
  %s1537 = smov 12
  %v1538 = vld [vmem:[%s1536] ss:$16 sm:%s1537]
  %vm1539 = vcmask 1043458
  %v1540 = vsel %vm1539, %v1538, %v1535
  %s1541 = scalar_lea.vmem %s0, 2319
  %s1542 = smov 48
  %v1543 = vld [vmem:[%s1541] ss:$16 sm:%s1542]
  %vm1544 = vcmask 1045508
  %v1545 = vsel %vm1544, %v1543, %v1540
  %s1546 = scalar_lea.vmem %s0, 2319
  %s1547 = smov 192
  %v1548 = vld [vmem:[%s1546] ss:$16 sm:%s1547]
  %vm1549 = vcmask 1047558
  %v1550 = vsel %vm1549, %v1548, %v1545
  %1551 = vrot.lane.b32.xlu0 %v1550, 112
  %v1552 = vpop.permute.xlu0 %1551
  %vm1553 = vcmask 1048448
  %s1554 = scalar_lea.vmem %s1, 296
  %1555 = vst.msk [vmem:[%s1554] sm:$0xff] %vm1553, %v1552
  %s1556 = scalar_lea.vmem %s0, 2575
  %s1557 = smov 3
  %v1558 = vld [vmem:[%s1556] ss:$16 sm:%s1557]
  %s1559 = scalar_lea.vmem %s0, 2575
  %s1560 = smov 12
  %v1561 = vld [vmem:[%s1559] ss:$16 sm:%s1560]
  %vm1562 = vcmask 1043458
  %v1563 = vsel %vm1562, %v1561, %v1558
  %s1564 = scalar_lea.vmem %s0, 2575
  %s1565 = smov 48
  %v1566 = vld [vmem:[%s1564] ss:$16 sm:%s1565]
  %vm1567 = vcmask 1045508
  %v1568 = vsel %vm1567, %v1566, %v1563
  %s1569 = scalar_lea.vmem %s0, 2575
  %s1570 = smov 192
  %v1571 = vld [vmem:[%s1569] ss:$16 sm:%s1570]
  %vm1572 = vcmask 1047558
  %v1573 = vsel %vm1572, %v1571, %v1568
  %1574 = vrot.lane.b32.xlu0 %v1573, 112
  %v1575 = vpop.permute.xlu0 %1574
  %vm1576 = vcmask 1048448
  %s1577 = scalar_lea.vmem %s1, 328
  %1578 = vst.msk [vmem:[%s1577] sm:$0xff] %vm1576, %v1575
  %s1579 = scalar_lea.vmem %s0, 2831
  %s1580 = smov 3
  %v1581 = vld [vmem:[%s1579] ss:$16 sm:%s1580]
  %s1582 = scalar_lea.vmem %s0, 2831
  %s1583 = smov 12
  %v1584 = vld [vmem:[%s1582] ss:$16 sm:%s1583]
  %vm1585 = vcmask 1043458
  %v1586 = vsel %vm1585, %v1584, %v1581
  %s1587 = scalar_lea.vmem %s0, 2831
  %s1588 = smov 48
  %v1589 = vld [vmem:[%s1587] ss:$16 sm:%s1588]
  %vm1590 = vcmask 1045508
  %v1591 = vsel %vm1590, %v1589, %v1586
  %s1592 = scalar_lea.vmem %s0, 2831
  %s1593 = smov 192
  %v1594 = vld [vmem:[%s1592] ss:$16 sm:%s1593]
  %vm1595 = vcmask 1047558
  %v1596 = vsel %vm1595, %v1594, %v1591
  %1597 = vrot.lane.b32.xlu0 %v1596, 112
  %v1598 = vpop.permute.xlu0 %1597
  %vm1599 = vcmask 1048448
  %s1600 = scalar_lea.vmem %s1, 360
  %1601 = vst.msk [vmem:[%s1600] sm:$0xff] %vm1599, %v1598
  %s1602 = scalar_lea.vmem %s0, 3087
  %s1603 = smov 3
  %v1604 = vld [vmem:[%s1602] ss:$16 sm:%s1603]
  %s1605 = scalar_lea.vmem %s0, 3087
  %s1606 = smov 12
  %v1607 = vld [vmem:[%s1605] ss:$16 sm:%s1606]
  %vm1608 = vcmask 1043458
  %v1609 = vsel %vm1608, %v1607, %v1604
  %s1610 = scalar_lea.vmem %s0, 3087
  %s1611 = smov 48
  %v1612 = vld [vmem:[%s1610] ss:$16 sm:%s1611]
  %vm1613 = vcmask 1045508
  %v1614 = vsel %vm1613, %v1612, %v1609
  %s1615 = scalar_lea.vmem %s0, 3087
  %s1616 = smov 192
  %v1617 = vld [vmem:[%s1615] ss:$16 sm:%s1616]
  %vm1618 = vcmask 1047558
  %v1619 = vsel %vm1618, %v1617, %v1614
  %1620 = vrot.lane.b32.xlu0 %v1619, 112
  %v1621 = vpop.permute.xlu0 %1620
  %vm1622 = vcmask 1048448
  %s1623 = scalar_lea.vmem %s1, 392
  %1624 = vst.msk [vmem:[%s1623] sm:$0xff] %vm1622, %v1621
  %s1625 = scalar_lea.vmem %s0, 3343
  %s1626 = smov 3
  %v1627 = vld [vmem:[%s1625] ss:$16 sm:%s1626]
  %s1628 = scalar_lea.vmem %s0, 3343
  %s1629 = smov 12
  %v1630 = vld [vmem:[%s1628] ss:$16 sm:%s1629]
  %vm1631 = vcmask 1043458
  %v1632 = vsel %vm1631, %v1630, %v1627
  %s1633 = scalar_lea.vmem %s0, 3343
  %s1634 = smov 48
  %v1635 = vld [vmem:[%s1633] ss:$16 sm:%s1634]
  %vm1636 = vcmask 1045508
  %v1637 = vsel %vm1636, %v1635, %v1632
  %s1638 = scalar_lea.vmem %s0, 3343
  %s1639 = smov 192
  %v1640 = vld [vmem:[%s1638] ss:$16 sm:%s1639]
  %vm1641 = vcmask 1047558
  %v1642 = vsel %vm1641, %v1640, %v1637
  %1643 = vrot.lane.b32.xlu0 %v1642, 112
  %v1644 = vpop.permute.xlu0 %1643
  %vm1645 = vcmask 1048448
  %s1646 = scalar_lea.vmem %s1, 424
  %1647 = vst.msk [vmem:[%s1646] sm:$0xff] %vm1645, %v1644
  %s1648 = scalar_lea.vmem %s0, 3599
  %s1649 = smov 3
  %v1650 = vld [vmem:[%s1648] ss:$16 sm:%s1649]
  %s1651 = scalar_lea.vmem %s0, 3599
  %s1652 = smov 12
  %v1653 = vld [vmem:[%s1651] ss:$16 sm:%s1652]
  %vm1654 = vcmask 1043458
  %v1655 = vsel %vm1654, %v1653, %v1650
  %s1656 = scalar_lea.vmem %s0, 3599
  %s1657 = smov 48
  %v1658 = vld [vmem:[%s1656] ss:$16 sm:%s1657]
  %vm1659 = vcmask 1045508
  %v1660 = vsel %vm1659, %v1658, %v1655
  %s1661 = scalar_lea.vmem %s0, 3599
  %s1662 = smov 192
  %v1663 = vld [vmem:[%s1661] ss:$16 sm:%s1662]
  %vm1664 = vcmask 1047558
  %v1665 = vsel %vm1664, %v1663, %v1660
  %1666 = vrot.lane.b32.xlu0 %v1665, 112
  %v1667 = vpop.permute.xlu0 %1666
  %vm1668 = vcmask 1048448
  %s1669 = scalar_lea.vmem %s1, 456
  %1670 = vst.msk [vmem:[%s1669] sm:$0xff] %vm1668, %v1667
  %s1671 = scalar_lea.vmem %s0, 3855
  %s1672 = smov 3
  %v1673 = vld [vmem:[%s1671] ss:$16 sm:%s1672]
  %s1674 = scalar_lea.vmem %s0, 3855
  %s1675 = smov 12
  %v1676 = vld [vmem:[%s1674] ss:$16 sm:%s1675]
  %vm1677 = vcmask 1043458
  %v1678 = vsel %vm1677, %v1676, %v1673
  %s1679 = scalar_lea.vmem %s0, 3855
  %s1680 = smov 48
  %v1681 = vld [vmem:[%s1679] ss:$16 sm:%s1680]
  %vm1682 = vcmask 1045508
  %v1683 = vsel %vm1682, %v1681, %v1678
  %s1684 = scalar_lea.vmem %s0, 3855
  %s1685 = smov 192
  %v1686 = vld [vmem:[%s1684] ss:$16 sm:%s1685]
  %vm1687 = vcmask 1047558
  %v1688 = vsel %vm1687, %v1686, %v1683
  %1689 = vrot.lane.b32.xlu0 %v1688, 112
  %v1690 = vpop.permute.xlu0 %1689
  %vm1691 = vcmask 1048448
  %s1692 = scalar_lea.vmem %s1, 488
  %1693 = vst.msk [vmem:[%s1692] sm:$0xff] %vm1691, %v1690
  %s1694 = scalar_lea.vmem %s0, 135
  %s1695 = smov 3
  %v1696 = vld [vmem:[%s1694] ss:$16 sm:%s1695]
  %s1697 = scalar_lea.vmem %s0, 135
  %s1698 = smov 12
  %v1699 = vld [vmem:[%s1697] ss:$16 sm:%s1698]
  %vm1700 = vcmask 1043458
  %v1701 = vsel %vm1700, %v1699, %v1696
  %s1702 = scalar_lea.vmem %s0, 135
  %s1703 = smov 48
  %v1704 = vld [vmem:[%s1702] ss:$16 sm:%s1703]
  %vm1705 = vcmask 1045508
  %v1706 = vsel %vm1705, %v1704, %v1701
  %s1707 = scalar_lea.vmem %s0, 135
  %s1708 = smov 192
  %v1709 = vld [vmem:[%s1707] ss:$16 sm:%s1708]
  %vm1710 = vcmask 1047558
  %v1711 = vsel %vm1710, %v1709, %v1706
  %1712 = vrot.lane.b32.xlu0 %v1711, 112
  %v1713 = vpop.permute.xlu0 %1712
  %vm1714 = vcmask 1048448
  %s1715 = scalar_lea.vmem %s1, 16
  %1716 = vst.msk [vmem:[%s1715] sm:$0xff] %vm1714, %v1713
  %s1717 = scalar_lea.vmem %s0, 391
  %s1718 = smov 3
  %v1719 = vld [vmem:[%s1717] ss:$16 sm:%s1718]
  %s1720 = scalar_lea.vmem %s0, 391
  %s1721 = smov 12
  %v1722 = vld [vmem:[%s1720] ss:$16 sm:%s1721]
  %vm1723 = vcmask 1043458
  %v1724 = vsel %vm1723, %v1722, %v1719
  %s1725 = scalar_lea.vmem %s0, 391
  %s1726 = smov 48
  %v1727 = vld [vmem:[%s1725] ss:$16 sm:%s1726]
  %vm1728 = vcmask 1045508
  %v1729 = vsel %vm1728, %v1727, %v1724
  %s1730 = scalar_lea.vmem %s0, 391
  %s1731 = smov 192
  %v1732 = vld [vmem:[%s1730] ss:$16 sm:%s1731]
  %vm1733 = vcmask 1047558
  %v1734 = vsel %vm1733, %v1732, %v1729
  %1735 = vrot.lane.b32.xlu0 %v1734, 112
  %v1736 = vpop.permute.xlu0 %1735
  %vm1737 = vcmask 1048448
  %s1738 = scalar_lea.vmem %s1, 48
  %1739 = vst.msk [vmem:[%s1738] sm:$0xff] %vm1737, %v1736
  %s1740 = scalar_lea.vmem %s0, 647
  %s1741 = smov 3
  %v1742 = vld [vmem:[%s1740] ss:$16 sm:%s1741]
  %s1743 = scalar_lea.vmem %s0, 647
  %s1744 = smov 12
  %v1745 = vld [vmem:[%s1743] ss:$16 sm:%s1744]
  %vm1746 = vcmask 1043458
  %v1747 = vsel %vm1746, %v1745, %v1742
  %s1748 = scalar_lea.vmem %s0, 647
  %s1749 = smov 48
  %v1750 = vld [vmem:[%s1748] ss:$16 sm:%s1749]
  %vm1751 = vcmask 1045508
  %v1752 = vsel %vm1751, %v1750, %v1747
  %s1753 = scalar_lea.vmem %s0, 647
  %s1754 = smov 192
  %v1755 = vld [vmem:[%s1753] ss:$16 sm:%s1754]
  %vm1756 = vcmask 1047558
  %v1757 = vsel %vm1756, %v1755, %v1752
  %1758 = vrot.lane.b32.xlu0 %v1757, 112
  %v1759 = vpop.permute.xlu0 %1758
  %vm1760 = vcmask 1048448
  %s1761 = scalar_lea.vmem %s1, 80
  %1762 = vst.msk [vmem:[%s1761] sm:$0xff] %vm1760, %v1759
  %s1763 = scalar_lea.vmem %s0, 903
  %s1764 = smov 3
  %v1765 = vld [vmem:[%s1763] ss:$16 sm:%s1764]
  %s1766 = scalar_lea.vmem %s0, 903
  %s1767 = smov 12
  %v1768 = vld [vmem:[%s1766] ss:$16 sm:%s1767]
  %vm1769 = vcmask 1043458
  %v1770 = vsel %vm1769, %v1768, %v1765
  %s1771 = scalar_lea.vmem %s0, 903
  %s1772 = smov 48
  %v1773 = vld [vmem:[%s1771] ss:$16 sm:%s1772]
  %vm1774 = vcmask 1045508
  %v1775 = vsel %vm1774, %v1773, %v1770
  %s1776 = scalar_lea.vmem %s0, 903
  %s1777 = smov 192
  %v1778 = vld [vmem:[%s1776] ss:$16 sm:%s1777]
  %vm1779 = vcmask 1047558
  %v1780 = vsel %vm1779, %v1778, %v1775
  %1781 = vrot.lane.b32.xlu0 %v1780, 112
  %v1782 = vpop.permute.xlu0 %1781
  %vm1783 = vcmask 1048448
  %s1784 = scalar_lea.vmem %s1, 112
  %1785 = vst.msk [vmem:[%s1784] sm:$0xff] %vm1783, %v1782
  %s1786 = scalar_lea.vmem %s0, 1159
  %s1787 = smov 3
  %v1788 = vld [vmem:[%s1786] ss:$16 sm:%s1787]
  %s1789 = scalar_lea.vmem %s0, 1159
  %s1790 = smov 12
  %v1791 = vld [vmem:[%s1789] ss:$16 sm:%s1790]
  %vm1792 = vcmask 1043458
  %v1793 = vsel %vm1792, %v1791, %v1788
  %s1794 = scalar_lea.vmem %s0, 1159
  %s1795 = smov 48
  %v1796 = vld [vmem:[%s1794] ss:$16 sm:%s1795]
  %vm1797 = vcmask 1045508
  %v1798 = vsel %vm1797, %v1796, %v1793
  %s1799 = scalar_lea.vmem %s0, 1159
  %s1800 = smov 192
  %v1801 = vld [vmem:[%s1799] ss:$16 sm:%s1800]
  %vm1802 = vcmask 1047558
  %v1803 = vsel %vm1802, %v1801, %v1798
  %1804 = vrot.lane.b32.xlu0 %v1803, 112
  %v1805 = vpop.permute.xlu0 %1804
  %vm1806 = vcmask 1048448
  %s1807 = scalar_lea.vmem %s1, 144
  %1808 = vst.msk [vmem:[%s1807] sm:$0xff] %vm1806, %v1805
  %s1809 = scalar_lea.vmem %s0, 1415
  %s1810 = smov 3
  %v1811 = vld [vmem:[%s1809] ss:$16 sm:%s1810]
  %s1812 = scalar_lea.vmem %s0, 1415
  %s1813 = smov 12
  %v1814 = vld [vmem:[%s1812] ss:$16 sm:%s1813]
  %vm1815 = vcmask 1043458
  %v1816 = vsel %vm1815, %v1814, %v1811
  %s1817 = scalar_lea.vmem %s0, 1415
  %s1818 = smov 48
  %v1819 = vld [vmem:[%s1817] ss:$16 sm:%s1818]
  %vm1820 = vcmask 1045508
  %v1821 = vsel %vm1820, %v1819, %v1816
  %s1822 = scalar_lea.vmem %s0, 1415
  %s1823 = smov 192
  %v1824 = vld [vmem:[%s1822] ss:$16 sm:%s1823]
  %vm1825 = vcmask 1047558
  %v1826 = vsel %vm1825, %v1824, %v1821
  %1827 = vrot.lane.b32.xlu0 %v1826, 112
  %v1828 = vpop.permute.xlu0 %1827
  %vm1829 = vcmask 1048448
  %s1830 = scalar_lea.vmem %s1, 176
  %1831 = vst.msk [vmem:[%s1830] sm:$0xff] %vm1829, %v1828
  %s1832 = scalar_lea.vmem %s0, 1671
  %s1833 = smov 3
  %v1834 = vld [vmem:[%s1832] ss:$16 sm:%s1833]
  %s1835 = scalar_lea.vmem %s0, 1671
  %s1836 = smov 12
  %v1837 = vld [vmem:[%s1835] ss:$16 sm:%s1836]
  %vm1838 = vcmask 1043458
  %v1839 = vsel %vm1838, %v1837, %v1834
  %s1840 = scalar_lea.vmem %s0, 1671
  %s1841 = smov 48
  %v1842 = vld [vmem:[%s1840] ss:$16 sm:%s1841]
  %vm1843 = vcmask 1045508
  %v1844 = vsel %vm1843, %v1842, %v1839
  %s1845 = scalar_lea.vmem %s0, 1671
  %s1846 = smov 192
  %v1847 = vld [vmem:[%s1845] ss:$16 sm:%s1846]
  %vm1848 = vcmask 1047558
  %v1849 = vsel %vm1848, %v1847, %v1844
  %1850 = vrot.lane.b32.xlu0 %v1849, 112
  %v1851 = vpop.permute.xlu0 %1850
  %vm1852 = vcmask 1048448
  %s1853 = scalar_lea.vmem %s1, 208
  %1854 = vst.msk [vmem:[%s1853] sm:$0xff] %vm1852, %v1851
  %s1855 = scalar_lea.vmem %s0, 1927
  %s1856 = smov 3
  %v1857 = vld [vmem:[%s1855] ss:$16 sm:%s1856]
  %s1858 = scalar_lea.vmem %s0, 1927
  %s1859 = smov 12
  %v1860 = vld [vmem:[%s1858] ss:$16 sm:%s1859]
  %vm1861 = vcmask 1043458
  %v1862 = vsel %vm1861, %v1860, %v1857
  %s1863 = scalar_lea.vmem %s0, 1927
  %s1864 = smov 48
  %v1865 = vld [vmem:[%s1863] ss:$16 sm:%s1864]
  %vm1866 = vcmask 1045508
  %v1867 = vsel %vm1866, %v1865, %v1862
  %s1868 = scalar_lea.vmem %s0, 1927
  %s1869 = smov 192
  %v1870 = vld [vmem:[%s1868] ss:$16 sm:%s1869]
  %vm1871 = vcmask 1047558
  %v1872 = vsel %vm1871, %v1870, %v1867
  %1873 = vrot.lane.b32.xlu0 %v1872, 112
  %v1874 = vpop.permute.xlu0 %1873
  %vm1875 = vcmask 1048448
  %s1876 = scalar_lea.vmem %s1, 240
  %1877 = vst.msk [vmem:[%s1876] sm:$0xff] %vm1875, %v1874
  %s1878 = scalar_lea.vmem %s0, 2183
  %s1879 = smov 3
  %v1880 = vld [vmem:[%s1878] ss:$16 sm:%s1879]
  %s1881 = scalar_lea.vmem %s0, 2183
  %s1882 = smov 12
  %v1883 = vld [vmem:[%s1881] ss:$16 sm:%s1882]
  %vm1884 = vcmask 1043458
  %v1885 = vsel %vm1884, %v1883, %v1880
  %s1886 = scalar_lea.vmem %s0, 2183
  %s1887 = smov 48
  %v1888 = vld [vmem:[%s1886] ss:$16 sm:%s1887]
  %vm1889 = vcmask 1045508
  %v1890 = vsel %vm1889, %v1888, %v1885
  %s1891 = scalar_lea.vmem %s0, 2183
  %s1892 = smov 192
  %v1893 = vld [vmem:[%s1891] ss:$16 sm:%s1892]
  %vm1894 = vcmask 1047558
  %v1895 = vsel %vm1894, %v1893, %v1890
  %1896 = vrot.lane.b32.xlu0 %v1895, 112
  %v1897 = vpop.permute.xlu0 %1896
  %vm1898 = vcmask 1048448
  %s1899 = scalar_lea.vmem %s1, 272
  %1900 = vst.msk [vmem:[%s1899] sm:$0xff] %vm1898, %v1897
  %s1901 = scalar_lea.vmem %s0, 2439
  %s1902 = smov 3
  %v1903 = vld [vmem:[%s1901] ss:$16 sm:%s1902]
  %s1904 = scalar_lea.vmem %s0, 2439
  %s1905 = smov 12
  %v1906 = vld [vmem:[%s1904] ss:$16 sm:%s1905]
  %vm1907 = vcmask 1043458
  %v1908 = vsel %vm1907, %v1906, %v1903
  %s1909 = scalar_lea.vmem %s0, 2439
  %s1910 = smov 48
  %v1911 = vld [vmem:[%s1909] ss:$16 sm:%s1910]
  %vm1912 = vcmask 1045508
  %v1913 = vsel %vm1912, %v1911, %v1908
  %s1914 = scalar_lea.vmem %s0, 2439
  %s1915 = smov 192
  %v1916 = vld [vmem:[%s1914] ss:$16 sm:%s1915]
  %vm1917 = vcmask 1047558
  %v1918 = vsel %vm1917, %v1916, %v1913
  %1919 = vrot.lane.b32.xlu0 %v1918, 112
  %v1920 = vpop.permute.xlu0 %1919
  %vm1921 = vcmask 1048448
  %s1922 = scalar_lea.vmem %s1, 304
  %1923 = vst.msk [vmem:[%s1922] sm:$0xff] %vm1921, %v1920
  %s1924 = scalar_lea.vmem %s0, 2695
  %s1925 = smov 3
  %v1926 = vld [vmem:[%s1924] ss:$16 sm:%s1925]
  %s1927 = scalar_lea.vmem %s0, 2695
  %s1928 = smov 12
  %v1929 = vld [vmem:[%s1927] ss:$16 sm:%s1928]
  %vm1930 = vcmask 1043458
  %v1931 = vsel %vm1930, %v1929, %v1926
  %s1932 = scalar_lea.vmem %s0, 2695
  %s1933 = smov 48
  %v1934 = vld [vmem:[%s1932] ss:$16 sm:%s1933]
  %vm1935 = vcmask 1045508
  %v1936 = vsel %vm1935, %v1934, %v1931
  %s1937 = scalar_lea.vmem %s0, 2695
  %s1938 = smov 192
  %v1939 = vld [vmem:[%s1937] ss:$16 sm:%s1938]
  %vm1940 = vcmask 1047558
  %v1941 = vsel %vm1940, %v1939, %v1936
  %1942 = vrot.lane.b32.xlu0 %v1941, 112
  %v1943 = vpop.permute.xlu0 %1942
  %vm1944 = vcmask 1048448
  %s1945 = scalar_lea.vmem %s1, 336
  %1946 = vst.msk [vmem:[%s1945] sm:$0xff] %vm1944, %v1943
  %s1947 = scalar_lea.vmem %s0, 2951
  %s1948 = smov 3
  %v1949 = vld [vmem:[%s1947] ss:$16 sm:%s1948]
  %s1950 = scalar_lea.vmem %s0, 2951
  %s1951 = smov 12
  %v1952 = vld [vmem:[%s1950] ss:$16 sm:%s1951]
  %vm1953 = vcmask 1043458
  %v1954 = vsel %vm1953, %v1952, %v1949
  %s1955 = scalar_lea.vmem %s0, 2951
  %s1956 = smov 48
  %v1957 = vld [vmem:[%s1955] ss:$16 sm:%s1956]
  %vm1958 = vcmask 1045508
  %v1959 = vsel %vm1958, %v1957, %v1954
  %s1960 = scalar_lea.vmem %s0, 2951
  %s1961 = smov 192
  %v1962 = vld [vmem:[%s1960] ss:$16 sm:%s1961]
  %vm1963 = vcmask 1047558
  %v1964 = vsel %vm1963, %v1962, %v1959
  %1965 = vrot.lane.b32.xlu0 %v1964, 112
  %v1966 = vpop.permute.xlu0 %1965
  %vm1967 = vcmask 1048448
  %s1968 = scalar_lea.vmem %s1, 368
  %1969 = vst.msk [vmem:[%s1968] sm:$0xff] %vm1967, %v1966
  %s1970 = scalar_lea.vmem %s0, 3207
  %s1971 = smov 3
  %v1972 = vld [vmem:[%s1970] ss:$16 sm:%s1971]
  %s1973 = scalar_lea.vmem %s0, 3207
  %s1974 = smov 12
  %v1975 = vld [vmem:[%s1973] ss:$16 sm:%s1974]
  %vm1976 = vcmask 1043458
  %v1977 = vsel %vm1976, %v1975, %v1972
  %s1978 = scalar_lea.vmem %s0, 3207
  %s1979 = smov 48
  %v1980 = vld [vmem:[%s1978] ss:$16 sm:%s1979]
  %vm1981 = vcmask 1045508
  %v1982 = vsel %vm1981, %v1980, %v1977
  %s1983 = scalar_lea.vmem %s0, 3207
  %s1984 = smov 192
  %v1985 = vld [vmem:[%s1983] ss:$16 sm:%s1984]
  %vm1986 = vcmask 1047558
  %v1987 = vsel %vm1986, %v1985, %v1982
  %1988 = vrot.lane.b32.xlu0 %v1987, 112
  %v1989 = vpop.permute.xlu0 %1988
  %vm1990 = vcmask 1048448
  %s1991 = scalar_lea.vmem %s1, 400
  %1992 = vst.msk [vmem:[%s1991] sm:$0xff] %vm1990, %v1989
  %s1993 = scalar_lea.vmem %s0, 3463
  %s1994 = smov 3
  %v1995 = vld [vmem:[%s1993] ss:$16 sm:%s1994]
  %s1996 = scalar_lea.vmem %s0, 3463
  %s1997 = smov 12
  %v1998 = vld [vmem:[%s1996] ss:$16 sm:%s1997]
  %vm1999 = vcmask 1043458
  %v2000 = vsel %vm1999, %v1998, %v1995
  %s2001 = scalar_lea.vmem %s0, 3463
  %s2002 = smov 48
  %v2003 = vld [vmem:[%s2001] ss:$16 sm:%s2002]
  %vm2004 = vcmask 1045508
  %v2005 = vsel %vm2004, %v2003, %v2000
  %s2006 = scalar_lea.vmem %s0, 3463
  %s2007 = smov 192
  %v2008 = vld [vmem:[%s2006] ss:$16 sm:%s2007]
  %vm2009 = vcmask 1047558
  %v2010 = vsel %vm2009, %v2008, %v2005
  %2011 = vrot.lane.b32.xlu0 %v2010, 112
  %v2012 = vpop.permute.xlu0 %2011
  %vm2013 = vcmask 1048448
  %s2014 = scalar_lea.vmem %s1, 432
  %2015 = vst.msk [vmem:[%s2014] sm:$0xff] %vm2013, %v2012
  %s2016 = scalar_lea.vmem %s0, 3719
  %s2017 = smov 3
  %v2018 = vld [vmem:[%s2016] ss:$16 sm:%s2017]
  %s2019 = scalar_lea.vmem %s0, 3719
  %s2020 = smov 12
  %v2021 = vld [vmem:[%s2019] ss:$16 sm:%s2020]
  %vm2022 = vcmask 1043458
  %v2023 = vsel %vm2022, %v2021, %v2018
  %s2024 = scalar_lea.vmem %s0, 3719
  %s2025 = smov 48
  %v2026 = vld [vmem:[%s2024] ss:$16 sm:%s2025]
  %vm2027 = vcmask 1045508
  %v2028 = vsel %vm2027, %v2026, %v2023
  %s2029 = scalar_lea.vmem %s0, 3719
  %s2030 = smov 192
  %v2031 = vld [vmem:[%s2029] ss:$16 sm:%s2030]
  %vm2032 = vcmask 1047558
  %v2033 = vsel %vm2032, %v2031, %v2028
  %2034 = vrot.lane.b32.xlu0 %v2033, 112
  %v2035 = vpop.permute.xlu0 %2034
  %vm2036 = vcmask 1048448
  %s2037 = scalar_lea.vmem %s1, 464
  %2038 = vst.msk [vmem:[%s2037] sm:$0xff] %vm2036, %v2035
  %s2039 = scalar_lea.vmem %s0, 3975
  %s2040 = smov 3
  %v2041 = vld [vmem:[%s2039] ss:$16 sm:%s2040]
  %s2042 = scalar_lea.vmem %s0, 3975
  %s2043 = smov 12
  %v2044 = vld [vmem:[%s2042] ss:$16 sm:%s2043]
  %vm2045 = vcmask 1043458
  %v2046 = vsel %vm2045, %v2044, %v2041
  %s2047 = scalar_lea.vmem %s0, 3975
  %s2048 = smov 48
  %v2049 = vld [vmem:[%s2047] ss:$16 sm:%s2048]
  %vm2050 = vcmask 1045508
  %v2051 = vsel %vm2050, %v2049, %v2046
  %s2052 = scalar_lea.vmem %s0, 3975
  %s2053 = smov 192
  %v2054 = vld [vmem:[%s2052] ss:$16 sm:%s2053]
  %vm2055 = vcmask 1047558
  %v2056 = vsel %vm2055, %v2054, %v2051
  %2057 = vrot.lane.b32.xlu0 %v2056, 112
  %v2058 = vpop.permute.xlu0 %2057
  %vm2059 = vcmask 1048448
  %s2060 = scalar_lea.vmem %s1, 496
  %2061 = vst.msk [vmem:[%s2060] sm:$0xff] %vm2059, %v2058
  %s2062 = scalar_lea.vmem %s0, 143
  %s2063 = smov 3
  %v2064 = vld [vmem:[%s2062] ss:$16 sm:%s2063]
  %s2065 = scalar_lea.vmem %s0, 143
  %s2066 = smov 12
  %v2067 = vld [vmem:[%s2065] ss:$16 sm:%s2066]
  %vm2068 = vcmask 1043458
  %v2069 = vsel %vm2068, %v2067, %v2064
  %s2070 = scalar_lea.vmem %s0, 143
  %s2071 = smov 48
  %v2072 = vld [vmem:[%s2070] ss:$16 sm:%s2071]
  %vm2073 = vcmask 1045508
  %v2074 = vsel %vm2073, %v2072, %v2069
  %s2075 = scalar_lea.vmem %s0, 143
  %s2076 = smov 192
  %v2077 = vld [vmem:[%s2075] ss:$16 sm:%s2076]
  %vm2078 = vcmask 1047558
  %v2079 = vsel %vm2078, %v2077, %v2074
  %2080 = vrot.lane.b32.xlu0 %v2079, 112
  %v2081 = vpop.permute.xlu0 %2080
  %vm2082 = vcmask 1048448
  %s2083 = scalar_lea.vmem %s1, 24
  %2084 = vst.msk [vmem:[%s2083] sm:$0xff] %vm2082, %v2081
  %s2085 = scalar_lea.vmem %s0, 399
  %s2086 = smov 3
  %v2087 = vld [vmem:[%s2085] ss:$16 sm:%s2086]
  %s2088 = scalar_lea.vmem %s0, 399
  %s2089 = smov 12
  %v2090 = vld [vmem:[%s2088] ss:$16 sm:%s2089]
  %vm2091 = vcmask 1043458
  %v2092 = vsel %vm2091, %v2090, %v2087
  %s2093 = scalar_lea.vmem %s0, 399
  %s2094 = smov 48
  %v2095 = vld [vmem:[%s2093] ss:$16 sm:%s2094]
  %vm2096 = vcmask 1045508
  %v2097 = vsel %vm2096, %v2095, %v2092
  %s2098 = scalar_lea.vmem %s0, 399
  %s2099 = smov 192
  %v2100 = vld [vmem:[%s2098] ss:$16 sm:%s2099]
  %vm2101 = vcmask 1047558
  %v2102 = vsel %vm2101, %v2100, %v2097
  %2103 = vrot.lane.b32.xlu0 %v2102, 112
  %v2104 = vpop.permute.xlu0 %2103
  %vm2105 = vcmask 1048448
  %s2106 = scalar_lea.vmem %s1, 56
  %2107 = vst.msk [vmem:[%s2106] sm:$0xff] %vm2105, %v2104
  %s2108 = scalar_lea.vmem %s0, 655
  %s2109 = smov 3
  %v2110 = vld [vmem:[%s2108] ss:$16 sm:%s2109]
  %s2111 = scalar_lea.vmem %s0, 655
  %s2112 = smov 12
  %v2113 = vld [vmem:[%s2111] ss:$16 sm:%s2112]
  %vm2114 = vcmask 1043458
  %v2115 = vsel %vm2114, %v2113, %v2110
  %s2116 = scalar_lea.vmem %s0, 655
  %s2117 = smov 48
  %v2118 = vld [vmem:[%s2116] ss:$16 sm:%s2117]
  %vm2119 = vcmask 1045508
  %v2120 = vsel %vm2119, %v2118, %v2115
  %s2121 = scalar_lea.vmem %s0, 655
  %s2122 = smov 192
  %v2123 = vld [vmem:[%s2121] ss:$16 sm:%s2122]
  %vm2124 = vcmask 1047558
  %v2125 = vsel %vm2124, %v2123, %v2120
  %2126 = vrot.lane.b32.xlu0 %v2125, 112
  %v2127 = vpop.permute.xlu0 %2126
  %vm2128 = vcmask 1048448
  %s2129 = scalar_lea.vmem %s1, 88
  %2130 = vst.msk [vmem:[%s2129] sm:$0xff] %vm2128, %v2127
  %s2131 = scalar_lea.vmem %s0, 911
  %s2132 = smov 3
  %v2133 = vld [vmem:[%s2131] ss:$16 sm:%s2132]
  %s2134 = scalar_lea.vmem %s0, 911
  %s2135 = smov 12
  %v2136 = vld [vmem:[%s2134] ss:$16 sm:%s2135]
  %vm2137 = vcmask 1043458
  %v2138 = vsel %vm2137, %v2136, %v2133
  %s2139 = scalar_lea.vmem %s0, 911
  %s2140 = smov 48
  %v2141 = vld [vmem:[%s2139] ss:$16 sm:%s2140]
  %vm2142 = vcmask 1045508
  %v2143 = vsel %vm2142, %v2141, %v2138
  %s2144 = scalar_lea.vmem %s0, 911
  %s2145 = smov 192
  %v2146 = vld [vmem:[%s2144] ss:$16 sm:%s2145]
  %vm2147 = vcmask 1047558
  %v2148 = vsel %vm2147, %v2146, %v2143
  %2149 = vrot.lane.b32.xlu0 %v2148, 112
  %v2150 = vpop.permute.xlu0 %2149
  %vm2151 = vcmask 1048448
  %s2152 = scalar_lea.vmem %s1, 120
  %2153 = vst.msk [vmem:[%s2152] sm:$0xff] %vm2151, %v2150
  %s2154 = scalar_lea.vmem %s0, 1167
  %s2155 = smov 3
  %v2156 = vld [vmem:[%s2154] ss:$16 sm:%s2155]
  %s2157 = scalar_lea.vmem %s0, 1167
  %s2158 = smov 12
  %v2159 = vld [vmem:[%s2157] ss:$16 sm:%s2158]
  %vm2160 = vcmask 1043458
  %v2161 = vsel %vm2160, %v2159, %v2156
  %s2162 = scalar_lea.vmem %s0, 1167
  %s2163 = smov 48
  %v2164 = vld [vmem:[%s2162] ss:$16 sm:%s2163]
  %vm2165 = vcmask 1045508
  %v2166 = vsel %vm2165, %v2164, %v2161
  %s2167 = scalar_lea.vmem %s0, 1167
  %s2168 = smov 192
  %v2169 = vld [vmem:[%s2167] ss:$16 sm:%s2168]
  %vm2170 = vcmask 1047558
  %v2171 = vsel %vm2170, %v2169, %v2166
  %2172 = vrot.lane.b32.xlu0 %v2171, 112
  %v2173 = vpop.permute.xlu0 %2172
  %vm2174 = vcmask 1048448
  %s2175 = scalar_lea.vmem %s1, 152
  %2176 = vst.msk [vmem:[%s2175] sm:$0xff] %vm2174, %v2173
  %s2177 = scalar_lea.vmem %s0, 1423
  %s2178 = smov 3
  %v2179 = vld [vmem:[%s2177] ss:$16 sm:%s2178]
  %s2180 = scalar_lea.vmem %s0, 1423
  %s2181 = smov 12
  %v2182 = vld [vmem:[%s2180] ss:$16 sm:%s2181]
  %vm2183 = vcmask 1043458
  %v2184 = vsel %vm2183, %v2182, %v2179
  %s2185 = scalar_lea.vmem %s0, 1423
  %s2186 = smov 48
  %v2187 = vld [vmem:[%s2185] ss:$16 sm:%s2186]
  %vm2188 = vcmask 1045508
  %v2189 = vsel %vm2188, %v2187, %v2184
  %s2190 = scalar_lea.vmem %s0, 1423
  %s2191 = smov 192
  %v2192 = vld [vmem:[%s2190] ss:$16 sm:%s2191]
  %vm2193 = vcmask 1047558
  %v2194 = vsel %vm2193, %v2192, %v2189
  %2195 = vrot.lane.b32.xlu0 %v2194, 112
  %v2196 = vpop.permute.xlu0 %2195
  %vm2197 = vcmask 1048448
  %s2198 = scalar_lea.vmem %s1, 184
  %2199 = vst.msk [vmem:[%s2198] sm:$0xff] %vm2197, %v2196
  %s2200 = scalar_lea.vmem %s0, 1679
  %s2201 = smov 3
  %v2202 = vld [vmem:[%s2200] ss:$16 sm:%s2201]
  %s2203 = scalar_lea.vmem %s0, 1679
  %s2204 = smov 12
  %v2205 = vld [vmem:[%s2203] ss:$16 sm:%s2204]
  %vm2206 = vcmask 1043458
  %v2207 = vsel %vm2206, %v2205, %v2202
  %s2208 = scalar_lea.vmem %s0, 1679
  %s2209 = smov 48
  %v2210 = vld [vmem:[%s2208] ss:$16 sm:%s2209]
  %vm2211 = vcmask 1045508
  %v2212 = vsel %vm2211, %v2210, %v2207
  %s2213 = scalar_lea.vmem %s0, 1679
  %s2214 = smov 192
  %v2215 = vld [vmem:[%s2213] ss:$16 sm:%s2214]
  %vm2216 = vcmask 1047558
  %v2217 = vsel %vm2216, %v2215, %v2212
  %2218 = vrot.lane.b32.xlu0 %v2217, 112
  %v2219 = vpop.permute.xlu0 %2218
  %vm2220 = vcmask 1048448
  %s2221 = scalar_lea.vmem %s1, 216
  %2222 = vst.msk [vmem:[%s2221] sm:$0xff] %vm2220, %v2219
  %s2223 = scalar_lea.vmem %s0, 1935
  %s2224 = smov 3
  %v2225 = vld [vmem:[%s2223] ss:$16 sm:%s2224]
  %s2226 = scalar_lea.vmem %s0, 1935
  %s2227 = smov 12
  %v2228 = vld [vmem:[%s2226] ss:$16 sm:%s2227]
  %vm2229 = vcmask 1043458
  %v2230 = vsel %vm2229, %v2228, %v2225
  %s2231 = scalar_lea.vmem %s0, 1935
  %s2232 = smov 48
  %v2233 = vld [vmem:[%s2231] ss:$16 sm:%s2232]
  %vm2234 = vcmask 1045508
  %v2235 = vsel %vm2234, %v2233, %v2230
  %s2236 = scalar_lea.vmem %s0, 1935
  %s2237 = smov 192
  %v2238 = vld [vmem:[%s2236] ss:$16 sm:%s2237]
  %vm2239 = vcmask 1047558
  %v2240 = vsel %vm2239, %v2238, %v2235
  %2241 = vrot.lane.b32.xlu0 %v2240, 112
  %v2242 = vpop.permute.xlu0 %2241
  %vm2243 = vcmask 1048448
  %s2244 = scalar_lea.vmem %s1, 248
  %2245 = vst.msk [vmem:[%s2244] sm:$0xff] %vm2243, %v2242
  %s2246 = scalar_lea.vmem %s0, 2191
  %s2247 = smov 3
  %v2248 = vld [vmem:[%s2246] ss:$16 sm:%s2247]
  %s2249 = scalar_lea.vmem %s0, 2191
  %s2250 = smov 12
  %v2251 = vld [vmem:[%s2249] ss:$16 sm:%s2250]
  %vm2252 = vcmask 1043458
  %v2253 = vsel %vm2252, %v2251, %v2248
  %s2254 = scalar_lea.vmem %s0, 2191
  %s2255 = smov 48
  %v2256 = vld [vmem:[%s2254] ss:$16 sm:%s2255]
  %vm2257 = vcmask 1045508
  %v2258 = vsel %vm2257, %v2256, %v2253
  %s2259 = scalar_lea.vmem %s0, 2191
  %s2260 = smov 192
  %v2261 = vld [vmem:[%s2259] ss:$16 sm:%s2260]
  %vm2262 = vcmask 1047558
  %v2263 = vsel %vm2262, %v2261, %v2258
  %2264 = vrot.lane.b32.xlu0 %v2263, 112
  %v2265 = vpop.permute.xlu0 %2264
  %vm2266 = vcmask 1048448
  %s2267 = scalar_lea.vmem %s1, 280
  %2268 = vst.msk [vmem:[%s2267] sm:$0xff] %vm2266, %v2265
  %s2269 = scalar_lea.vmem %s0, 2447
  %s2270 = smov 3
  %v2271 = vld [vmem:[%s2269] ss:$16 sm:%s2270]
  %s2272 = scalar_lea.vmem %s0, 2447
  %s2273 = smov 12
  %v2274 = vld [vmem:[%s2272] ss:$16 sm:%s2273]
  %vm2275 = vcmask 1043458
  %v2276 = vsel %vm2275, %v2274, %v2271
  %s2277 = scalar_lea.vmem %s0, 2447
  %s2278 = smov 48
  %v2279 = vld [vmem:[%s2277] ss:$16 sm:%s2278]
  %vm2280 = vcmask 1045508
  %v2281 = vsel %vm2280, %v2279, %v2276
  %s2282 = scalar_lea.vmem %s0, 2447
  %s2283 = smov 192
  %v2284 = vld [vmem:[%s2282] ss:$16 sm:%s2283]
  %vm2285 = vcmask 1047558
  %v2286 = vsel %vm2285, %v2284, %v2281
  %2287 = vrot.lane.b32.xlu0 %v2286, 112
  %v2288 = vpop.permute.xlu0 %2287
  %vm2289 = vcmask 1048448
  %s2290 = scalar_lea.vmem %s1, 312
  %2291 = vst.msk [vmem:[%s2290] sm:$0xff] %vm2289, %v2288
  %s2292 = scalar_lea.vmem %s0, 2703
  %s2293 = smov 3
  %v2294 = vld [vmem:[%s2292] ss:$16 sm:%s2293]
  %s2295 = scalar_lea.vmem %s0, 2703
  %s2296 = smov 12
  %v2297 = vld [vmem:[%s2295] ss:$16 sm:%s2296]
  %vm2298 = vcmask 1043458
  %v2299 = vsel %vm2298, %v2297, %v2294
  %s2300 = scalar_lea.vmem %s0, 2703
  %s2301 = smov 48
  %v2302 = vld [vmem:[%s2300] ss:$16 sm:%s2301]
  %vm2303 = vcmask 1045508
  %v2304 = vsel %vm2303, %v2302, %v2299
  %s2305 = scalar_lea.vmem %s0, 2703
  %s2306 = smov 192
  %v2307 = vld [vmem:[%s2305] ss:$16 sm:%s2306]
  %vm2308 = vcmask 1047558
  %v2309 = vsel %vm2308, %v2307, %v2304
  %2310 = vrot.lane.b32.xlu0 %v2309, 112
  %v2311 = vpop.permute.xlu0 %2310
  %vm2312 = vcmask 1048448
  %s2313 = scalar_lea.vmem %s1, 344
  %2314 = vst.msk [vmem:[%s2313] sm:$0xff] %vm2312, %v2311
  %s2315 = scalar_lea.vmem %s0, 2959
  %s2316 = smov 3
  %v2317 = vld [vmem:[%s2315] ss:$16 sm:%s2316]
  %s2318 = scalar_lea.vmem %s0, 2959
  %s2319 = smov 12
  %v2320 = vld [vmem:[%s2318] ss:$16 sm:%s2319]
  %vm2321 = vcmask 1043458
  %v2322 = vsel %vm2321, %v2320, %v2317
  %s2323 = scalar_lea.vmem %s0, 2959
  %s2324 = smov 48
  %v2325 = vld [vmem:[%s2323] ss:$16 sm:%s2324]
  %vm2326 = vcmask 1045508
  %v2327 = vsel %vm2326, %v2325, %v2322
  %s2328 = scalar_lea.vmem %s0, 2959
  %s2329 = smov 192
  %v2330 = vld [vmem:[%s2328] ss:$16 sm:%s2329]
  %vm2331 = vcmask 1047558
  %v2332 = vsel %vm2331, %v2330, %v2327
  %2333 = vrot.lane.b32.xlu0 %v2332, 112
  %v2334 = vpop.permute.xlu0 %2333
  %vm2335 = vcmask 1048448
  %s2336 = scalar_lea.vmem %s1, 376
  %2337 = vst.msk [vmem:[%s2336] sm:$0xff] %vm2335, %v2334
  %s2338 = scalar_lea.vmem %s0, 3215
  %s2339 = smov 3
  %v2340 = vld [vmem:[%s2338] ss:$16 sm:%s2339]
  %s2341 = scalar_lea.vmem %s0, 3215
  %s2342 = smov 12
  %v2343 = vld [vmem:[%s2341] ss:$16 sm:%s2342]
  %vm2344 = vcmask 1043458
  %v2345 = vsel %vm2344, %v2343, %v2340
  %s2346 = scalar_lea.vmem %s0, 3215
  %s2347 = smov 48
  %v2348 = vld [vmem:[%s2346] ss:$16 sm:%s2347]
  %vm2349 = vcmask 1045508
  %v2350 = vsel %vm2349, %v2348, %v2345
  %s2351 = scalar_lea.vmem %s0, 3215
  %s2352 = smov 192
  %v2353 = vld [vmem:[%s2351] ss:$16 sm:%s2352]
  %vm2354 = vcmask 1047558
  %v2355 = vsel %vm2354, %v2353, %v2350
  %2356 = vrot.lane.b32.xlu0 %v2355, 112
  %v2357 = vpop.permute.xlu0 %2356
  %vm2358 = vcmask 1048448
  %s2359 = scalar_lea.vmem %s1, 408
  %2360 = vst.msk [vmem:[%s2359] sm:$0xff] %vm2358, %v2357
  %s2361 = scalar_lea.vmem %s0, 3471
  %s2362 = smov 3
  %v2363 = vld [vmem:[%s2361] ss:$16 sm:%s2362]
  %s2364 = scalar_lea.vmem %s0, 3471
  %s2365 = smov 12
  %v2366 = vld [vmem:[%s2364] ss:$16 sm:%s2365]
  %vm2367 = vcmask 1043458
  %v2368 = vsel %vm2367, %v2366, %v2363
  %s2369 = scalar_lea.vmem %s0, 3471
  %s2370 = smov 48
  %v2371 = vld [vmem:[%s2369] ss:$16 sm:%s2370]
  %vm2372 = vcmask 1045508
  %v2373 = vsel %vm2372, %v2371, %v2368
  %s2374 = scalar_lea.vmem %s0, 3471
  %s2375 = smov 192
  %v2376 = vld [vmem:[%s2374] ss:$16 sm:%s2375]
  %vm2377 = vcmask 1047558
  %v2378 = vsel %vm2377, %v2376, %v2373
  %2379 = vrot.lane.b32.xlu0 %v2378, 112
  %v2380 = vpop.permute.xlu0 %2379
  %vm2381 = vcmask 1048448
  %s2382 = scalar_lea.vmem %s1, 440
  %2383 = vst.msk [vmem:[%s2382] sm:$0xff] %vm2381, %v2380
  %s2384 = scalar_lea.vmem %s0, 3727
  %s2385 = smov 3
  %v2386 = vld [vmem:[%s2384] ss:$16 sm:%s2385]
  %s2387 = scalar_lea.vmem %s0, 3727
  %s2388 = smov 12
  %v2389 = vld [vmem:[%s2387] ss:$16 sm:%s2388]
  %vm2390 = vcmask 1043458
  %v2391 = vsel %vm2390, %v2389, %v2386
  %s2392 = scalar_lea.vmem %s0, 3727
  %s2393 = smov 48
  %v2394 = vld [vmem:[%s2392] ss:$16 sm:%s2393]
  %vm2395 = vcmask 1045508
  %v2396 = vsel %vm2395, %v2394, %v2391
  %s2397 = scalar_lea.vmem %s0, 3727
  %s2398 = smov 192
  %v2399 = vld [vmem:[%s2397] ss:$16 sm:%s2398]
  %vm2400 = vcmask 1047558
  %v2401 = vsel %vm2400, %v2399, %v2396
  %2402 = vrot.lane.b32.xlu0 %v2401, 112
  %v2403 = vpop.permute.xlu0 %2402
  %vm2404 = vcmask 1048448
  %s2405 = scalar_lea.vmem %s1, 472
  %2406 = vst.msk [vmem:[%s2405] sm:$0xff] %vm2404, %v2403
  %s2407 = scalar_lea.vmem %s0, 3983
  %s2408 = smov 3
  %v2409 = vld [vmem:[%s2407] ss:$16 sm:%s2408]
  %s2410 = scalar_lea.vmem %s0, 3983
  %s2411 = smov 12
  %v2412 = vld [vmem:[%s2410] ss:$16 sm:%s2411]
  %vm2413 = vcmask 1043458
  %v2414 = vsel %vm2413, %v2412, %v2409
  %s2415 = scalar_lea.vmem %s0, 3983
  %s2416 = smov 48
  %v2417 = vld [vmem:[%s2415] ss:$16 sm:%s2416]
  %vm2418 = vcmask 1045508
  %v2419 = vsel %vm2418, %v2417, %v2414
  %s2420 = scalar_lea.vmem %s0, 3983
  %s2421 = smov 192
  %v2422 = vld [vmem:[%s2420] ss:$16 sm:%s2421]
  %vm2423 = vcmask 1047558
  %v2424 = vsel %vm2423, %v2422, %v2419
  %2425 = vrot.lane.b32.xlu0 %v2424, 112
  %v2426 = vpop.permute.xlu0 %2425
  %vm2427 = vcmask 1048448
  %s2428 = scalar_lea.vmem %s1, 504
  %2429 = vst.msk [vmem:[%s2428] sm:$0xff] %vm2427, %v2426
  %s2430 = scalar_lea.vmem %s0, 6
  %s2431 = smov 3
  %v2432 = vld [vmem:[%s2430] ss:$16 sm:%s2431]
  %s2433 = scalar_lea.vmem %s0, 6
  %s2434 = smov 12
  %v2435 = vld [vmem:[%s2433] ss:$16 sm:%s2434]
  %vm2436 = vcmask 1043458
  %v2437 = vsel %vm2436, %v2435, %v2432
  %s2438 = scalar_lea.vmem %s0, 6
  %s2439 = smov 48
  %v2440 = vld [vmem:[%s2438] ss:$16 sm:%s2439]
  %vm2441 = vcmask 1045508
  %v2442 = vsel %vm2441, %v2440, %v2437
  %s2443 = scalar_lea.vmem %s0, 6
  %s2444 = smov 192
  %v2445 = vld [vmem:[%s2443] ss:$16 sm:%s2444]
  %vm2446 = vcmask 1047558
  %v2447 = vsel %vm2446, %v2445, %v2442
  %2448 = vrot.lane.b32.xlu0 %v2447, 96
  %v2449 = vpop.permute.xlu0 %2448
  %vm2450 = vcmask 917248
  %2451 = vst.msk [vmem:[%s1] sm:$0xff] %vm2450, %v2449
  %s2452 = scalar_lea.vmem %s0, 262
  %s2453 = smov 3
  %v2454 = vld [vmem:[%s2452] ss:$16 sm:%s2453]
  %s2455 = scalar_lea.vmem %s0, 262
  %s2456 = smov 12
  %v2457 = vld [vmem:[%s2455] ss:$16 sm:%s2456]
  %vm2458 = vcmask 1043458
  %v2459 = vsel %vm2458, %v2457, %v2454
  %s2460 = scalar_lea.vmem %s0, 262
  %s2461 = smov 48
  %v2462 = vld [vmem:[%s2460] ss:$16 sm:%s2461]
  %vm2463 = vcmask 1045508
  %v2464 = vsel %vm2463, %v2462, %v2459
  %s2465 = scalar_lea.vmem %s0, 262
  %s2466 = smov 192
  %v2467 = vld [vmem:[%s2465] ss:$16 sm:%s2466]
  %vm2468 = vcmask 1047558
  %v2469 = vsel %vm2468, %v2467, %v2464
  %2470 = vrot.lane.b32.xlu0 %v2469, 96
  %v2471 = vpop.permute.xlu0 %2470
  %vm2472 = vcmask 917248
  %s2473 = scalar_lea.vmem %s1, 32
  %2474 = vst.msk [vmem:[%s2473] sm:$0xff] %vm2472, %v2471
  %s2475 = scalar_lea.vmem %s0, 518
  %s2476 = smov 3
  %v2477 = vld [vmem:[%s2475] ss:$16 sm:%s2476]
  %s2478 = scalar_lea.vmem %s0, 518
  %s2479 = smov 12
  %v2480 = vld [vmem:[%s2478] ss:$16 sm:%s2479]
  %vm2481 = vcmask 1043458
  %v2482 = vsel %vm2481, %v2480, %v2477
  %s2483 = scalar_lea.vmem %s0, 518
  %s2484 = smov 48
  %v2485 = vld [vmem:[%s2483] ss:$16 sm:%s2484]
  %vm2486 = vcmask 1045508
  %v2487 = vsel %vm2486, %v2485, %v2482
  %s2488 = scalar_lea.vmem %s0, 518
  %s2489 = smov 192
  %v2490 = vld [vmem:[%s2488] ss:$16 sm:%s2489]
  %vm2491 = vcmask 1047558
  %v2492 = vsel %vm2491, %v2490, %v2487
  %2493 = vrot.lane.b32.xlu0 %v2492, 96
  %v2494 = vpop.permute.xlu0 %2493
  %vm2495 = vcmask 917248
  %s2496 = scalar_lea.vmem %s1, 64
  %2497 = vst.msk [vmem:[%s2496] sm:$0xff] %vm2495, %v2494
  %s2498 = scalar_lea.vmem %s0, 774
  %s2499 = smov 3
  %v2500 = vld [vmem:[%s2498] ss:$16 sm:%s2499]
  %s2501 = scalar_lea.vmem %s0, 774
  %s2502 = smov 12
  %v2503 = vld [vmem:[%s2501] ss:$16 sm:%s2502]
  %vm2504 = vcmask 1043458
  %v2505 = vsel %vm2504, %v2503, %v2500
  %s2506 = scalar_lea.vmem %s0, 774
  %s2507 = smov 48
  %v2508 = vld [vmem:[%s2506] ss:$16 sm:%s2507]
  %vm2509 = vcmask 1045508
  %v2510 = vsel %vm2509, %v2508, %v2505
  %s2511 = scalar_lea.vmem %s0, 774
  %s2512 = smov 192
  %v2513 = vld [vmem:[%s2511] ss:$16 sm:%s2512]
  %vm2514 = vcmask 1047558
  %v2515 = vsel %vm2514, %v2513, %v2510
  %2516 = vrot.lane.b32.xlu0 %v2515, 96
  %v2517 = vpop.permute.xlu0 %2516
  %vm2518 = vcmask 917248
  %s2519 = scalar_lea.vmem %s1, 96
  %2520 = vst.msk [vmem:[%s2519] sm:$0xff] %vm2518, %v2517
  %s2521 = scalar_lea.vmem %s0, 1030
  %s2522 = smov 3
  %v2523 = vld [vmem:[%s2521] ss:$16 sm:%s2522]
  %s2524 = scalar_lea.vmem %s0, 1030
  %s2525 = smov 12
  %v2526 = vld [vmem:[%s2524] ss:$16 sm:%s2525]
  %vm2527 = vcmask 1043458
  %v2528 = vsel %vm2527, %v2526, %v2523
  %s2529 = scalar_lea.vmem %s0, 1030
  %s2530 = smov 48
  %v2531 = vld [vmem:[%s2529] ss:$16 sm:%s2530]
  %vm2532 = vcmask 1045508
  %v2533 = vsel %vm2532, %v2531, %v2528
  %s2534 = scalar_lea.vmem %s0, 1030
  %s2535 = smov 192
  %v2536 = vld [vmem:[%s2534] ss:$16 sm:%s2535]
  %vm2537 = vcmask 1047558
  %v2538 = vsel %vm2537, %v2536, %v2533
  %2539 = vrot.lane.b32.xlu0 %v2538, 96
  %v2540 = vpop.permute.xlu0 %2539
  %vm2541 = vcmask 917248
  %s2542 = scalar_lea.vmem %s1, 128
  %2543 = vst.msk [vmem:[%s2542] sm:$0xff] %vm2541, %v2540
  %s2544 = scalar_lea.vmem %s0, 1286
  %s2545 = smov 3
  %v2546 = vld [vmem:[%s2544] ss:$16 sm:%s2545]
  %s2547 = scalar_lea.vmem %s0, 1286
  %s2548 = smov 12
  %v2549 = vld [vmem:[%s2547] ss:$16 sm:%s2548]
  %vm2550 = vcmask 1043458
  %v2551 = vsel %vm2550, %v2549, %v2546
  %s2552 = scalar_lea.vmem %s0, 1286
  %s2553 = smov 48
  %v2554 = vld [vmem:[%s2552] ss:$16 sm:%s2553]
  %vm2555 = vcmask 1045508
  %v2556 = vsel %vm2555, %v2554, %v2551
  %s2557 = scalar_lea.vmem %s0, 1286
  %s2558 = smov 192
  %v2559 = vld [vmem:[%s2557] ss:$16 sm:%s2558]
  %vm2560 = vcmask 1047558
  %v2561 = vsel %vm2560, %v2559, %v2556
  %2562 = vrot.lane.b32.xlu0 %v2561, 96
  %v2563 = vpop.permute.xlu0 %2562
  %vm2564 = vcmask 917248
  %s2565 = scalar_lea.vmem %s1, 160
  %2566 = vst.msk [vmem:[%s2565] sm:$0xff] %vm2564, %v2563
  %s2567 = scalar_lea.vmem %s0, 1542
  %s2568 = smov 3
  %v2569 = vld [vmem:[%s2567] ss:$16 sm:%s2568]
  %s2570 = scalar_lea.vmem %s0, 1542
  %s2571 = smov 12
  %v2572 = vld [vmem:[%s2570] ss:$16 sm:%s2571]
  %vm2573 = vcmask 1043458
  %v2574 = vsel %vm2573, %v2572, %v2569
  %s2575 = scalar_lea.vmem %s0, 1542
  %s2576 = smov 48
  %v2577 = vld [vmem:[%s2575] ss:$16 sm:%s2576]
  %vm2578 = vcmask 1045508
  %v2579 = vsel %vm2578, %v2577, %v2574
  %s2580 = scalar_lea.vmem %s0, 1542
  %s2581 = smov 192
  %v2582 = vld [vmem:[%s2580] ss:$16 sm:%s2581]
  %vm2583 = vcmask 1047558
  %v2584 = vsel %vm2583, %v2582, %v2579
  %2585 = vrot.lane.b32.xlu0 %v2584, 96
  %v2586 = vpop.permute.xlu0 %2585
  %vm2587 = vcmask 917248
  %s2588 = scalar_lea.vmem %s1, 192
  %2589 = vst.msk [vmem:[%s2588] sm:$0xff] %vm2587, %v2586
  %s2590 = scalar_lea.vmem %s0, 1798
  %s2591 = smov 3
  %v2592 = vld [vmem:[%s2590] ss:$16 sm:%s2591]
  %s2593 = scalar_lea.vmem %s0, 1798
  %s2594 = smov 12
  %v2595 = vld [vmem:[%s2593] ss:$16 sm:%s2594]
  %vm2596 = vcmask 1043458
  %v2597 = vsel %vm2596, %v2595, %v2592
  %s2598 = scalar_lea.vmem %s0, 1798
  %s2599 = smov 48
  %v2600 = vld [vmem:[%s2598] ss:$16 sm:%s2599]
  %vm2601 = vcmask 1045508
  %v2602 = vsel %vm2601, %v2600, %v2597
  %s2603 = scalar_lea.vmem %s0, 1798
  %s2604 = smov 192
  %v2605 = vld [vmem:[%s2603] ss:$16 sm:%s2604]
  %vm2606 = vcmask 1047558
  %v2607 = vsel %vm2606, %v2605, %v2602
  %2608 = vrot.lane.b32.xlu0 %v2607, 96
  %v2609 = vpop.permute.xlu0 %2608
  %vm2610 = vcmask 917248
  %s2611 = scalar_lea.vmem %s1, 224
  %2612 = vst.msk [vmem:[%s2611] sm:$0xff] %vm2610, %v2609
  %s2613 = scalar_lea.vmem %s0, 2054
  %s2614 = smov 3
  %v2615 = vld [vmem:[%s2613] ss:$16 sm:%s2614]
  %s2616 = scalar_lea.vmem %s0, 2054
  %s2617 = smov 12
  %v2618 = vld [vmem:[%s2616] ss:$16 sm:%s2617]
  %vm2619 = vcmask 1043458
  %v2620 = vsel %vm2619, %v2618, %v2615
  %s2621 = scalar_lea.vmem %s0, 2054
  %s2622 = smov 48
  %v2623 = vld [vmem:[%s2621] ss:$16 sm:%s2622]
  %vm2624 = vcmask 1045508
  %v2625 = vsel %vm2624, %v2623, %v2620
  %s2626 = scalar_lea.vmem %s0, 2054
  %s2627 = smov 192
  %v2628 = vld [vmem:[%s2626] ss:$16 sm:%s2627]
  %vm2629 = vcmask 1047558
  %v2630 = vsel %vm2629, %v2628, %v2625
  %2631 = vrot.lane.b32.xlu0 %v2630, 96
  %v2632 = vpop.permute.xlu0 %2631
  %vm2633 = vcmask 917248
  %s2634 = scalar_lea.vmem %s1, 256
  %2635 = vst.msk [vmem:[%s2634] sm:$0xff] %vm2633, %v2632
  %s2636 = scalar_lea.vmem %s0, 2310
  %s2637 = smov 3
  %v2638 = vld [vmem:[%s2636] ss:$16 sm:%s2637]
  %s2639 = scalar_lea.vmem %s0, 2310
  %s2640 = smov 12
  %v2641 = vld [vmem:[%s2639] ss:$16 sm:%s2640]
  %vm2642 = vcmask 1043458
  %v2643 = vsel %vm2642, %v2641, %v2638
  %s2644 = scalar_lea.vmem %s0, 2310
  %s2645 = smov 48
  %v2646 = vld [vmem:[%s2644] ss:$16 sm:%s2645]
  %vm2647 = vcmask 1045508
  %v2648 = vsel %vm2647, %v2646, %v2643
  %s2649 = scalar_lea.vmem %s0, 2310
  %s2650 = smov 192
  %v2651 = vld [vmem:[%s2649] ss:$16 sm:%s2650]
  %vm2652 = vcmask 1047558
  %v2653 = vsel %vm2652, %v2651, %v2648
  %2654 = vrot.lane.b32.xlu0 %v2653, 96
  %v2655 = vpop.permute.xlu0 %2654
  %vm2656 = vcmask 917248
  %s2657 = scalar_lea.vmem %s1, 288
  %2658 = vst.msk [vmem:[%s2657] sm:$0xff] %vm2656, %v2655
  %s2659 = scalar_lea.vmem %s0, 2566
  %s2660 = smov 3
  %v2661 = vld [vmem:[%s2659] ss:$16 sm:%s2660]
  %s2662 = scalar_lea.vmem %s0, 2566
  %s2663 = smov 12
  %v2664 = vld [vmem:[%s2662] ss:$16 sm:%s2663]
  %vm2665 = vcmask 1043458
  %v2666 = vsel %vm2665, %v2664, %v2661
  %s2667 = scalar_lea.vmem %s0, 2566
  %s2668 = smov 48
  %v2669 = vld [vmem:[%s2667] ss:$16 sm:%s2668]
  %vm2670 = vcmask 1045508
  %v2671 = vsel %vm2670, %v2669, %v2666
  %s2672 = scalar_lea.vmem %s0, 2566
  %s2673 = smov 192
  %v2674 = vld [vmem:[%s2672] ss:$16 sm:%s2673]
  %vm2675 = vcmask 1047558
  %v2676 = vsel %vm2675, %v2674, %v2671
  %2677 = vrot.lane.b32.xlu0 %v2676, 96
  %v2678 = vpop.permute.xlu0 %2677
  %vm2679 = vcmask 917248
  %s2680 = scalar_lea.vmem %s1, 320
  %2681 = vst.msk [vmem:[%s2680] sm:$0xff] %vm2679, %v2678
  %s2682 = scalar_lea.vmem %s0, 2822
  %s2683 = smov 3
  %v2684 = vld [vmem:[%s2682] ss:$16 sm:%s2683]
  %s2685 = scalar_lea.vmem %s0, 2822
  %s2686 = smov 12
  %v2687 = vld [vmem:[%s2685] ss:$16 sm:%s2686]
  %vm2688 = vcmask 1043458
  %v2689 = vsel %vm2688, %v2687, %v2684
  %s2690 = scalar_lea.vmem %s0, 2822
  %s2691 = smov 48
  %v2692 = vld [vmem:[%s2690] ss:$16 sm:%s2691]
  %vm2693 = vcmask 1045508
  %v2694 = vsel %vm2693, %v2692, %v2689
  %s2695 = scalar_lea.vmem %s0, 2822
  %s2696 = smov 192
  %v2697 = vld [vmem:[%s2695] ss:$16 sm:%s2696]
  %vm2698 = vcmask 1047558
  %v2699 = vsel %vm2698, %v2697, %v2694
  %2700 = vrot.lane.b32.xlu0 %v2699, 96
  %v2701 = vpop.permute.xlu0 %2700
  %vm2702 = vcmask 917248
  %s2703 = scalar_lea.vmem %s1, 352
  %2704 = vst.msk [vmem:[%s2703] sm:$0xff] %vm2702, %v2701
  %s2705 = scalar_lea.vmem %s0, 3078
  %s2706 = smov 3
  %v2707 = vld [vmem:[%s2705] ss:$16 sm:%s2706]
  %s2708 = scalar_lea.vmem %s0, 3078
  %s2709 = smov 12
  %v2710 = vld [vmem:[%s2708] ss:$16 sm:%s2709]
  %vm2711 = vcmask 1043458
  %v2712 = vsel %vm2711, %v2710, %v2707
  %s2713 = scalar_lea.vmem %s0, 3078
  %s2714 = smov 48
  %v2715 = vld [vmem:[%s2713] ss:$16 sm:%s2714]
  %vm2716 = vcmask 1045508
  %v2717 = vsel %vm2716, %v2715, %v2712
  %s2718 = scalar_lea.vmem %s0, 3078
  %s2719 = smov 192
  %v2720 = vld [vmem:[%s2718] ss:$16 sm:%s2719]
  %vm2721 = vcmask 1047558
  %v2722 = vsel %vm2721, %v2720, %v2717
  %2723 = vrot.lane.b32.xlu0 %v2722, 96
  %v2724 = vpop.permute.xlu0 %2723
  %vm2725 = vcmask 917248
  %s2726 = scalar_lea.vmem %s1, 384
  %2727 = vst.msk [vmem:[%s2726] sm:$0xff] %vm2725, %v2724
  %s2728 = scalar_lea.vmem %s0, 3334
  %s2729 = smov 3
  %v2730 = vld [vmem:[%s2728] ss:$16 sm:%s2729]
  %s2731 = scalar_lea.vmem %s0, 3334
  %s2732 = smov 12
  %v2733 = vld [vmem:[%s2731] ss:$16 sm:%s2732]
  %vm2734 = vcmask 1043458
  %v2735 = vsel %vm2734, %v2733, %v2730
  %s2736 = scalar_lea.vmem %s0, 3334
  %s2737 = smov 48
  %v2738 = vld [vmem:[%s2736] ss:$16 sm:%s2737]
  %vm2739 = vcmask 1045508
  %v2740 = vsel %vm2739, %v2738, %v2735
  %s2741 = scalar_lea.vmem %s0, 3334
  %s2742 = smov 192
  %v2743 = vld [vmem:[%s2741] ss:$16 sm:%s2742]
  %vm2744 = vcmask 1047558
  %v2745 = vsel %vm2744, %v2743, %v2740
  %2746 = vrot.lane.b32.xlu0 %v2745, 96
  %v2747 = vpop.permute.xlu0 %2746
  %vm2748 = vcmask 917248
  %s2749 = scalar_lea.vmem %s1, 416
  %2750 = vst.msk [vmem:[%s2749] sm:$0xff] %vm2748, %v2747
  %s2751 = scalar_lea.vmem %s0, 3590
  %s2752 = smov 3
  %v2753 = vld [vmem:[%s2751] ss:$16 sm:%s2752]
  %s2754 = scalar_lea.vmem %s0, 3590
  %s2755 = smov 12
  %v2756 = vld [vmem:[%s2754] ss:$16 sm:%s2755]
  %vm2757 = vcmask 1043458
  %v2758 = vsel %vm2757, %v2756, %v2753
  %s2759 = scalar_lea.vmem %s0, 3590
  %s2760 = smov 48
  %v2761 = vld [vmem:[%s2759] ss:$16 sm:%s2760]
  %vm2762 = vcmask 1045508
  %v2763 = vsel %vm2762, %v2761, %v2758
  %s2764 = scalar_lea.vmem %s0, 3590
  %s2765 = smov 192
  %v2766 = vld [vmem:[%s2764] ss:$16 sm:%s2765]
  %vm2767 = vcmask 1047558
  %v2768 = vsel %vm2767, %v2766, %v2763
  %2769 = vrot.lane.b32.xlu0 %v2768, 96
  %v2770 = vpop.permute.xlu0 %2769
  %vm2771 = vcmask 917248
  %s2772 = scalar_lea.vmem %s1, 448
  %2773 = vst.msk [vmem:[%s2772] sm:$0xff] %vm2771, %v2770
  %s2774 = scalar_lea.vmem %s0, 3846
  %s2775 = smov 3
  %v2776 = vld [vmem:[%s2774] ss:$16 sm:%s2775]
  %s2777 = scalar_lea.vmem %s0, 3846
  %s2778 = smov 12
  %v2779 = vld [vmem:[%s2777] ss:$16 sm:%s2778]
  %vm2780 = vcmask 1043458
  %v2781 = vsel %vm2780, %v2779, %v2776
  %s2782 = scalar_lea.vmem %s0, 3846
  %s2783 = smov 48
  %v2784 = vld [vmem:[%s2782] ss:$16 sm:%s2783]
  %vm2785 = vcmask 1045508
  %v2786 = vsel %vm2785, %v2784, %v2781
  %s2787 = scalar_lea.vmem %s0, 3846
  %s2788 = smov 192
  %v2789 = vld [vmem:[%s2787] ss:$16 sm:%s2788]
  %vm2790 = vcmask 1047558
  %v2791 = vsel %vm2790, %v2789, %v2786
  %2792 = vrot.lane.b32.xlu0 %v2791, 96
  %v2793 = vpop.permute.xlu0 %2792
  %vm2794 = vcmask 917248
  %s2795 = scalar_lea.vmem %s1, 480
  %2796 = vst.msk [vmem:[%s2795] sm:$0xff] %vm2794, %v2793
  %s2797 = scalar_lea.vmem %s0, 14
  %s2798 = smov 3
  %v2799 = vld [vmem:[%s2797] ss:$16 sm:%s2798]
  %s2800 = scalar_lea.vmem %s0, 14
  %s2801 = smov 12
  %v2802 = vld [vmem:[%s2800] ss:$16 sm:%s2801]
  %vm2803 = vcmask 1043458
  %v2804 = vsel %vm2803, %v2802, %v2799
  %s2805 = scalar_lea.vmem %s0, 14
  %s2806 = smov 48
  %v2807 = vld [vmem:[%s2805] ss:$16 sm:%s2806]
  %vm2808 = vcmask 1045508
  %v2809 = vsel %vm2808, %v2807, %v2804
  %s2810 = scalar_lea.vmem %s0, 14
  %s2811 = smov 192
  %v2812 = vld [vmem:[%s2810] ss:$16 sm:%s2811]
  %vm2813 = vcmask 1047558
  %v2814 = vsel %vm2813, %v2812, %v2809
  %2815 = vrot.lane.b32.xlu0 %v2814, 96
  %v2816 = vpop.permute.xlu0 %2815
  %vm2817 = vcmask 917248
  %s2818 = scalar_lea.vmem %s1, 8
  %2819 = vst.msk [vmem:[%s2818] sm:$0xff] %vm2817, %v2816
  %s2820 = scalar_lea.vmem %s0, 270
  %s2821 = smov 3
  %v2822 = vld [vmem:[%s2820] ss:$16 sm:%s2821]
  %s2823 = scalar_lea.vmem %s0, 270
  %s2824 = smov 12
  %v2825 = vld [vmem:[%s2823] ss:$16 sm:%s2824]
  %vm2826 = vcmask 1043458
  %v2827 = vsel %vm2826, %v2825, %v2822
  %s2828 = scalar_lea.vmem %s0, 270
  %s2829 = smov 48
  %v2830 = vld [vmem:[%s2828] ss:$16 sm:%s2829]
  %vm2831 = vcmask 1045508
  %v2832 = vsel %vm2831, %v2830, %v2827
  %s2833 = scalar_lea.vmem %s0, 270
  %s2834 = smov 192
  %v2835 = vld [vmem:[%s2833] ss:$16 sm:%s2834]
  %vm2836 = vcmask 1047558
  %v2837 = vsel %vm2836, %v2835, %v2832
  %2838 = vrot.lane.b32.xlu0 %v2837, 96
  %v2839 = vpop.permute.xlu0 %2838
  %vm2840 = vcmask 917248
  %s2841 = scalar_lea.vmem %s1, 40
  %2842 = vst.msk [vmem:[%s2841] sm:$0xff] %vm2840, %v2839
  %s2843 = scalar_lea.vmem %s0, 526
  %s2844 = smov 3
  %v2845 = vld [vmem:[%s2843] ss:$16 sm:%s2844]
  %s2846 = scalar_lea.vmem %s0, 526
  %s2847 = smov 12
  %v2848 = vld [vmem:[%s2846] ss:$16 sm:%s2847]
  %vm2849 = vcmask 1043458
  %v2850 = vsel %vm2849, %v2848, %v2845
  %s2851 = scalar_lea.vmem %s0, 526
  %s2852 = smov 48
  %v2853 = vld [vmem:[%s2851] ss:$16 sm:%s2852]
  %vm2854 = vcmask 1045508
  %v2855 = vsel %vm2854, %v2853, %v2850
  %s2856 = scalar_lea.vmem %s0, 526
  %s2857 = smov 192
  %v2858 = vld [vmem:[%s2856] ss:$16 sm:%s2857]
  %vm2859 = vcmask 1047558
  %v2860 = vsel %vm2859, %v2858, %v2855
  %2861 = vrot.lane.b32.xlu0 %v2860, 96
  %v2862 = vpop.permute.xlu0 %2861
  %vm2863 = vcmask 917248
  %s2864 = scalar_lea.vmem %s1, 72
  %2865 = vst.msk [vmem:[%s2864] sm:$0xff] %vm2863, %v2862
  %s2866 = scalar_lea.vmem %s0, 782
  %s2867 = smov 3
  %v2868 = vld [vmem:[%s2866] ss:$16 sm:%s2867]
  %s2869 = scalar_lea.vmem %s0, 782
  %s2870 = smov 12
  %v2871 = vld [vmem:[%s2869] ss:$16 sm:%s2870]
  %vm2872 = vcmask 1043458
  %v2873 = vsel %vm2872, %v2871, %v2868
  %s2874 = scalar_lea.vmem %s0, 782
  %s2875 = smov 48
  %v2876 = vld [vmem:[%s2874] ss:$16 sm:%s2875]
  %vm2877 = vcmask 1045508
  %v2878 = vsel %vm2877, %v2876, %v2873
  %s2879 = scalar_lea.vmem %s0, 782
  %s2880 = smov 192
  %v2881 = vld [vmem:[%s2879] ss:$16 sm:%s2880]
  %vm2882 = vcmask 1047558
  %v2883 = vsel %vm2882, %v2881, %v2878
  %2884 = vrot.lane.b32.xlu0 %v2883, 96
  %v2885 = vpop.permute.xlu0 %2884
  %vm2886 = vcmask 917248
  %s2887 = scalar_lea.vmem %s1, 104
  %2888 = vst.msk [vmem:[%s2887] sm:$0xff] %vm2886, %v2885
  %s2889 = scalar_lea.vmem %s0, 1038
  %s2890 = smov 3
  %v2891 = vld [vmem:[%s2889] ss:$16 sm:%s2890]
  %s2892 = scalar_lea.vmem %s0, 1038
  %s2893 = smov 12
  %v2894 = vld [vmem:[%s2892] ss:$16 sm:%s2893]
  %vm2895 = vcmask 1043458
  %v2896 = vsel %vm2895, %v2894, %v2891
  %s2897 = scalar_lea.vmem %s0, 1038
  %s2898 = smov 48
  %v2899 = vld [vmem:[%s2897] ss:$16 sm:%s2898]
  %vm2900 = vcmask 1045508
  %v2901 = vsel %vm2900, %v2899, %v2896
  %s2902 = scalar_lea.vmem %s0, 1038
  %s2903 = smov 192
  %v2904 = vld [vmem:[%s2902] ss:$16 sm:%s2903]
  %vm2905 = vcmask 1047558
  %v2906 = vsel %vm2905, %v2904, %v2901
  %2907 = vrot.lane.b32.xlu0 %v2906, 96
  %v2908 = vpop.permute.xlu0 %2907
  %vm2909 = vcmask 917248
  %s2910 = scalar_lea.vmem %s1, 136
  %2911 = vst.msk [vmem:[%s2910] sm:$0xff] %vm2909, %v2908
  %s2912 = scalar_lea.vmem %s0, 1294
  %s2913 = smov 3
  %v2914 = vld [vmem:[%s2912] ss:$16 sm:%s2913]
  %s2915 = scalar_lea.vmem %s0, 1294
  %s2916 = smov 12
  %v2917 = vld [vmem:[%s2915] ss:$16 sm:%s2916]
  %vm2918 = vcmask 1043458
  %v2919 = vsel %vm2918, %v2917, %v2914
  %s2920 = scalar_lea.vmem %s0, 1294
  %s2921 = smov 48
  %v2922 = vld [vmem:[%s2920] ss:$16 sm:%s2921]
  %vm2923 = vcmask 1045508
  %v2924 = vsel %vm2923, %v2922, %v2919
  %s2925 = scalar_lea.vmem %s0, 1294
  %s2926 = smov 192
  %v2927 = vld [vmem:[%s2925] ss:$16 sm:%s2926]
  %vm2928 = vcmask 1047558
  %v2929 = vsel %vm2928, %v2927, %v2924
  %2930 = vrot.lane.b32.xlu0 %v2929, 96
  %v2931 = vpop.permute.xlu0 %2930
  %vm2932 = vcmask 917248
  %s2933 = scalar_lea.vmem %s1, 168
  %2934 = vst.msk [vmem:[%s2933] sm:$0xff] %vm2932, %v2931
  %s2935 = scalar_lea.vmem %s0, 1550
  %s2936 = smov 3
  %v2937 = vld [vmem:[%s2935] ss:$16 sm:%s2936]
  %s2938 = scalar_lea.vmem %s0, 1550
  %s2939 = smov 12
  %v2940 = vld [vmem:[%s2938] ss:$16 sm:%s2939]
  %vm2941 = vcmask 1043458
  %v2942 = vsel %vm2941, %v2940, %v2937
  %s2943 = scalar_lea.vmem %s0, 1550
  %s2944 = smov 48
  %v2945 = vld [vmem:[%s2943] ss:$16 sm:%s2944]
  %vm2946 = vcmask 1045508
  %v2947 = vsel %vm2946, %v2945, %v2942
  %s2948 = scalar_lea.vmem %s0, 1550
  %s2949 = smov 192
  %v2950 = vld [vmem:[%s2948] ss:$16 sm:%s2949]
  %vm2951 = vcmask 1047558
  %v2952 = vsel %vm2951, %v2950, %v2947
  %2953 = vrot.lane.b32.xlu0 %v2952, 96
  %v2954 = vpop.permute.xlu0 %2953
  %vm2955 = vcmask 917248
  %s2956 = scalar_lea.vmem %s1, 200
  %2957 = vst.msk [vmem:[%s2956] sm:$0xff] %vm2955, %v2954
  %s2958 = scalar_lea.vmem %s0, 1806
  %s2959 = smov 3
  %v2960 = vld [vmem:[%s2958] ss:$16 sm:%s2959]
  %s2961 = scalar_lea.vmem %s0, 1806
  %s2962 = smov 12
  %v2963 = vld [vmem:[%s2961] ss:$16 sm:%s2962]
  %vm2964 = vcmask 1043458
  %v2965 = vsel %vm2964, %v2963, %v2960
  %s2966 = scalar_lea.vmem %s0, 1806
  %s2967 = smov 48
  %v2968 = vld [vmem:[%s2966] ss:$16 sm:%s2967]
  %vm2969 = vcmask 1045508
  %v2970 = vsel %vm2969, %v2968, %v2965
  %s2971 = scalar_lea.vmem %s0, 1806
  %s2972 = smov 192
  %v2973 = vld [vmem:[%s2971] ss:$16 sm:%s2972]
  %vm2974 = vcmask 1047558
  %v2975 = vsel %vm2974, %v2973, %v2970
  %2976 = vrot.lane.b32.xlu0 %v2975, 96
  %v2977 = vpop.permute.xlu0 %2976
  %vm2978 = vcmask 917248
  %s2979 = scalar_lea.vmem %s1, 232
  %2980 = vst.msk [vmem:[%s2979] sm:$0xff] %vm2978, %v2977
  %s2981 = scalar_lea.vmem %s0, 2062
  %s2982 = smov 3
  %v2983 = vld [vmem:[%s2981] ss:$16 sm:%s2982]
  %s2984 = scalar_lea.vmem %s0, 2062
  %s2985 = smov 12
  %v2986 = vld [vmem:[%s2984] ss:$16 sm:%s2985]
  %vm2987 = vcmask 1043458
  %v2988 = vsel %vm2987, %v2986, %v2983
  %s2989 = scalar_lea.vmem %s0, 2062
  %s2990 = smov 48
  %v2991 = vld [vmem:[%s2989] ss:$16 sm:%s2990]
  %vm2992 = vcmask 1045508
  %v2993 = vsel %vm2992, %v2991, %v2988
  %s2994 = scalar_lea.vmem %s0, 2062
  %s2995 = smov 192
  %v2996 = vld [vmem:[%s2994] ss:$16 sm:%s2995]
  %vm2997 = vcmask 1047558
  %v2998 = vsel %vm2997, %v2996, %v2993
  %2999 = vrot.lane.b32.xlu0 %v2998, 96
  %v3000 = vpop.permute.xlu0 %2999
  %vm3001 = vcmask 917248
  %s3002 = scalar_lea.vmem %s1, 264
  %3003 = vst.msk [vmem:[%s3002] sm:$0xff] %vm3001, %v3000
  %s3004 = scalar_lea.vmem %s0, 2318
  %s3005 = smov 3
  %v3006 = vld [vmem:[%s3004] ss:$16 sm:%s3005]
  %s3007 = scalar_lea.vmem %s0, 2318
  %s3008 = smov 12
  %v3009 = vld [vmem:[%s3007] ss:$16 sm:%s3008]
  %vm3010 = vcmask 1043458
  %v3011 = vsel %vm3010, %v3009, %v3006
  %s3012 = scalar_lea.vmem %s0, 2318
  %s3013 = smov 48
  %v3014 = vld [vmem:[%s3012] ss:$16 sm:%s3013]
  %vm3015 = vcmask 1045508
  %v3016 = vsel %vm3015, %v3014, %v3011
  %s3017 = scalar_lea.vmem %s0, 2318
  %s3018 = smov 192
  %v3019 = vld [vmem:[%s3017] ss:$16 sm:%s3018]
  %vm3020 = vcmask 1047558
  %v3021 = vsel %vm3020, %v3019, %v3016
  %3022 = vrot.lane.b32.xlu0 %v3021, 96
  %v3023 = vpop.permute.xlu0 %3022
  %vm3024 = vcmask 917248
  %s3025 = scalar_lea.vmem %s1, 296
  %3026 = vst.msk [vmem:[%s3025] sm:$0xff] %vm3024, %v3023
  %s3027 = scalar_lea.vmem %s0, 2574
  %s3028 = smov 3
  %v3029 = vld [vmem:[%s3027] ss:$16 sm:%s3028]
  %s3030 = scalar_lea.vmem %s0, 2574
  %s3031 = smov 12
  %v3032 = vld [vmem:[%s3030] ss:$16 sm:%s3031]
  %vm3033 = vcmask 1043458
  %v3034 = vsel %vm3033, %v3032, %v3029
  %s3035 = scalar_lea.vmem %s0, 2574
  %s3036 = smov 48
  %v3037 = vld [vmem:[%s3035] ss:$16 sm:%s3036]
  %vm3038 = vcmask 1045508
  %v3039 = vsel %vm3038, %v3037, %v3034
  %s3040 = scalar_lea.vmem %s0, 2574
  %s3041 = smov 192
  %v3042 = vld [vmem:[%s3040] ss:$16 sm:%s3041]
  %vm3043 = vcmask 1047558
  %v3044 = vsel %vm3043, %v3042, %v3039
  %3045 = vrot.lane.b32.xlu0 %v3044, 96
  %v3046 = vpop.permute.xlu0 %3045
  %vm3047 = vcmask 917248
  %s3048 = scalar_lea.vmem %s1, 328
  %3049 = vst.msk [vmem:[%s3048] sm:$0xff] %vm3047, %v3046
  %s3050 = scalar_lea.vmem %s0, 2830
  %s3051 = smov 3
  %v3052 = vld [vmem:[%s3050] ss:$16 sm:%s3051]
  %s3053 = scalar_lea.vmem %s0, 2830
  %s3054 = smov 12
  %v3055 = vld [vmem:[%s3053] ss:$16 sm:%s3054]
  %vm3056 = vcmask 1043458
  %v3057 = vsel %vm3056, %v3055, %v3052
  %s3058 = scalar_lea.vmem %s0, 2830
  %s3059 = smov 48
  %v3060 = vld [vmem:[%s3058] ss:$16 sm:%s3059]
  %vm3061 = vcmask 1045508
  %v3062 = vsel %vm3061, %v3060, %v3057
  %s3063 = scalar_lea.vmem %s0, 2830
  %s3064 = smov 192
  %v3065 = vld [vmem:[%s3063] ss:$16 sm:%s3064]
  %vm3066 = vcmask 1047558
  %v3067 = vsel %vm3066, %v3065, %v3062
  %3068 = vrot.lane.b32.xlu0 %v3067, 96
  %v3069 = vpop.permute.xlu0 %3068
  %vm3070 = vcmask 917248
  %s3071 = scalar_lea.vmem %s1, 360
  %3072 = vst.msk [vmem:[%s3071] sm:$0xff] %vm3070, %v3069
  %s3073 = scalar_lea.vmem %s0, 3086
  %s3074 = smov 3
  %v3075 = vld [vmem:[%s3073] ss:$16 sm:%s3074]
  %s3076 = scalar_lea.vmem %s0, 3086
  %s3077 = smov 12
  %v3078 = vld [vmem:[%s3076] ss:$16 sm:%s3077]
  %vm3079 = vcmask 1043458
  %v3080 = vsel %vm3079, %v3078, %v3075
  %s3081 = scalar_lea.vmem %s0, 3086
  %s3082 = smov 48
  %v3083 = vld [vmem:[%s3081] ss:$16 sm:%s3082]
  %vm3084 = vcmask 1045508
  %v3085 = vsel %vm3084, %v3083, %v3080
  %s3086 = scalar_lea.vmem %s0, 3086
  %s3087 = smov 192
  %v3088 = vld [vmem:[%s3086] ss:$16 sm:%s3087]
  %vm3089 = vcmask 1047558
  %v3090 = vsel %vm3089, %v3088, %v3085
  %3091 = vrot.lane.b32.xlu0 %v3090, 96
  %v3092 = vpop.permute.xlu0 %3091
  %vm3093 = vcmask 917248
  %s3094 = scalar_lea.vmem %s1, 392
  %3095 = vst.msk [vmem:[%s3094] sm:$0xff] %vm3093, %v3092
  %s3096 = scalar_lea.vmem %s0, 3342
  %s3097 = smov 3
  %v3098 = vld [vmem:[%s3096] ss:$16 sm:%s3097]
  %s3099 = scalar_lea.vmem %s0, 3342
  %s3100 = smov 12
  %v3101 = vld [vmem:[%s3099] ss:$16 sm:%s3100]
  %vm3102 = vcmask 1043458
  %v3103 = vsel %vm3102, %v3101, %v3098
  %s3104 = scalar_lea.vmem %s0, 3342
  %s3105 = smov 48
  %v3106 = vld [vmem:[%s3104] ss:$16 sm:%s3105]
  %vm3107 = vcmask 1045508
  %v3108 = vsel %vm3107, %v3106, %v3103
  %s3109 = scalar_lea.vmem %s0, 3342
  %s3110 = smov 192
  %v3111 = vld [vmem:[%s3109] ss:$16 sm:%s3110]
  %vm3112 = vcmask 1047558
  %v3113 = vsel %vm3112, %v3111, %v3108
  %3114 = vrot.lane.b32.xlu0 %v3113, 96
  %v3115 = vpop.permute.xlu0 %3114
  %vm3116 = vcmask 917248
  %s3117 = scalar_lea.vmem %s1, 424
  %3118 = vst.msk [vmem:[%s3117] sm:$0xff] %vm3116, %v3115
  %s3119 = scalar_lea.vmem %s0, 3598
  %s3120 = smov 3
  %v3121 = vld [vmem:[%s3119] ss:$16 sm:%s3120]
  %s3122 = scalar_lea.vmem %s0, 3598
  %s3123 = smov 12
  %v3124 = vld [vmem:[%s3122] ss:$16 sm:%s3123]
  %vm3125 = vcmask 1043458
  %v3126 = vsel %vm3125, %v3124, %v3121
  %s3127 = scalar_lea.vmem %s0, 3598
  %s3128 = smov 48
  %v3129 = vld [vmem:[%s3127] ss:$16 sm:%s3128]
  %vm3130 = vcmask 1045508
  %v3131 = vsel %vm3130, %v3129, %v3126
  %s3132 = scalar_lea.vmem %s0, 3598
  %s3133 = smov 192
  %v3134 = vld [vmem:[%s3132] ss:$16 sm:%s3133]
  %vm3135 = vcmask 1047558
  %v3136 = vsel %vm3135, %v3134, %v3131
  %3137 = vrot.lane.b32.xlu0 %v3136, 96
  %v3138 = vpop.permute.xlu0 %3137
  %vm3139 = vcmask 917248
  %s3140 = scalar_lea.vmem %s1, 456
  %3141 = vst.msk [vmem:[%s3140] sm:$0xff] %vm3139, %v3138
  %s3142 = scalar_lea.vmem %s0, 3854
  %s3143 = smov 3
  %v3144 = vld [vmem:[%s3142] ss:$16 sm:%s3143]
  %s3145 = scalar_lea.vmem %s0, 3854
  %s3146 = smov 12
  %v3147 = vld [vmem:[%s3145] ss:$16 sm:%s3146]
  %vm3148 = vcmask 1043458
  %v3149 = vsel %vm3148, %v3147, %v3144
  %s3150 = scalar_lea.vmem %s0, 3854
  %s3151 = smov 48
  %v3152 = vld [vmem:[%s3150] ss:$16 sm:%s3151]
  %vm3153 = vcmask 1045508
  %v3154 = vsel %vm3153, %v3152, %v3149
  %s3155 = scalar_lea.vmem %s0, 3854
  %s3156 = smov 192
  %v3157 = vld [vmem:[%s3155] ss:$16 sm:%s3156]
  %vm3158 = vcmask 1047558
  %v3159 = vsel %vm3158, %v3157, %v3154
  %3160 = vrot.lane.b32.xlu0 %v3159, 96
  %v3161 = vpop.permute.xlu0 %3160
  %vm3162 = vcmask 917248
  %s3163 = scalar_lea.vmem %s1, 488
  %3164 = vst.msk [vmem:[%s3163] sm:$0xff] %vm3162, %v3161
  %s3165 = scalar_lea.vmem %s0, 134
  %s3166 = smov 3
  %v3167 = vld [vmem:[%s3165] ss:$16 sm:%s3166]
  %s3168 = scalar_lea.vmem %s0, 134
  %s3169 = smov 12
  %v3170 = vld [vmem:[%s3168] ss:$16 sm:%s3169]
  %vm3171 = vcmask 1043458
  %v3172 = vsel %vm3171, %v3170, %v3167
  %s3173 = scalar_lea.vmem %s0, 134
  %s3174 = smov 48
  %v3175 = vld [vmem:[%s3173] ss:$16 sm:%s3174]
  %vm3176 = vcmask 1045508
  %v3177 = vsel %vm3176, %v3175, %v3172
  %s3178 = scalar_lea.vmem %s0, 134
  %s3179 = smov 192
  %v3180 = vld [vmem:[%s3178] ss:$16 sm:%s3179]
  %vm3181 = vcmask 1047558
  %v3182 = vsel %vm3181, %v3180, %v3177
  %3183 = vrot.lane.b32.xlu0 %v3182, 96
  %v3184 = vpop.permute.xlu0 %3183
  %vm3185 = vcmask 917248
  %s3186 = scalar_lea.vmem %s1, 16
  %3187 = vst.msk [vmem:[%s3186] sm:$0xff] %vm3185, %v3184
  %s3188 = scalar_lea.vmem %s0, 390
  %s3189 = smov 3
  %v3190 = vld [vmem:[%s3188] ss:$16 sm:%s3189]
  %s3191 = scalar_lea.vmem %s0, 390
  %s3192 = smov 12
  %v3193 = vld [vmem:[%s3191] ss:$16 sm:%s3192]
  %vm3194 = vcmask 1043458
  %v3195 = vsel %vm3194, %v3193, %v3190
  %s3196 = scalar_lea.vmem %s0, 390
  %s3197 = smov 48
  %v3198 = vld [vmem:[%s3196] ss:$16 sm:%s3197]
  %vm3199 = vcmask 1045508
  %v3200 = vsel %vm3199, %v3198, %v3195
  %s3201 = scalar_lea.vmem %s0, 390
  %s3202 = smov 192
  %v3203 = vld [vmem:[%s3201] ss:$16 sm:%s3202]
  %vm3204 = vcmask 1047558
  %v3205 = vsel %vm3204, %v3203, %v3200
  %3206 = vrot.lane.b32.xlu0 %v3205, 96
  %v3207 = vpop.permute.xlu0 %3206
  %vm3208 = vcmask 917248
  %s3209 = scalar_lea.vmem %s1, 48
  %3210 = vst.msk [vmem:[%s3209] sm:$0xff] %vm3208, %v3207
  %s3211 = scalar_lea.vmem %s0, 646
  %s3212 = smov 3
  %v3213 = vld [vmem:[%s3211] ss:$16 sm:%s3212]
  %s3214 = scalar_lea.vmem %s0, 646
  %s3215 = smov 12
  %v3216 = vld [vmem:[%s3214] ss:$16 sm:%s3215]
  %vm3217 = vcmask 1043458
  %v3218 = vsel %vm3217, %v3216, %v3213
  %s3219 = scalar_lea.vmem %s0, 646
  %s3220 = smov 48
  %v3221 = vld [vmem:[%s3219] ss:$16 sm:%s3220]
  %vm3222 = vcmask 1045508
  %v3223 = vsel %vm3222, %v3221, %v3218
  %s3224 = scalar_lea.vmem %s0, 646
  %s3225 = smov 192
  %v3226 = vld [vmem:[%s3224] ss:$16 sm:%s3225]
  %vm3227 = vcmask 1047558
  %v3228 = vsel %vm3227, %v3226, %v3223
  %3229 = vrot.lane.b32.xlu0 %v3228, 96
  %v3230 = vpop.permute.xlu0 %3229
  %vm3231 = vcmask 917248
  %s3232 = scalar_lea.vmem %s1, 80
  %3233 = vst.msk [vmem:[%s3232] sm:$0xff] %vm3231, %v3230
  %s3234 = scalar_lea.vmem %s0, 902
  %s3235 = smov 3
  %v3236 = vld [vmem:[%s3234] ss:$16 sm:%s3235]
  %s3237 = scalar_lea.vmem %s0, 902
  %s3238 = smov 12
  %v3239 = vld [vmem:[%s3237] ss:$16 sm:%s3238]
  %vm3240 = vcmask 1043458
  %v3241 = vsel %vm3240, %v3239, %v3236
  %s3242 = scalar_lea.vmem %s0, 902
  %s3243 = smov 48
  %v3244 = vld [vmem:[%s3242] ss:$16 sm:%s3243]
  %vm3245 = vcmask 1045508
  %v3246 = vsel %vm3245, %v3244, %v3241
  %s3247 = scalar_lea.vmem %s0, 902
  %s3248 = smov 192
  %v3249 = vld [vmem:[%s3247] ss:$16 sm:%s3248]
  %vm3250 = vcmask 1047558
  %v3251 = vsel %vm3250, %v3249, %v3246
  %3252 = vrot.lane.b32.xlu0 %v3251, 96
  %v3253 = vpop.permute.xlu0 %3252
  %vm3254 = vcmask 917248
  %s3255 = scalar_lea.vmem %s1, 112
  %3256 = vst.msk [vmem:[%s3255] sm:$0xff] %vm3254, %v3253
  %s3257 = scalar_lea.vmem %s0, 1158
  %s3258 = smov 3
  %v3259 = vld [vmem:[%s3257] ss:$16 sm:%s3258]
  %s3260 = scalar_lea.vmem %s0, 1158
  %s3261 = smov 12
  %v3262 = vld [vmem:[%s3260] ss:$16 sm:%s3261]
  %vm3263 = vcmask 1043458
  %v3264 = vsel %vm3263, %v3262, %v3259
  %s3265 = scalar_lea.vmem %s0, 1158
  %s3266 = smov 48
  %v3267 = vld [vmem:[%s3265] ss:$16 sm:%s3266]
  %vm3268 = vcmask 1045508
  %v3269 = vsel %vm3268, %v3267, %v3264
  %s3270 = scalar_lea.vmem %s0, 1158
  %s3271 = smov 192
  %v3272 = vld [vmem:[%s3270] ss:$16 sm:%s3271]
  %vm3273 = vcmask 1047558
  %v3274 = vsel %vm3273, %v3272, %v3269
  %3275 = vrot.lane.b32.xlu0 %v3274, 96
  %v3276 = vpop.permute.xlu0 %3275
  %vm3277 = vcmask 917248
  %s3278 = scalar_lea.vmem %s1, 144
  %3279 = vst.msk [vmem:[%s3278] sm:$0xff] %vm3277, %v3276
  %s3280 = scalar_lea.vmem %s0, 1414
  %s3281 = smov 3
  %v3282 = vld [vmem:[%s3280] ss:$16 sm:%s3281]
  %s3283 = scalar_lea.vmem %s0, 1414
  %s3284 = smov 12
  %v3285 = vld [vmem:[%s3283] ss:$16 sm:%s3284]
  %vm3286 = vcmask 1043458
  %v3287 = vsel %vm3286, %v3285, %v3282
  %s3288 = scalar_lea.vmem %s0, 1414
  %s3289 = smov 48
  %v3290 = vld [vmem:[%s3288] ss:$16 sm:%s3289]
  %vm3291 = vcmask 1045508
  %v3292 = vsel %vm3291, %v3290, %v3287
  %s3293 = scalar_lea.vmem %s0, 1414
  %s3294 = smov 192
  %v3295 = vld [vmem:[%s3293] ss:$16 sm:%s3294]
  %vm3296 = vcmask 1047558
  %v3297 = vsel %vm3296, %v3295, %v3292
  %3298 = vrot.lane.b32.xlu0 %v3297, 96
  %v3299 = vpop.permute.xlu0 %3298
  %vm3300 = vcmask 917248
  %s3301 = scalar_lea.vmem %s1, 176
  %3302 = vst.msk [vmem:[%s3301] sm:$0xff] %vm3300, %v3299
  %s3303 = scalar_lea.vmem %s0, 1670
  %s3304 = smov 3
  %v3305 = vld [vmem:[%s3303] ss:$16 sm:%s3304]
  %s3306 = scalar_lea.vmem %s0, 1670
  %s3307 = smov 12
  %v3308 = vld [vmem:[%s3306] ss:$16 sm:%s3307]
  %vm3309 = vcmask 1043458
  %v3310 = vsel %vm3309, %v3308, %v3305
  %s3311 = scalar_lea.vmem %s0, 1670
  %s3312 = smov 48
  %v3313 = vld [vmem:[%s3311] ss:$16 sm:%s3312]
  %vm3314 = vcmask 1045508
  %v3315 = vsel %vm3314, %v3313, %v3310
  %s3316 = scalar_lea.vmem %s0, 1670
  %s3317 = smov 192
  %v3318 = vld [vmem:[%s3316] ss:$16 sm:%s3317]
  %vm3319 = vcmask 1047558
  %v3320 = vsel %vm3319, %v3318, %v3315
  %3321 = vrot.lane.b32.xlu0 %v3320, 96
  %v3322 = vpop.permute.xlu0 %3321
  %vm3323 = vcmask 917248
  %s3324 = scalar_lea.vmem %s1, 208
  %3325 = vst.msk [vmem:[%s3324] sm:$0xff] %vm3323, %v3322
  %s3326 = scalar_lea.vmem %s0, 1926
  %s3327 = smov 3
  %v3328 = vld [vmem:[%s3326] ss:$16 sm:%s3327]
  %s3329 = scalar_lea.vmem %s0, 1926
  %s3330 = smov 12
  %v3331 = vld [vmem:[%s3329] ss:$16 sm:%s3330]
  %vm3332 = vcmask 1043458
  %v3333 = vsel %vm3332, %v3331, %v3328
  %s3334 = scalar_lea.vmem %s0, 1926
  %s3335 = smov 48
  %v3336 = vld [vmem:[%s3334] ss:$16 sm:%s3335]
  %vm3337 = vcmask 1045508
  %v3338 = vsel %vm3337, %v3336, %v3333
  %s3339 = scalar_lea.vmem %s0, 1926
  %s3340 = smov 192
  %v3341 = vld [vmem:[%s3339] ss:$16 sm:%s3340]
  %vm3342 = vcmask 1047558
  %v3343 = vsel %vm3342, %v3341, %v3338
  %3344 = vrot.lane.b32.xlu0 %v3343, 96
  %v3345 = vpop.permute.xlu0 %3344
  %vm3346 = vcmask 917248
  %s3347 = scalar_lea.vmem %s1, 240
  %3348 = vst.msk [vmem:[%s3347] sm:$0xff] %vm3346, %v3345
  %s3349 = scalar_lea.vmem %s0, 2182
  %s3350 = smov 3
  %v3351 = vld [vmem:[%s3349] ss:$16 sm:%s3350]
  %s3352 = scalar_lea.vmem %s0, 2182
  %s3353 = smov 12
  %v3354 = vld [vmem:[%s3352] ss:$16 sm:%s3353]
  %vm3355 = vcmask 1043458
  %v3356 = vsel %vm3355, %v3354, %v3351
  %s3357 = scalar_lea.vmem %s0, 2182
  %s3358 = smov 48
  %v3359 = vld [vmem:[%s3357] ss:$16 sm:%s3358]
  %vm3360 = vcmask 1045508
  %v3361 = vsel %vm3360, %v3359, %v3356
  %s3362 = scalar_lea.vmem %s0, 2182
  %s3363 = smov 192
  %v3364 = vld [vmem:[%s3362] ss:$16 sm:%s3363]
  %vm3365 = vcmask 1047558
  %v3366 = vsel %vm3365, %v3364, %v3361
  %3367 = vrot.lane.b32.xlu0 %v3366, 96
  %v3368 = vpop.permute.xlu0 %3367
  %vm3369 = vcmask 917248
  %s3370 = scalar_lea.vmem %s1, 272
  %3371 = vst.msk [vmem:[%s3370] sm:$0xff] %vm3369, %v3368
  %s3372 = scalar_lea.vmem %s0, 2438
  %s3373 = smov 3
  %v3374 = vld [vmem:[%s3372] ss:$16 sm:%s3373]
  %s3375 = scalar_lea.vmem %s0, 2438
  %s3376 = smov 12
  %v3377 = vld [vmem:[%s3375] ss:$16 sm:%s3376]
  %vm3378 = vcmask 1043458
  %v3379 = vsel %vm3378, %v3377, %v3374
  %s3380 = scalar_lea.vmem %s0, 2438
  %s3381 = smov 48
  %v3382 = vld [vmem:[%s3380] ss:$16 sm:%s3381]
  %vm3383 = vcmask 1045508
  %v3384 = vsel %vm3383, %v3382, %v3379
  %s3385 = scalar_lea.vmem %s0, 2438
  %s3386 = smov 192
  %v3387 = vld [vmem:[%s3385] ss:$16 sm:%s3386]
  %vm3388 = vcmask 1047558
  %v3389 = vsel %vm3388, %v3387, %v3384
  %3390 = vrot.lane.b32.xlu0 %v3389, 96
  %v3391 = vpop.permute.xlu0 %3390
  %vm3392 = vcmask 917248
  %s3393 = scalar_lea.vmem %s1, 304
  %3394 = vst.msk [vmem:[%s3393] sm:$0xff] %vm3392, %v3391
  %s3395 = scalar_lea.vmem %s0, 2694
  %s3396 = smov 3
  %v3397 = vld [vmem:[%s3395] ss:$16 sm:%s3396]
  %s3398 = scalar_lea.vmem %s0, 2694
  %s3399 = smov 12
  %v3400 = vld [vmem:[%s3398] ss:$16 sm:%s3399]
  %vm3401 = vcmask 1043458
  %v3402 = vsel %vm3401, %v3400, %v3397
  %s3403 = scalar_lea.vmem %s0, 2694
  %s3404 = smov 48
  %v3405 = vld [vmem:[%s3403] ss:$16 sm:%s3404]
  %vm3406 = vcmask 1045508
  %v3407 = vsel %vm3406, %v3405, %v3402
  %s3408 = scalar_lea.vmem %s0, 2694
  %s3409 = smov 192
  %v3410 = vld [vmem:[%s3408] ss:$16 sm:%s3409]
  %vm3411 = vcmask 1047558
  %v3412 = vsel %vm3411, %v3410, %v3407
  %3413 = vrot.lane.b32.xlu0 %v3412, 96
  %v3414 = vpop.permute.xlu0 %3413
  %vm3415 = vcmask 917248
  %s3416 = scalar_lea.vmem %s1, 336
  %3417 = vst.msk [vmem:[%s3416] sm:$0xff] %vm3415, %v3414
  %s3418 = scalar_lea.vmem %s0, 2950
  %s3419 = smov 3
  %v3420 = vld [vmem:[%s3418] ss:$16 sm:%s3419]
  %s3421 = scalar_lea.vmem %s0, 2950
  %s3422 = smov 12
  %v3423 = vld [vmem:[%s3421] ss:$16 sm:%s3422]
  %vm3424 = vcmask 1043458
  %v3425 = vsel %vm3424, %v3423, %v3420
  %s3426 = scalar_lea.vmem %s0, 2950
  %s3427 = smov 48
  %v3428 = vld [vmem:[%s3426] ss:$16 sm:%s3427]
  %vm3429 = vcmask 1045508
  %v3430 = vsel %vm3429, %v3428, %v3425
  %s3431 = scalar_lea.vmem %s0, 2950
  %s3432 = smov 192
  %v3433 = vld [vmem:[%s3431] ss:$16 sm:%s3432]
  %vm3434 = vcmask 1047558
  %v3435 = vsel %vm3434, %v3433, %v3430
  %3436 = vrot.lane.b32.xlu0 %v3435, 96
  %v3437 = vpop.permute.xlu0 %3436
  %vm3438 = vcmask 917248
  %s3439 = scalar_lea.vmem %s1, 368
  %3440 = vst.msk [vmem:[%s3439] sm:$0xff] %vm3438, %v3437
  %s3441 = scalar_lea.vmem %s0, 3206
  %s3442 = smov 3
  %v3443 = vld [vmem:[%s3441] ss:$16 sm:%s3442]
  %s3444 = scalar_lea.vmem %s0, 3206
  %s3445 = smov 12
  %v3446 = vld [vmem:[%s3444] ss:$16 sm:%s3445]
  %vm3447 = vcmask 1043458
  %v3448 = vsel %vm3447, %v3446, %v3443
  %s3449 = scalar_lea.vmem %s0, 3206
  %s3450 = smov 48
  %v3451 = vld [vmem:[%s3449] ss:$16 sm:%s3450]
  %vm3452 = vcmask 1045508
  %v3453 = vsel %vm3452, %v3451, %v3448
  %s3454 = scalar_lea.vmem %s0, 3206
  %s3455 = smov 192
  %v3456 = vld [vmem:[%s3454] ss:$16 sm:%s3455]
  %vm3457 = vcmask 1047558
  %v3458 = vsel %vm3457, %v3456, %v3453
  %3459 = vrot.lane.b32.xlu0 %v3458, 96
  %v3460 = vpop.permute.xlu0 %3459
  %vm3461 = vcmask 917248
  %s3462 = scalar_lea.vmem %s1, 400
  %3463 = vst.msk [vmem:[%s3462] sm:$0xff] %vm3461, %v3460
  %s3464 = scalar_lea.vmem %s0, 3462
  %s3465 = smov 3
  %v3466 = vld [vmem:[%s3464] ss:$16 sm:%s3465]
  %s3467 = scalar_lea.vmem %s0, 3462
  %s3468 = smov 12
  %v3469 = vld [vmem:[%s3467] ss:$16 sm:%s3468]
  %vm3470 = vcmask 1043458
  %v3471 = vsel %vm3470, %v3469, %v3466
  %s3472 = scalar_lea.vmem %s0, 3462
  %s3473 = smov 48
  %v3474 = vld [vmem:[%s3472] ss:$16 sm:%s3473]
  %vm3475 = vcmask 1045508
  %v3476 = vsel %vm3475, %v3474, %v3471
  %s3477 = scalar_lea.vmem %s0, 3462
  %s3478 = smov 192
  %v3479 = vld [vmem:[%s3477] ss:$16 sm:%s3478]
  %vm3480 = vcmask 1047558
  %v3481 = vsel %vm3480, %v3479, %v3476
  %3482 = vrot.lane.b32.xlu0 %v3481, 96
  %v3483 = vpop.permute.xlu0 %3482
  %vm3484 = vcmask 917248
  %s3485 = scalar_lea.vmem %s1, 432
  %3486 = vst.msk [vmem:[%s3485] sm:$0xff] %vm3484, %v3483
  %s3487 = scalar_lea.vmem %s0, 3718
  %s3488 = smov 3
  %v3489 = vld [vmem:[%s3487] ss:$16 sm:%s3488]
  %s3490 = scalar_lea.vmem %s0, 3718
  %s3491 = smov 12
  %v3492 = vld [vmem:[%s3490] ss:$16 sm:%s3491]
  %vm3493 = vcmask 1043458
  %v3494 = vsel %vm3493, %v3492, %v3489
  %s3495 = scalar_lea.vmem %s0, 3718
  %s3496 = smov 48
  %v3497 = vld [vmem:[%s3495] ss:$16 sm:%s3496]
  %vm3498 = vcmask 1045508
  %v3499 = vsel %vm3498, %v3497, %v3494
  %s3500 = scalar_lea.vmem %s0, 3718
  %s3501 = smov 192
  %v3502 = vld [vmem:[%s3500] ss:$16 sm:%s3501]
  %vm3503 = vcmask 1047558
  %v3504 = vsel %vm3503, %v3502, %v3499
  %3505 = vrot.lane.b32.xlu0 %v3504, 96
  %v3506 = vpop.permute.xlu0 %3505
  %vm3507 = vcmask 917248
  %s3508 = scalar_lea.vmem %s1, 464
  %3509 = vst.msk [vmem:[%s3508] sm:$0xff] %vm3507, %v3506
  %s3510 = scalar_lea.vmem %s0, 3974
  %s3511 = smov 3
  %v3512 = vld [vmem:[%s3510] ss:$16 sm:%s3511]
  %s3513 = scalar_lea.vmem %s0, 3974
  %s3514 = smov 12
  %v3515 = vld [vmem:[%s3513] ss:$16 sm:%s3514]
  %vm3516 = vcmask 1043458
  %v3517 = vsel %vm3516, %v3515, %v3512
  %s3518 = scalar_lea.vmem %s0, 3974
  %s3519 = smov 48
  %v3520 = vld [vmem:[%s3518] ss:$16 sm:%s3519]
  %vm3521 = vcmask 1045508
  %v3522 = vsel %vm3521, %v3520, %v3517
  %s3523 = scalar_lea.vmem %s0, 3974
  %s3524 = smov 192
  %v3525 = vld [vmem:[%s3523] ss:$16 sm:%s3524]
  %vm3526 = vcmask 1047558
  %v3527 = vsel %vm3526, %v3525, %v3522
  %3528 = vrot.lane.b32.xlu0 %v3527, 96
  %v3529 = vpop.permute.xlu0 %3528
  %vm3530 = vcmask 917248
  %s3531 = scalar_lea.vmem %s1, 496
  %3532 = vst.msk [vmem:[%s3531] sm:$0xff] %vm3530, %v3529
  %s3533 = scalar_lea.vmem %s0, 142
  %s3534 = smov 3
  %v3535 = vld [vmem:[%s3533] ss:$16 sm:%s3534]
  %s3536 = scalar_lea.vmem %s0, 142
  %s3537 = smov 12
  %v3538 = vld [vmem:[%s3536] ss:$16 sm:%s3537]
  %vm3539 = vcmask 1043458
  %v3540 = vsel %vm3539, %v3538, %v3535
  %s3541 = scalar_lea.vmem %s0, 142
  %s3542 = smov 48
  %v3543 = vld [vmem:[%s3541] ss:$16 sm:%s3542]
  %vm3544 = vcmask 1045508
  %v3545 = vsel %vm3544, %v3543, %v3540
  %s3546 = scalar_lea.vmem %s0, 142
  %s3547 = smov 192
  %v3548 = vld [vmem:[%s3546] ss:$16 sm:%s3547]
  %vm3549 = vcmask 1047558
  %v3550 = vsel %vm3549, %v3548, %v3545
  %3551 = vrot.lane.b32.xlu0 %v3550, 96
  %v3552 = vpop.permute.xlu0 %3551
  %vm3553 = vcmask 917248
  %s3554 = scalar_lea.vmem %s1, 24
  %3555 = vst.msk [vmem:[%s3554] sm:$0xff] %vm3553, %v3552
  %s3556 = scalar_lea.vmem %s0, 398
  %s3557 = smov 3
  %v3558 = vld [vmem:[%s3556] ss:$16 sm:%s3557]
  %s3559 = scalar_lea.vmem %s0, 398
  %s3560 = smov 12
  %v3561 = vld [vmem:[%s3559] ss:$16 sm:%s3560]
  %vm3562 = vcmask 1043458
  %v3563 = vsel %vm3562, %v3561, %v3558
  %s3564 = scalar_lea.vmem %s0, 398
  %s3565 = smov 48
  %v3566 = vld [vmem:[%s3564] ss:$16 sm:%s3565]
  %vm3567 = vcmask 1045508
  %v3568 = vsel %vm3567, %v3566, %v3563
  %s3569 = scalar_lea.vmem %s0, 398
  %s3570 = smov 192
  %v3571 = vld [vmem:[%s3569] ss:$16 sm:%s3570]
  %vm3572 = vcmask 1047558
  %v3573 = vsel %vm3572, %v3571, %v3568
  %3574 = vrot.lane.b32.xlu0 %v3573, 96
  %v3575 = vpop.permute.xlu0 %3574
  %vm3576 = vcmask 917248
  %s3577 = scalar_lea.vmem %s1, 56
  %3578 = vst.msk [vmem:[%s3577] sm:$0xff] %vm3576, %v3575
  %s3579 = scalar_lea.vmem %s0, 654
  %s3580 = smov 3
  %v3581 = vld [vmem:[%s3579] ss:$16 sm:%s3580]
  %s3582 = scalar_lea.vmem %s0, 654
  %s3583 = smov 12
  %v3584 = vld [vmem:[%s3582] ss:$16 sm:%s3583]
  %vm3585 = vcmask 1043458
  %v3586 = vsel %vm3585, %v3584, %v3581
  %s3587 = scalar_lea.vmem %s0, 654
  %s3588 = smov 48
  %v3589 = vld [vmem:[%s3587] ss:$16 sm:%s3588]
  %vm3590 = vcmask 1045508
  %v3591 = vsel %vm3590, %v3589, %v3586
  %s3592 = scalar_lea.vmem %s0, 654
  %s3593 = smov 192
  %v3594 = vld [vmem:[%s3592] ss:$16 sm:%s3593]
  %vm3595 = vcmask 1047558
  %v3596 = vsel %vm3595, %v3594, %v3591
  %3597 = vrot.lane.b32.xlu0 %v3596, 96
  %v3598 = vpop.permute.xlu0 %3597
  %vm3599 = vcmask 917248
  %s3600 = scalar_lea.vmem %s1, 88
  %3601 = vst.msk [vmem:[%s3600] sm:$0xff] %vm3599, %v3598
  %s3602 = scalar_lea.vmem %s0, 910
  %s3603 = smov 3
  %v3604 = vld [vmem:[%s3602] ss:$16 sm:%s3603]
  %s3605 = scalar_lea.vmem %s0, 910
  %s3606 = smov 12
  %v3607 = vld [vmem:[%s3605] ss:$16 sm:%s3606]
  %vm3608 = vcmask 1043458
  %v3609 = vsel %vm3608, %v3607, %v3604
  %s3610 = scalar_lea.vmem %s0, 910
  %s3611 = smov 48
  %v3612 = vld [vmem:[%s3610] ss:$16 sm:%s3611]
  %vm3613 = vcmask 1045508
  %v3614 = vsel %vm3613, %v3612, %v3609
  %s3615 = scalar_lea.vmem %s0, 910
  %s3616 = smov 192
  %v3617 = vld [vmem:[%s3615] ss:$16 sm:%s3616]
  %vm3618 = vcmask 1047558
  %v3619 = vsel %vm3618, %v3617, %v3614
  %3620 = vrot.lane.b32.xlu0 %v3619, 96
  %v3621 = vpop.permute.xlu0 %3620
  %vm3622 = vcmask 917248
  %s3623 = scalar_lea.vmem %s1, 120
  %3624 = vst.msk [vmem:[%s3623] sm:$0xff] %vm3622, %v3621
  %s3625 = scalar_lea.vmem %s0, 1166
  %s3626 = smov 3
  %v3627 = vld [vmem:[%s3625] ss:$16 sm:%s3626]
  %s3628 = scalar_lea.vmem %s0, 1166
  %s3629 = smov 12
  %v3630 = vld [vmem:[%s3628] ss:$16 sm:%s3629]
  %vm3631 = vcmask 1043458
  %v3632 = vsel %vm3631, %v3630, %v3627
  %s3633 = scalar_lea.vmem %s0, 1166
  %s3634 = smov 48
  %v3635 = vld [vmem:[%s3633] ss:$16 sm:%s3634]
  %vm3636 = vcmask 1045508
  %v3637 = vsel %vm3636, %v3635, %v3632
  %s3638 = scalar_lea.vmem %s0, 1166
  %s3639 = smov 192
  %v3640 = vld [vmem:[%s3638] ss:$16 sm:%s3639]
  %vm3641 = vcmask 1047558
  %v3642 = vsel %vm3641, %v3640, %v3637
  %3643 = vrot.lane.b32.xlu0 %v3642, 96
  %v3644 = vpop.permute.xlu0 %3643
  %vm3645 = vcmask 917248
  %s3646 = scalar_lea.vmem %s1, 152
  %3647 = vst.msk [vmem:[%s3646] sm:$0xff] %vm3645, %v3644
  %s3648 = scalar_lea.vmem %s0, 1422
  %s3649 = smov 3
  %v3650 = vld [vmem:[%s3648] ss:$16 sm:%s3649]
  %s3651 = scalar_lea.vmem %s0, 1422
  %s3652 = smov 12
  %v3653 = vld [vmem:[%s3651] ss:$16 sm:%s3652]
  %vm3654 = vcmask 1043458
  %v3655 = vsel %vm3654, %v3653, %v3650
  %s3656 = scalar_lea.vmem %s0, 1422
  %s3657 = smov 48
  %v3658 = vld [vmem:[%s3656] ss:$16 sm:%s3657]
  %vm3659 = vcmask 1045508
  %v3660 = vsel %vm3659, %v3658, %v3655
  %s3661 = scalar_lea.vmem %s0, 1422
  %s3662 = smov 192
  %v3663 = vld [vmem:[%s3661] ss:$16 sm:%s3662]
  %vm3664 = vcmask 1047558
  %v3665 = vsel %vm3664, %v3663, %v3660
  %3666 = vrot.lane.b32.xlu0 %v3665, 96
  %v3667 = vpop.permute.xlu0 %3666
  %vm3668 = vcmask 917248
  %s3669 = scalar_lea.vmem %s1, 184
  %3670 = vst.msk [vmem:[%s3669] sm:$0xff] %vm3668, %v3667
  %s3671 = scalar_lea.vmem %s0, 1678
  %s3672 = smov 3
  %v3673 = vld [vmem:[%s3671] ss:$16 sm:%s3672]
  %s3674 = scalar_lea.vmem %s0, 1678
  %s3675 = smov 12
  %v3676 = vld [vmem:[%s3674] ss:$16 sm:%s3675]
  %vm3677 = vcmask 1043458
  %v3678 = vsel %vm3677, %v3676, %v3673
  %s3679 = scalar_lea.vmem %s0, 1678
  %s3680 = smov 48
  %v3681 = vld [vmem:[%s3679] ss:$16 sm:%s3680]
  %vm3682 = vcmask 1045508
  %v3683 = vsel %vm3682, %v3681, %v3678
  %s3684 = scalar_lea.vmem %s0, 1678
  %s3685 = smov 192
  %v3686 = vld [vmem:[%s3684] ss:$16 sm:%s3685]
  %vm3687 = vcmask 1047558
  %v3688 = vsel %vm3687, %v3686, %v3683
  %3689 = vrot.lane.b32.xlu0 %v3688, 96
  %v3690 = vpop.permute.xlu0 %3689
  %vm3691 = vcmask 917248
  %s3692 = scalar_lea.vmem %s1, 216
  %3693 = vst.msk [vmem:[%s3692] sm:$0xff] %vm3691, %v3690
  %s3694 = scalar_lea.vmem %s0, 1934
  %s3695 = smov 3
  %v3696 = vld [vmem:[%s3694] ss:$16 sm:%s3695]
  %s3697 = scalar_lea.vmem %s0, 1934
  %s3698 = smov 12
  %v3699 = vld [vmem:[%s3697] ss:$16 sm:%s3698]
  %vm3700 = vcmask 1043458
  %v3701 = vsel %vm3700, %v3699, %v3696
  %s3702 = scalar_lea.vmem %s0, 1934
  %s3703 = smov 48
  %v3704 = vld [vmem:[%s3702] ss:$16 sm:%s3703]
  %vm3705 = vcmask 1045508
  %v3706 = vsel %vm3705, %v3704, %v3701
  %s3707 = scalar_lea.vmem %s0, 1934
  %s3708 = smov 192
  %v3709 = vld [vmem:[%s3707] ss:$16 sm:%s3708]
  %vm3710 = vcmask 1047558
  %v3711 = vsel %vm3710, %v3709, %v3706
  %3712 = vrot.lane.b32.xlu0 %v3711, 96
  %v3713 = vpop.permute.xlu0 %3712
  %vm3714 = vcmask 917248
  %s3715 = scalar_lea.vmem %s1, 248
  %3716 = vst.msk [vmem:[%s3715] sm:$0xff] %vm3714, %v3713
  %s3717 = scalar_lea.vmem %s0, 2190
  %s3718 = smov 3
  %v3719 = vld [vmem:[%s3717] ss:$16 sm:%s3718]
  %s3720 = scalar_lea.vmem %s0, 2190
  %s3721 = smov 12
  %v3722 = vld [vmem:[%s3720] ss:$16 sm:%s3721]
  %vm3723 = vcmask 1043458
  %v3724 = vsel %vm3723, %v3722, %v3719
  %s3725 = scalar_lea.vmem %s0, 2190
  %s3726 = smov 48
  %v3727 = vld [vmem:[%s3725] ss:$16 sm:%s3726]
  %vm3728 = vcmask 1045508
  %v3729 = vsel %vm3728, %v3727, %v3724
  %s3730 = scalar_lea.vmem %s0, 2190
  %s3731 = smov 192
  %v3732 = vld [vmem:[%s3730] ss:$16 sm:%s3731]
  %vm3733 = vcmask 1047558
  %v3734 = vsel %vm3733, %v3732, %v3729
  %3735 = vrot.lane.b32.xlu0 %v3734, 96
  %v3736 = vpop.permute.xlu0 %3735
  %vm3737 = vcmask 917248
  %s3738 = scalar_lea.vmem %s1, 280
  %3739 = vst.msk [vmem:[%s3738] sm:$0xff] %vm3737, %v3736
  %s3740 = scalar_lea.vmem %s0, 2446
  %s3741 = smov 3
  %v3742 = vld [vmem:[%s3740] ss:$16 sm:%s3741]
  %s3743 = scalar_lea.vmem %s0, 2446
  %s3744 = smov 12
  %v3745 = vld [vmem:[%s3743] ss:$16 sm:%s3744]
  %vm3746 = vcmask 1043458
  %v3747 = vsel %vm3746, %v3745, %v3742
  %s3748 = scalar_lea.vmem %s0, 2446
  %s3749 = smov 48
  %v3750 = vld [vmem:[%s3748] ss:$16 sm:%s3749]
  %vm3751 = vcmask 1045508
  %v3752 = vsel %vm3751, %v3750, %v3747
  %s3753 = scalar_lea.vmem %s0, 2446
  %s3754 = smov 192
  %v3755 = vld [vmem:[%s3753] ss:$16 sm:%s3754]
  %vm3756 = vcmask 1047558
  %v3757 = vsel %vm3756, %v3755, %v3752
  %3758 = vrot.lane.b32.xlu0 %v3757, 96
  %v3759 = vpop.permute.xlu0 %3758
  %vm3760 = vcmask 917248
  %s3761 = scalar_lea.vmem %s1, 312
  %3762 = vst.msk [vmem:[%s3761] sm:$0xff] %vm3760, %v3759
  %s3763 = scalar_lea.vmem %s0, 2702
  %s3764 = smov 3
  %v3765 = vld [vmem:[%s3763] ss:$16 sm:%s3764]
  %s3766 = scalar_lea.vmem %s0, 2702
  %s3767 = smov 12
  %v3768 = vld [vmem:[%s3766] ss:$16 sm:%s3767]
  %vm3769 = vcmask 1043458
  %v3770 = vsel %vm3769, %v3768, %v3765
  %s3771 = scalar_lea.vmem %s0, 2702
  %s3772 = smov 48
  %v3773 = vld [vmem:[%s3771] ss:$16 sm:%s3772]
  %vm3774 = vcmask 1045508
  %v3775 = vsel %vm3774, %v3773, %v3770
  %s3776 = scalar_lea.vmem %s0, 2702
  %s3777 = smov 192
  %v3778 = vld [vmem:[%s3776] ss:$16 sm:%s3777]
  %vm3779 = vcmask 1047558
  %v3780 = vsel %vm3779, %v3778, %v3775
  %3781 = vrot.lane.b32.xlu0 %v3780, 96
  %v3782 = vpop.permute.xlu0 %3781
  %vm3783 = vcmask 917248
  %s3784 = scalar_lea.vmem %s1, 344
  %3785 = vst.msk [vmem:[%s3784] sm:$0xff] %vm3783, %v3782
  %s3786 = scalar_lea.vmem %s0, 2958
  %s3787 = smov 3
  %v3788 = vld [vmem:[%s3786] ss:$16 sm:%s3787]
  %s3789 = scalar_lea.vmem %s0, 2958
  %s3790 = smov 12
  %v3791 = vld [vmem:[%s3789] ss:$16 sm:%s3790]
  %vm3792 = vcmask 1043458
  %v3793 = vsel %vm3792, %v3791, %v3788
  %s3794 = scalar_lea.vmem %s0, 2958
  %s3795 = smov 48
  %v3796 = vld [vmem:[%s3794] ss:$16 sm:%s3795]
  %vm3797 = vcmask 1045508
  %v3798 = vsel %vm3797, %v3796, %v3793
  %s3799 = scalar_lea.vmem %s0, 2958
  %s3800 = smov 192
  %v3801 = vld [vmem:[%s3799] ss:$16 sm:%s3800]
  %vm3802 = vcmask 1047558
  %v3803 = vsel %vm3802, %v3801, %v3798
  %3804 = vrot.lane.b32.xlu0 %v3803, 96
  %v3805 = vpop.permute.xlu0 %3804
  %vm3806 = vcmask 917248
  %s3807 = scalar_lea.vmem %s1, 376
  %3808 = vst.msk [vmem:[%s3807] sm:$0xff] %vm3806, %v3805
  %s3809 = scalar_lea.vmem %s0, 3214
  %s3810 = smov 3
  %v3811 = vld [vmem:[%s3809] ss:$16 sm:%s3810]
  %s3812 = scalar_lea.vmem %s0, 3214
  %s3813 = smov 12
  %v3814 = vld [vmem:[%s3812] ss:$16 sm:%s3813]
  %vm3815 = vcmask 1043458
  %v3816 = vsel %vm3815, %v3814, %v3811
  %s3817 = scalar_lea.vmem %s0, 3214
  %s3818 = smov 48
  %v3819 = vld [vmem:[%s3817] ss:$16 sm:%s3818]
  %vm3820 = vcmask 1045508
  %v3821 = vsel %vm3820, %v3819, %v3816
  %s3822 = scalar_lea.vmem %s0, 3214
  %s3823 = smov 192
  %v3824 = vld [vmem:[%s3822] ss:$16 sm:%s3823]
  %vm3825 = vcmask 1047558
  %v3826 = vsel %vm3825, %v3824, %v3821
  %3827 = vrot.lane.b32.xlu0 %v3826, 96
  %v3828 = vpop.permute.xlu0 %3827
  %vm3829 = vcmask 917248
  %s3830 = scalar_lea.vmem %s1, 408
  %3831 = vst.msk [vmem:[%s3830] sm:$0xff] %vm3829, %v3828
  %s3832 = scalar_lea.vmem %s0, 3470
  %s3833 = smov 3
  %v3834 = vld [vmem:[%s3832] ss:$16 sm:%s3833]
  %s3835 = scalar_lea.vmem %s0, 3470
  %s3836 = smov 12
  %v3837 = vld [vmem:[%s3835] ss:$16 sm:%s3836]
  %vm3838 = vcmask 1043458
  %v3839 = vsel %vm3838, %v3837, %v3834
  %s3840 = scalar_lea.vmem %s0, 3470
  %s3841 = smov 48
  %v3842 = vld [vmem:[%s3840] ss:$16 sm:%s3841]
  %vm3843 = vcmask 1045508
  %v3844 = vsel %vm3843, %v3842, %v3839
  %s3845 = scalar_lea.vmem %s0, 3470
  %s3846 = smov 192
  %v3847 = vld [vmem:[%s3845] ss:$16 sm:%s3846]
  %vm3848 = vcmask 1047558
  %v3849 = vsel %vm3848, %v3847, %v3844
  %3850 = vrot.lane.b32.xlu0 %v3849, 96
  %v3851 = vpop.permute.xlu0 %3850
  %vm3852 = vcmask 917248
  %s3853 = scalar_lea.vmem %s1, 440
  %3854 = vst.msk [vmem:[%s3853] sm:$0xff] %vm3852, %v3851
  %s3855 = scalar_lea.vmem %s0, 3726
  %s3856 = smov 3
  %v3857 = vld [vmem:[%s3855] ss:$16 sm:%s3856]
  %s3858 = scalar_lea.vmem %s0, 3726
  %s3859 = smov 12
  %v3860 = vld [vmem:[%s3858] ss:$16 sm:%s3859]
  %vm3861 = vcmask 1043458
  %v3862 = vsel %vm3861, %v3860, %v3857
  %s3863 = scalar_lea.vmem %s0, 3726
  %s3864 = smov 48
  %v3865 = vld [vmem:[%s3863] ss:$16 sm:%s3864]
  %vm3866 = vcmask 1045508
  %v3867 = vsel %vm3866, %v3865, %v3862
  %s3868 = scalar_lea.vmem %s0, 3726
  %s3869 = smov 192
  %v3870 = vld [vmem:[%s3868] ss:$16 sm:%s3869]
  %vm3871 = vcmask 1047558
  %v3872 = vsel %vm3871, %v3870, %v3867
  %3873 = vrot.lane.b32.xlu0 %v3872, 96
  %v3874 = vpop.permute.xlu0 %3873
  %vm3875 = vcmask 917248
  %s3876 = scalar_lea.vmem %s1, 472
  %3877 = vst.msk [vmem:[%s3876] sm:$0xff] %vm3875, %v3874
  %s3878 = scalar_lea.vmem %s0, 3982
  %s3879 = smov 3
  %v3880 = vld [vmem:[%s3878] ss:$16 sm:%s3879]
  %s3881 = scalar_lea.vmem %s0, 3982
  %s3882 = smov 12
  %v3883 = vld [vmem:[%s3881] ss:$16 sm:%s3882]
  %vm3884 = vcmask 1043458
  %v3885 = vsel %vm3884, %v3883, %v3880
  %s3886 = scalar_lea.vmem %s0, 3982
  %s3887 = smov 48
  %v3888 = vld [vmem:[%s3886] ss:$16 sm:%s3887]
  %vm3889 = vcmask 1045508
  %v3890 = vsel %vm3889, %v3888, %v3885
  %s3891 = scalar_lea.vmem %s0, 3982
  %s3892 = smov 192
  %v3893 = vld [vmem:[%s3891] ss:$16 sm:%s3892]
  %vm3894 = vcmask 1047558
  %v3895 = vsel %vm3894, %v3893, %v3890
  %3896 = vrot.lane.b32.xlu0 %v3895, 96
  %v3897 = vpop.permute.xlu0 %3896
  %vm3898 = vcmask 917248
  %s3899 = scalar_lea.vmem %s1, 504
  %3900 = vst.msk [vmem:[%s3899] sm:$0xff] %vm3898, %v3897
  %s3901 = scalar_lea.vmem %s0, 5
  %s3902 = smov 3
  %v3903 = vld [vmem:[%s3901] ss:$16 sm:%s3902]
  %s3904 = scalar_lea.vmem %s0, 5
  %s3905 = smov 12
  %v3906 = vld [vmem:[%s3904] ss:$16 sm:%s3905]
  %vm3907 = vcmask 1043458
  %v3908 = vsel %vm3907, %v3906, %v3903
  %s3909 = scalar_lea.vmem %s0, 5
  %s3910 = smov 48
  %v3911 = vld [vmem:[%s3909] ss:$16 sm:%s3910]
  %vm3912 = vcmask 1045508
  %v3913 = vsel %vm3912, %v3911, %v3908
  %s3914 = scalar_lea.vmem %s0, 5
  %s3915 = smov 192
  %v3916 = vld [vmem:[%s3914] ss:$16 sm:%s3915]
  %vm3917 = vcmask 1047558
  %v3918 = vsel %vm3917, %v3916, %v3913
  %3919 = vrot.lane.b32.xlu0 %v3918, 80
  %v3920 = vpop.permute.xlu0 %3919
  %vm3921 = vcmask 786048
  %3922 = vst.msk [vmem:[%s1] sm:$0xff] %vm3921, %v3920
  %s3923 = scalar_lea.vmem %s0, 261
  %s3924 = smov 3
  %v3925 = vld [vmem:[%s3923] ss:$16 sm:%s3924]
  %s3926 = scalar_lea.vmem %s0, 261
  %s3927 = smov 12
  %v3928 = vld [vmem:[%s3926] ss:$16 sm:%s3927]
  %vm3929 = vcmask 1043458
  %v3930 = vsel %vm3929, %v3928, %v3925
  %s3931 = scalar_lea.vmem %s0, 261
  %s3932 = smov 48
  %v3933 = vld [vmem:[%s3931] ss:$16 sm:%s3932]
  %vm3934 = vcmask 1045508
  %v3935 = vsel %vm3934, %v3933, %v3930
  %s3936 = scalar_lea.vmem %s0, 261
  %s3937 = smov 192
  %v3938 = vld [vmem:[%s3936] ss:$16 sm:%s3937]
  %vm3939 = vcmask 1047558
  %v3940 = vsel %vm3939, %v3938, %v3935
  %3941 = vrot.lane.b32.xlu0 %v3940, 80
  %v3942 = vpop.permute.xlu0 %3941
  %vm3943 = vcmask 786048
  %s3944 = scalar_lea.vmem %s1, 32
  %3945 = vst.msk [vmem:[%s3944] sm:$0xff] %vm3943, %v3942
  %s3946 = scalar_lea.vmem %s0, 517
  %s3947 = smov 3
  %v3948 = vld [vmem:[%s3946] ss:$16 sm:%s3947]
  %s3949 = scalar_lea.vmem %s0, 517
  %s3950 = smov 12
  %v3951 = vld [vmem:[%s3949] ss:$16 sm:%s3950]
  %vm3952 = vcmask 1043458
  %v3953 = vsel %vm3952, %v3951, %v3948
  %s3954 = scalar_lea.vmem %s0, 517
  %s3955 = smov 48
  %v3956 = vld [vmem:[%s3954] ss:$16 sm:%s3955]
  %vm3957 = vcmask 1045508
  %v3958 = vsel %vm3957, %v3956, %v3953
  %s3959 = scalar_lea.vmem %s0, 517
  %s3960 = smov 192
  %v3961 = vld [vmem:[%s3959] ss:$16 sm:%s3960]
  %vm3962 = vcmask 1047558
  %v3963 = vsel %vm3962, %v3961, %v3958
  %3964 = vrot.lane.b32.xlu0 %v3963, 80
  %v3965 = vpop.permute.xlu0 %3964
  %vm3966 = vcmask 786048
  %s3967 = scalar_lea.vmem %s1, 64
  %3968 = vst.msk [vmem:[%s3967] sm:$0xff] %vm3966, %v3965
  %s3969 = scalar_lea.vmem %s0, 773
  %s3970 = smov 3
  %v3971 = vld [vmem:[%s3969] ss:$16 sm:%s3970]
  %s3972 = scalar_lea.vmem %s0, 773
  %s3973 = smov 12
  %v3974 = vld [vmem:[%s3972] ss:$16 sm:%s3973]
  %vm3975 = vcmask 1043458
  %v3976 = vsel %vm3975, %v3974, %v3971
  %s3977 = scalar_lea.vmem %s0, 773
  %s3978 = smov 48
  %v3979 = vld [vmem:[%s3977] ss:$16 sm:%s3978]
  %vm3980 = vcmask 1045508
  %v3981 = vsel %vm3980, %v3979, %v3976
  %s3982 = scalar_lea.vmem %s0, 773
  %s3983 = smov 192
  %v3984 = vld [vmem:[%s3982] ss:$16 sm:%s3983]
  %vm3985 = vcmask 1047558
  %v3986 = vsel %vm3985, %v3984, %v3981
  %3987 = vrot.lane.b32.xlu0 %v3986, 80
  %v3988 = vpop.permute.xlu0 %3987
  %vm3989 = vcmask 786048
  %s3990 = scalar_lea.vmem %s1, 96
  %3991 = vst.msk [vmem:[%s3990] sm:$0xff] %vm3989, %v3988
  %s3992 = scalar_lea.vmem %s0, 1029
  %s3993 = smov 3
  %v3994 = vld [vmem:[%s3992] ss:$16 sm:%s3993]
  %s3995 = scalar_lea.vmem %s0, 1029
  %s3996 = smov 12
  %v3997 = vld [vmem:[%s3995] ss:$16 sm:%s3996]
  %vm3998 = vcmask 1043458
  %v3999 = vsel %vm3998, %v3997, %v3994
  %s4000 = scalar_lea.vmem %s0, 1029
  %s4001 = smov 48
  %v4002 = vld [vmem:[%s4000] ss:$16 sm:%s4001]
  %vm4003 = vcmask 1045508
  %v4004 = vsel %vm4003, %v4002, %v3999
  %s4005 = scalar_lea.vmem %s0, 1029
  %s4006 = smov 192
  %v4007 = vld [vmem:[%s4005] ss:$16 sm:%s4006]
  %vm4008 = vcmask 1047558
  %v4009 = vsel %vm4008, %v4007, %v4004
  %4010 = vrot.lane.b32.xlu0 %v4009, 80
  %v4011 = vpop.permute.xlu0 %4010
  %vm4012 = vcmask 786048
  %s4013 = scalar_lea.vmem %s1, 128
  %4014 = vst.msk [vmem:[%s4013] sm:$0xff] %vm4012, %v4011
  %s4015 = scalar_lea.vmem %s0, 1285
  %s4016 = smov 3
  %v4017 = vld [vmem:[%s4015] ss:$16 sm:%s4016]
  %s4018 = scalar_lea.vmem %s0, 1285
  %s4019 = smov 12
  %v4020 = vld [vmem:[%s4018] ss:$16 sm:%s4019]
  %vm4021 = vcmask 1043458
  %v4022 = vsel %vm4021, %v4020, %v4017
  %s4023 = scalar_lea.vmem %s0, 1285
  %s4024 = smov 48
  %v4025 = vld [vmem:[%s4023] ss:$16 sm:%s4024]
  %vm4026 = vcmask 1045508
  %v4027 = vsel %vm4026, %v4025, %v4022
  %s4028 = scalar_lea.vmem %s0, 1285
  %s4029 = smov 192
  %v4030 = vld [vmem:[%s4028] ss:$16 sm:%s4029]
  %vm4031 = vcmask 1047558
  %v4032 = vsel %vm4031, %v4030, %v4027
  %4033 = vrot.lane.b32.xlu0 %v4032, 80
  %v4034 = vpop.permute.xlu0 %4033
  %vm4035 = vcmask 786048
  %s4036 = scalar_lea.vmem %s1, 160
  %4037 = vst.msk [vmem:[%s4036] sm:$0xff] %vm4035, %v4034
  %s4038 = scalar_lea.vmem %s0, 1541
  %s4039 = smov 3
  %v4040 = vld [vmem:[%s4038] ss:$16 sm:%s4039]
  %s4041 = scalar_lea.vmem %s0, 1541
  %s4042 = smov 12
  %v4043 = vld [vmem:[%s4041] ss:$16 sm:%s4042]
  %vm4044 = vcmask 1043458
  %v4045 = vsel %vm4044, %v4043, %v4040
  %s4046 = scalar_lea.vmem %s0, 1541
  %s4047 = smov 48
  %v4048 = vld [vmem:[%s4046] ss:$16 sm:%s4047]
  %vm4049 = vcmask 1045508
  %v4050 = vsel %vm4049, %v4048, %v4045
  %s4051 = scalar_lea.vmem %s0, 1541
  %s4052 = smov 192
  %v4053 = vld [vmem:[%s4051] ss:$16 sm:%s4052]
  %vm4054 = vcmask 1047558
  %v4055 = vsel %vm4054, %v4053, %v4050
  %4056 = vrot.lane.b32.xlu0 %v4055, 80
  %v4057 = vpop.permute.xlu0 %4056
  %vm4058 = vcmask 786048
  %s4059 = scalar_lea.vmem %s1, 192
  %4060 = vst.msk [vmem:[%s4059] sm:$0xff] %vm4058, %v4057
  %s4061 = scalar_lea.vmem %s0, 1797
  %s4062 = smov 3
  %v4063 = vld [vmem:[%s4061] ss:$16 sm:%s4062]
  %s4064 = scalar_lea.vmem %s0, 1797
  %s4065 = smov 12
  %v4066 = vld [vmem:[%s4064] ss:$16 sm:%s4065]
  %vm4067 = vcmask 1043458
  %v4068 = vsel %vm4067, %v4066, %v4063
  %s4069 = scalar_lea.vmem %s0, 1797
  %s4070 = smov 48
  %v4071 = vld [vmem:[%s4069] ss:$16 sm:%s4070]
  %vm4072 = vcmask 1045508
  %v4073 = vsel %vm4072, %v4071, %v4068
  %s4074 = scalar_lea.vmem %s0, 1797
  %s4075 = smov 192
  %v4076 = vld [vmem:[%s4074] ss:$16 sm:%s4075]
  %vm4077 = vcmask 1047558
  %v4078 = vsel %vm4077, %v4076, %v4073
  %4079 = vrot.lane.b32.xlu0 %v4078, 80
  %v4080 = vpop.permute.xlu0 %4079
  %vm4081 = vcmask 786048
  %s4082 = scalar_lea.vmem %s1, 224
  %4083 = vst.msk [vmem:[%s4082] sm:$0xff] %vm4081, %v4080
  %s4084 = scalar_lea.vmem %s0, 2053
  %s4085 = smov 3
  %v4086 = vld [vmem:[%s4084] ss:$16 sm:%s4085]
  %s4087 = scalar_lea.vmem %s0, 2053
  %s4088 = smov 12
  %v4089 = vld [vmem:[%s4087] ss:$16 sm:%s4088]
  %vm4090 = vcmask 1043458
  %v4091 = vsel %vm4090, %v4089, %v4086
  %s4092 = scalar_lea.vmem %s0, 2053
  %s4093 = smov 48
  %v4094 = vld [vmem:[%s4092] ss:$16 sm:%s4093]
  %vm4095 = vcmask 1045508
  %v4096 = vsel %vm4095, %v4094, %v4091
  %s4097 = scalar_lea.vmem %s0, 2053
  %s4098 = smov 192
  %v4099 = vld [vmem:[%s4097] ss:$16 sm:%s4098]
  %vm4100 = vcmask 1047558
  %v4101 = vsel %vm4100, %v4099, %v4096
  %4102 = vrot.lane.b32.xlu0 %v4101, 80
  %v4103 = vpop.permute.xlu0 %4102
  %vm4104 = vcmask 786048
  %s4105 = scalar_lea.vmem %s1, 256
  %4106 = vst.msk [vmem:[%s4105] sm:$0xff] %vm4104, %v4103
  %s4107 = scalar_lea.vmem %s0, 2309
  %s4108 = smov 3
  %v4109 = vld [vmem:[%s4107] ss:$16 sm:%s4108]
  %s4110 = scalar_lea.vmem %s0, 2309
  %s4111 = smov 12
  %v4112 = vld [vmem:[%s4110] ss:$16 sm:%s4111]
  %vm4113 = vcmask 1043458
  %v4114 = vsel %vm4113, %v4112, %v4109
  %s4115 = scalar_lea.vmem %s0, 2309
  %s4116 = smov 48
  %v4117 = vld [vmem:[%s4115] ss:$16 sm:%s4116]
  %vm4118 = vcmask 1045508
  %v4119 = vsel %vm4118, %v4117, %v4114
  %s4120 = scalar_lea.vmem %s0, 2309
  %s4121 = smov 192
  %v4122 = vld [vmem:[%s4120] ss:$16 sm:%s4121]
  %vm4123 = vcmask 1047558
  %v4124 = vsel %vm4123, %v4122, %v4119
  %4125 = vrot.lane.b32.xlu0 %v4124, 80
  %v4126 = vpop.permute.xlu0 %4125
  %vm4127 = vcmask 786048
  %s4128 = scalar_lea.vmem %s1, 288
  %4129 = vst.msk [vmem:[%s4128] sm:$0xff] %vm4127, %v4126
  %s4130 = scalar_lea.vmem %s0, 2565
  %s4131 = smov 3
  %v4132 = vld [vmem:[%s4130] ss:$16 sm:%s4131]
  %s4133 = scalar_lea.vmem %s0, 2565
  %s4134 = smov 12
  %v4135 = vld [vmem:[%s4133] ss:$16 sm:%s4134]
  %vm4136 = vcmask 1043458
  %v4137 = vsel %vm4136, %v4135, %v4132
  %s4138 = scalar_lea.vmem %s0, 2565
  %s4139 = smov 48
  %v4140 = vld [vmem:[%s4138] ss:$16 sm:%s4139]
  %vm4141 = vcmask 1045508
  %v4142 = vsel %vm4141, %v4140, %v4137
  %s4143 = scalar_lea.vmem %s0, 2565
  %s4144 = smov 192
  %v4145 = vld [vmem:[%s4143] ss:$16 sm:%s4144]
  %vm4146 = vcmask 1047558
  %v4147 = vsel %vm4146, %v4145, %v4142
  %4148 = vrot.lane.b32.xlu0 %v4147, 80
  %v4149 = vpop.permute.xlu0 %4148
  %vm4150 = vcmask 786048
  %s4151 = scalar_lea.vmem %s1, 320
  %4152 = vst.msk [vmem:[%s4151] sm:$0xff] %vm4150, %v4149
  %s4153 = scalar_lea.vmem %s0, 2821
  %s4154 = smov 3
  %v4155 = vld [vmem:[%s4153] ss:$16 sm:%s4154]
  %s4156 = scalar_lea.vmem %s0, 2821
  %s4157 = smov 12
  %v4158 = vld [vmem:[%s4156] ss:$16 sm:%s4157]
  %vm4159 = vcmask 1043458
  %v4160 = vsel %vm4159, %v4158, %v4155
  %s4161 = scalar_lea.vmem %s0, 2821
  %s4162 = smov 48
  %v4163 = vld [vmem:[%s4161] ss:$16 sm:%s4162]
  %vm4164 = vcmask 1045508
  %v4165 = vsel %vm4164, %v4163, %v4160
  %s4166 = scalar_lea.vmem %s0, 2821
  %s4167 = smov 192
  %v4168 = vld [vmem:[%s4166] ss:$16 sm:%s4167]
  %vm4169 = vcmask 1047558
  %v4170 = vsel %vm4169, %v4168, %v4165
  %4171 = vrot.lane.b32.xlu0 %v4170, 80
  %v4172 = vpop.permute.xlu0 %4171
  %vm4173 = vcmask 786048
  %s4174 = scalar_lea.vmem %s1, 352
  %4175 = vst.msk [vmem:[%s4174] sm:$0xff] %vm4173, %v4172
  %s4176 = scalar_lea.vmem %s0, 3077
  %s4177 = smov 3
  %v4178 = vld [vmem:[%s4176] ss:$16 sm:%s4177]
  %s4179 = scalar_lea.vmem %s0, 3077
  %s4180 = smov 12
  %v4181 = vld [vmem:[%s4179] ss:$16 sm:%s4180]
  %vm4182 = vcmask 1043458
  %v4183 = vsel %vm4182, %v4181, %v4178
  %s4184 = scalar_lea.vmem %s0, 3077
  %s4185 = smov 48
  %v4186 = vld [vmem:[%s4184] ss:$16 sm:%s4185]
  %vm4187 = vcmask 1045508
  %v4188 = vsel %vm4187, %v4186, %v4183
  %s4189 = scalar_lea.vmem %s0, 3077
  %s4190 = smov 192
  %v4191 = vld [vmem:[%s4189] ss:$16 sm:%s4190]
  %vm4192 = vcmask 1047558
  %v4193 = vsel %vm4192, %v4191, %v4188
  %4194 = vrot.lane.b32.xlu0 %v4193, 80
  %v4195 = vpop.permute.xlu0 %4194
  %vm4196 = vcmask 786048
  %s4197 = scalar_lea.vmem %s1, 384
  %4198 = vst.msk [vmem:[%s4197] sm:$0xff] %vm4196, %v4195
  %s4199 = scalar_lea.vmem %s0, 3333
  %s4200 = smov 3
  %v4201 = vld [vmem:[%s4199] ss:$16 sm:%s4200]
  %s4202 = scalar_lea.vmem %s0, 3333
  %s4203 = smov 12
  %v4204 = vld [vmem:[%s4202] ss:$16 sm:%s4203]
  %vm4205 = vcmask 1043458
  %v4206 = vsel %vm4205, %v4204, %v4201
  %s4207 = scalar_lea.vmem %s0, 3333
  %s4208 = smov 48
  %v4209 = vld [vmem:[%s4207] ss:$16 sm:%s4208]
  %vm4210 = vcmask 1045508
  %v4211 = vsel %vm4210, %v4209, %v4206
  %s4212 = scalar_lea.vmem %s0, 3333
  %s4213 = smov 192
  %v4214 = vld [vmem:[%s4212] ss:$16 sm:%s4213]
  %vm4215 = vcmask 1047558
  %v4216 = vsel %vm4215, %v4214, %v4211
  %4217 = vrot.lane.b32.xlu0 %v4216, 80
  %v4218 = vpop.permute.xlu0 %4217
  %vm4219 = vcmask 786048
  %s4220 = scalar_lea.vmem %s1, 416
  %4221 = vst.msk [vmem:[%s4220] sm:$0xff] %vm4219, %v4218
  %s4222 = scalar_lea.vmem %s0, 3589
  %s4223 = smov 3
  %v4224 = vld [vmem:[%s4222] ss:$16 sm:%s4223]
  %s4225 = scalar_lea.vmem %s0, 3589
  %s4226 = smov 12
  %v4227 = vld [vmem:[%s4225] ss:$16 sm:%s4226]
  %vm4228 = vcmask 1043458
  %v4229 = vsel %vm4228, %v4227, %v4224
  %s4230 = scalar_lea.vmem %s0, 3589
  %s4231 = smov 48
  %v4232 = vld [vmem:[%s4230] ss:$16 sm:%s4231]
  %vm4233 = vcmask 1045508
  %v4234 = vsel %vm4233, %v4232, %v4229
  %s4235 = scalar_lea.vmem %s0, 3589
  %s4236 = smov 192
  %v4237 = vld [vmem:[%s4235] ss:$16 sm:%s4236]
  %vm4238 = vcmask 1047558
  %v4239 = vsel %vm4238, %v4237, %v4234
  %4240 = vrot.lane.b32.xlu0 %v4239, 80
  %v4241 = vpop.permute.xlu0 %4240
  %vm4242 = vcmask 786048
  %s4243 = scalar_lea.vmem %s1, 448
  %4244 = vst.msk [vmem:[%s4243] sm:$0xff] %vm4242, %v4241
  %s4245 = scalar_lea.vmem %s0, 3845
  %s4246 = smov 3
  %v4247 = vld [vmem:[%s4245] ss:$16 sm:%s4246]
  %s4248 = scalar_lea.vmem %s0, 3845
  %s4249 = smov 12
  %v4250 = vld [vmem:[%s4248] ss:$16 sm:%s4249]
  %vm4251 = vcmask 1043458
  %v4252 = vsel %vm4251, %v4250, %v4247
  %s4253 = scalar_lea.vmem %s0, 3845
  %s4254 = smov 48
  %v4255 = vld [vmem:[%s4253] ss:$16 sm:%s4254]
  %vm4256 = vcmask 1045508
  %v4257 = vsel %vm4256, %v4255, %v4252
  %s4258 = scalar_lea.vmem %s0, 3845
  %s4259 = smov 192
  %v4260 = vld [vmem:[%s4258] ss:$16 sm:%s4259]
  %vm4261 = vcmask 1047558
  %v4262 = vsel %vm4261, %v4260, %v4257
  %4263 = vrot.lane.b32.xlu0 %v4262, 80
  %v4264 = vpop.permute.xlu0 %4263
  %vm4265 = vcmask 786048
  %s4266 = scalar_lea.vmem %s1, 480
  %4267 = vst.msk [vmem:[%s4266] sm:$0xff] %vm4265, %v4264
  %s4268 = scalar_lea.vmem %s0, 13
  %s4269 = smov 3
  %v4270 = vld [vmem:[%s4268] ss:$16 sm:%s4269]
  %s4271 = scalar_lea.vmem %s0, 13
  %s4272 = smov 12
  %v4273 = vld [vmem:[%s4271] ss:$16 sm:%s4272]
  %vm4274 = vcmask 1043458
  %v4275 = vsel %vm4274, %v4273, %v4270
  %s4276 = scalar_lea.vmem %s0, 13
  %s4277 = smov 48
  %v4278 = vld [vmem:[%s4276] ss:$16 sm:%s4277]
  %vm4279 = vcmask 1045508
  %v4280 = vsel %vm4279, %v4278, %v4275
  %s4281 = scalar_lea.vmem %s0, 13
  %s4282 = smov 192
  %v4283 = vld [vmem:[%s4281] ss:$16 sm:%s4282]
  %vm4284 = vcmask 1047558
  %v4285 = vsel %vm4284, %v4283, %v4280
  %4286 = vrot.lane.b32.xlu0 %v4285, 80
  %v4287 = vpop.permute.xlu0 %4286
  %vm4288 = vcmask 786048
  %s4289 = scalar_lea.vmem %s1, 8
  %4290 = vst.msk [vmem:[%s4289] sm:$0xff] %vm4288, %v4287
  %s4291 = scalar_lea.vmem %s0, 269
  %s4292 = smov 3
  %v4293 = vld [vmem:[%s4291] ss:$16 sm:%s4292]
  %s4294 = scalar_lea.vmem %s0, 269
  %s4295 = smov 12
  %v4296 = vld [vmem:[%s4294] ss:$16 sm:%s4295]
  %vm4297 = vcmask 1043458
  %v4298 = vsel %vm4297, %v4296, %v4293
  %s4299 = scalar_lea.vmem %s0, 269
  %s4300 = smov 48
  %v4301 = vld [vmem:[%s4299] ss:$16 sm:%s4300]
  %vm4302 = vcmask 1045508
  %v4303 = vsel %vm4302, %v4301, %v4298
  %s4304 = scalar_lea.vmem %s0, 269
  %s4305 = smov 192
  %v4306 = vld [vmem:[%s4304] ss:$16 sm:%s4305]
  %vm4307 = vcmask 1047558
  %v4308 = vsel %vm4307, %v4306, %v4303
  %4309 = vrot.lane.b32.xlu0 %v4308, 80
  %v4310 = vpop.permute.xlu0 %4309
  %vm4311 = vcmask 786048
  %s4312 = scalar_lea.vmem %s1, 40
  %4313 = vst.msk [vmem:[%s4312] sm:$0xff] %vm4311, %v4310
  %s4314 = scalar_lea.vmem %s0, 525
  %s4315 = smov 3
  %v4316 = vld [vmem:[%s4314] ss:$16 sm:%s4315]
  %s4317 = scalar_lea.vmem %s0, 525
  %s4318 = smov 12
  %v4319 = vld [vmem:[%s4317] ss:$16 sm:%s4318]
  %vm4320 = vcmask 1043458
  %v4321 = vsel %vm4320, %v4319, %v4316
  %s4322 = scalar_lea.vmem %s0, 525
  %s4323 = smov 48
  %v4324 = vld [vmem:[%s4322] ss:$16 sm:%s4323]
  %vm4325 = vcmask 1045508
  %v4326 = vsel %vm4325, %v4324, %v4321
  %s4327 = scalar_lea.vmem %s0, 525
  %s4328 = smov 192
  %v4329 = vld [vmem:[%s4327] ss:$16 sm:%s4328]
  %vm4330 = vcmask 1047558
  %v4331 = vsel %vm4330, %v4329, %v4326
  %4332 = vrot.lane.b32.xlu0 %v4331, 80
  %v4333 = vpop.permute.xlu0 %4332
  %vm4334 = vcmask 786048
  %s4335 = scalar_lea.vmem %s1, 72
  %4336 = vst.msk [vmem:[%s4335] sm:$0xff] %vm4334, %v4333
  %s4337 = scalar_lea.vmem %s0, 781
  %s4338 = smov 3
  %v4339 = vld [vmem:[%s4337] ss:$16 sm:%s4338]
  %s4340 = scalar_lea.vmem %s0, 781
  %s4341 = smov 12
  %v4342 = vld [vmem:[%s4340] ss:$16 sm:%s4341]
  %vm4343 = vcmask 1043458
  %v4344 = vsel %vm4343, %v4342, %v4339
  %s4345 = scalar_lea.vmem %s0, 781
  %s4346 = smov 48
  %v4347 = vld [vmem:[%s4345] ss:$16 sm:%s4346]
  %vm4348 = vcmask 1045508
  %v4349 = vsel %vm4348, %v4347, %v4344
  %s4350 = scalar_lea.vmem %s0, 781
  %s4351 = smov 192
  %v4352 = vld [vmem:[%s4350] ss:$16 sm:%s4351]
  %vm4353 = vcmask 1047558
  %v4354 = vsel %vm4353, %v4352, %v4349
  %4355 = vrot.lane.b32.xlu0 %v4354, 80
  %v4356 = vpop.permute.xlu0 %4355
  %vm4357 = vcmask 786048
  %s4358 = scalar_lea.vmem %s1, 104
  %4359 = vst.msk [vmem:[%s4358] sm:$0xff] %vm4357, %v4356
  %s4360 = scalar_lea.vmem %s0, 1037
  %s4361 = smov 3
  %v4362 = vld [vmem:[%s4360] ss:$16 sm:%s4361]
  %s4363 = scalar_lea.vmem %s0, 1037
  %s4364 = smov 12
  %v4365 = vld [vmem:[%s4363] ss:$16 sm:%s4364]
  %vm4366 = vcmask 1043458
  %v4367 = vsel %vm4366, %v4365, %v4362
  %s4368 = scalar_lea.vmem %s0, 1037
  %s4369 = smov 48
  %v4370 = vld [vmem:[%s4368] ss:$16 sm:%s4369]
  %vm4371 = vcmask 1045508
  %v4372 = vsel %vm4371, %v4370, %v4367
  %s4373 = scalar_lea.vmem %s0, 1037
  %s4374 = smov 192
  %v4375 = vld [vmem:[%s4373] ss:$16 sm:%s4374]
  %vm4376 = vcmask 1047558
  %v4377 = vsel %vm4376, %v4375, %v4372
  %4378 = vrot.lane.b32.xlu0 %v4377, 80
  %v4379 = vpop.permute.xlu0 %4378
  %vm4380 = vcmask 786048
  %s4381 = scalar_lea.vmem %s1, 136
  %4382 = vst.msk [vmem:[%s4381] sm:$0xff] %vm4380, %v4379
  %s4383 = scalar_lea.vmem %s0, 1293
  %s4384 = smov 3
  %v4385 = vld [vmem:[%s4383] ss:$16 sm:%s4384]
  %s4386 = scalar_lea.vmem %s0, 1293
  %s4387 = smov 12
  %v4388 = vld [vmem:[%s4386] ss:$16 sm:%s4387]
  %vm4389 = vcmask 1043458
  %v4390 = vsel %vm4389, %v4388, %v4385
  %s4391 = scalar_lea.vmem %s0, 1293
  %s4392 = smov 48
  %v4393 = vld [vmem:[%s4391] ss:$16 sm:%s4392]
  %vm4394 = vcmask 1045508
  %v4395 = vsel %vm4394, %v4393, %v4390
  %s4396 = scalar_lea.vmem %s0, 1293
  %s4397 = smov 192
  %v4398 = vld [vmem:[%s4396] ss:$16 sm:%s4397]
  %vm4399 = vcmask 1047558
  %v4400 = vsel %vm4399, %v4398, %v4395
  %4401 = vrot.lane.b32.xlu0 %v4400, 80
  %v4402 = vpop.permute.xlu0 %4401
  %vm4403 = vcmask 786048
  %s4404 = scalar_lea.vmem %s1, 168
  %4405 = vst.msk [vmem:[%s4404] sm:$0xff] %vm4403, %v4402
  %s4406 = scalar_lea.vmem %s0, 1549
  %s4407 = smov 3
  %v4408 = vld [vmem:[%s4406] ss:$16 sm:%s4407]
  %s4409 = scalar_lea.vmem %s0, 1549
  %s4410 = smov 12
  %v4411 = vld [vmem:[%s4409] ss:$16 sm:%s4410]
  %vm4412 = vcmask 1043458
  %v4413 = vsel %vm4412, %v4411, %v4408
  %s4414 = scalar_lea.vmem %s0, 1549
  %s4415 = smov 48
  %v4416 = vld [vmem:[%s4414] ss:$16 sm:%s4415]
  %vm4417 = vcmask 1045508
  %v4418 = vsel %vm4417, %v4416, %v4413
  %s4419 = scalar_lea.vmem %s0, 1549
  %s4420 = smov 192
  %v4421 = vld [vmem:[%s4419] ss:$16 sm:%s4420]
  %vm4422 = vcmask 1047558
  %v4423 = vsel %vm4422, %v4421, %v4418
  %4424 = vrot.lane.b32.xlu0 %v4423, 80
  %v4425 = vpop.permute.xlu0 %4424
  %vm4426 = vcmask 786048
  %s4427 = scalar_lea.vmem %s1, 200
  %4428 = vst.msk [vmem:[%s4427] sm:$0xff] %vm4426, %v4425
  %s4429 = scalar_lea.vmem %s0, 1805
  %s4430 = smov 3
  %v4431 = vld [vmem:[%s4429] ss:$16 sm:%s4430]
  %s4432 = scalar_lea.vmem %s0, 1805
  %s4433 = smov 12
  %v4434 = vld [vmem:[%s4432] ss:$16 sm:%s4433]
  %vm4435 = vcmask 1043458
  %v4436 = vsel %vm4435, %v4434, %v4431
  %s4437 = scalar_lea.vmem %s0, 1805
  %s4438 = smov 48
  %v4439 = vld [vmem:[%s4437] ss:$16 sm:%s4438]
  %vm4440 = vcmask 1045508
  %v4441 = vsel %vm4440, %v4439, %v4436
  %s4442 = scalar_lea.vmem %s0, 1805
  %s4443 = smov 192
  %v4444 = vld [vmem:[%s4442] ss:$16 sm:%s4443]
  %vm4445 = vcmask 1047558
  %v4446 = vsel %vm4445, %v4444, %v4441
  %4447 = vrot.lane.b32.xlu0 %v4446, 80
  %v4448 = vpop.permute.xlu0 %4447
  %vm4449 = vcmask 786048
  %s4450 = scalar_lea.vmem %s1, 232
  %4451 = vst.msk [vmem:[%s4450] sm:$0xff] %vm4449, %v4448
  %s4452 = scalar_lea.vmem %s0, 2061
  %s4453 = smov 3
  %v4454 = vld [vmem:[%s4452] ss:$16 sm:%s4453]
  %s4455 = scalar_lea.vmem %s0, 2061
  %s4456 = smov 12
  %v4457 = vld [vmem:[%s4455] ss:$16 sm:%s4456]
  %vm4458 = vcmask 1043458
  %v4459 = vsel %vm4458, %v4457, %v4454
  %s4460 = scalar_lea.vmem %s0, 2061
  %s4461 = smov 48
  %v4462 = vld [vmem:[%s4460] ss:$16 sm:%s4461]
  %vm4463 = vcmask 1045508
  %v4464 = vsel %vm4463, %v4462, %v4459
  %s4465 = scalar_lea.vmem %s0, 2061
  %s4466 = smov 192
  %v4467 = vld [vmem:[%s4465] ss:$16 sm:%s4466]
  %vm4468 = vcmask 1047558
  %v4469 = vsel %vm4468, %v4467, %v4464
  %4470 = vrot.lane.b32.xlu0 %v4469, 80
  %v4471 = vpop.permute.xlu0 %4470
  %vm4472 = vcmask 786048
  %s4473 = scalar_lea.vmem %s1, 264
  %4474 = vst.msk [vmem:[%s4473] sm:$0xff] %vm4472, %v4471
  %s4475 = scalar_lea.vmem %s0, 2317
  %s4476 = smov 3
  %v4477 = vld [vmem:[%s4475] ss:$16 sm:%s4476]
  %s4478 = scalar_lea.vmem %s0, 2317
  %s4479 = smov 12
  %v4480 = vld [vmem:[%s4478] ss:$16 sm:%s4479]
  %vm4481 = vcmask 1043458
  %v4482 = vsel %vm4481, %v4480, %v4477
  %s4483 = scalar_lea.vmem %s0, 2317
  %s4484 = smov 48
  %v4485 = vld [vmem:[%s4483] ss:$16 sm:%s4484]
  %vm4486 = vcmask 1045508
  %v4487 = vsel %vm4486, %v4485, %v4482
  %s4488 = scalar_lea.vmem %s0, 2317
  %s4489 = smov 192
  %v4490 = vld [vmem:[%s4488] ss:$16 sm:%s4489]
  %vm4491 = vcmask 1047558
  %v4492 = vsel %vm4491, %v4490, %v4487
  %4493 = vrot.lane.b32.xlu0 %v4492, 80
  %v4494 = vpop.permute.xlu0 %4493
  %vm4495 = vcmask 786048
  %s4496 = scalar_lea.vmem %s1, 296
  %4497 = vst.msk [vmem:[%s4496] sm:$0xff] %vm4495, %v4494
  %s4498 = scalar_lea.vmem %s0, 2573
  %s4499 = smov 3
  %v4500 = vld [vmem:[%s4498] ss:$16 sm:%s4499]
  %s4501 = scalar_lea.vmem %s0, 2573
  %s4502 = smov 12
  %v4503 = vld [vmem:[%s4501] ss:$16 sm:%s4502]
  %vm4504 = vcmask 1043458
  %v4505 = vsel %vm4504, %v4503, %v4500
  %s4506 = scalar_lea.vmem %s0, 2573
  %s4507 = smov 48
  %v4508 = vld [vmem:[%s4506] ss:$16 sm:%s4507]
  %vm4509 = vcmask 1045508
  %v4510 = vsel %vm4509, %v4508, %v4505
  %s4511 = scalar_lea.vmem %s0, 2573
  %s4512 = smov 192
  %v4513 = vld [vmem:[%s4511] ss:$16 sm:%s4512]
  %vm4514 = vcmask 1047558
  %v4515 = vsel %vm4514, %v4513, %v4510
  %4516 = vrot.lane.b32.xlu0 %v4515, 80
  %v4517 = vpop.permute.xlu0 %4516
  %vm4518 = vcmask 786048
  %s4519 = scalar_lea.vmem %s1, 328
  %4520 = vst.msk [vmem:[%s4519] sm:$0xff] %vm4518, %v4517
  %s4521 = scalar_lea.vmem %s0, 2829
  %s4522 = smov 3
  %v4523 = vld [vmem:[%s4521] ss:$16 sm:%s4522]
  %s4524 = scalar_lea.vmem %s0, 2829
  %s4525 = smov 12
  %v4526 = vld [vmem:[%s4524] ss:$16 sm:%s4525]
  %vm4527 = vcmask 1043458
  %v4528 = vsel %vm4527, %v4526, %v4523
  %s4529 = scalar_lea.vmem %s0, 2829
  %s4530 = smov 48
  %v4531 = vld [vmem:[%s4529] ss:$16 sm:%s4530]
  %vm4532 = vcmask 1045508
  %v4533 = vsel %vm4532, %v4531, %v4528
  %s4534 = scalar_lea.vmem %s0, 2829
  %s4535 = smov 192
  %v4536 = vld [vmem:[%s4534] ss:$16 sm:%s4535]
  %vm4537 = vcmask 1047558
  %v4538 = vsel %vm4537, %v4536, %v4533
  %4539 = vrot.lane.b32.xlu0 %v4538, 80
  %v4540 = vpop.permute.xlu0 %4539
  %vm4541 = vcmask 786048
  %s4542 = scalar_lea.vmem %s1, 360
  %4543 = vst.msk [vmem:[%s4542] sm:$0xff] %vm4541, %v4540
  %s4544 = scalar_lea.vmem %s0, 3085
  %s4545 = smov 3
  %v4546 = vld [vmem:[%s4544] ss:$16 sm:%s4545]
  %s4547 = scalar_lea.vmem %s0, 3085
  %s4548 = smov 12
  %v4549 = vld [vmem:[%s4547] ss:$16 sm:%s4548]
  %vm4550 = vcmask 1043458
  %v4551 = vsel %vm4550, %v4549, %v4546
  %s4552 = scalar_lea.vmem %s0, 3085
  %s4553 = smov 48
  %v4554 = vld [vmem:[%s4552] ss:$16 sm:%s4553]
  %vm4555 = vcmask 1045508
  %v4556 = vsel %vm4555, %v4554, %v4551
  %s4557 = scalar_lea.vmem %s0, 3085
  %s4558 = smov 192
  %v4559 = vld [vmem:[%s4557] ss:$16 sm:%s4558]
  %vm4560 = vcmask 1047558
  %v4561 = vsel %vm4560, %v4559, %v4556
  %4562 = vrot.lane.b32.xlu0 %v4561, 80
  %v4563 = vpop.permute.xlu0 %4562
  %vm4564 = vcmask 786048
  %s4565 = scalar_lea.vmem %s1, 392
  %4566 = vst.msk [vmem:[%s4565] sm:$0xff] %vm4564, %v4563
  %s4567 = scalar_lea.vmem %s0, 3341
  %s4568 = smov 3
  %v4569 = vld [vmem:[%s4567] ss:$16 sm:%s4568]
  %s4570 = scalar_lea.vmem %s0, 3341
  %s4571 = smov 12
  %v4572 = vld [vmem:[%s4570] ss:$16 sm:%s4571]
  %vm4573 = vcmask 1043458
  %v4574 = vsel %vm4573, %v4572, %v4569
  %s4575 = scalar_lea.vmem %s0, 3341
  %s4576 = smov 48
  %v4577 = vld [vmem:[%s4575] ss:$16 sm:%s4576]
  %vm4578 = vcmask 1045508
  %v4579 = vsel %vm4578, %v4577, %v4574
  %s4580 = scalar_lea.vmem %s0, 3341
  %s4581 = smov 192
  %v4582 = vld [vmem:[%s4580] ss:$16 sm:%s4581]
  %vm4583 = vcmask 1047558
  %v4584 = vsel %vm4583, %v4582, %v4579
  %4585 = vrot.lane.b32.xlu0 %v4584, 80
  %v4586 = vpop.permute.xlu0 %4585
  %vm4587 = vcmask 786048
  %s4588 = scalar_lea.vmem %s1, 424
  %4589 = vst.msk [vmem:[%s4588] sm:$0xff] %vm4587, %v4586
  %s4590 = scalar_lea.vmem %s0, 3597
  %s4591 = smov 3
  %v4592 = vld [vmem:[%s4590] ss:$16 sm:%s4591]
  %s4593 = scalar_lea.vmem %s0, 3597
  %s4594 = smov 12
  %v4595 = vld [vmem:[%s4593] ss:$16 sm:%s4594]
  %vm4596 = vcmask 1043458
  %v4597 = vsel %vm4596, %v4595, %v4592
  %s4598 = scalar_lea.vmem %s0, 3597
  %s4599 = smov 48
  %v4600 = vld [vmem:[%s4598] ss:$16 sm:%s4599]
  %vm4601 = vcmask 1045508
  %v4602 = vsel %vm4601, %v4600, %v4597
  %s4603 = scalar_lea.vmem %s0, 3597
  %s4604 = smov 192
  %v4605 = vld [vmem:[%s4603] ss:$16 sm:%s4604]
  %vm4606 = vcmask 1047558
  %v4607 = vsel %vm4606, %v4605, %v4602
  %4608 = vrot.lane.b32.xlu0 %v4607, 80
  %v4609 = vpop.permute.xlu0 %4608
  %vm4610 = vcmask 786048
  %s4611 = scalar_lea.vmem %s1, 456
  %4612 = vst.msk [vmem:[%s4611] sm:$0xff] %vm4610, %v4609
  %s4613 = scalar_lea.vmem %s0, 3853
  %s4614 = smov 3
  %v4615 = vld [vmem:[%s4613] ss:$16 sm:%s4614]
  %s4616 = scalar_lea.vmem %s0, 3853
  %s4617 = smov 12
  %v4618 = vld [vmem:[%s4616] ss:$16 sm:%s4617]
  %vm4619 = vcmask 1043458
  %v4620 = vsel %vm4619, %v4618, %v4615
  %s4621 = scalar_lea.vmem %s0, 3853
  %s4622 = smov 48
  %v4623 = vld [vmem:[%s4621] ss:$16 sm:%s4622]
  %vm4624 = vcmask 1045508
  %v4625 = vsel %vm4624, %v4623, %v4620
  %s4626 = scalar_lea.vmem %s0, 3853
  %s4627 = smov 192
  %v4628 = vld [vmem:[%s4626] ss:$16 sm:%s4627]
  %vm4629 = vcmask 1047558
  %v4630 = vsel %vm4629, %v4628, %v4625
  %4631 = vrot.lane.b32.xlu0 %v4630, 80
  %v4632 = vpop.permute.xlu0 %4631
  %vm4633 = vcmask 786048
  %s4634 = scalar_lea.vmem %s1, 488
  %4635 = vst.msk [vmem:[%s4634] sm:$0xff] %vm4633, %v4632
  %s4636 = scalar_lea.vmem %s0, 133
  %s4637 = smov 3
  %v4638 = vld [vmem:[%s4636] ss:$16 sm:%s4637]
  %s4639 = scalar_lea.vmem %s0, 133
  %s4640 = smov 12
  %v4641 = vld [vmem:[%s4639] ss:$16 sm:%s4640]
  %vm4642 = vcmask 1043458
  %v4643 = vsel %vm4642, %v4641, %v4638
  %s4644 = scalar_lea.vmem %s0, 133
  %s4645 = smov 48
  %v4646 = vld [vmem:[%s4644] ss:$16 sm:%s4645]
  %vm4647 = vcmask 1045508
  %v4648 = vsel %vm4647, %v4646, %v4643
  %s4649 = scalar_lea.vmem %s0, 133
  %s4650 = smov 192
  %v4651 = vld [vmem:[%s4649] ss:$16 sm:%s4650]
  %vm4652 = vcmask 1047558
  %v4653 = vsel %vm4652, %v4651, %v4648
  %4654 = vrot.lane.b32.xlu0 %v4653, 80
  %v4655 = vpop.permute.xlu0 %4654
  %vm4656 = vcmask 786048
  %s4657 = scalar_lea.vmem %s1, 16
  %4658 = vst.msk [vmem:[%s4657] sm:$0xff] %vm4656, %v4655
  %s4659 = scalar_lea.vmem %s0, 389
  %s4660 = smov 3
  %v4661 = vld [vmem:[%s4659] ss:$16 sm:%s4660]
  %s4662 = scalar_lea.vmem %s0, 389
  %s4663 = smov 12
  %v4664 = vld [vmem:[%s4662] ss:$16 sm:%s4663]
  %vm4665 = vcmask 1043458
  %v4666 = vsel %vm4665, %v4664, %v4661
  %s4667 = scalar_lea.vmem %s0, 389
  %s4668 = smov 48
  %v4669 = vld [vmem:[%s4667] ss:$16 sm:%s4668]
  %vm4670 = vcmask 1045508
  %v4671 = vsel %vm4670, %v4669, %v4666
  %s4672 = scalar_lea.vmem %s0, 389
  %s4673 = smov 192
  %v4674 = vld [vmem:[%s4672] ss:$16 sm:%s4673]
  %vm4675 = vcmask 1047558
  %v4676 = vsel %vm4675, %v4674, %v4671
  %4677 = vrot.lane.b32.xlu0 %v4676, 80
  %v4678 = vpop.permute.xlu0 %4677
  %vm4679 = vcmask 786048
  %s4680 = scalar_lea.vmem %s1, 48
  %4681 = vst.msk [vmem:[%s4680] sm:$0xff] %vm4679, %v4678
  %s4682 = scalar_lea.vmem %s0, 645
  %s4683 = smov 3
  %v4684 = vld [vmem:[%s4682] ss:$16 sm:%s4683]
  %s4685 = scalar_lea.vmem %s0, 645
  %s4686 = smov 12
  %v4687 = vld [vmem:[%s4685] ss:$16 sm:%s4686]
  %vm4688 = vcmask 1043458
  %v4689 = vsel %vm4688, %v4687, %v4684
  %s4690 = scalar_lea.vmem %s0, 645
  %s4691 = smov 48
  %v4692 = vld [vmem:[%s4690] ss:$16 sm:%s4691]
  %vm4693 = vcmask 1045508
  %v4694 = vsel %vm4693, %v4692, %v4689
  %s4695 = scalar_lea.vmem %s0, 645
  %s4696 = smov 192
  %v4697 = vld [vmem:[%s4695] ss:$16 sm:%s4696]
  %vm4698 = vcmask 1047558
  %v4699 = vsel %vm4698, %v4697, %v4694
  %4700 = vrot.lane.b32.xlu0 %v4699, 80
  %v4701 = vpop.permute.xlu0 %4700
  %vm4702 = vcmask 786048
  %s4703 = scalar_lea.vmem %s1, 80
  %4704 = vst.msk [vmem:[%s4703] sm:$0xff] %vm4702, %v4701
  %s4705 = scalar_lea.vmem %s0, 901
  %s4706 = smov 3
  %v4707 = vld [vmem:[%s4705] ss:$16 sm:%s4706]
  %s4708 = scalar_lea.vmem %s0, 901
  %s4709 = smov 12
  %v4710 = vld [vmem:[%s4708] ss:$16 sm:%s4709]
  %vm4711 = vcmask 1043458
  %v4712 = vsel %vm4711, %v4710, %v4707
  %s4713 = scalar_lea.vmem %s0, 901
  %s4714 = smov 48
  %v4715 = vld [vmem:[%s4713] ss:$16 sm:%s4714]
  %vm4716 = vcmask 1045508
  %v4717 = vsel %vm4716, %v4715, %v4712
  %s4718 = scalar_lea.vmem %s0, 901
  %s4719 = smov 192
  %v4720 = vld [vmem:[%s4718] ss:$16 sm:%s4719]
  %vm4721 = vcmask 1047558
  %v4722 = vsel %vm4721, %v4720, %v4717
  %4723 = vrot.lane.b32.xlu0 %v4722, 80
  %v4724 = vpop.permute.xlu0 %4723
  %vm4725 = vcmask 786048
  %s4726 = scalar_lea.vmem %s1, 112
  %4727 = vst.msk [vmem:[%s4726] sm:$0xff] %vm4725, %v4724
  %s4728 = scalar_lea.vmem %s0, 1157
  %s4729 = smov 3
  %v4730 = vld [vmem:[%s4728] ss:$16 sm:%s4729]
  %s4731 = scalar_lea.vmem %s0, 1157
  %s4732 = smov 12
  %v4733 = vld [vmem:[%s4731] ss:$16 sm:%s4732]
  %vm4734 = vcmask 1043458
  %v4735 = vsel %vm4734, %v4733, %v4730
  %s4736 = scalar_lea.vmem %s0, 1157
  %s4737 = smov 48
  %v4738 = vld [vmem:[%s4736] ss:$16 sm:%s4737]
  %vm4739 = vcmask 1045508
  %v4740 = vsel %vm4739, %v4738, %v4735
  %s4741 = scalar_lea.vmem %s0, 1157
  %s4742 = smov 192
  %v4743 = vld [vmem:[%s4741] ss:$16 sm:%s4742]
  %vm4744 = vcmask 1047558
  %v4745 = vsel %vm4744, %v4743, %v4740
  %4746 = vrot.lane.b32.xlu0 %v4745, 80
  %v4747 = vpop.permute.xlu0 %4746
  %vm4748 = vcmask 786048
  %s4749 = scalar_lea.vmem %s1, 144
  %4750 = vst.msk [vmem:[%s4749] sm:$0xff] %vm4748, %v4747
  %s4751 = scalar_lea.vmem %s0, 1413
  %s4752 = smov 3
  %v4753 = vld [vmem:[%s4751] ss:$16 sm:%s4752]
  %s4754 = scalar_lea.vmem %s0, 1413
  %s4755 = smov 12
  %v4756 = vld [vmem:[%s4754] ss:$16 sm:%s4755]
  %vm4757 = vcmask 1043458
  %v4758 = vsel %vm4757, %v4756, %v4753
  %s4759 = scalar_lea.vmem %s0, 1413
  %s4760 = smov 48
  %v4761 = vld [vmem:[%s4759] ss:$16 sm:%s4760]
  %vm4762 = vcmask 1045508
  %v4763 = vsel %vm4762, %v4761, %v4758
  %s4764 = scalar_lea.vmem %s0, 1413
  %s4765 = smov 192
  %v4766 = vld [vmem:[%s4764] ss:$16 sm:%s4765]
  %vm4767 = vcmask 1047558
  %v4768 = vsel %vm4767, %v4766, %v4763
  %4769 = vrot.lane.b32.xlu0 %v4768, 80
  %v4770 = vpop.permute.xlu0 %4769
  %vm4771 = vcmask 786048
  %s4772 = scalar_lea.vmem %s1, 176
  %4773 = vst.msk [vmem:[%s4772] sm:$0xff] %vm4771, %v4770
  %s4774 = scalar_lea.vmem %s0, 1669
  %s4775 = smov 3
  %v4776 = vld [vmem:[%s4774] ss:$16 sm:%s4775]
  %s4777 = scalar_lea.vmem %s0, 1669
  %s4778 = smov 12
  %v4779 = vld [vmem:[%s4777] ss:$16 sm:%s4778]
  %vm4780 = vcmask 1043458
  %v4781 = vsel %vm4780, %v4779, %v4776
  %s4782 = scalar_lea.vmem %s0, 1669
  %s4783 = smov 48
  %v4784 = vld [vmem:[%s4782] ss:$16 sm:%s4783]
  %vm4785 = vcmask 1045508
  %v4786 = vsel %vm4785, %v4784, %v4781
  %s4787 = scalar_lea.vmem %s0, 1669
  %s4788 = smov 192
  %v4789 = vld [vmem:[%s4787] ss:$16 sm:%s4788]
  %vm4790 = vcmask 1047558
  %v4791 = vsel %vm4790, %v4789, %v4786
  %4792 = vrot.lane.b32.xlu0 %v4791, 80
  %v4793 = vpop.permute.xlu0 %4792
  %vm4794 = vcmask 786048
  %s4795 = scalar_lea.vmem %s1, 208
  %4796 = vst.msk [vmem:[%s4795] sm:$0xff] %vm4794, %v4793
  %s4797 = scalar_lea.vmem %s0, 1925
  %s4798 = smov 3
  %v4799 = vld [vmem:[%s4797] ss:$16 sm:%s4798]
  %s4800 = scalar_lea.vmem %s0, 1925
  %s4801 = smov 12
  %v4802 = vld [vmem:[%s4800] ss:$16 sm:%s4801]
  %vm4803 = vcmask 1043458
  %v4804 = vsel %vm4803, %v4802, %v4799
  %s4805 = scalar_lea.vmem %s0, 1925
  %s4806 = smov 48
  %v4807 = vld [vmem:[%s4805] ss:$16 sm:%s4806]
  %vm4808 = vcmask 1045508
  %v4809 = vsel %vm4808, %v4807, %v4804
  %s4810 = scalar_lea.vmem %s0, 1925
  %s4811 = smov 192
  %v4812 = vld [vmem:[%s4810] ss:$16 sm:%s4811]
  %vm4813 = vcmask 1047558
  %v4814 = vsel %vm4813, %v4812, %v4809
  %4815 = vrot.lane.b32.xlu0 %v4814, 80
  %v4816 = vpop.permute.xlu0 %4815
  %vm4817 = vcmask 786048
  %s4818 = scalar_lea.vmem %s1, 240
  %4819 = vst.msk [vmem:[%s4818] sm:$0xff] %vm4817, %v4816
  %s4820 = scalar_lea.vmem %s0, 2181
  %s4821 = smov 3
  %v4822 = vld [vmem:[%s4820] ss:$16 sm:%s4821]
  %s4823 = scalar_lea.vmem %s0, 2181
  %s4824 = smov 12
  %v4825 = vld [vmem:[%s4823] ss:$16 sm:%s4824]
  %vm4826 = vcmask 1043458
  %v4827 = vsel %vm4826, %v4825, %v4822
  %s4828 = scalar_lea.vmem %s0, 2181
  %s4829 = smov 48
  %v4830 = vld [vmem:[%s4828] ss:$16 sm:%s4829]
  %vm4831 = vcmask 1045508
  %v4832 = vsel %vm4831, %v4830, %v4827
  %s4833 = scalar_lea.vmem %s0, 2181
  %s4834 = smov 192
  %v4835 = vld [vmem:[%s4833] ss:$16 sm:%s4834]
  %vm4836 = vcmask 1047558
  %v4837 = vsel %vm4836, %v4835, %v4832
  %4838 = vrot.lane.b32.xlu0 %v4837, 80
  %v4839 = vpop.permute.xlu0 %4838
  %vm4840 = vcmask 786048
  %s4841 = scalar_lea.vmem %s1, 272
  %4842 = vst.msk [vmem:[%s4841] sm:$0xff] %vm4840, %v4839
  %s4843 = scalar_lea.vmem %s0, 2437
  %s4844 = smov 3
  %v4845 = vld [vmem:[%s4843] ss:$16 sm:%s4844]
  %s4846 = scalar_lea.vmem %s0, 2437
  %s4847 = smov 12
  %v4848 = vld [vmem:[%s4846] ss:$16 sm:%s4847]
  %vm4849 = vcmask 1043458
  %v4850 = vsel %vm4849, %v4848, %v4845
  %s4851 = scalar_lea.vmem %s0, 2437
  %s4852 = smov 48
  %v4853 = vld [vmem:[%s4851] ss:$16 sm:%s4852]
  %vm4854 = vcmask 1045508
  %v4855 = vsel %vm4854, %v4853, %v4850
  %s4856 = scalar_lea.vmem %s0, 2437
  %s4857 = smov 192
  %v4858 = vld [vmem:[%s4856] ss:$16 sm:%s4857]
  %vm4859 = vcmask 1047558
  %v4860 = vsel %vm4859, %v4858, %v4855
  %4861 = vrot.lane.b32.xlu0 %v4860, 80
  %v4862 = vpop.permute.xlu0 %4861
  %vm4863 = vcmask 786048
  %s4864 = scalar_lea.vmem %s1, 304
  %4865 = vst.msk [vmem:[%s4864] sm:$0xff] %vm4863, %v4862
  %s4866 = scalar_lea.vmem %s0, 2693
  %s4867 = smov 3
  %v4868 = vld [vmem:[%s4866] ss:$16 sm:%s4867]
  %s4869 = scalar_lea.vmem %s0, 2693
  %s4870 = smov 12
  %v4871 = vld [vmem:[%s4869] ss:$16 sm:%s4870]
  %vm4872 = vcmask 1043458
  %v4873 = vsel %vm4872, %v4871, %v4868
  %s4874 = scalar_lea.vmem %s0, 2693
  %s4875 = smov 48
  %v4876 = vld [vmem:[%s4874] ss:$16 sm:%s4875]
  %vm4877 = vcmask 1045508
  %v4878 = vsel %vm4877, %v4876, %v4873
  %s4879 = scalar_lea.vmem %s0, 2693
  %s4880 = smov 192
  %v4881 = vld [vmem:[%s4879] ss:$16 sm:%s4880]
  %vm4882 = vcmask 1047558
  %v4883 = vsel %vm4882, %v4881, %v4878
  %4884 = vrot.lane.b32.xlu0 %v4883, 80
  %v4885 = vpop.permute.xlu0 %4884
  %vm4886 = vcmask 786048
  %s4887 = scalar_lea.vmem %s1, 336
  %4888 = vst.msk [vmem:[%s4887] sm:$0xff] %vm4886, %v4885
  %s4889 = scalar_lea.vmem %s0, 2949
  %s4890 = smov 3
  %v4891 = vld [vmem:[%s4889] ss:$16 sm:%s4890]
  %s4892 = scalar_lea.vmem %s0, 2949
  %s4893 = smov 12
  %v4894 = vld [vmem:[%s4892] ss:$16 sm:%s4893]
  %vm4895 = vcmask 1043458
  %v4896 = vsel %vm4895, %v4894, %v4891
  %s4897 = scalar_lea.vmem %s0, 2949
  %s4898 = smov 48
  %v4899 = vld [vmem:[%s4897] ss:$16 sm:%s4898]
  %vm4900 = vcmask 1045508
  %v4901 = vsel %vm4900, %v4899, %v4896
  %s4902 = scalar_lea.vmem %s0, 2949
  %s4903 = smov 192
  %v4904 = vld [vmem:[%s4902] ss:$16 sm:%s4903]
  %vm4905 = vcmask 1047558
  %v4906 = vsel %vm4905, %v4904, %v4901
  %4907 = vrot.lane.b32.xlu0 %v4906, 80
  %v4908 = vpop.permute.xlu0 %4907
  %vm4909 = vcmask 786048
  %s4910 = scalar_lea.vmem %s1, 368
  %4911 = vst.msk [vmem:[%s4910] sm:$0xff] %vm4909, %v4908
  %s4912 = scalar_lea.vmem %s0, 3205
  %s4913 = smov 3
  %v4914 = vld [vmem:[%s4912] ss:$16 sm:%s4913]
  %s4915 = scalar_lea.vmem %s0, 3205
  %s4916 = smov 12
  %v4917 = vld [vmem:[%s4915] ss:$16 sm:%s4916]
  %vm4918 = vcmask 1043458
  %v4919 = vsel %vm4918, %v4917, %v4914
  %s4920 = scalar_lea.vmem %s0, 3205
  %s4921 = smov 48
  %v4922 = vld [vmem:[%s4920] ss:$16 sm:%s4921]
  %vm4923 = vcmask 1045508
  %v4924 = vsel %vm4923, %v4922, %v4919
  %s4925 = scalar_lea.vmem %s0, 3205
  %s4926 = smov 192
  %v4927 = vld [vmem:[%s4925] ss:$16 sm:%s4926]
  %vm4928 = vcmask 1047558
  %v4929 = vsel %vm4928, %v4927, %v4924
  %4930 = vrot.lane.b32.xlu0 %v4929, 80
  %v4931 = vpop.permute.xlu0 %4930
  %vm4932 = vcmask 786048
  %s4933 = scalar_lea.vmem %s1, 400
  %4934 = vst.msk [vmem:[%s4933] sm:$0xff] %vm4932, %v4931
  %s4935 = scalar_lea.vmem %s0, 3461
  %s4936 = smov 3
  %v4937 = vld [vmem:[%s4935] ss:$16 sm:%s4936]
  %s4938 = scalar_lea.vmem %s0, 3461
  %s4939 = smov 12
  %v4940 = vld [vmem:[%s4938] ss:$16 sm:%s4939]
  %vm4941 = vcmask 1043458
  %v4942 = vsel %vm4941, %v4940, %v4937
  %s4943 = scalar_lea.vmem %s0, 3461
  %s4944 = smov 48
  %v4945 = vld [vmem:[%s4943] ss:$16 sm:%s4944]
  %vm4946 = vcmask 1045508
  %v4947 = vsel %vm4946, %v4945, %v4942
  %s4948 = scalar_lea.vmem %s0, 3461
  %s4949 = smov 192
  %v4950 = vld [vmem:[%s4948] ss:$16 sm:%s4949]
  %vm4951 = vcmask 1047558
  %v4952 = vsel %vm4951, %v4950, %v4947
  %4953 = vrot.lane.b32.xlu0 %v4952, 80
  %v4954 = vpop.permute.xlu0 %4953
  %vm4955 = vcmask 786048
  %s4956 = scalar_lea.vmem %s1, 432
  %4957 = vst.msk [vmem:[%s4956] sm:$0xff] %vm4955, %v4954
  %s4958 = scalar_lea.vmem %s0, 3717
  %s4959 = smov 3
  %v4960 = vld [vmem:[%s4958] ss:$16 sm:%s4959]
  %s4961 = scalar_lea.vmem %s0, 3717
  %s4962 = smov 12
  %v4963 = vld [vmem:[%s4961] ss:$16 sm:%s4962]
  %vm4964 = vcmask 1043458
  %v4965 = vsel %vm4964, %v4963, %v4960
  %s4966 = scalar_lea.vmem %s0, 3717
  %s4967 = smov 48
  %v4968 = vld [vmem:[%s4966] ss:$16 sm:%s4967]
  %vm4969 = vcmask 1045508
  %v4970 = vsel %vm4969, %v4968, %v4965
  %s4971 = scalar_lea.vmem %s0, 3717
  %s4972 = smov 192
  %v4973 = vld [vmem:[%s4971] ss:$16 sm:%s4972]
  %vm4974 = vcmask 1047558
  %v4975 = vsel %vm4974, %v4973, %v4970
  %4976 = vrot.lane.b32.xlu0 %v4975, 80
  %v4977 = vpop.permute.xlu0 %4976
  %vm4978 = vcmask 786048
  %s4979 = scalar_lea.vmem %s1, 464
  %4980 = vst.msk [vmem:[%s4979] sm:$0xff] %vm4978, %v4977
  %s4981 = scalar_lea.vmem %s0, 3973
  %s4982 = smov 3
  %v4983 = vld [vmem:[%s4981] ss:$16 sm:%s4982]
  %s4984 = scalar_lea.vmem %s0, 3973
  %s4985 = smov 12
  %v4986 = vld [vmem:[%s4984] ss:$16 sm:%s4985]
  %vm4987 = vcmask 1043458
  %v4988 = vsel %vm4987, %v4986, %v4983
  %s4989 = scalar_lea.vmem %s0, 3973
  %s4990 = smov 48
  %v4991 = vld [vmem:[%s4989] ss:$16 sm:%s4990]
  %vm4992 = vcmask 1045508
  %v4993 = vsel %vm4992, %v4991, %v4988
  %s4994 = scalar_lea.vmem %s0, 3973
  %s4995 = smov 192
  %v4996 = vld [vmem:[%s4994] ss:$16 sm:%s4995]
  %vm4997 = vcmask 1047558
  %v4998 = vsel %vm4997, %v4996, %v4993
  %4999 = vrot.lane.b32.xlu0 %v4998, 80
  %v5000 = vpop.permute.xlu0 %4999
  %vm5001 = vcmask 786048
  %s5002 = scalar_lea.vmem %s1, 496
  %5003 = vst.msk [vmem:[%s5002] sm:$0xff] %vm5001, %v5000
  %s5004 = scalar_lea.vmem %s0, 141
  %s5005 = smov 3
  %v5006 = vld [vmem:[%s5004] ss:$16 sm:%s5005]
  %s5007 = scalar_lea.vmem %s0, 141
  %s5008 = smov 12
  %v5009 = vld [vmem:[%s5007] ss:$16 sm:%s5008]
  %vm5010 = vcmask 1043458
  %v5011 = vsel %vm5010, %v5009, %v5006
  %s5012 = scalar_lea.vmem %s0, 141
  %s5013 = smov 48
  %v5014 = vld [vmem:[%s5012] ss:$16 sm:%s5013]
  %vm5015 = vcmask 1045508
  %v5016 = vsel %vm5015, %v5014, %v5011
  %s5017 = scalar_lea.vmem %s0, 141
  %s5018 = smov 192
  %v5019 = vld [vmem:[%s5017] ss:$16 sm:%s5018]
  %vm5020 = vcmask 1047558
  %v5021 = vsel %vm5020, %v5019, %v5016
  %5022 = vrot.lane.b32.xlu0 %v5021, 80
  %v5023 = vpop.permute.xlu0 %5022
  %vm5024 = vcmask 786048
  %s5025 = scalar_lea.vmem %s1, 24
  %5026 = vst.msk [vmem:[%s5025] sm:$0xff] %vm5024, %v5023
  %s5027 = scalar_lea.vmem %s0, 397
  %s5028 = smov 3
  %v5029 = vld [vmem:[%s5027] ss:$16 sm:%s5028]
  %s5030 = scalar_lea.vmem %s0, 397
  %s5031 = smov 12
  %v5032 = vld [vmem:[%s5030] ss:$16 sm:%s5031]
  %vm5033 = vcmask 1043458
  %v5034 = vsel %vm5033, %v5032, %v5029
  %s5035 = scalar_lea.vmem %s0, 397
  %s5036 = smov 48
  %v5037 = vld [vmem:[%s5035] ss:$16 sm:%s5036]
  %vm5038 = vcmask 1045508
  %v5039 = vsel %vm5038, %v5037, %v5034
  %s5040 = scalar_lea.vmem %s0, 397
  %s5041 = smov 192
  %v5042 = vld [vmem:[%s5040] ss:$16 sm:%s5041]
  %vm5043 = vcmask 1047558
  %v5044 = vsel %vm5043, %v5042, %v5039
  %5045 = vrot.lane.b32.xlu0 %v5044, 80
  %v5046 = vpop.permute.xlu0 %5045
  %vm5047 = vcmask 786048
  %s5048 = scalar_lea.vmem %s1, 56
  %5049 = vst.msk [vmem:[%s5048] sm:$0xff] %vm5047, %v5046
  %s5050 = scalar_lea.vmem %s0, 653
  %s5051 = smov 3
  %v5052 = vld [vmem:[%s5050] ss:$16 sm:%s5051]
  %s5053 = scalar_lea.vmem %s0, 653
  %s5054 = smov 12
  %v5055 = vld [vmem:[%s5053] ss:$16 sm:%s5054]
  %vm5056 = vcmask 1043458
  %v5057 = vsel %vm5056, %v5055, %v5052
  %s5058 = scalar_lea.vmem %s0, 653
  %s5059 = smov 48
  %v5060 = vld [vmem:[%s5058] ss:$16 sm:%s5059]
  %vm5061 = vcmask 1045508
  %v5062 = vsel %vm5061, %v5060, %v5057
  %s5063 = scalar_lea.vmem %s0, 653
  %s5064 = smov 192
  %v5065 = vld [vmem:[%s5063] ss:$16 sm:%s5064]
  %vm5066 = vcmask 1047558
  %v5067 = vsel %vm5066, %v5065, %v5062
  %5068 = vrot.lane.b32.xlu0 %v5067, 80
  %v5069 = vpop.permute.xlu0 %5068
  %vm5070 = vcmask 786048
  %s5071 = scalar_lea.vmem %s1, 88
  %5072 = vst.msk [vmem:[%s5071] sm:$0xff] %vm5070, %v5069
  %s5073 = scalar_lea.vmem %s0, 909
  %s5074 = smov 3
  %v5075 = vld [vmem:[%s5073] ss:$16 sm:%s5074]
  %s5076 = scalar_lea.vmem %s0, 909
  %s5077 = smov 12
  %v5078 = vld [vmem:[%s5076] ss:$16 sm:%s5077]
  %vm5079 = vcmask 1043458
  %v5080 = vsel %vm5079, %v5078, %v5075
  %s5081 = scalar_lea.vmem %s0, 909
  %s5082 = smov 48
  %v5083 = vld [vmem:[%s5081] ss:$16 sm:%s5082]
  %vm5084 = vcmask 1045508
  %v5085 = vsel %vm5084, %v5083, %v5080
  %s5086 = scalar_lea.vmem %s0, 909
  %s5087 = smov 192
  %v5088 = vld [vmem:[%s5086] ss:$16 sm:%s5087]
  %vm5089 = vcmask 1047558
  %v5090 = vsel %vm5089, %v5088, %v5085
  %5091 = vrot.lane.b32.xlu0 %v5090, 80
  %v5092 = vpop.permute.xlu0 %5091
  %vm5093 = vcmask 786048
  %s5094 = scalar_lea.vmem %s1, 120
  %5095 = vst.msk [vmem:[%s5094] sm:$0xff] %vm5093, %v5092
  %s5096 = scalar_lea.vmem %s0, 1165
  %s5097 = smov 3
  %v5098 = vld [vmem:[%s5096] ss:$16 sm:%s5097]
  %s5099 = scalar_lea.vmem %s0, 1165
  %s5100 = smov 12
  %v5101 = vld [vmem:[%s5099] ss:$16 sm:%s5100]
  %vm5102 = vcmask 1043458
  %v5103 = vsel %vm5102, %v5101, %v5098
  %s5104 = scalar_lea.vmem %s0, 1165
  %s5105 = smov 48
  %v5106 = vld [vmem:[%s5104] ss:$16 sm:%s5105]
  %vm5107 = vcmask 1045508
  %v5108 = vsel %vm5107, %v5106, %v5103
  %s5109 = scalar_lea.vmem %s0, 1165
  %s5110 = smov 192
  %v5111 = vld [vmem:[%s5109] ss:$16 sm:%s5110]
  %vm5112 = vcmask 1047558
  %v5113 = vsel %vm5112, %v5111, %v5108
  %5114 = vrot.lane.b32.xlu0 %v5113, 80
  %v5115 = vpop.permute.xlu0 %5114
  %vm5116 = vcmask 786048
  %s5117 = scalar_lea.vmem %s1, 152
  %5118 = vst.msk [vmem:[%s5117] sm:$0xff] %vm5116, %v5115
  %s5119 = scalar_lea.vmem %s0, 1421
  %s5120 = smov 3
  %v5121 = vld [vmem:[%s5119] ss:$16 sm:%s5120]
  %s5122 = scalar_lea.vmem %s0, 1421
  %s5123 = smov 12
  %v5124 = vld [vmem:[%s5122] ss:$16 sm:%s5123]
  %vm5125 = vcmask 1043458
  %v5126 = vsel %vm5125, %v5124, %v5121
  %s5127 = scalar_lea.vmem %s0, 1421
  %s5128 = smov 48
  %v5129 = vld [vmem:[%s5127] ss:$16 sm:%s5128]
  %vm5130 = vcmask 1045508
  %v5131 = vsel %vm5130, %v5129, %v5126
  %s5132 = scalar_lea.vmem %s0, 1421
  %s5133 = smov 192
  %v5134 = vld [vmem:[%s5132] ss:$16 sm:%s5133]
  %vm5135 = vcmask 1047558
  %v5136 = vsel %vm5135, %v5134, %v5131
  %5137 = vrot.lane.b32.xlu0 %v5136, 80
  %v5138 = vpop.permute.xlu0 %5137
  %vm5139 = vcmask 786048
  %s5140 = scalar_lea.vmem %s1, 184
  %5141 = vst.msk [vmem:[%s5140] sm:$0xff] %vm5139, %v5138
  %s5142 = scalar_lea.vmem %s0, 1677
  %s5143 = smov 3
  %v5144 = vld [vmem:[%s5142] ss:$16 sm:%s5143]
  %s5145 = scalar_lea.vmem %s0, 1677
  %s5146 = smov 12
  %v5147 = vld [vmem:[%s5145] ss:$16 sm:%s5146]
  %vm5148 = vcmask 1043458
  %v5149 = vsel %vm5148, %v5147, %v5144
  %s5150 = scalar_lea.vmem %s0, 1677
  %s5151 = smov 48
  %v5152 = vld [vmem:[%s5150] ss:$16 sm:%s5151]
  %vm5153 = vcmask 1045508
  %v5154 = vsel %vm5153, %v5152, %v5149
  %s5155 = scalar_lea.vmem %s0, 1677
  %s5156 = smov 192
  %v5157 = vld [vmem:[%s5155] ss:$16 sm:%s5156]
  %vm5158 = vcmask 1047558
  %v5159 = vsel %vm5158, %v5157, %v5154
  %5160 = vrot.lane.b32.xlu0 %v5159, 80
  %v5161 = vpop.permute.xlu0 %5160
  %vm5162 = vcmask 786048
  %s5163 = scalar_lea.vmem %s1, 216
  %5164 = vst.msk [vmem:[%s5163] sm:$0xff] %vm5162, %v5161
  %s5165 = scalar_lea.vmem %s0, 1933
  %s5166 = smov 3
  %v5167 = vld [vmem:[%s5165] ss:$16 sm:%s5166]
  %s5168 = scalar_lea.vmem %s0, 1933
  %s5169 = smov 12
  %v5170 = vld [vmem:[%s5168] ss:$16 sm:%s5169]
  %vm5171 = vcmask 1043458
  %v5172 = vsel %vm5171, %v5170, %v5167
  %s5173 = scalar_lea.vmem %s0, 1933
  %s5174 = smov 48
  %v5175 = vld [vmem:[%s5173] ss:$16 sm:%s5174]
  %vm5176 = vcmask 1045508
  %v5177 = vsel %vm5176, %v5175, %v5172
  %s5178 = scalar_lea.vmem %s0, 1933
  %s5179 = smov 192
  %v5180 = vld [vmem:[%s5178] ss:$16 sm:%s5179]
  %vm5181 = vcmask 1047558
  %v5182 = vsel %vm5181, %v5180, %v5177
  %5183 = vrot.lane.b32.xlu0 %v5182, 80
  %v5184 = vpop.permute.xlu0 %5183
  %vm5185 = vcmask 786048
  %s5186 = scalar_lea.vmem %s1, 248
  %5187 = vst.msk [vmem:[%s5186] sm:$0xff] %vm5185, %v5184
  %s5188 = scalar_lea.vmem %s0, 2189
  %s5189 = smov 3
  %v5190 = vld [vmem:[%s5188] ss:$16 sm:%s5189]
  %s5191 = scalar_lea.vmem %s0, 2189
  %s5192 = smov 12
  %v5193 = vld [vmem:[%s5191] ss:$16 sm:%s5192]
  %vm5194 = vcmask 1043458
  %v5195 = vsel %vm5194, %v5193, %v5190
  %s5196 = scalar_lea.vmem %s0, 2189
  %s5197 = smov 48
  %v5198 = vld [vmem:[%s5196] ss:$16 sm:%s5197]
  %vm5199 = vcmask 1045508
  %v5200 = vsel %vm5199, %v5198, %v5195
  %s5201 = scalar_lea.vmem %s0, 2189
  %s5202 = smov 192
  %v5203 = vld [vmem:[%s5201] ss:$16 sm:%s5202]
  %vm5204 = vcmask 1047558
  %v5205 = vsel %vm5204, %v5203, %v5200
  %5206 = vrot.lane.b32.xlu0 %v5205, 80
  %v5207 = vpop.permute.xlu0 %5206
  %vm5208 = vcmask 786048
  %s5209 = scalar_lea.vmem %s1, 280
  %5210 = vst.msk [vmem:[%s5209] sm:$0xff] %vm5208, %v5207
  %s5211 = scalar_lea.vmem %s0, 2445
  %s5212 = smov 3
  %v5213 = vld [vmem:[%s5211] ss:$16 sm:%s5212]
  %s5214 = scalar_lea.vmem %s0, 2445
  %s5215 = smov 12
  %v5216 = vld [vmem:[%s5214] ss:$16 sm:%s5215]
  %vm5217 = vcmask 1043458
  %v5218 = vsel %vm5217, %v5216, %v5213
  %s5219 = scalar_lea.vmem %s0, 2445
  %s5220 = smov 48
  %v5221 = vld [vmem:[%s5219] ss:$16 sm:%s5220]
  %vm5222 = vcmask 1045508
  %v5223 = vsel %vm5222, %v5221, %v5218
  %s5224 = scalar_lea.vmem %s0, 2445
  %s5225 = smov 192
  %v5226 = vld [vmem:[%s5224] ss:$16 sm:%s5225]
  %vm5227 = vcmask 1047558
  %v5228 = vsel %vm5227, %v5226, %v5223
  %5229 = vrot.lane.b32.xlu0 %v5228, 80
  %v5230 = vpop.permute.xlu0 %5229
  %vm5231 = vcmask 786048
  %s5232 = scalar_lea.vmem %s1, 312
  %5233 = vst.msk [vmem:[%s5232] sm:$0xff] %vm5231, %v5230
  %s5234 = scalar_lea.vmem %s0, 2701
  %s5235 = smov 3
  %v5236 = vld [vmem:[%s5234] ss:$16 sm:%s5235]
  %s5237 = scalar_lea.vmem %s0, 2701
  %s5238 = smov 12
  %v5239 = vld [vmem:[%s5237] ss:$16 sm:%s5238]
  %vm5240 = vcmask 1043458
  %v5241 = vsel %vm5240, %v5239, %v5236
  %s5242 = scalar_lea.vmem %s0, 2701
  %s5243 = smov 48
  %v5244 = vld [vmem:[%s5242] ss:$16 sm:%s5243]
  %vm5245 = vcmask 1045508
  %v5246 = vsel %vm5245, %v5244, %v5241
  %s5247 = scalar_lea.vmem %s0, 2701
  %s5248 = smov 192
  %v5249 = vld [vmem:[%s5247] ss:$16 sm:%s5248]
  %vm5250 = vcmask 1047558
  %v5251 = vsel %vm5250, %v5249, %v5246
  %5252 = vrot.lane.b32.xlu0 %v5251, 80
  %v5253 = vpop.permute.xlu0 %5252
  %vm5254 = vcmask 786048
  %s5255 = scalar_lea.vmem %s1, 344
  %5256 = vst.msk [vmem:[%s5255] sm:$0xff] %vm5254, %v5253
  %s5257 = scalar_lea.vmem %s0, 2957
  %s5258 = smov 3
  %v5259 = vld [vmem:[%s5257] ss:$16 sm:%s5258]
  %s5260 = scalar_lea.vmem %s0, 2957
  %s5261 = smov 12
  %v5262 = vld [vmem:[%s5260] ss:$16 sm:%s5261]
  %vm5263 = vcmask 1043458
  %v5264 = vsel %vm5263, %v5262, %v5259
  %s5265 = scalar_lea.vmem %s0, 2957
  %s5266 = smov 48
  %v5267 = vld [vmem:[%s5265] ss:$16 sm:%s5266]
  %vm5268 = vcmask 1045508
  %v5269 = vsel %vm5268, %v5267, %v5264
  %s5270 = scalar_lea.vmem %s0, 2957
  %s5271 = smov 192
  %v5272 = vld [vmem:[%s5270] ss:$16 sm:%s5271]
  %vm5273 = vcmask 1047558
  %v5274 = vsel %vm5273, %v5272, %v5269
  %5275 = vrot.lane.b32.xlu0 %v5274, 80
  %v5276 = vpop.permute.xlu0 %5275
  %vm5277 = vcmask 786048
  %s5278 = scalar_lea.vmem %s1, 376
  %5279 = vst.msk [vmem:[%s5278] sm:$0xff] %vm5277, %v5276
  %s5280 = scalar_lea.vmem %s0, 3213
  %s5281 = smov 3
  %v5282 = vld [vmem:[%s5280] ss:$16 sm:%s5281]
  %s5283 = scalar_lea.vmem %s0, 3213
  %s5284 = smov 12
  %v5285 = vld [vmem:[%s5283] ss:$16 sm:%s5284]
  %vm5286 = vcmask 1043458
  %v5287 = vsel %vm5286, %v5285, %v5282
  %s5288 = scalar_lea.vmem %s0, 3213
  %s5289 = smov 48
  %v5290 = vld [vmem:[%s5288] ss:$16 sm:%s5289]
  %vm5291 = vcmask 1045508
  %v5292 = vsel %vm5291, %v5290, %v5287
  %s5293 = scalar_lea.vmem %s0, 3213
  %s5294 = smov 192
  %v5295 = vld [vmem:[%s5293] ss:$16 sm:%s5294]
  %vm5296 = vcmask 1047558
  %v5297 = vsel %vm5296, %v5295, %v5292
  %5298 = vrot.lane.b32.xlu0 %v5297, 80
  %v5299 = vpop.permute.xlu0 %5298
  %vm5300 = vcmask 786048
  %s5301 = scalar_lea.vmem %s1, 408
  %5302 = vst.msk [vmem:[%s5301] sm:$0xff] %vm5300, %v5299
  %s5303 = scalar_lea.vmem %s0, 3469
  %s5304 = smov 3
  %v5305 = vld [vmem:[%s5303] ss:$16 sm:%s5304]
  %s5306 = scalar_lea.vmem %s0, 3469
  %s5307 = smov 12
  %v5308 = vld [vmem:[%s5306] ss:$16 sm:%s5307]
  %vm5309 = vcmask 1043458
  %v5310 = vsel %vm5309, %v5308, %v5305
  %s5311 = scalar_lea.vmem %s0, 3469
  %s5312 = smov 48
  %v5313 = vld [vmem:[%s5311] ss:$16 sm:%s5312]
  %vm5314 = vcmask 1045508
  %v5315 = vsel %vm5314, %v5313, %v5310
  %s5316 = scalar_lea.vmem %s0, 3469
  %s5317 = smov 192
  %v5318 = vld [vmem:[%s5316] ss:$16 sm:%s5317]
  %vm5319 = vcmask 1047558
  %v5320 = vsel %vm5319, %v5318, %v5315
  %5321 = vrot.lane.b32.xlu0 %v5320, 80
  %v5322 = vpop.permute.xlu0 %5321
  %vm5323 = vcmask 786048
  %s5324 = scalar_lea.vmem %s1, 440
  %5325 = vst.msk [vmem:[%s5324] sm:$0xff] %vm5323, %v5322
  %s5326 = scalar_lea.vmem %s0, 3725
  %s5327 = smov 3
  %v5328 = vld [vmem:[%s5326] ss:$16 sm:%s5327]
  %s5329 = scalar_lea.vmem %s0, 3725
  %s5330 = smov 12
  %v5331 = vld [vmem:[%s5329] ss:$16 sm:%s5330]
  %vm5332 = vcmask 1043458
  %v5333 = vsel %vm5332, %v5331, %v5328
  %s5334 = scalar_lea.vmem %s0, 3725
  %s5335 = smov 48
  %v5336 = vld [vmem:[%s5334] ss:$16 sm:%s5335]
  %vm5337 = vcmask 1045508
  %v5338 = vsel %vm5337, %v5336, %v5333
  %s5339 = scalar_lea.vmem %s0, 3725
  %s5340 = smov 192
  %v5341 = vld [vmem:[%s5339] ss:$16 sm:%s5340]
  %vm5342 = vcmask 1047558
  %v5343 = vsel %vm5342, %v5341, %v5338
  %5344 = vrot.lane.b32.xlu0 %v5343, 80
  %v5345 = vpop.permute.xlu0 %5344
  %vm5346 = vcmask 786048
  %s5347 = scalar_lea.vmem %s1, 472
  %5348 = vst.msk [vmem:[%s5347] sm:$0xff] %vm5346, %v5345
  %s5349 = scalar_lea.vmem %s0, 3981
  %s5350 = smov 3
  %v5351 = vld [vmem:[%s5349] ss:$16 sm:%s5350]
  %s5352 = scalar_lea.vmem %s0, 3981
  %s5353 = smov 12
  %v5354 = vld [vmem:[%s5352] ss:$16 sm:%s5353]
  %vm5355 = vcmask 1043458
  %v5356 = vsel %vm5355, %v5354, %v5351
  %s5357 = scalar_lea.vmem %s0, 3981
  %s5358 = smov 48
  %v5359 = vld [vmem:[%s5357] ss:$16 sm:%s5358]
  %vm5360 = vcmask 1045508
  %v5361 = vsel %vm5360, %v5359, %v5356
  %s5362 = scalar_lea.vmem %s0, 3981
  %s5363 = smov 192
  %v5364 = vld [vmem:[%s5362] ss:$16 sm:%s5363]
  %vm5365 = vcmask 1047558
  %v5366 = vsel %vm5365, %v5364, %v5361
  %5367 = vrot.lane.b32.xlu0 %v5366, 80
  %v5368 = vpop.permute.xlu0 %5367
  %vm5369 = vcmask 786048
  %s5370 = scalar_lea.vmem %s1, 504
  %5371 = vst.msk [vmem:[%s5370] sm:$0xff] %vm5369, %v5368
  %s5372 = scalar_lea.vmem %s0, 4
  %s5373 = smov 3
  %v5374 = vld [vmem:[%s5372] ss:$16 sm:%s5373]
  %s5375 = scalar_lea.vmem %s0, 4
  %s5376 = smov 12
  %v5377 = vld [vmem:[%s5375] ss:$16 sm:%s5376]
  %vm5378 = vcmask 1043458
  %v5379 = vsel %vm5378, %v5377, %v5374
  %s5380 = scalar_lea.vmem %s0, 4
  %s5381 = smov 48
  %v5382 = vld [vmem:[%s5380] ss:$16 sm:%s5381]
  %vm5383 = vcmask 1045508
  %v5384 = vsel %vm5383, %v5382, %v5379
  %s5385 = scalar_lea.vmem %s0, 4
  %s5386 = smov 192
  %v5387 = vld [vmem:[%s5385] ss:$16 sm:%s5386]
  %vm5388 = vcmask 1047558
  %v5389 = vsel %vm5388, %v5387, %v5384
  %5390 = vrot.lane.b32.xlu0 %v5389, 64
  %v5391 = vpop.permute.xlu0 %5390
  %vm5392 = vcmask 654848
  %5393 = vst.msk [vmem:[%s1] sm:$0xff] %vm5392, %v5391
  %s5394 = scalar_lea.vmem %s0, 260
  %s5395 = smov 3
  %v5396 = vld [vmem:[%s5394] ss:$16 sm:%s5395]
  %s5397 = scalar_lea.vmem %s0, 260
  %s5398 = smov 12
  %v5399 = vld [vmem:[%s5397] ss:$16 sm:%s5398]
  %vm5400 = vcmask 1043458
  %v5401 = vsel %vm5400, %v5399, %v5396
  %s5402 = scalar_lea.vmem %s0, 260
  %s5403 = smov 48
  %v5404 = vld [vmem:[%s5402] ss:$16 sm:%s5403]
  %vm5405 = vcmask 1045508
  %v5406 = vsel %vm5405, %v5404, %v5401
  %s5407 = scalar_lea.vmem %s0, 260
  %s5408 = smov 192
  %v5409 = vld [vmem:[%s5407] ss:$16 sm:%s5408]
  %vm5410 = vcmask 1047558
  %v5411 = vsel %vm5410, %v5409, %v5406
  %5412 = vrot.lane.b32.xlu0 %v5411, 64
  %v5413 = vpop.permute.xlu0 %5412
  %vm5414 = vcmask 654848
  %s5415 = scalar_lea.vmem %s1, 32
  %5416 = vst.msk [vmem:[%s5415] sm:$0xff] %vm5414, %v5413
  %s5417 = scalar_lea.vmem %s0, 516
  %s5418 = smov 3
  %v5419 = vld [vmem:[%s5417] ss:$16 sm:%s5418]
  %s5420 = scalar_lea.vmem %s0, 516
  %s5421 = smov 12
  %v5422 = vld [vmem:[%s5420] ss:$16 sm:%s5421]
  %vm5423 = vcmask 1043458
  %v5424 = vsel %vm5423, %v5422, %v5419
  %s5425 = scalar_lea.vmem %s0, 516
  %s5426 = smov 48
  %v5427 = vld [vmem:[%s5425] ss:$16 sm:%s5426]
  %vm5428 = vcmask 1045508
  %v5429 = vsel %vm5428, %v5427, %v5424
  %s5430 = scalar_lea.vmem %s0, 516
  %s5431 = smov 192
  %v5432 = vld [vmem:[%s5430] ss:$16 sm:%s5431]
  %vm5433 = vcmask 1047558
  %v5434 = vsel %vm5433, %v5432, %v5429
  %5435 = vrot.lane.b32.xlu0 %v5434, 64
  %v5436 = vpop.permute.xlu0 %5435
  %vm5437 = vcmask 654848
  %s5438 = scalar_lea.vmem %s1, 64
  %5439 = vst.msk [vmem:[%s5438] sm:$0xff] %vm5437, %v5436
  %s5440 = scalar_lea.vmem %s0, 772
  %s5441 = smov 3
  %v5442 = vld [vmem:[%s5440] ss:$16 sm:%s5441]
  %s5443 = scalar_lea.vmem %s0, 772
  %s5444 = smov 12
  %v5445 = vld [vmem:[%s5443] ss:$16 sm:%s5444]
  %vm5446 = vcmask 1043458
  %v5447 = vsel %vm5446, %v5445, %v5442
  %s5448 = scalar_lea.vmem %s0, 772
  %s5449 = smov 48
  %v5450 = vld [vmem:[%s5448] ss:$16 sm:%s5449]
  %vm5451 = vcmask 1045508
  %v5452 = vsel %vm5451, %v5450, %v5447
  %s5453 = scalar_lea.vmem %s0, 772
  %s5454 = smov 192
  %v5455 = vld [vmem:[%s5453] ss:$16 sm:%s5454]
  %vm5456 = vcmask 1047558
  %v5457 = vsel %vm5456, %v5455, %v5452
  %5458 = vrot.lane.b32.xlu0 %v5457, 64
  %v5459 = vpop.permute.xlu0 %5458
  %vm5460 = vcmask 654848
  %s5461 = scalar_lea.vmem %s1, 96
  %5462 = vst.msk [vmem:[%s5461] sm:$0xff] %vm5460, %v5459
  %s5463 = scalar_lea.vmem %s0, 1028
  %s5464 = smov 3
  %v5465 = vld [vmem:[%s5463] ss:$16 sm:%s5464]
  %s5466 = scalar_lea.vmem %s0, 1028
  %s5467 = smov 12
  %v5468 = vld [vmem:[%s5466] ss:$16 sm:%s5467]
  %vm5469 = vcmask 1043458
  %v5470 = vsel %vm5469, %v5468, %v5465
  %s5471 = scalar_lea.vmem %s0, 1028
  %s5472 = smov 48
  %v5473 = vld [vmem:[%s5471] ss:$16 sm:%s5472]
  %vm5474 = vcmask 1045508
  %v5475 = vsel %vm5474, %v5473, %v5470
  %s5476 = scalar_lea.vmem %s0, 1028
  %s5477 = smov 192
  %v5478 = vld [vmem:[%s5476] ss:$16 sm:%s5477]
  %vm5479 = vcmask 1047558
  %v5480 = vsel %vm5479, %v5478, %v5475
  %5481 = vrot.lane.b32.xlu0 %v5480, 64
  %v5482 = vpop.permute.xlu0 %5481
  %vm5483 = vcmask 654848
  %s5484 = scalar_lea.vmem %s1, 128
  %5485 = vst.msk [vmem:[%s5484] sm:$0xff] %vm5483, %v5482
  %s5486 = scalar_lea.vmem %s0, 1284
  %s5487 = smov 3
  %v5488 = vld [vmem:[%s5486] ss:$16 sm:%s5487]
  %s5489 = scalar_lea.vmem %s0, 1284
  %s5490 = smov 12
  %v5491 = vld [vmem:[%s5489] ss:$16 sm:%s5490]
  %vm5492 = vcmask 1043458
  %v5493 = vsel %vm5492, %v5491, %v5488
  %s5494 = scalar_lea.vmem %s0, 1284
  %s5495 = smov 48
  %v5496 = vld [vmem:[%s5494] ss:$16 sm:%s5495]
  %vm5497 = vcmask 1045508
  %v5498 = vsel %vm5497, %v5496, %v5493
  %s5499 = scalar_lea.vmem %s0, 1284
  %s5500 = smov 192
  %v5501 = vld [vmem:[%s5499] ss:$16 sm:%s5500]
  %vm5502 = vcmask 1047558
  %v5503 = vsel %vm5502, %v5501, %v5498
  %5504 = vrot.lane.b32.xlu0 %v5503, 64
  %v5505 = vpop.permute.xlu0 %5504
  %vm5506 = vcmask 654848
  %s5507 = scalar_lea.vmem %s1, 160
  %5508 = vst.msk [vmem:[%s5507] sm:$0xff] %vm5506, %v5505
  %s5509 = scalar_lea.vmem %s0, 1540
  %s5510 = smov 3
  %v5511 = vld [vmem:[%s5509] ss:$16 sm:%s5510]
  %s5512 = scalar_lea.vmem %s0, 1540
  %s5513 = smov 12
  %v5514 = vld [vmem:[%s5512] ss:$16 sm:%s5513]
  %vm5515 = vcmask 1043458
  %v5516 = vsel %vm5515, %v5514, %v5511
  %s5517 = scalar_lea.vmem %s0, 1540
  %s5518 = smov 48
  %v5519 = vld [vmem:[%s5517] ss:$16 sm:%s5518]
  %vm5520 = vcmask 1045508
  %v5521 = vsel %vm5520, %v5519, %v5516
  %s5522 = scalar_lea.vmem %s0, 1540
  %s5523 = smov 192
  %v5524 = vld [vmem:[%s5522] ss:$16 sm:%s5523]
  %vm5525 = vcmask 1047558
  %v5526 = vsel %vm5525, %v5524, %v5521
  %5527 = vrot.lane.b32.xlu0 %v5526, 64
  %v5528 = vpop.permute.xlu0 %5527
  %vm5529 = vcmask 654848
  %s5530 = scalar_lea.vmem %s1, 192
  %5531 = vst.msk [vmem:[%s5530] sm:$0xff] %vm5529, %v5528
  %s5532 = scalar_lea.vmem %s0, 1796
  %s5533 = smov 3
  %v5534 = vld [vmem:[%s5532] ss:$16 sm:%s5533]
  %s5535 = scalar_lea.vmem %s0, 1796
  %s5536 = smov 12
  %v5537 = vld [vmem:[%s5535] ss:$16 sm:%s5536]
  %vm5538 = vcmask 1043458
  %v5539 = vsel %vm5538, %v5537, %v5534
  %s5540 = scalar_lea.vmem %s0, 1796
  %s5541 = smov 48
  %v5542 = vld [vmem:[%s5540] ss:$16 sm:%s5541]
  %vm5543 = vcmask 1045508
  %v5544 = vsel %vm5543, %v5542, %v5539
  %s5545 = scalar_lea.vmem %s0, 1796
  %s5546 = smov 192
  %v5547 = vld [vmem:[%s5545] ss:$16 sm:%s5546]
  %vm5548 = vcmask 1047558
  %v5549 = vsel %vm5548, %v5547, %v5544
  %5550 = vrot.lane.b32.xlu0 %v5549, 64
  %v5551 = vpop.permute.xlu0 %5550
  %vm5552 = vcmask 654848
  %s5553 = scalar_lea.vmem %s1, 224
  %5554 = vst.msk [vmem:[%s5553] sm:$0xff] %vm5552, %v5551
  %s5555 = scalar_lea.vmem %s0, 2052
  %s5556 = smov 3
  %v5557 = vld [vmem:[%s5555] ss:$16 sm:%s5556]
  %s5558 = scalar_lea.vmem %s0, 2052
  %s5559 = smov 12
  %v5560 = vld [vmem:[%s5558] ss:$16 sm:%s5559]
  %vm5561 = vcmask 1043458
  %v5562 = vsel %vm5561, %v5560, %v5557
  %s5563 = scalar_lea.vmem %s0, 2052
  %s5564 = smov 48
  %v5565 = vld [vmem:[%s5563] ss:$16 sm:%s5564]
  %vm5566 = vcmask 1045508
  %v5567 = vsel %vm5566, %v5565, %v5562
  %s5568 = scalar_lea.vmem %s0, 2052
  %s5569 = smov 192
  %v5570 = vld [vmem:[%s5568] ss:$16 sm:%s5569]
  %vm5571 = vcmask 1047558
  %v5572 = vsel %vm5571, %v5570, %v5567
  %5573 = vrot.lane.b32.xlu0 %v5572, 64
  %v5574 = vpop.permute.xlu0 %5573
  %vm5575 = vcmask 654848
  %s5576 = scalar_lea.vmem %s1, 256
  %5577 = vst.msk [vmem:[%s5576] sm:$0xff] %vm5575, %v5574
  %s5578 = scalar_lea.vmem %s0, 2308
  %s5579 = smov 3
  %v5580 = vld [vmem:[%s5578] ss:$16 sm:%s5579]
  %s5581 = scalar_lea.vmem %s0, 2308
  %s5582 = smov 12
  %v5583 = vld [vmem:[%s5581] ss:$16 sm:%s5582]
  %vm5584 = vcmask 1043458
  %v5585 = vsel %vm5584, %v5583, %v5580
  %s5586 = scalar_lea.vmem %s0, 2308
  %s5587 = smov 48
  %v5588 = vld [vmem:[%s5586] ss:$16 sm:%s5587]
  %vm5589 = vcmask 1045508
  %v5590 = vsel %vm5589, %v5588, %v5585
  %s5591 = scalar_lea.vmem %s0, 2308
  %s5592 = smov 192
  %v5593 = vld [vmem:[%s5591] ss:$16 sm:%s5592]
  %vm5594 = vcmask 1047558
  %v5595 = vsel %vm5594, %v5593, %v5590
  %5596 = vrot.lane.b32.xlu0 %v5595, 64
  %v5597 = vpop.permute.xlu0 %5596
  %vm5598 = vcmask 654848
  %s5599 = scalar_lea.vmem %s1, 288
  %5600 = vst.msk [vmem:[%s5599] sm:$0xff] %vm5598, %v5597
  %s5601 = scalar_lea.vmem %s0, 2564
  %s5602 = smov 3
  %v5603 = vld [vmem:[%s5601] ss:$16 sm:%s5602]
  %s5604 = scalar_lea.vmem %s0, 2564
  %s5605 = smov 12
  %v5606 = vld [vmem:[%s5604] ss:$16 sm:%s5605]
  %vm5607 = vcmask 1043458
  %v5608 = vsel %vm5607, %v5606, %v5603
  %s5609 = scalar_lea.vmem %s0, 2564
  %s5610 = smov 48
  %v5611 = vld [vmem:[%s5609] ss:$16 sm:%s5610]
  %vm5612 = vcmask 1045508
  %v5613 = vsel %vm5612, %v5611, %v5608
  %s5614 = scalar_lea.vmem %s0, 2564
  %s5615 = smov 192
  %v5616 = vld [vmem:[%s5614] ss:$16 sm:%s5615]
  %vm5617 = vcmask 1047558
  %v5618 = vsel %vm5617, %v5616, %v5613
  %5619 = vrot.lane.b32.xlu0 %v5618, 64
  %v5620 = vpop.permute.xlu0 %5619
  %vm5621 = vcmask 654848
  %s5622 = scalar_lea.vmem %s1, 320
  %5623 = vst.msk [vmem:[%s5622] sm:$0xff] %vm5621, %v5620
  %s5624 = scalar_lea.vmem %s0, 2820
  %s5625 = smov 3
  %v5626 = vld [vmem:[%s5624] ss:$16 sm:%s5625]
  %s5627 = scalar_lea.vmem %s0, 2820
  %s5628 = smov 12
  %v5629 = vld [vmem:[%s5627] ss:$16 sm:%s5628]
  %vm5630 = vcmask 1043458
  %v5631 = vsel %vm5630, %v5629, %v5626
  %s5632 = scalar_lea.vmem %s0, 2820
  %s5633 = smov 48
  %v5634 = vld [vmem:[%s5632] ss:$16 sm:%s5633]
  %vm5635 = vcmask 1045508
  %v5636 = vsel %vm5635, %v5634, %v5631
  %s5637 = scalar_lea.vmem %s0, 2820
  %s5638 = smov 192
  %v5639 = vld [vmem:[%s5637] ss:$16 sm:%s5638]
  %vm5640 = vcmask 1047558
  %v5641 = vsel %vm5640, %v5639, %v5636
  %5642 = vrot.lane.b32.xlu0 %v5641, 64
  %v5643 = vpop.permute.xlu0 %5642
  %vm5644 = vcmask 654848
  %s5645 = scalar_lea.vmem %s1, 352
  %5646 = vst.msk [vmem:[%s5645] sm:$0xff] %vm5644, %v5643
  %s5647 = scalar_lea.vmem %s0, 3076
  %s5648 = smov 3
  %v5649 = vld [vmem:[%s5647] ss:$16 sm:%s5648]
  %s5650 = scalar_lea.vmem %s0, 3076
  %s5651 = smov 12
  %v5652 = vld [vmem:[%s5650] ss:$16 sm:%s5651]
  %vm5653 = vcmask 1043458
  %v5654 = vsel %vm5653, %v5652, %v5649
  %s5655 = scalar_lea.vmem %s0, 3076
  %s5656 = smov 48
  %v5657 = vld [vmem:[%s5655] ss:$16 sm:%s5656]
  %vm5658 = vcmask 1045508
  %v5659 = vsel %vm5658, %v5657, %v5654
  %s5660 = scalar_lea.vmem %s0, 3076
  %s5661 = smov 192
  %v5662 = vld [vmem:[%s5660] ss:$16 sm:%s5661]
  %vm5663 = vcmask 1047558
  %v5664 = vsel %vm5663, %v5662, %v5659
  %5665 = vrot.lane.b32.xlu0 %v5664, 64
  %v5666 = vpop.permute.xlu0 %5665
  %vm5667 = vcmask 654848
  %s5668 = scalar_lea.vmem %s1, 384
  %5669 = vst.msk [vmem:[%s5668] sm:$0xff] %vm5667, %v5666
  %s5670 = scalar_lea.vmem %s0, 3332
  %s5671 = smov 3
  %v5672 = vld [vmem:[%s5670] ss:$16 sm:%s5671]
  %s5673 = scalar_lea.vmem %s0, 3332
  %s5674 = smov 12
  %v5675 = vld [vmem:[%s5673] ss:$16 sm:%s5674]
  %vm5676 = vcmask 1043458
  %v5677 = vsel %vm5676, %v5675, %v5672
  %s5678 = scalar_lea.vmem %s0, 3332
  %s5679 = smov 48
  %v5680 = vld [vmem:[%s5678] ss:$16 sm:%s5679]
  %vm5681 = vcmask 1045508
  %v5682 = vsel %vm5681, %v5680, %v5677
  %s5683 = scalar_lea.vmem %s0, 3332
  %s5684 = smov 192
  %v5685 = vld [vmem:[%s5683] ss:$16 sm:%s5684]
  %vm5686 = vcmask 1047558
  %v5687 = vsel %vm5686, %v5685, %v5682
  %5688 = vrot.lane.b32.xlu0 %v5687, 64
  %v5689 = vpop.permute.xlu0 %5688
  %vm5690 = vcmask 654848
  %s5691 = scalar_lea.vmem %s1, 416
  %5692 = vst.msk [vmem:[%s5691] sm:$0xff] %vm5690, %v5689
  %s5693 = scalar_lea.vmem %s0, 3588
  %s5694 = smov 3
  %v5695 = vld [vmem:[%s5693] ss:$16 sm:%s5694]
  %s5696 = scalar_lea.vmem %s0, 3588
  %s5697 = smov 12
  %v5698 = vld [vmem:[%s5696] ss:$16 sm:%s5697]
  %vm5699 = vcmask 1043458
  %v5700 = vsel %vm5699, %v5698, %v5695
  %s5701 = scalar_lea.vmem %s0, 3588
  %s5702 = smov 48
  %v5703 = vld [vmem:[%s5701] ss:$16 sm:%s5702]
  %vm5704 = vcmask 1045508
  %v5705 = vsel %vm5704, %v5703, %v5700
  %s5706 = scalar_lea.vmem %s0, 3588
  %s5707 = smov 192
  %v5708 = vld [vmem:[%s5706] ss:$16 sm:%s5707]
  %vm5709 = vcmask 1047558
  %v5710 = vsel %vm5709, %v5708, %v5705
  %5711 = vrot.lane.b32.xlu0 %v5710, 64
  %v5712 = vpop.permute.xlu0 %5711
  %vm5713 = vcmask 654848
  %s5714 = scalar_lea.vmem %s1, 448
  %5715 = vst.msk [vmem:[%s5714] sm:$0xff] %vm5713, %v5712
  %s5716 = scalar_lea.vmem %s0, 3844
  %s5717 = smov 3
  %v5718 = vld [vmem:[%s5716] ss:$16 sm:%s5717]
  %s5719 = scalar_lea.vmem %s0, 3844
  %s5720 = smov 12
  %v5721 = vld [vmem:[%s5719] ss:$16 sm:%s5720]
  %vm5722 = vcmask 1043458
  %v5723 = vsel %vm5722, %v5721, %v5718
  %s5724 = scalar_lea.vmem %s0, 3844
  %s5725 = smov 48
  %v5726 = vld [vmem:[%s5724] ss:$16 sm:%s5725]
  %vm5727 = vcmask 1045508
  %v5728 = vsel %vm5727, %v5726, %v5723
  %s5729 = scalar_lea.vmem %s0, 3844
  %s5730 = smov 192
  %v5731 = vld [vmem:[%s5729] ss:$16 sm:%s5730]
  %vm5732 = vcmask 1047558
  %v5733 = vsel %vm5732, %v5731, %v5728
  %5734 = vrot.lane.b32.xlu0 %v5733, 64
  %v5735 = vpop.permute.xlu0 %5734
  %vm5736 = vcmask 654848
  %s5737 = scalar_lea.vmem %s1, 480
  %5738 = vst.msk [vmem:[%s5737] sm:$0xff] %vm5736, %v5735
  %s5739 = scalar_lea.vmem %s0, 12
  %s5740 = smov 3
  %v5741 = vld [vmem:[%s5739] ss:$16 sm:%s5740]
  %s5742 = scalar_lea.vmem %s0, 12
  %s5743 = smov 12
  %v5744 = vld [vmem:[%s5742] ss:$16 sm:%s5743]
  %vm5745 = vcmask 1043458
  %v5746 = vsel %vm5745, %v5744, %v5741
  %s5747 = scalar_lea.vmem %s0, 12
  %s5748 = smov 48
  %v5749 = vld [vmem:[%s5747] ss:$16 sm:%s5748]
  %vm5750 = vcmask 1045508
  %v5751 = vsel %vm5750, %v5749, %v5746
  %s5752 = scalar_lea.vmem %s0, 12
  %s5753 = smov 192
  %v5754 = vld [vmem:[%s5752] ss:$16 sm:%s5753]
  %vm5755 = vcmask 1047558
  %v5756 = vsel %vm5755, %v5754, %v5751
  %5757 = vrot.lane.b32.xlu0 %v5756, 64
  %v5758 = vpop.permute.xlu0 %5757
  %vm5759 = vcmask 654848
  %s5760 = scalar_lea.vmem %s1, 8
  %5761 = vst.msk [vmem:[%s5760] sm:$0xff] %vm5759, %v5758
  %s5762 = scalar_lea.vmem %s0, 268
  %s5763 = smov 3
  %v5764 = vld [vmem:[%s5762] ss:$16 sm:%s5763]
  %s5765 = scalar_lea.vmem %s0, 268
  %s5766 = smov 12
  %v5767 = vld [vmem:[%s5765] ss:$16 sm:%s5766]
  %vm5768 = vcmask 1043458
  %v5769 = vsel %vm5768, %v5767, %v5764
  %s5770 = scalar_lea.vmem %s0, 268
  %s5771 = smov 48
  %v5772 = vld [vmem:[%s5770] ss:$16 sm:%s5771]
  %vm5773 = vcmask 1045508
  %v5774 = vsel %vm5773, %v5772, %v5769
  %s5775 = scalar_lea.vmem %s0, 268
  %s5776 = smov 192
  %v5777 = vld [vmem:[%s5775] ss:$16 sm:%s5776]
  %vm5778 = vcmask 1047558
  %v5779 = vsel %vm5778, %v5777, %v5774
  %5780 = vrot.lane.b32.xlu0 %v5779, 64
  %v5781 = vpop.permute.xlu0 %5780
  %vm5782 = vcmask 654848
  %s5783 = scalar_lea.vmem %s1, 40
  %5784 = vst.msk [vmem:[%s5783] sm:$0xff] %vm5782, %v5781
  %s5785 = scalar_lea.vmem %s0, 524
  %s5786 = smov 3
  %v5787 = vld [vmem:[%s5785] ss:$16 sm:%s5786]
  %s5788 = scalar_lea.vmem %s0, 524
  %s5789 = smov 12
  %v5790 = vld [vmem:[%s5788] ss:$16 sm:%s5789]
  %vm5791 = vcmask 1043458
  %v5792 = vsel %vm5791, %v5790, %v5787
  %s5793 = scalar_lea.vmem %s0, 524
  %s5794 = smov 48
  %v5795 = vld [vmem:[%s5793] ss:$16 sm:%s5794]
  %vm5796 = vcmask 1045508
  %v5797 = vsel %vm5796, %v5795, %v5792
  %s5798 = scalar_lea.vmem %s0, 524
  %s5799 = smov 192
  %v5800 = vld [vmem:[%s5798] ss:$16 sm:%s5799]
  %vm5801 = vcmask 1047558
  %v5802 = vsel %vm5801, %v5800, %v5797
  %5803 = vrot.lane.b32.xlu0 %v5802, 64
  %v5804 = vpop.permute.xlu0 %5803
  %vm5805 = vcmask 654848
  %s5806 = scalar_lea.vmem %s1, 72
  %5807 = vst.msk [vmem:[%s5806] sm:$0xff] %vm5805, %v5804
  %s5808 = scalar_lea.vmem %s0, 780
  %s5809 = smov 3
  %v5810 = vld [vmem:[%s5808] ss:$16 sm:%s5809]
  %s5811 = scalar_lea.vmem %s0, 780
  %s5812 = smov 12
  %v5813 = vld [vmem:[%s5811] ss:$16 sm:%s5812]
  %vm5814 = vcmask 1043458
  %v5815 = vsel %vm5814, %v5813, %v5810
  %s5816 = scalar_lea.vmem %s0, 780
  %s5817 = smov 48
  %v5818 = vld [vmem:[%s5816] ss:$16 sm:%s5817]
  %vm5819 = vcmask 1045508
  %v5820 = vsel %vm5819, %v5818, %v5815
  %s5821 = scalar_lea.vmem %s0, 780
  %s5822 = smov 192
  %v5823 = vld [vmem:[%s5821] ss:$16 sm:%s5822]
  %vm5824 = vcmask 1047558
  %v5825 = vsel %vm5824, %v5823, %v5820
  %5826 = vrot.lane.b32.xlu0 %v5825, 64
  %v5827 = vpop.permute.xlu0 %5826
  %vm5828 = vcmask 654848
  %s5829 = scalar_lea.vmem %s1, 104
  %5830 = vst.msk [vmem:[%s5829] sm:$0xff] %vm5828, %v5827
  %s5831 = scalar_lea.vmem %s0, 1036
  %s5832 = smov 3
  %v5833 = vld [vmem:[%s5831] ss:$16 sm:%s5832]
  %s5834 = scalar_lea.vmem %s0, 1036
  %s5835 = smov 12
  %v5836 = vld [vmem:[%s5834] ss:$16 sm:%s5835]
  %vm5837 = vcmask 1043458
  %v5838 = vsel %vm5837, %v5836, %v5833
  %s5839 = scalar_lea.vmem %s0, 1036
  %s5840 = smov 48
  %v5841 = vld [vmem:[%s5839] ss:$16 sm:%s5840]
  %vm5842 = vcmask 1045508
  %v5843 = vsel %vm5842, %v5841, %v5838
  %s5844 = scalar_lea.vmem %s0, 1036
  %s5845 = smov 192
  %v5846 = vld [vmem:[%s5844] ss:$16 sm:%s5845]
  %vm5847 = vcmask 1047558
  %v5848 = vsel %vm5847, %v5846, %v5843
  %5849 = vrot.lane.b32.xlu0 %v5848, 64
  %v5850 = vpop.permute.xlu0 %5849
  %vm5851 = vcmask 654848
  %s5852 = scalar_lea.vmem %s1, 136
  %5853 = vst.msk [vmem:[%s5852] sm:$0xff] %vm5851, %v5850
  %s5854 = scalar_lea.vmem %s0, 1292
  %s5855 = smov 3
  %v5856 = vld [vmem:[%s5854] ss:$16 sm:%s5855]
  %s5857 = scalar_lea.vmem %s0, 1292
  %s5858 = smov 12
  %v5859 = vld [vmem:[%s5857] ss:$16 sm:%s5858]
  %vm5860 = vcmask 1043458
  %v5861 = vsel %vm5860, %v5859, %v5856
  %s5862 = scalar_lea.vmem %s0, 1292
  %s5863 = smov 48
  %v5864 = vld [vmem:[%s5862] ss:$16 sm:%s5863]
  %vm5865 = vcmask 1045508
  %v5866 = vsel %vm5865, %v5864, %v5861
  %s5867 = scalar_lea.vmem %s0, 1292
  %s5868 = smov 192
  %v5869 = vld [vmem:[%s5867] ss:$16 sm:%s5868]
  %vm5870 = vcmask 1047558
  %v5871 = vsel %vm5870, %v5869, %v5866
  %5872 = vrot.lane.b32.xlu0 %v5871, 64
  %v5873 = vpop.permute.xlu0 %5872
  %vm5874 = vcmask 654848
  %s5875 = scalar_lea.vmem %s1, 168
  %5876 = vst.msk [vmem:[%s5875] sm:$0xff] %vm5874, %v5873
  %s5877 = scalar_lea.vmem %s0, 1548
  %s5878 = smov 3
  %v5879 = vld [vmem:[%s5877] ss:$16 sm:%s5878]
  %s5880 = scalar_lea.vmem %s0, 1548
  %s5881 = smov 12
  %v5882 = vld [vmem:[%s5880] ss:$16 sm:%s5881]
  %vm5883 = vcmask 1043458
  %v5884 = vsel %vm5883, %v5882, %v5879
  %s5885 = scalar_lea.vmem %s0, 1548
  %s5886 = smov 48
  %v5887 = vld [vmem:[%s5885] ss:$16 sm:%s5886]
  %vm5888 = vcmask 1045508
  %v5889 = vsel %vm5888, %v5887, %v5884
  %s5890 = scalar_lea.vmem %s0, 1548
  %s5891 = smov 192
  %v5892 = vld [vmem:[%s5890] ss:$16 sm:%s5891]
  %vm5893 = vcmask 1047558
  %v5894 = vsel %vm5893, %v5892, %v5889
  %5895 = vrot.lane.b32.xlu0 %v5894, 64
  %v5896 = vpop.permute.xlu0 %5895
  %vm5897 = vcmask 654848
  %s5898 = scalar_lea.vmem %s1, 200
  %5899 = vst.msk [vmem:[%s5898] sm:$0xff] %vm5897, %v5896
  %s5900 = scalar_lea.vmem %s0, 1804
  %s5901 = smov 3
  %v5902 = vld [vmem:[%s5900] ss:$16 sm:%s5901]
  %s5903 = scalar_lea.vmem %s0, 1804
  %s5904 = smov 12
  %v5905 = vld [vmem:[%s5903] ss:$16 sm:%s5904]
  %vm5906 = vcmask 1043458
  %v5907 = vsel %vm5906, %v5905, %v5902
  %s5908 = scalar_lea.vmem %s0, 1804
  %s5909 = smov 48
  %v5910 = vld [vmem:[%s5908] ss:$16 sm:%s5909]
  %vm5911 = vcmask 1045508
  %v5912 = vsel %vm5911, %v5910, %v5907
  %s5913 = scalar_lea.vmem %s0, 1804
  %s5914 = smov 192
  %v5915 = vld [vmem:[%s5913] ss:$16 sm:%s5914]
  %vm5916 = vcmask 1047558
  %v5917 = vsel %vm5916, %v5915, %v5912
  %5918 = vrot.lane.b32.xlu0 %v5917, 64
  %v5919 = vpop.permute.xlu0 %5918
  %vm5920 = vcmask 654848
  %s5921 = scalar_lea.vmem %s1, 232
  %5922 = vst.msk [vmem:[%s5921] sm:$0xff] %vm5920, %v5919
  %s5923 = scalar_lea.vmem %s0, 2060
  %s5924 = smov 3
  %v5925 = vld [vmem:[%s5923] ss:$16 sm:%s5924]
  %s5926 = scalar_lea.vmem %s0, 2060
  %s5927 = smov 12
  %v5928 = vld [vmem:[%s5926] ss:$16 sm:%s5927]
  %vm5929 = vcmask 1043458
  %v5930 = vsel %vm5929, %v5928, %v5925
  %s5931 = scalar_lea.vmem %s0, 2060
  %s5932 = smov 48
  %v5933 = vld [vmem:[%s5931] ss:$16 sm:%s5932]
  %vm5934 = vcmask 1045508
  %v5935 = vsel %vm5934, %v5933, %v5930
  %s5936 = scalar_lea.vmem %s0, 2060
  %s5937 = smov 192
  %v5938 = vld [vmem:[%s5936] ss:$16 sm:%s5937]
  %vm5939 = vcmask 1047558
  %v5940 = vsel %vm5939, %v5938, %v5935
  %5941 = vrot.lane.b32.xlu0 %v5940, 64
  %v5942 = vpop.permute.xlu0 %5941
  %vm5943 = vcmask 654848
  %s5944 = scalar_lea.vmem %s1, 264
  %5945 = vst.msk [vmem:[%s5944] sm:$0xff] %vm5943, %v5942
  %s5946 = scalar_lea.vmem %s0, 2316
  %s5947 = smov 3
  %v5948 = vld [vmem:[%s5946] ss:$16 sm:%s5947]
  %s5949 = scalar_lea.vmem %s0, 2316
  %s5950 = smov 12
  %v5951 = vld [vmem:[%s5949] ss:$16 sm:%s5950]
  %vm5952 = vcmask 1043458
  %v5953 = vsel %vm5952, %v5951, %v5948
  %s5954 = scalar_lea.vmem %s0, 2316
  %s5955 = smov 48
  %v5956 = vld [vmem:[%s5954] ss:$16 sm:%s5955]
  %vm5957 = vcmask 1045508
  %v5958 = vsel %vm5957, %v5956, %v5953
  %s5959 = scalar_lea.vmem %s0, 2316
  %s5960 = smov 192
  %v5961 = vld [vmem:[%s5959] ss:$16 sm:%s5960]
  %vm5962 = vcmask 1047558
  %v5963 = vsel %vm5962, %v5961, %v5958
  %5964 = vrot.lane.b32.xlu0 %v5963, 64
  %v5965 = vpop.permute.xlu0 %5964
  %vm5966 = vcmask 654848
  %s5967 = scalar_lea.vmem %s1, 296
  %5968 = vst.msk [vmem:[%s5967] sm:$0xff] %vm5966, %v5965
  %s5969 = scalar_lea.vmem %s0, 2572
  %s5970 = smov 3
  %v5971 = vld [vmem:[%s5969] ss:$16 sm:%s5970]
  %s5972 = scalar_lea.vmem %s0, 2572
  %s5973 = smov 12
  %v5974 = vld [vmem:[%s5972] ss:$16 sm:%s5973]
  %vm5975 = vcmask 1043458
  %v5976 = vsel %vm5975, %v5974, %v5971
  %s5977 = scalar_lea.vmem %s0, 2572
  %s5978 = smov 48
  %v5979 = vld [vmem:[%s5977] ss:$16 sm:%s5978]
  %vm5980 = vcmask 1045508
  %v5981 = vsel %vm5980, %v5979, %v5976
  %s5982 = scalar_lea.vmem %s0, 2572
  %s5983 = smov 192
  %v5984 = vld [vmem:[%s5982] ss:$16 sm:%s5983]
  %vm5985 = vcmask 1047558
  %v5986 = vsel %vm5985, %v5984, %v5981
  %5987 = vrot.lane.b32.xlu0 %v5986, 64
  %v5988 = vpop.permute.xlu0 %5987
  %vm5989 = vcmask 654848
  %s5990 = scalar_lea.vmem %s1, 328
  %5991 = vst.msk [vmem:[%s5990] sm:$0xff] %vm5989, %v5988
  %s5992 = scalar_lea.vmem %s0, 2828
  %s5993 = smov 3
  %v5994 = vld [vmem:[%s5992] ss:$16 sm:%s5993]
  %s5995 = scalar_lea.vmem %s0, 2828
  %s5996 = smov 12
  %v5997 = vld [vmem:[%s5995] ss:$16 sm:%s5996]
  %vm5998 = vcmask 1043458
  %v5999 = vsel %vm5998, %v5997, %v5994
  %s6000 = scalar_lea.vmem %s0, 2828
  %s6001 = smov 48
  %v6002 = vld [vmem:[%s6000] ss:$16 sm:%s6001]
  %vm6003 = vcmask 1045508
  %v6004 = vsel %vm6003, %v6002, %v5999
  %s6005 = scalar_lea.vmem %s0, 2828
  %s6006 = smov 192
  %v6007 = vld [vmem:[%s6005] ss:$16 sm:%s6006]
  %vm6008 = vcmask 1047558
  %v6009 = vsel %vm6008, %v6007, %v6004
  %6010 = vrot.lane.b32.xlu0 %v6009, 64
  %v6011 = vpop.permute.xlu0 %6010
  %vm6012 = vcmask 654848
  %s6013 = scalar_lea.vmem %s1, 360
  %6014 = vst.msk [vmem:[%s6013] sm:$0xff] %vm6012, %v6011
  %s6015 = scalar_lea.vmem %s0, 3084
  %s6016 = smov 3
  %v6017 = vld [vmem:[%s6015] ss:$16 sm:%s6016]
  %s6018 = scalar_lea.vmem %s0, 3084
  %s6019 = smov 12
  %v6020 = vld [vmem:[%s6018] ss:$16 sm:%s6019]
  %vm6021 = vcmask 1043458
  %v6022 = vsel %vm6021, %v6020, %v6017
  %s6023 = scalar_lea.vmem %s0, 3084
  %s6024 = smov 48
  %v6025 = vld [vmem:[%s6023] ss:$16 sm:%s6024]
  %vm6026 = vcmask 1045508
  %v6027 = vsel %vm6026, %v6025, %v6022
  %s6028 = scalar_lea.vmem %s0, 3084
  %s6029 = smov 192
  %v6030 = vld [vmem:[%s6028] ss:$16 sm:%s6029]
  %vm6031 = vcmask 1047558
  %v6032 = vsel %vm6031, %v6030, %v6027
  %6033 = vrot.lane.b32.xlu0 %v6032, 64
  %v6034 = vpop.permute.xlu0 %6033
  %vm6035 = vcmask 654848
  %s6036 = scalar_lea.vmem %s1, 392
  %6037 = vst.msk [vmem:[%s6036] sm:$0xff] %vm6035, %v6034
  %s6038 = scalar_lea.vmem %s0, 3340
  %s6039 = smov 3
  %v6040 = vld [vmem:[%s6038] ss:$16 sm:%s6039]
  %s6041 = scalar_lea.vmem %s0, 3340
  %s6042 = smov 12
  %v6043 = vld [vmem:[%s6041] ss:$16 sm:%s6042]
  %vm6044 = vcmask 1043458
  %v6045 = vsel %vm6044, %v6043, %v6040
  %s6046 = scalar_lea.vmem %s0, 3340
  %s6047 = smov 48
  %v6048 = vld [vmem:[%s6046] ss:$16 sm:%s6047]
  %vm6049 = vcmask 1045508
  %v6050 = vsel %vm6049, %v6048, %v6045
  %s6051 = scalar_lea.vmem %s0, 3340
  %s6052 = smov 192
  %v6053 = vld [vmem:[%s6051] ss:$16 sm:%s6052]
  %vm6054 = vcmask 1047558
  %v6055 = vsel %vm6054, %v6053, %v6050
  %6056 = vrot.lane.b32.xlu0 %v6055, 64
  %v6057 = vpop.permute.xlu0 %6056
  %vm6058 = vcmask 654848
  %s6059 = scalar_lea.vmem %s1, 424
  %6060 = vst.msk [vmem:[%s6059] sm:$0xff] %vm6058, %v6057
  %s6061 = scalar_lea.vmem %s0, 3596
  %s6062 = smov 3
  %v6063 = vld [vmem:[%s6061] ss:$16 sm:%s6062]
  %s6064 = scalar_lea.vmem %s0, 3596
  %s6065 = smov 12
  %v6066 = vld [vmem:[%s6064] ss:$16 sm:%s6065]
  %vm6067 = vcmask 1043458
  %v6068 = vsel %vm6067, %v6066, %v6063
  %s6069 = scalar_lea.vmem %s0, 3596
  %s6070 = smov 48
  %v6071 = vld [vmem:[%s6069] ss:$16 sm:%s6070]
  %vm6072 = vcmask 1045508
  %v6073 = vsel %vm6072, %v6071, %v6068
  %s6074 = scalar_lea.vmem %s0, 3596
  %s6075 = smov 192
  %v6076 = vld [vmem:[%s6074] ss:$16 sm:%s6075]
  %vm6077 = vcmask 1047558
  %v6078 = vsel %vm6077, %v6076, %v6073
  %6079 = vrot.lane.b32.xlu0 %v6078, 64
  %v6080 = vpop.permute.xlu0 %6079
  %vm6081 = vcmask 654848
  %s6082 = scalar_lea.vmem %s1, 456
  %6083 = vst.msk [vmem:[%s6082] sm:$0xff] %vm6081, %v6080
  %s6084 = scalar_lea.vmem %s0, 3852
  %s6085 = smov 3
  %v6086 = vld [vmem:[%s6084] ss:$16 sm:%s6085]
  %s6087 = scalar_lea.vmem %s0, 3852
  %s6088 = smov 12
  %v6089 = vld [vmem:[%s6087] ss:$16 sm:%s6088]
  %vm6090 = vcmask 1043458
  %v6091 = vsel %vm6090, %v6089, %v6086
  %s6092 = scalar_lea.vmem %s0, 3852
  %s6093 = smov 48
  %v6094 = vld [vmem:[%s6092] ss:$16 sm:%s6093]
  %vm6095 = vcmask 1045508
  %v6096 = vsel %vm6095, %v6094, %v6091
  %s6097 = scalar_lea.vmem %s0, 3852
  %s6098 = smov 192
  %v6099 = vld [vmem:[%s6097] ss:$16 sm:%s6098]
  %vm6100 = vcmask 1047558
  %v6101 = vsel %vm6100, %v6099, %v6096
  %6102 = vrot.lane.b32.xlu0 %v6101, 64
  %v6103 = vpop.permute.xlu0 %6102
  %vm6104 = vcmask 654848
  %s6105 = scalar_lea.vmem %s1, 488
  %6106 = vst.msk [vmem:[%s6105] sm:$0xff] %vm6104, %v6103
  %s6107 = scalar_lea.vmem %s0, 132
  %s6108 = smov 3
  %v6109 = vld [vmem:[%s6107] ss:$16 sm:%s6108]
  %s6110 = scalar_lea.vmem %s0, 132
  %s6111 = smov 12
  %v6112 = vld [vmem:[%s6110] ss:$16 sm:%s6111]
  %vm6113 = vcmask 1043458
  %v6114 = vsel %vm6113, %v6112, %v6109
  %s6115 = scalar_lea.vmem %s0, 132
  %s6116 = smov 48
  %v6117 = vld [vmem:[%s6115] ss:$16 sm:%s6116]
  %vm6118 = vcmask 1045508
  %v6119 = vsel %vm6118, %v6117, %v6114
  %s6120 = scalar_lea.vmem %s0, 132
  %s6121 = smov 192
  %v6122 = vld [vmem:[%s6120] ss:$16 sm:%s6121]
  %vm6123 = vcmask 1047558
  %v6124 = vsel %vm6123, %v6122, %v6119
  %6125 = vrot.lane.b32.xlu0 %v6124, 64
  %v6126 = vpop.permute.xlu0 %6125
  %vm6127 = vcmask 654848
  %s6128 = scalar_lea.vmem %s1, 16
  %6129 = vst.msk [vmem:[%s6128] sm:$0xff] %vm6127, %v6126
  %s6130 = scalar_lea.vmem %s0, 388
  %s6131 = smov 3
  %v6132 = vld [vmem:[%s6130] ss:$16 sm:%s6131]
  %s6133 = scalar_lea.vmem %s0, 388
  %s6134 = smov 12
  %v6135 = vld [vmem:[%s6133] ss:$16 sm:%s6134]
  %vm6136 = vcmask 1043458
  %v6137 = vsel %vm6136, %v6135, %v6132
  %s6138 = scalar_lea.vmem %s0, 388
  %s6139 = smov 48
  %v6140 = vld [vmem:[%s6138] ss:$16 sm:%s6139]
  %vm6141 = vcmask 1045508
  %v6142 = vsel %vm6141, %v6140, %v6137
  %s6143 = scalar_lea.vmem %s0, 388
  %s6144 = smov 192
  %v6145 = vld [vmem:[%s6143] ss:$16 sm:%s6144]
  %vm6146 = vcmask 1047558
  %v6147 = vsel %vm6146, %v6145, %v6142
  %6148 = vrot.lane.b32.xlu0 %v6147, 64
  %v6149 = vpop.permute.xlu0 %6148
  %vm6150 = vcmask 654848
  %s6151 = scalar_lea.vmem %s1, 48
  %6152 = vst.msk [vmem:[%s6151] sm:$0xff] %vm6150, %v6149
  %s6153 = scalar_lea.vmem %s0, 644
  %s6154 = smov 3
  %v6155 = vld [vmem:[%s6153] ss:$16 sm:%s6154]
  %s6156 = scalar_lea.vmem %s0, 644
  %s6157 = smov 12
  %v6158 = vld [vmem:[%s6156] ss:$16 sm:%s6157]
  %vm6159 = vcmask 1043458
  %v6160 = vsel %vm6159, %v6158, %v6155
  %s6161 = scalar_lea.vmem %s0, 644
  %s6162 = smov 48
  %v6163 = vld [vmem:[%s6161] ss:$16 sm:%s6162]
  %vm6164 = vcmask 1045508
  %v6165 = vsel %vm6164, %v6163, %v6160
  %s6166 = scalar_lea.vmem %s0, 644
  %s6167 = smov 192
  %v6168 = vld [vmem:[%s6166] ss:$16 sm:%s6167]
  %vm6169 = vcmask 1047558
  %v6170 = vsel %vm6169, %v6168, %v6165
  %6171 = vrot.lane.b32.xlu0 %v6170, 64
  %v6172 = vpop.permute.xlu0 %6171
  %vm6173 = vcmask 654848
  %s6174 = scalar_lea.vmem %s1, 80
  %6175 = vst.msk [vmem:[%s6174] sm:$0xff] %vm6173, %v6172
  %s6176 = scalar_lea.vmem %s0, 900
  %s6177 = smov 3
  %v6178 = vld [vmem:[%s6176] ss:$16 sm:%s6177]
  %s6179 = scalar_lea.vmem %s0, 900
  %s6180 = smov 12
  %v6181 = vld [vmem:[%s6179] ss:$16 sm:%s6180]
  %vm6182 = vcmask 1043458
  %v6183 = vsel %vm6182, %v6181, %v6178
  %s6184 = scalar_lea.vmem %s0, 900
  %s6185 = smov 48
  %v6186 = vld [vmem:[%s6184] ss:$16 sm:%s6185]
  %vm6187 = vcmask 1045508
  %v6188 = vsel %vm6187, %v6186, %v6183
  %s6189 = scalar_lea.vmem %s0, 900
  %s6190 = smov 192
  %v6191 = vld [vmem:[%s6189] ss:$16 sm:%s6190]
  %vm6192 = vcmask 1047558
  %v6193 = vsel %vm6192, %v6191, %v6188
  %6194 = vrot.lane.b32.xlu0 %v6193, 64
  %v6195 = vpop.permute.xlu0 %6194
  %vm6196 = vcmask 654848
  %s6197 = scalar_lea.vmem %s1, 112
  %6198 = vst.msk [vmem:[%s6197] sm:$0xff] %vm6196, %v6195
  %s6199 = scalar_lea.vmem %s0, 1156
  %s6200 = smov 3
  %v6201 = vld [vmem:[%s6199] ss:$16 sm:%s6200]
  %s6202 = scalar_lea.vmem %s0, 1156
  %s6203 = smov 12
  %v6204 = vld [vmem:[%s6202] ss:$16 sm:%s6203]
  %vm6205 = vcmask 1043458
  %v6206 = vsel %vm6205, %v6204, %v6201
  %s6207 = scalar_lea.vmem %s0, 1156
  %s6208 = smov 48
  %v6209 = vld [vmem:[%s6207] ss:$16 sm:%s6208]
  %vm6210 = vcmask 1045508
  %v6211 = vsel %vm6210, %v6209, %v6206
  %s6212 = scalar_lea.vmem %s0, 1156
  %s6213 = smov 192
  %v6214 = vld [vmem:[%s6212] ss:$16 sm:%s6213]
  %vm6215 = vcmask 1047558
  %v6216 = vsel %vm6215, %v6214, %v6211
  %6217 = vrot.lane.b32.xlu0 %v6216, 64
  %v6218 = vpop.permute.xlu0 %6217
  %vm6219 = vcmask 654848
  %s6220 = scalar_lea.vmem %s1, 144
  %6221 = vst.msk [vmem:[%s6220] sm:$0xff] %vm6219, %v6218
  %s6222 = scalar_lea.vmem %s0, 1412
  %s6223 = smov 3
  %v6224 = vld [vmem:[%s6222] ss:$16 sm:%s6223]
  %s6225 = scalar_lea.vmem %s0, 1412
  %s6226 = smov 12
  %v6227 = vld [vmem:[%s6225] ss:$16 sm:%s6226]
  %vm6228 = vcmask 1043458
  %v6229 = vsel %vm6228, %v6227, %v6224
  %s6230 = scalar_lea.vmem %s0, 1412
  %s6231 = smov 48
  %v6232 = vld [vmem:[%s6230] ss:$16 sm:%s6231]
  %vm6233 = vcmask 1045508
  %v6234 = vsel %vm6233, %v6232, %v6229
  %s6235 = scalar_lea.vmem %s0, 1412
  %s6236 = smov 192
  %v6237 = vld [vmem:[%s6235] ss:$16 sm:%s6236]
  %vm6238 = vcmask 1047558
  %v6239 = vsel %vm6238, %v6237, %v6234
  %6240 = vrot.lane.b32.xlu0 %v6239, 64
  %v6241 = vpop.permute.xlu0 %6240
  %vm6242 = vcmask 654848
  %s6243 = scalar_lea.vmem %s1, 176
  %6244 = vst.msk [vmem:[%s6243] sm:$0xff] %vm6242, %v6241
  %s6245 = scalar_lea.vmem %s0, 1668
  %s6246 = smov 3
  %v6247 = vld [vmem:[%s6245] ss:$16 sm:%s6246]
  %s6248 = scalar_lea.vmem %s0, 1668
  %s6249 = smov 12
  %v6250 = vld [vmem:[%s6248] ss:$16 sm:%s6249]
  %vm6251 = vcmask 1043458
  %v6252 = vsel %vm6251, %v6250, %v6247
  %s6253 = scalar_lea.vmem %s0, 1668
  %s6254 = smov 48
  %v6255 = vld [vmem:[%s6253] ss:$16 sm:%s6254]
  %vm6256 = vcmask 1045508
  %v6257 = vsel %vm6256, %v6255, %v6252
  %s6258 = scalar_lea.vmem %s0, 1668
  %s6259 = smov 192
  %v6260 = vld [vmem:[%s6258] ss:$16 sm:%s6259]
  %vm6261 = vcmask 1047558
  %v6262 = vsel %vm6261, %v6260, %v6257
  %6263 = vrot.lane.b32.xlu0 %v6262, 64
  %v6264 = vpop.permute.xlu0 %6263
  %vm6265 = vcmask 654848
  %s6266 = scalar_lea.vmem %s1, 208
  %6267 = vst.msk [vmem:[%s6266] sm:$0xff] %vm6265, %v6264
  %s6268 = scalar_lea.vmem %s0, 1924
  %s6269 = smov 3
  %v6270 = vld [vmem:[%s6268] ss:$16 sm:%s6269]
  %s6271 = scalar_lea.vmem %s0, 1924
  %s6272 = smov 12
  %v6273 = vld [vmem:[%s6271] ss:$16 sm:%s6272]
  %vm6274 = vcmask 1043458
  %v6275 = vsel %vm6274, %v6273, %v6270
  %s6276 = scalar_lea.vmem %s0, 1924
  %s6277 = smov 48
  %v6278 = vld [vmem:[%s6276] ss:$16 sm:%s6277]
  %vm6279 = vcmask 1045508
  %v6280 = vsel %vm6279, %v6278, %v6275
  %s6281 = scalar_lea.vmem %s0, 1924
  %s6282 = smov 192
  %v6283 = vld [vmem:[%s6281] ss:$16 sm:%s6282]
  %vm6284 = vcmask 1047558
  %v6285 = vsel %vm6284, %v6283, %v6280
  %6286 = vrot.lane.b32.xlu0 %v6285, 64
  %v6287 = vpop.permute.xlu0 %6286
  %vm6288 = vcmask 654848
  %s6289 = scalar_lea.vmem %s1, 240
  %6290 = vst.msk [vmem:[%s6289] sm:$0xff] %vm6288, %v6287
  %s6291 = scalar_lea.vmem %s0, 2180
  %s6292 = smov 3
  %v6293 = vld [vmem:[%s6291] ss:$16 sm:%s6292]
  %s6294 = scalar_lea.vmem %s0, 2180
  %s6295 = smov 12
  %v6296 = vld [vmem:[%s6294] ss:$16 sm:%s6295]
  %vm6297 = vcmask 1043458
  %v6298 = vsel %vm6297, %v6296, %v6293
  %s6299 = scalar_lea.vmem %s0, 2180
  %s6300 = smov 48
  %v6301 = vld [vmem:[%s6299] ss:$16 sm:%s6300]
  %vm6302 = vcmask 1045508
  %v6303 = vsel %vm6302, %v6301, %v6298
  %s6304 = scalar_lea.vmem %s0, 2180
  %s6305 = smov 192
  %v6306 = vld [vmem:[%s6304] ss:$16 sm:%s6305]
  %vm6307 = vcmask 1047558
  %v6308 = vsel %vm6307, %v6306, %v6303
  %6309 = vrot.lane.b32.xlu0 %v6308, 64
  %v6310 = vpop.permute.xlu0 %6309
  %vm6311 = vcmask 654848
  %s6312 = scalar_lea.vmem %s1, 272
  %6313 = vst.msk [vmem:[%s6312] sm:$0xff] %vm6311, %v6310
  %s6314 = scalar_lea.vmem %s0, 2436
  %s6315 = smov 3
  %v6316 = vld [vmem:[%s6314] ss:$16 sm:%s6315]
  %s6317 = scalar_lea.vmem %s0, 2436
  %s6318 = smov 12
  %v6319 = vld [vmem:[%s6317] ss:$16 sm:%s6318]
  %vm6320 = vcmask 1043458
  %v6321 = vsel %vm6320, %v6319, %v6316
  %s6322 = scalar_lea.vmem %s0, 2436
  %s6323 = smov 48
  %v6324 = vld [vmem:[%s6322] ss:$16 sm:%s6323]
  %vm6325 = vcmask 1045508
  %v6326 = vsel %vm6325, %v6324, %v6321
  %s6327 = scalar_lea.vmem %s0, 2436
  %s6328 = smov 192
  %v6329 = vld [vmem:[%s6327] ss:$16 sm:%s6328]
  %vm6330 = vcmask 1047558
  %v6331 = vsel %vm6330, %v6329, %v6326
  %6332 = vrot.lane.b32.xlu0 %v6331, 64
  %v6333 = vpop.permute.xlu0 %6332
  %vm6334 = vcmask 654848
  %s6335 = scalar_lea.vmem %s1, 304
  %6336 = vst.msk [vmem:[%s6335] sm:$0xff] %vm6334, %v6333
  %s6337 = scalar_lea.vmem %s0, 2692
  %s6338 = smov 3
  %v6339 = vld [vmem:[%s6337] ss:$16 sm:%s6338]
  %s6340 = scalar_lea.vmem %s0, 2692
  %s6341 = smov 12
  %v6342 = vld [vmem:[%s6340] ss:$16 sm:%s6341]
  %vm6343 = vcmask 1043458
  %v6344 = vsel %vm6343, %v6342, %v6339
  %s6345 = scalar_lea.vmem %s0, 2692
  %s6346 = smov 48
  %v6347 = vld [vmem:[%s6345] ss:$16 sm:%s6346]
  %vm6348 = vcmask 1045508
  %v6349 = vsel %vm6348, %v6347, %v6344
  %s6350 = scalar_lea.vmem %s0, 2692
  %s6351 = smov 192
  %v6352 = vld [vmem:[%s6350] ss:$16 sm:%s6351]
  %vm6353 = vcmask 1047558
  %v6354 = vsel %vm6353, %v6352, %v6349
  %6355 = vrot.lane.b32.xlu0 %v6354, 64
  %v6356 = vpop.permute.xlu0 %6355
  %vm6357 = vcmask 654848
  %s6358 = scalar_lea.vmem %s1, 336
  %6359 = vst.msk [vmem:[%s6358] sm:$0xff] %vm6357, %v6356
  %s6360 = scalar_lea.vmem %s0, 2948
  %s6361 = smov 3
  %v6362 = vld [vmem:[%s6360] ss:$16 sm:%s6361]
  %s6363 = scalar_lea.vmem %s0, 2948
  %s6364 = smov 12
  %v6365 = vld [vmem:[%s6363] ss:$16 sm:%s6364]
  %vm6366 = vcmask 1043458
  %v6367 = vsel %vm6366, %v6365, %v6362
  %s6368 = scalar_lea.vmem %s0, 2948
  %s6369 = smov 48
  %v6370 = vld [vmem:[%s6368] ss:$16 sm:%s6369]
  %vm6371 = vcmask 1045508
  %v6372 = vsel %vm6371, %v6370, %v6367
  %s6373 = scalar_lea.vmem %s0, 2948
  %s6374 = smov 192
  %v6375 = vld [vmem:[%s6373] ss:$16 sm:%s6374]
  %vm6376 = vcmask 1047558
  %v6377 = vsel %vm6376, %v6375, %v6372
  %6378 = vrot.lane.b32.xlu0 %v6377, 64
  %v6379 = vpop.permute.xlu0 %6378
  %vm6380 = vcmask 654848
  %s6381 = scalar_lea.vmem %s1, 368
  %6382 = vst.msk [vmem:[%s6381] sm:$0xff] %vm6380, %v6379
  %s6383 = scalar_lea.vmem %s0, 3204
  %s6384 = smov 3
  %v6385 = vld [vmem:[%s6383] ss:$16 sm:%s6384]
  %s6386 = scalar_lea.vmem %s0, 3204
  %s6387 = smov 12
  %v6388 = vld [vmem:[%s6386] ss:$16 sm:%s6387]
  %vm6389 = vcmask 1043458
  %v6390 = vsel %vm6389, %v6388, %v6385
  %s6391 = scalar_lea.vmem %s0, 3204
  %s6392 = smov 48
  %v6393 = vld [vmem:[%s6391] ss:$16 sm:%s6392]
  %vm6394 = vcmask 1045508
  %v6395 = vsel %vm6394, %v6393, %v6390
  %s6396 = scalar_lea.vmem %s0, 3204
  %s6397 = smov 192
  %v6398 = vld [vmem:[%s6396] ss:$16 sm:%s6397]
  %vm6399 = vcmask 1047558
  %v6400 = vsel %vm6399, %v6398, %v6395
  %6401 = vrot.lane.b32.xlu0 %v6400, 64
  %v6402 = vpop.permute.xlu0 %6401
  %vm6403 = vcmask 654848
  %s6404 = scalar_lea.vmem %s1, 400
  %6405 = vst.msk [vmem:[%s6404] sm:$0xff] %vm6403, %v6402
  %s6406 = scalar_lea.vmem %s0, 3460
  %s6407 = smov 3
  %v6408 = vld [vmem:[%s6406] ss:$16 sm:%s6407]
  %s6409 = scalar_lea.vmem %s0, 3460
  %s6410 = smov 12
  %v6411 = vld [vmem:[%s6409] ss:$16 sm:%s6410]
  %vm6412 = vcmask 1043458
  %v6413 = vsel %vm6412, %v6411, %v6408
  %s6414 = scalar_lea.vmem %s0, 3460
  %s6415 = smov 48
  %v6416 = vld [vmem:[%s6414] ss:$16 sm:%s6415]
  %vm6417 = vcmask 1045508
  %v6418 = vsel %vm6417, %v6416, %v6413
  %s6419 = scalar_lea.vmem %s0, 3460
  %s6420 = smov 192
  %v6421 = vld [vmem:[%s6419] ss:$16 sm:%s6420]
  %vm6422 = vcmask 1047558
  %v6423 = vsel %vm6422, %v6421, %v6418
  %6424 = vrot.lane.b32.xlu0 %v6423, 64
  %v6425 = vpop.permute.xlu0 %6424
  %vm6426 = vcmask 654848
  %s6427 = scalar_lea.vmem %s1, 432
  %6428 = vst.msk [vmem:[%s6427] sm:$0xff] %vm6426, %v6425
  %s6429 = scalar_lea.vmem %s0, 3716
  %s6430 = smov 3
  %v6431 = vld [vmem:[%s6429] ss:$16 sm:%s6430]
  %s6432 = scalar_lea.vmem %s0, 3716
  %s6433 = smov 12
  %v6434 = vld [vmem:[%s6432] ss:$16 sm:%s6433]
  %vm6435 = vcmask 1043458
  %v6436 = vsel %vm6435, %v6434, %v6431
  %s6437 = scalar_lea.vmem %s0, 3716
  %s6438 = smov 48
  %v6439 = vld [vmem:[%s6437] ss:$16 sm:%s6438]
  %vm6440 = vcmask 1045508
  %v6441 = vsel %vm6440, %v6439, %v6436
  %s6442 = scalar_lea.vmem %s0, 3716
  %s6443 = smov 192
  %v6444 = vld [vmem:[%s6442] ss:$16 sm:%s6443]
  %vm6445 = vcmask 1047558
  %v6446 = vsel %vm6445, %v6444, %v6441
  %6447 = vrot.lane.b32.xlu0 %v6446, 64
  %v6448 = vpop.permute.xlu0 %6447
  %vm6449 = vcmask 654848
  %s6450 = scalar_lea.vmem %s1, 464
  %6451 = vst.msk [vmem:[%s6450] sm:$0xff] %vm6449, %v6448
  %s6452 = scalar_lea.vmem %s0, 3972
  %s6453 = smov 3
  %v6454 = vld [vmem:[%s6452] ss:$16 sm:%s6453]
  %s6455 = scalar_lea.vmem %s0, 3972
  %s6456 = smov 12
  %v6457 = vld [vmem:[%s6455] ss:$16 sm:%s6456]
  %vm6458 = vcmask 1043458
  %v6459 = vsel %vm6458, %v6457, %v6454
  %s6460 = scalar_lea.vmem %s0, 3972
  %s6461 = smov 48
  %v6462 = vld [vmem:[%s6460] ss:$16 sm:%s6461]
  %vm6463 = vcmask 1045508
  %v6464 = vsel %vm6463, %v6462, %v6459
  %s6465 = scalar_lea.vmem %s0, 3972
  %s6466 = smov 192
  %v6467 = vld [vmem:[%s6465] ss:$16 sm:%s6466]
  %vm6468 = vcmask 1047558
  %v6469 = vsel %vm6468, %v6467, %v6464
  %6470 = vrot.lane.b32.xlu0 %v6469, 64
  %v6471 = vpop.permute.xlu0 %6470
  %vm6472 = vcmask 654848
  %s6473 = scalar_lea.vmem %s1, 496
  %6474 = vst.msk [vmem:[%s6473] sm:$0xff] %vm6472, %v6471
  %s6475 = scalar_lea.vmem %s0, 140
  %s6476 = smov 3
  %v6477 = vld [vmem:[%s6475] ss:$16 sm:%s6476]
  %s6478 = scalar_lea.vmem %s0, 140
  %s6479 = smov 12
  %v6480 = vld [vmem:[%s6478] ss:$16 sm:%s6479]
  %vm6481 = vcmask 1043458
  %v6482 = vsel %vm6481, %v6480, %v6477
  %s6483 = scalar_lea.vmem %s0, 140
  %s6484 = smov 48
  %v6485 = vld [vmem:[%s6483] ss:$16 sm:%s6484]
  %vm6486 = vcmask 1045508
  %v6487 = vsel %vm6486, %v6485, %v6482
  %s6488 = scalar_lea.vmem %s0, 140
  %s6489 = smov 192
  %v6490 = vld [vmem:[%s6488] ss:$16 sm:%s6489]
  %vm6491 = vcmask 1047558
  %v6492 = vsel %vm6491, %v6490, %v6487
  %6493 = vrot.lane.b32.xlu0 %v6492, 64
  %v6494 = vpop.permute.xlu0 %6493
  %vm6495 = vcmask 654848
  %s6496 = scalar_lea.vmem %s1, 24
  %6497 = vst.msk [vmem:[%s6496] sm:$0xff] %vm6495, %v6494
  %s6498 = scalar_lea.vmem %s0, 396
  %s6499 = smov 3
  %v6500 = vld [vmem:[%s6498] ss:$16 sm:%s6499]
  %s6501 = scalar_lea.vmem %s0, 396
  %s6502 = smov 12
  %v6503 = vld [vmem:[%s6501] ss:$16 sm:%s6502]
  %vm6504 = vcmask 1043458
  %v6505 = vsel %vm6504, %v6503, %v6500
  %s6506 = scalar_lea.vmem %s0, 396
  %s6507 = smov 48
  %v6508 = vld [vmem:[%s6506] ss:$16 sm:%s6507]
  %vm6509 = vcmask 1045508
  %v6510 = vsel %vm6509, %v6508, %v6505
  %s6511 = scalar_lea.vmem %s0, 396
  %s6512 = smov 192
  %v6513 = vld [vmem:[%s6511] ss:$16 sm:%s6512]
  %vm6514 = vcmask 1047558
  %v6515 = vsel %vm6514, %v6513, %v6510
  %6516 = vrot.lane.b32.xlu0 %v6515, 64
  %v6517 = vpop.permute.xlu0 %6516
  %vm6518 = vcmask 654848
  %s6519 = scalar_lea.vmem %s1, 56
  %6520 = vst.msk [vmem:[%s6519] sm:$0xff] %vm6518, %v6517
  %s6521 = scalar_lea.vmem %s0, 652
  %s6522 = smov 3
  %v6523 = vld [vmem:[%s6521] ss:$16 sm:%s6522]
  %s6524 = scalar_lea.vmem %s0, 652
  %s6525 = smov 12
  %v6526 = vld [vmem:[%s6524] ss:$16 sm:%s6525]
  %vm6527 = vcmask 1043458
  %v6528 = vsel %vm6527, %v6526, %v6523
  %s6529 = scalar_lea.vmem %s0, 652
  %s6530 = smov 48
  %v6531 = vld [vmem:[%s6529] ss:$16 sm:%s6530]
  %vm6532 = vcmask 1045508
  %v6533 = vsel %vm6532, %v6531, %v6528
  %s6534 = scalar_lea.vmem %s0, 652
  %s6535 = smov 192
  %v6536 = vld [vmem:[%s6534] ss:$16 sm:%s6535]
  %vm6537 = vcmask 1047558
  %v6538 = vsel %vm6537, %v6536, %v6533
  %6539 = vrot.lane.b32.xlu0 %v6538, 64
  %v6540 = vpop.permute.xlu0 %6539
  %vm6541 = vcmask 654848
  %s6542 = scalar_lea.vmem %s1, 88
  %6543 = vst.msk [vmem:[%s6542] sm:$0xff] %vm6541, %v6540
  %s6544 = scalar_lea.vmem %s0, 908
  %s6545 = smov 3
  %v6546 = vld [vmem:[%s6544] ss:$16 sm:%s6545]
  %s6547 = scalar_lea.vmem %s0, 908
  %s6548 = smov 12
  %v6549 = vld [vmem:[%s6547] ss:$16 sm:%s6548]
  %vm6550 = vcmask 1043458
  %v6551 = vsel %vm6550, %v6549, %v6546
  %s6552 = scalar_lea.vmem %s0, 908
  %s6553 = smov 48
  %v6554 = vld [vmem:[%s6552] ss:$16 sm:%s6553]
  %vm6555 = vcmask 1045508
  %v6556 = vsel %vm6555, %v6554, %v6551
  %s6557 = scalar_lea.vmem %s0, 908
  %s6558 = smov 192
  %v6559 = vld [vmem:[%s6557] ss:$16 sm:%s6558]
  %vm6560 = vcmask 1047558
  %v6561 = vsel %vm6560, %v6559, %v6556
  %6562 = vrot.lane.b32.xlu0 %v6561, 64
  %v6563 = vpop.permute.xlu0 %6562
  %vm6564 = vcmask 654848
  %s6565 = scalar_lea.vmem %s1, 120
  %6566 = vst.msk [vmem:[%s6565] sm:$0xff] %vm6564, %v6563
  %s6567 = scalar_lea.vmem %s0, 1164
  %s6568 = smov 3
  %v6569 = vld [vmem:[%s6567] ss:$16 sm:%s6568]
  %s6570 = scalar_lea.vmem %s0, 1164
  %s6571 = smov 12
  %v6572 = vld [vmem:[%s6570] ss:$16 sm:%s6571]
  %vm6573 = vcmask 1043458
  %v6574 = vsel %vm6573, %v6572, %v6569
  %s6575 = scalar_lea.vmem %s0, 1164
  %s6576 = smov 48
  %v6577 = vld [vmem:[%s6575] ss:$16 sm:%s6576]
  %vm6578 = vcmask 1045508
  %v6579 = vsel %vm6578, %v6577, %v6574
  %s6580 = scalar_lea.vmem %s0, 1164
  %s6581 = smov 192
  %v6582 = vld [vmem:[%s6580] ss:$16 sm:%s6581]
  %vm6583 = vcmask 1047558
  %v6584 = vsel %vm6583, %v6582, %v6579
  %6585 = vrot.lane.b32.xlu0 %v6584, 64
  %v6586 = vpop.permute.xlu0 %6585
  %vm6587 = vcmask 654848
  %s6588 = scalar_lea.vmem %s1, 152
  %6589 = vst.msk [vmem:[%s6588] sm:$0xff] %vm6587, %v6586
  %s6590 = scalar_lea.vmem %s0, 1420
  %s6591 = smov 3
  %v6592 = vld [vmem:[%s6590] ss:$16 sm:%s6591]
  %s6593 = scalar_lea.vmem %s0, 1420
  %s6594 = smov 12
  %v6595 = vld [vmem:[%s6593] ss:$16 sm:%s6594]
  %vm6596 = vcmask 1043458
  %v6597 = vsel %vm6596, %v6595, %v6592
  %s6598 = scalar_lea.vmem %s0, 1420
  %s6599 = smov 48
  %v6600 = vld [vmem:[%s6598] ss:$16 sm:%s6599]
  %vm6601 = vcmask 1045508
  %v6602 = vsel %vm6601, %v6600, %v6597
  %s6603 = scalar_lea.vmem %s0, 1420
  %s6604 = smov 192
  %v6605 = vld [vmem:[%s6603] ss:$16 sm:%s6604]
  %vm6606 = vcmask 1047558
  %v6607 = vsel %vm6606, %v6605, %v6602
  %6608 = vrot.lane.b32.xlu0 %v6607, 64
  %v6609 = vpop.permute.xlu0 %6608
  %vm6610 = vcmask 654848
  %s6611 = scalar_lea.vmem %s1, 184
  %6612 = vst.msk [vmem:[%s6611] sm:$0xff] %vm6610, %v6609
  %s6613 = scalar_lea.vmem %s0, 1676
  %s6614 = smov 3
  %v6615 = vld [vmem:[%s6613] ss:$16 sm:%s6614]
  %s6616 = scalar_lea.vmem %s0, 1676
  %s6617 = smov 12
  %v6618 = vld [vmem:[%s6616] ss:$16 sm:%s6617]
  %vm6619 = vcmask 1043458
  %v6620 = vsel %vm6619, %v6618, %v6615
  %s6621 = scalar_lea.vmem %s0, 1676
  %s6622 = smov 48
  %v6623 = vld [vmem:[%s6621] ss:$16 sm:%s6622]
  %vm6624 = vcmask 1045508
  %v6625 = vsel %vm6624, %v6623, %v6620
  %s6626 = scalar_lea.vmem %s0, 1676
  %s6627 = smov 192
  %v6628 = vld [vmem:[%s6626] ss:$16 sm:%s6627]
  %vm6629 = vcmask 1047558
  %v6630 = vsel %vm6629, %v6628, %v6625
  %6631 = vrot.lane.b32.xlu0 %v6630, 64
  %v6632 = vpop.permute.xlu0 %6631
  %vm6633 = vcmask 654848
  %s6634 = scalar_lea.vmem %s1, 216
  %6635 = vst.msk [vmem:[%s6634] sm:$0xff] %vm6633, %v6632
  %s6636 = scalar_lea.vmem %s0, 1932
  %s6637 = smov 3
  %v6638 = vld [vmem:[%s6636] ss:$16 sm:%s6637]
  %s6639 = scalar_lea.vmem %s0, 1932
  %s6640 = smov 12
  %v6641 = vld [vmem:[%s6639] ss:$16 sm:%s6640]
  %vm6642 = vcmask 1043458
  %v6643 = vsel %vm6642, %v6641, %v6638
  %s6644 = scalar_lea.vmem %s0, 1932
  %s6645 = smov 48
  %v6646 = vld [vmem:[%s6644] ss:$16 sm:%s6645]
  %vm6647 = vcmask 1045508
  %v6648 = vsel %vm6647, %v6646, %v6643
  %s6649 = scalar_lea.vmem %s0, 1932
  %s6650 = smov 192
  %v6651 = vld [vmem:[%s6649] ss:$16 sm:%s6650]
  %vm6652 = vcmask 1047558
  %v6653 = vsel %vm6652, %v6651, %v6648
  %6654 = vrot.lane.b32.xlu0 %v6653, 64
  %v6655 = vpop.permute.xlu0 %6654
  %vm6656 = vcmask 654848
  %s6657 = scalar_lea.vmem %s1, 248
  %6658 = vst.msk [vmem:[%s6657] sm:$0xff] %vm6656, %v6655
  %s6659 = scalar_lea.vmem %s0, 2188
  %s6660 = smov 3
  %v6661 = vld [vmem:[%s6659] ss:$16 sm:%s6660]
  %s6662 = scalar_lea.vmem %s0, 2188
  %s6663 = smov 12
  %v6664 = vld [vmem:[%s6662] ss:$16 sm:%s6663]
  %vm6665 = vcmask 1043458
  %v6666 = vsel %vm6665, %v6664, %v6661
  %s6667 = scalar_lea.vmem %s0, 2188
  %s6668 = smov 48
  %v6669 = vld [vmem:[%s6667] ss:$16 sm:%s6668]
  %vm6670 = vcmask 1045508
  %v6671 = vsel %vm6670, %v6669, %v6666
  %s6672 = scalar_lea.vmem %s0, 2188
  %s6673 = smov 192
  %v6674 = vld [vmem:[%s6672] ss:$16 sm:%s6673]
  %vm6675 = vcmask 1047558
  %v6676 = vsel %vm6675, %v6674, %v6671
  %6677 = vrot.lane.b32.xlu0 %v6676, 64
  %v6678 = vpop.permute.xlu0 %6677
  %vm6679 = vcmask 654848
  %s6680 = scalar_lea.vmem %s1, 280
  %6681 = vst.msk [vmem:[%s6680] sm:$0xff] %vm6679, %v6678
  %s6682 = scalar_lea.vmem %s0, 2444
  %s6683 = smov 3
  %v6684 = vld [vmem:[%s6682] ss:$16 sm:%s6683]
  %s6685 = scalar_lea.vmem %s0, 2444
  %s6686 = smov 12
  %v6687 = vld [vmem:[%s6685] ss:$16 sm:%s6686]
  %vm6688 = vcmask 1043458
  %v6689 = vsel %vm6688, %v6687, %v6684
  %s6690 = scalar_lea.vmem %s0, 2444
  %s6691 = smov 48
  %v6692 = vld [vmem:[%s6690] ss:$16 sm:%s6691]
  %vm6693 = vcmask 1045508
  %v6694 = vsel %vm6693, %v6692, %v6689
  %s6695 = scalar_lea.vmem %s0, 2444
  %s6696 = smov 192
  %v6697 = vld [vmem:[%s6695] ss:$16 sm:%s6696]
  %vm6698 = vcmask 1047558
  %v6699 = vsel %vm6698, %v6697, %v6694
  %6700 = vrot.lane.b32.xlu0 %v6699, 64
  %v6701 = vpop.permute.xlu0 %6700
  %vm6702 = vcmask 654848
  %s6703 = scalar_lea.vmem %s1, 312
  %6704 = vst.msk [vmem:[%s6703] sm:$0xff] %vm6702, %v6701
  %s6705 = scalar_lea.vmem %s0, 2700
  %s6706 = smov 3
  %v6707 = vld [vmem:[%s6705] ss:$16 sm:%s6706]
  %s6708 = scalar_lea.vmem %s0, 2700
  %s6709 = smov 12
  %v6710 = vld [vmem:[%s6708] ss:$16 sm:%s6709]
  %vm6711 = vcmask 1043458
  %v6712 = vsel %vm6711, %v6710, %v6707
  %s6713 = scalar_lea.vmem %s0, 2700
  %s6714 = smov 48
  %v6715 = vld [vmem:[%s6713] ss:$16 sm:%s6714]
  %vm6716 = vcmask 1045508
  %v6717 = vsel %vm6716, %v6715, %v6712
  %s6718 = scalar_lea.vmem %s0, 2700
  %s6719 = smov 192
  %v6720 = vld [vmem:[%s6718] ss:$16 sm:%s6719]
  %vm6721 = vcmask 1047558
  %v6722 = vsel %vm6721, %v6720, %v6717
  %6723 = vrot.lane.b32.xlu0 %v6722, 64
  %v6724 = vpop.permute.xlu0 %6723
  %vm6725 = vcmask 654848
  %s6726 = scalar_lea.vmem %s1, 344
  %6727 = vst.msk [vmem:[%s6726] sm:$0xff] %vm6725, %v6724
  %s6728 = scalar_lea.vmem %s0, 2956
  %s6729 = smov 3
  %v6730 = vld [vmem:[%s6728] ss:$16 sm:%s6729]
  %s6731 = scalar_lea.vmem %s0, 2956
  %s6732 = smov 12
  %v6733 = vld [vmem:[%s6731] ss:$16 sm:%s6732]
  %vm6734 = vcmask 1043458
  %v6735 = vsel %vm6734, %v6733, %v6730
  %s6736 = scalar_lea.vmem %s0, 2956
  %s6737 = smov 48
  %v6738 = vld [vmem:[%s6736] ss:$16 sm:%s6737]
  %vm6739 = vcmask 1045508
  %v6740 = vsel %vm6739, %v6738, %v6735
  %s6741 = scalar_lea.vmem %s0, 2956
  %s6742 = smov 192
  %v6743 = vld [vmem:[%s6741] ss:$16 sm:%s6742]
  %vm6744 = vcmask 1047558
  %v6745 = vsel %vm6744, %v6743, %v6740
  %6746 = vrot.lane.b32.xlu0 %v6745, 64
  %v6747 = vpop.permute.xlu0 %6746
  %vm6748 = vcmask 654848
  %s6749 = scalar_lea.vmem %s1, 376
  %6750 = vst.msk [vmem:[%s6749] sm:$0xff] %vm6748, %v6747
  %s6751 = scalar_lea.vmem %s0, 3212
  %s6752 = smov 3
  %v6753 = vld [vmem:[%s6751] ss:$16 sm:%s6752]
  %s6754 = scalar_lea.vmem %s0, 3212
  %s6755 = smov 12
  %v6756 = vld [vmem:[%s6754] ss:$16 sm:%s6755]
  %vm6757 = vcmask 1043458
  %v6758 = vsel %vm6757, %v6756, %v6753
  %s6759 = scalar_lea.vmem %s0, 3212
  %s6760 = smov 48
  %v6761 = vld [vmem:[%s6759] ss:$16 sm:%s6760]
  %vm6762 = vcmask 1045508
  %v6763 = vsel %vm6762, %v6761, %v6758
  %s6764 = scalar_lea.vmem %s0, 3212
  %s6765 = smov 192
  %v6766 = vld [vmem:[%s6764] ss:$16 sm:%s6765]
  %vm6767 = vcmask 1047558
  %v6768 = vsel %vm6767, %v6766, %v6763
  %6769 = vrot.lane.b32.xlu0 %v6768, 64
  %v6770 = vpop.permute.xlu0 %6769
  %vm6771 = vcmask 654848
  %s6772 = scalar_lea.vmem %s1, 408
  %6773 = vst.msk [vmem:[%s6772] sm:$0xff] %vm6771, %v6770
  %s6774 = scalar_lea.vmem %s0, 3468
  %s6775 = smov 3
  %v6776 = vld [vmem:[%s6774] ss:$16 sm:%s6775]
  %s6777 = scalar_lea.vmem %s0, 3468
  %s6778 = smov 12
  %v6779 = vld [vmem:[%s6777] ss:$16 sm:%s6778]
  %vm6780 = vcmask 1043458
  %v6781 = vsel %vm6780, %v6779, %v6776
  %s6782 = scalar_lea.vmem %s0, 3468
  %s6783 = smov 48
  %v6784 = vld [vmem:[%s6782] ss:$16 sm:%s6783]
  %vm6785 = vcmask 1045508
  %v6786 = vsel %vm6785, %v6784, %v6781
  %s6787 = scalar_lea.vmem %s0, 3468
  %s6788 = smov 192
  %v6789 = vld [vmem:[%s6787] ss:$16 sm:%s6788]
  %vm6790 = vcmask 1047558
  %v6791 = vsel %vm6790, %v6789, %v6786
  %6792 = vrot.lane.b32.xlu0 %v6791, 64
  %v6793 = vpop.permute.xlu0 %6792
  %vm6794 = vcmask 654848
  %s6795 = scalar_lea.vmem %s1, 440
  %6796 = vst.msk [vmem:[%s6795] sm:$0xff] %vm6794, %v6793
  %s6797 = scalar_lea.vmem %s0, 3724
  %s6798 = smov 3
  %v6799 = vld [vmem:[%s6797] ss:$16 sm:%s6798]
  %s6800 = scalar_lea.vmem %s0, 3724
  %s6801 = smov 12
  %v6802 = vld [vmem:[%s6800] ss:$16 sm:%s6801]
  %vm6803 = vcmask 1043458
  %v6804 = vsel %vm6803, %v6802, %v6799
  %s6805 = scalar_lea.vmem %s0, 3724
  %s6806 = smov 48
  %v6807 = vld [vmem:[%s6805] ss:$16 sm:%s6806]
  %vm6808 = vcmask 1045508
  %v6809 = vsel %vm6808, %v6807, %v6804
  %s6810 = scalar_lea.vmem %s0, 3724
  %s6811 = smov 192
  %v6812 = vld [vmem:[%s6810] ss:$16 sm:%s6811]
  %vm6813 = vcmask 1047558
  %v6814 = vsel %vm6813, %v6812, %v6809
  %6815 = vrot.lane.b32.xlu0 %v6814, 64
  %v6816 = vpop.permute.xlu0 %6815
  %vm6817 = vcmask 654848
  %s6818 = scalar_lea.vmem %s1, 472
  %6819 = vst.msk [vmem:[%s6818] sm:$0xff] %vm6817, %v6816
  %s6820 = scalar_lea.vmem %s0, 3980
  %s6821 = smov 3
  %v6822 = vld [vmem:[%s6820] ss:$16 sm:%s6821]
  %s6823 = scalar_lea.vmem %s0, 3980
  %s6824 = smov 12
  %v6825 = vld [vmem:[%s6823] ss:$16 sm:%s6824]
  %vm6826 = vcmask 1043458
  %v6827 = vsel %vm6826, %v6825, %v6822
  %s6828 = scalar_lea.vmem %s0, 3980
  %s6829 = smov 48
  %v6830 = vld [vmem:[%s6828] ss:$16 sm:%s6829]
  %vm6831 = vcmask 1045508
  %v6832 = vsel %vm6831, %v6830, %v6827
  %s6833 = scalar_lea.vmem %s0, 3980
  %s6834 = smov 192
  %v6835 = vld [vmem:[%s6833] ss:$16 sm:%s6834]
  %vm6836 = vcmask 1047558
  %v6837 = vsel %vm6836, %v6835, %v6832
  %6838 = vrot.lane.b32.xlu0 %v6837, 64
  %v6839 = vpop.permute.xlu0 %6838
  %vm6840 = vcmask 654848
  %s6841 = scalar_lea.vmem %s1, 504
  %6842 = vst.msk [vmem:[%s6841] sm:$0xff] %vm6840, %v6839
  %s6843 = scalar_lea.vmem %s0, 3
  %s6844 = smov 3
  %v6845 = vld [vmem:[%s6843] ss:$16 sm:%s6844]
  %s6846 = scalar_lea.vmem %s0, 3
  %s6847 = smov 12
  %v6848 = vld [vmem:[%s6846] ss:$16 sm:%s6847]
  %vm6849 = vcmask 1043458
  %v6850 = vsel %vm6849, %v6848, %v6845
  %s6851 = scalar_lea.vmem %s0, 3
  %s6852 = smov 48
  %v6853 = vld [vmem:[%s6851] ss:$16 sm:%s6852]
  %vm6854 = vcmask 1045508
  %v6855 = vsel %vm6854, %v6853, %v6850
  %s6856 = scalar_lea.vmem %s0, 3
  %s6857 = smov 192
  %v6858 = vld [vmem:[%s6856] ss:$16 sm:%s6857]
  %vm6859 = vcmask 1047558
  %v6860 = vsel %vm6859, %v6858, %v6855
  %6861 = vrot.lane.b32.xlu0 %v6860, 48
  %v6862 = vpop.permute.xlu0 %6861
  %vm6863 = vcmask 523648
  %6864 = vst.msk [vmem:[%s1] sm:$0xff] %vm6863, %v6862
  %s6865 = scalar_lea.vmem %s0, 259
  %s6866 = smov 3
  %v6867 = vld [vmem:[%s6865] ss:$16 sm:%s6866]
  %s6868 = scalar_lea.vmem %s0, 259
  %s6869 = smov 12
  %v6870 = vld [vmem:[%s6868] ss:$16 sm:%s6869]
  %vm6871 = vcmask 1043458
  %v6872 = vsel %vm6871, %v6870, %v6867
  %s6873 = scalar_lea.vmem %s0, 259
  %s6874 = smov 48
  %v6875 = vld [vmem:[%s6873] ss:$16 sm:%s6874]
  %vm6876 = vcmask 1045508
  %v6877 = vsel %vm6876, %v6875, %v6872
  %s6878 = scalar_lea.vmem %s0, 259
  %s6879 = smov 192
  %v6880 = vld [vmem:[%s6878] ss:$16 sm:%s6879]
  %vm6881 = vcmask 1047558
  %v6882 = vsel %vm6881, %v6880, %v6877
  %6883 = vrot.lane.b32.xlu0 %v6882, 48
  %v6884 = vpop.permute.xlu0 %6883
  %vm6885 = vcmask 523648
  %s6886 = scalar_lea.vmem %s1, 32
  %6887 = vst.msk [vmem:[%s6886] sm:$0xff] %vm6885, %v6884
  %s6888 = scalar_lea.vmem %s0, 515
  %s6889 = smov 3
  %v6890 = vld [vmem:[%s6888] ss:$16 sm:%s6889]
  %s6891 = scalar_lea.vmem %s0, 515
  %s6892 = smov 12
  %v6893 = vld [vmem:[%s6891] ss:$16 sm:%s6892]
  %vm6894 = vcmask 1043458
  %v6895 = vsel %vm6894, %v6893, %v6890
  %s6896 = scalar_lea.vmem %s0, 515
  %s6897 = smov 48
  %v6898 = vld [vmem:[%s6896] ss:$16 sm:%s6897]
  %vm6899 = vcmask 1045508
  %v6900 = vsel %vm6899, %v6898, %v6895
  %s6901 = scalar_lea.vmem %s0, 515
  %s6902 = smov 192
  %v6903 = vld [vmem:[%s6901] ss:$16 sm:%s6902]
  %vm6904 = vcmask 1047558
  %v6905 = vsel %vm6904, %v6903, %v6900
  %6906 = vrot.lane.b32.xlu0 %v6905, 48
  %v6907 = vpop.permute.xlu0 %6906
  %vm6908 = vcmask 523648
  %s6909 = scalar_lea.vmem %s1, 64
  %6910 = vst.msk [vmem:[%s6909] sm:$0xff] %vm6908, %v6907
  %s6911 = scalar_lea.vmem %s0, 771
  %s6912 = smov 3
  %v6913 = vld [vmem:[%s6911] ss:$16 sm:%s6912]
  %s6914 = scalar_lea.vmem %s0, 771
  %s6915 = smov 12
  %v6916 = vld [vmem:[%s6914] ss:$16 sm:%s6915]
  %vm6917 = vcmask 1043458
  %v6918 = vsel %vm6917, %v6916, %v6913
  %s6919 = scalar_lea.vmem %s0, 771
  %s6920 = smov 48
  %v6921 = vld [vmem:[%s6919] ss:$16 sm:%s6920]
  %vm6922 = vcmask 1045508
  %v6923 = vsel %vm6922, %v6921, %v6918
  %s6924 = scalar_lea.vmem %s0, 771
  %s6925 = smov 192
  %v6926 = vld [vmem:[%s6924] ss:$16 sm:%s6925]
  %vm6927 = vcmask 1047558
  %v6928 = vsel %vm6927, %v6926, %v6923
  %6929 = vrot.lane.b32.xlu0 %v6928, 48
  %v6930 = vpop.permute.xlu0 %6929
  %vm6931 = vcmask 523648
  %s6932 = scalar_lea.vmem %s1, 96
  %6933 = vst.msk [vmem:[%s6932] sm:$0xff] %vm6931, %v6930
  %s6934 = scalar_lea.vmem %s0, 1027
  %s6935 = smov 3
  %v6936 = vld [vmem:[%s6934] ss:$16 sm:%s6935]
  %s6937 = scalar_lea.vmem %s0, 1027
  %s6938 = smov 12
  %v6939 = vld [vmem:[%s6937] ss:$16 sm:%s6938]
  %vm6940 = vcmask 1043458
  %v6941 = vsel %vm6940, %v6939, %v6936
  %s6942 = scalar_lea.vmem %s0, 1027
  %s6943 = smov 48
  %v6944 = vld [vmem:[%s6942] ss:$16 sm:%s6943]
  %vm6945 = vcmask 1045508
  %v6946 = vsel %vm6945, %v6944, %v6941
  %s6947 = scalar_lea.vmem %s0, 1027
  %s6948 = smov 192
  %v6949 = vld [vmem:[%s6947] ss:$16 sm:%s6948]
  %vm6950 = vcmask 1047558
  %v6951 = vsel %vm6950, %v6949, %v6946
  %6952 = vrot.lane.b32.xlu0 %v6951, 48
  %v6953 = vpop.permute.xlu0 %6952
  %vm6954 = vcmask 523648
  %s6955 = scalar_lea.vmem %s1, 128
  %6956 = vst.msk [vmem:[%s6955] sm:$0xff] %vm6954, %v6953
  %s6957 = scalar_lea.vmem %s0, 1283
  %s6958 = smov 3
  %v6959 = vld [vmem:[%s6957] ss:$16 sm:%s6958]
  %s6960 = scalar_lea.vmem %s0, 1283
  %s6961 = smov 12
  %v6962 = vld [vmem:[%s6960] ss:$16 sm:%s6961]
  %vm6963 = vcmask 1043458
  %v6964 = vsel %vm6963, %v6962, %v6959
  %s6965 = scalar_lea.vmem %s0, 1283
  %s6966 = smov 48
  %v6967 = vld [vmem:[%s6965] ss:$16 sm:%s6966]
  %vm6968 = vcmask 1045508
  %v6969 = vsel %vm6968, %v6967, %v6964
  %s6970 = scalar_lea.vmem %s0, 1283
  %s6971 = smov 192
  %v6972 = vld [vmem:[%s6970] ss:$16 sm:%s6971]
  %vm6973 = vcmask 1047558
  %v6974 = vsel %vm6973, %v6972, %v6969
  %6975 = vrot.lane.b32.xlu0 %v6974, 48
  %v6976 = vpop.permute.xlu0 %6975
  %vm6977 = vcmask 523648
  %s6978 = scalar_lea.vmem %s1, 160
  %6979 = vst.msk [vmem:[%s6978] sm:$0xff] %vm6977, %v6976
  %s6980 = scalar_lea.vmem %s0, 1539
  %s6981 = smov 3
  %v6982 = vld [vmem:[%s6980] ss:$16 sm:%s6981]
  %s6983 = scalar_lea.vmem %s0, 1539
  %s6984 = smov 12
  %v6985 = vld [vmem:[%s6983] ss:$16 sm:%s6984]
  %vm6986 = vcmask 1043458
  %v6987 = vsel %vm6986, %v6985, %v6982
  %s6988 = scalar_lea.vmem %s0, 1539
  %s6989 = smov 48
  %v6990 = vld [vmem:[%s6988] ss:$16 sm:%s6989]
  %vm6991 = vcmask 1045508
  %v6992 = vsel %vm6991, %v6990, %v6987
  %s6993 = scalar_lea.vmem %s0, 1539
  %s6994 = smov 192
  %v6995 = vld [vmem:[%s6993] ss:$16 sm:%s6994]
  %vm6996 = vcmask 1047558
  %v6997 = vsel %vm6996, %v6995, %v6992
  %6998 = vrot.lane.b32.xlu0 %v6997, 48
  %v6999 = vpop.permute.xlu0 %6998
  %vm7000 = vcmask 523648
  %s7001 = scalar_lea.vmem %s1, 192
  %7002 = vst.msk [vmem:[%s7001] sm:$0xff] %vm7000, %v6999
  %s7003 = scalar_lea.vmem %s0, 1795
  %s7004 = smov 3
  %v7005 = vld [vmem:[%s7003] ss:$16 sm:%s7004]
  %s7006 = scalar_lea.vmem %s0, 1795
  %s7007 = smov 12
  %v7008 = vld [vmem:[%s7006] ss:$16 sm:%s7007]
  %vm7009 = vcmask 1043458
  %v7010 = vsel %vm7009, %v7008, %v7005
  %s7011 = scalar_lea.vmem %s0, 1795
  %s7012 = smov 48
  %v7013 = vld [vmem:[%s7011] ss:$16 sm:%s7012]
  %vm7014 = vcmask 1045508
  %v7015 = vsel %vm7014, %v7013, %v7010
  %s7016 = scalar_lea.vmem %s0, 1795
  %s7017 = smov 192
  %v7018 = vld [vmem:[%s7016] ss:$16 sm:%s7017]
  %vm7019 = vcmask 1047558
  %v7020 = vsel %vm7019, %v7018, %v7015
  %7021 = vrot.lane.b32.xlu0 %v7020, 48
  %v7022 = vpop.permute.xlu0 %7021
  %vm7023 = vcmask 523648
  %s7024 = scalar_lea.vmem %s1, 224
  %7025 = vst.msk [vmem:[%s7024] sm:$0xff] %vm7023, %v7022
  %s7026 = scalar_lea.vmem %s0, 2051
  %s7027 = smov 3
  %v7028 = vld [vmem:[%s7026] ss:$16 sm:%s7027]
  %s7029 = scalar_lea.vmem %s0, 2051
  %s7030 = smov 12
  %v7031 = vld [vmem:[%s7029] ss:$16 sm:%s7030]
  %vm7032 = vcmask 1043458
  %v7033 = vsel %vm7032, %v7031, %v7028
  %s7034 = scalar_lea.vmem %s0, 2051
  %s7035 = smov 48
  %v7036 = vld [vmem:[%s7034] ss:$16 sm:%s7035]
  %vm7037 = vcmask 1045508
  %v7038 = vsel %vm7037, %v7036, %v7033
  %s7039 = scalar_lea.vmem %s0, 2051
  %s7040 = smov 192
  %v7041 = vld [vmem:[%s7039] ss:$16 sm:%s7040]
  %vm7042 = vcmask 1047558
  %v7043 = vsel %vm7042, %v7041, %v7038
  %7044 = vrot.lane.b32.xlu0 %v7043, 48
  %v7045 = vpop.permute.xlu0 %7044
  %vm7046 = vcmask 523648
  %s7047 = scalar_lea.vmem %s1, 256
  %7048 = vst.msk [vmem:[%s7047] sm:$0xff] %vm7046, %v7045
  %s7049 = scalar_lea.vmem %s0, 2307
  %s7050 = smov 3
  %v7051 = vld [vmem:[%s7049] ss:$16 sm:%s7050]
  %s7052 = scalar_lea.vmem %s0, 2307
  %s7053 = smov 12
  %v7054 = vld [vmem:[%s7052] ss:$16 sm:%s7053]
  %vm7055 = vcmask 1043458
  %v7056 = vsel %vm7055, %v7054, %v7051
  %s7057 = scalar_lea.vmem %s0, 2307
  %s7058 = smov 48
  %v7059 = vld [vmem:[%s7057] ss:$16 sm:%s7058]
  %vm7060 = vcmask 1045508
  %v7061 = vsel %vm7060, %v7059, %v7056
  %s7062 = scalar_lea.vmem %s0, 2307
  %s7063 = smov 192
  %v7064 = vld [vmem:[%s7062] ss:$16 sm:%s7063]
  %vm7065 = vcmask 1047558
  %v7066 = vsel %vm7065, %v7064, %v7061
  %7067 = vrot.lane.b32.xlu0 %v7066, 48
  %v7068 = vpop.permute.xlu0 %7067
  %vm7069 = vcmask 523648
  %s7070 = scalar_lea.vmem %s1, 288
  %7071 = vst.msk [vmem:[%s7070] sm:$0xff] %vm7069, %v7068
  %s7072 = scalar_lea.vmem %s0, 2563
  %s7073 = smov 3
  %v7074 = vld [vmem:[%s7072] ss:$16 sm:%s7073]
  %s7075 = scalar_lea.vmem %s0, 2563
  %s7076 = smov 12
  %v7077 = vld [vmem:[%s7075] ss:$16 sm:%s7076]
  %vm7078 = vcmask 1043458
  %v7079 = vsel %vm7078, %v7077, %v7074
  %s7080 = scalar_lea.vmem %s0, 2563
  %s7081 = smov 48
  %v7082 = vld [vmem:[%s7080] ss:$16 sm:%s7081]
  %vm7083 = vcmask 1045508
  %v7084 = vsel %vm7083, %v7082, %v7079
  %s7085 = scalar_lea.vmem %s0, 2563
  %s7086 = smov 192
  %v7087 = vld [vmem:[%s7085] ss:$16 sm:%s7086]
  %vm7088 = vcmask 1047558
  %v7089 = vsel %vm7088, %v7087, %v7084
  %7090 = vrot.lane.b32.xlu0 %v7089, 48
  %v7091 = vpop.permute.xlu0 %7090
  %vm7092 = vcmask 523648
  %s7093 = scalar_lea.vmem %s1, 320
  %7094 = vst.msk [vmem:[%s7093] sm:$0xff] %vm7092, %v7091
  %s7095 = scalar_lea.vmem %s0, 2819
  %s7096 = smov 3
  %v7097 = vld [vmem:[%s7095] ss:$16 sm:%s7096]
  %s7098 = scalar_lea.vmem %s0, 2819
  %s7099 = smov 12
  %v7100 = vld [vmem:[%s7098] ss:$16 sm:%s7099]
  %vm7101 = vcmask 1043458
  %v7102 = vsel %vm7101, %v7100, %v7097
  %s7103 = scalar_lea.vmem %s0, 2819
  %s7104 = smov 48
  %v7105 = vld [vmem:[%s7103] ss:$16 sm:%s7104]
  %vm7106 = vcmask 1045508
  %v7107 = vsel %vm7106, %v7105, %v7102
  %s7108 = scalar_lea.vmem %s0, 2819
  %s7109 = smov 192
  %v7110 = vld [vmem:[%s7108] ss:$16 sm:%s7109]
  %vm7111 = vcmask 1047558
  %v7112 = vsel %vm7111, %v7110, %v7107
  %7113 = vrot.lane.b32.xlu0 %v7112, 48
  %v7114 = vpop.permute.xlu0 %7113
  %vm7115 = vcmask 523648
  %s7116 = scalar_lea.vmem %s1, 352
  %7117 = vst.msk [vmem:[%s7116] sm:$0xff] %vm7115, %v7114
  %s7118 = scalar_lea.vmem %s0, 3075
  %s7119 = smov 3
  %v7120 = vld [vmem:[%s7118] ss:$16 sm:%s7119]
  %s7121 = scalar_lea.vmem %s0, 3075
  %s7122 = smov 12
  %v7123 = vld [vmem:[%s7121] ss:$16 sm:%s7122]
  %vm7124 = vcmask 1043458
  %v7125 = vsel %vm7124, %v7123, %v7120
  %s7126 = scalar_lea.vmem %s0, 3075
  %s7127 = smov 48
  %v7128 = vld [vmem:[%s7126] ss:$16 sm:%s7127]
  %vm7129 = vcmask 1045508
  %v7130 = vsel %vm7129, %v7128, %v7125
  %s7131 = scalar_lea.vmem %s0, 3075
  %s7132 = smov 192
  %v7133 = vld [vmem:[%s7131] ss:$16 sm:%s7132]
  %vm7134 = vcmask 1047558
  %v7135 = vsel %vm7134, %v7133, %v7130
  %7136 = vrot.lane.b32.xlu0 %v7135, 48
  %v7137 = vpop.permute.xlu0 %7136
  %vm7138 = vcmask 523648
  %s7139 = scalar_lea.vmem %s1, 384
  %7140 = vst.msk [vmem:[%s7139] sm:$0xff] %vm7138, %v7137
  %s7141 = scalar_lea.vmem %s0, 3331
  %s7142 = smov 3
  %v7143 = vld [vmem:[%s7141] ss:$16 sm:%s7142]
  %s7144 = scalar_lea.vmem %s0, 3331
  %s7145 = smov 12
  %v7146 = vld [vmem:[%s7144] ss:$16 sm:%s7145]
  %vm7147 = vcmask 1043458
  %v7148 = vsel %vm7147, %v7146, %v7143
  %s7149 = scalar_lea.vmem %s0, 3331
  %s7150 = smov 48
  %v7151 = vld [vmem:[%s7149] ss:$16 sm:%s7150]
  %vm7152 = vcmask 1045508
  %v7153 = vsel %vm7152, %v7151, %v7148
  %s7154 = scalar_lea.vmem %s0, 3331
  %s7155 = smov 192
  %v7156 = vld [vmem:[%s7154] ss:$16 sm:%s7155]
  %vm7157 = vcmask 1047558
  %v7158 = vsel %vm7157, %v7156, %v7153
  %7159 = vrot.lane.b32.xlu0 %v7158, 48
  %v7160 = vpop.permute.xlu0 %7159
  %vm7161 = vcmask 523648
  %s7162 = scalar_lea.vmem %s1, 416
  %7163 = vst.msk [vmem:[%s7162] sm:$0xff] %vm7161, %v7160
  %s7164 = scalar_lea.vmem %s0, 3587
  %s7165 = smov 3
  %v7166 = vld [vmem:[%s7164] ss:$16 sm:%s7165]
  %s7167 = scalar_lea.vmem %s0, 3587
  %s7168 = smov 12
  %v7169 = vld [vmem:[%s7167] ss:$16 sm:%s7168]
  %vm7170 = vcmask 1043458
  %v7171 = vsel %vm7170, %v7169, %v7166
  %s7172 = scalar_lea.vmem %s0, 3587
  %s7173 = smov 48
  %v7174 = vld [vmem:[%s7172] ss:$16 sm:%s7173]
  %vm7175 = vcmask 1045508
  %v7176 = vsel %vm7175, %v7174, %v7171
  %s7177 = scalar_lea.vmem %s0, 3587
  %s7178 = smov 192
  %v7179 = vld [vmem:[%s7177] ss:$16 sm:%s7178]
  %vm7180 = vcmask 1047558
  %v7181 = vsel %vm7180, %v7179, %v7176
  %7182 = vrot.lane.b32.xlu0 %v7181, 48
  %v7183 = vpop.permute.xlu0 %7182
  %vm7184 = vcmask 523648
  %s7185 = scalar_lea.vmem %s1, 448
  %7186 = vst.msk [vmem:[%s7185] sm:$0xff] %vm7184, %v7183
  %s7187 = scalar_lea.vmem %s0, 3843
  %s7188 = smov 3
  %v7189 = vld [vmem:[%s7187] ss:$16 sm:%s7188]
  %s7190 = scalar_lea.vmem %s0, 3843
  %s7191 = smov 12
  %v7192 = vld [vmem:[%s7190] ss:$16 sm:%s7191]
  %vm7193 = vcmask 1043458
  %v7194 = vsel %vm7193, %v7192, %v7189
  %s7195 = scalar_lea.vmem %s0, 3843
  %s7196 = smov 48
  %v7197 = vld [vmem:[%s7195] ss:$16 sm:%s7196]
  %vm7198 = vcmask 1045508
  %v7199 = vsel %vm7198, %v7197, %v7194
  %s7200 = scalar_lea.vmem %s0, 3843
  %s7201 = smov 192
  %v7202 = vld [vmem:[%s7200] ss:$16 sm:%s7201]
  %vm7203 = vcmask 1047558
  %v7204 = vsel %vm7203, %v7202, %v7199
  %7205 = vrot.lane.b32.xlu0 %v7204, 48
  %v7206 = vpop.permute.xlu0 %7205
  %vm7207 = vcmask 523648
  %s7208 = scalar_lea.vmem %s1, 480
  %7209 = vst.msk [vmem:[%s7208] sm:$0xff] %vm7207, %v7206
  %s7210 = scalar_lea.vmem %s0, 11
  %s7211 = smov 3
  %v7212 = vld [vmem:[%s7210] ss:$16 sm:%s7211]
  %s7213 = scalar_lea.vmem %s0, 11
  %s7214 = smov 12
  %v7215 = vld [vmem:[%s7213] ss:$16 sm:%s7214]
  %vm7216 = vcmask 1043458
  %v7217 = vsel %vm7216, %v7215, %v7212
  %s7218 = scalar_lea.vmem %s0, 11
  %s7219 = smov 48
  %v7220 = vld [vmem:[%s7218] ss:$16 sm:%s7219]
  %vm7221 = vcmask 1045508
  %v7222 = vsel %vm7221, %v7220, %v7217
  %s7223 = scalar_lea.vmem %s0, 11
  %s7224 = smov 192
  %v7225 = vld [vmem:[%s7223] ss:$16 sm:%s7224]
  %vm7226 = vcmask 1047558
  %v7227 = vsel %vm7226, %v7225, %v7222
  %7228 = vrot.lane.b32.xlu0 %v7227, 48
  %v7229 = vpop.permute.xlu0 %7228
  %vm7230 = vcmask 523648
  %s7231 = scalar_lea.vmem %s1, 8
  %7232 = vst.msk [vmem:[%s7231] sm:$0xff] %vm7230, %v7229
  %s7233 = scalar_lea.vmem %s0, 267
  %s7234 = smov 3
  %v7235 = vld [vmem:[%s7233] ss:$16 sm:%s7234]
  %s7236 = scalar_lea.vmem %s0, 267
  %s7237 = smov 12
  %v7238 = vld [vmem:[%s7236] ss:$16 sm:%s7237]
  %vm7239 = vcmask 1043458
  %v7240 = vsel %vm7239, %v7238, %v7235
  %s7241 = scalar_lea.vmem %s0, 267
  %s7242 = smov 48
  %v7243 = vld [vmem:[%s7241] ss:$16 sm:%s7242]
  %vm7244 = vcmask 1045508
  %v7245 = vsel %vm7244, %v7243, %v7240
  %s7246 = scalar_lea.vmem %s0, 267
  %s7247 = smov 192
  %v7248 = vld [vmem:[%s7246] ss:$16 sm:%s7247]
  %vm7249 = vcmask 1047558
  %v7250 = vsel %vm7249, %v7248, %v7245
  %7251 = vrot.lane.b32.xlu0 %v7250, 48
  %v7252 = vpop.permute.xlu0 %7251
  %vm7253 = vcmask 523648
  %s7254 = scalar_lea.vmem %s1, 40
  %7255 = vst.msk [vmem:[%s7254] sm:$0xff] %vm7253, %v7252
  %s7256 = scalar_lea.vmem %s0, 523
  %s7257 = smov 3
  %v7258 = vld [vmem:[%s7256] ss:$16 sm:%s7257]
  %s7259 = scalar_lea.vmem %s0, 523
  %s7260 = smov 12
  %v7261 = vld [vmem:[%s7259] ss:$16 sm:%s7260]
  %vm7262 = vcmask 1043458
  %v7263 = vsel %vm7262, %v7261, %v7258
  %s7264 = scalar_lea.vmem %s0, 523
  %s7265 = smov 48
  %v7266 = vld [vmem:[%s7264] ss:$16 sm:%s7265]
  %vm7267 = vcmask 1045508
  %v7268 = vsel %vm7267, %v7266, %v7263
  %s7269 = scalar_lea.vmem %s0, 523
  %s7270 = smov 192
  %v7271 = vld [vmem:[%s7269] ss:$16 sm:%s7270]
  %vm7272 = vcmask 1047558
  %v7273 = vsel %vm7272, %v7271, %v7268
  %7274 = vrot.lane.b32.xlu0 %v7273, 48
  %v7275 = vpop.permute.xlu0 %7274
  %vm7276 = vcmask 523648
  %s7277 = scalar_lea.vmem %s1, 72
  %7278 = vst.msk [vmem:[%s7277] sm:$0xff] %vm7276, %v7275
  %s7279 = scalar_lea.vmem %s0, 779
  %s7280 = smov 3
  %v7281 = vld [vmem:[%s7279] ss:$16 sm:%s7280]
  %s7282 = scalar_lea.vmem %s0, 779
  %s7283 = smov 12
  %v7284 = vld [vmem:[%s7282] ss:$16 sm:%s7283]
  %vm7285 = vcmask 1043458
  %v7286 = vsel %vm7285, %v7284, %v7281
  %s7287 = scalar_lea.vmem %s0, 779
  %s7288 = smov 48
  %v7289 = vld [vmem:[%s7287] ss:$16 sm:%s7288]
  %vm7290 = vcmask 1045508
  %v7291 = vsel %vm7290, %v7289, %v7286
  %s7292 = scalar_lea.vmem %s0, 779
  %s7293 = smov 192
  %v7294 = vld [vmem:[%s7292] ss:$16 sm:%s7293]
  %vm7295 = vcmask 1047558
  %v7296 = vsel %vm7295, %v7294, %v7291
  %7297 = vrot.lane.b32.xlu0 %v7296, 48
  %v7298 = vpop.permute.xlu0 %7297
  %vm7299 = vcmask 523648
  %s7300 = scalar_lea.vmem %s1, 104
  %7301 = vst.msk [vmem:[%s7300] sm:$0xff] %vm7299, %v7298
  %s7302 = scalar_lea.vmem %s0, 1035
  %s7303 = smov 3
  %v7304 = vld [vmem:[%s7302] ss:$16 sm:%s7303]
  %s7305 = scalar_lea.vmem %s0, 1035
  %s7306 = smov 12
  %v7307 = vld [vmem:[%s7305] ss:$16 sm:%s7306]
  %vm7308 = vcmask 1043458
  %v7309 = vsel %vm7308, %v7307, %v7304
  %s7310 = scalar_lea.vmem %s0, 1035
  %s7311 = smov 48
  %v7312 = vld [vmem:[%s7310] ss:$16 sm:%s7311]
  %vm7313 = vcmask 1045508
  %v7314 = vsel %vm7313, %v7312, %v7309
  %s7315 = scalar_lea.vmem %s0, 1035
  %s7316 = smov 192
  %v7317 = vld [vmem:[%s7315] ss:$16 sm:%s7316]
  %vm7318 = vcmask 1047558
  %v7319 = vsel %vm7318, %v7317, %v7314
  %7320 = vrot.lane.b32.xlu0 %v7319, 48
  %v7321 = vpop.permute.xlu0 %7320
  %vm7322 = vcmask 523648
  %s7323 = scalar_lea.vmem %s1, 136
  %7324 = vst.msk [vmem:[%s7323] sm:$0xff] %vm7322, %v7321
  %s7325 = scalar_lea.vmem %s0, 1291
  %s7326 = smov 3
  %v7327 = vld [vmem:[%s7325] ss:$16 sm:%s7326]
  %s7328 = scalar_lea.vmem %s0, 1291
  %s7329 = smov 12
  %v7330 = vld [vmem:[%s7328] ss:$16 sm:%s7329]
  %vm7331 = vcmask 1043458
  %v7332 = vsel %vm7331, %v7330, %v7327
  %s7333 = scalar_lea.vmem %s0, 1291
  %s7334 = smov 48
  %v7335 = vld [vmem:[%s7333] ss:$16 sm:%s7334]
  %vm7336 = vcmask 1045508
  %v7337 = vsel %vm7336, %v7335, %v7332
  %s7338 = scalar_lea.vmem %s0, 1291
  %s7339 = smov 192
  %v7340 = vld [vmem:[%s7338] ss:$16 sm:%s7339]
  %vm7341 = vcmask 1047558
  %v7342 = vsel %vm7341, %v7340, %v7337
  %7343 = vrot.lane.b32.xlu0 %v7342, 48
  %v7344 = vpop.permute.xlu0 %7343
  %vm7345 = vcmask 523648
  %s7346 = scalar_lea.vmem %s1, 168
  %7347 = vst.msk [vmem:[%s7346] sm:$0xff] %vm7345, %v7344
  %s7348 = scalar_lea.vmem %s0, 1547
  %s7349 = smov 3
  %v7350 = vld [vmem:[%s7348] ss:$16 sm:%s7349]
  %s7351 = scalar_lea.vmem %s0, 1547
  %s7352 = smov 12
  %v7353 = vld [vmem:[%s7351] ss:$16 sm:%s7352]
  %vm7354 = vcmask 1043458
  %v7355 = vsel %vm7354, %v7353, %v7350
  %s7356 = scalar_lea.vmem %s0, 1547
  %s7357 = smov 48
  %v7358 = vld [vmem:[%s7356] ss:$16 sm:%s7357]
  %vm7359 = vcmask 1045508
  %v7360 = vsel %vm7359, %v7358, %v7355
  %s7361 = scalar_lea.vmem %s0, 1547
  %s7362 = smov 192
  %v7363 = vld [vmem:[%s7361] ss:$16 sm:%s7362]
  %vm7364 = vcmask 1047558
  %v7365 = vsel %vm7364, %v7363, %v7360
  %7366 = vrot.lane.b32.xlu0 %v7365, 48
  %v7367 = vpop.permute.xlu0 %7366
  %vm7368 = vcmask 523648
  %s7369 = scalar_lea.vmem %s1, 200
  %7370 = vst.msk [vmem:[%s7369] sm:$0xff] %vm7368, %v7367
  %s7371 = scalar_lea.vmem %s0, 1803
  %s7372 = smov 3
  %v7373 = vld [vmem:[%s7371] ss:$16 sm:%s7372]
  %s7374 = scalar_lea.vmem %s0, 1803
  %s7375 = smov 12
  %v7376 = vld [vmem:[%s7374] ss:$16 sm:%s7375]
  %vm7377 = vcmask 1043458
  %v7378 = vsel %vm7377, %v7376, %v7373
  %s7379 = scalar_lea.vmem %s0, 1803
  %s7380 = smov 48
  %v7381 = vld [vmem:[%s7379] ss:$16 sm:%s7380]
  %vm7382 = vcmask 1045508
  %v7383 = vsel %vm7382, %v7381, %v7378
  %s7384 = scalar_lea.vmem %s0, 1803
  %s7385 = smov 192
  %v7386 = vld [vmem:[%s7384] ss:$16 sm:%s7385]
  %vm7387 = vcmask 1047558
  %v7388 = vsel %vm7387, %v7386, %v7383
  %7389 = vrot.lane.b32.xlu0 %v7388, 48
  %v7390 = vpop.permute.xlu0 %7389
  %vm7391 = vcmask 523648
  %s7392 = scalar_lea.vmem %s1, 232
  %7393 = vst.msk [vmem:[%s7392] sm:$0xff] %vm7391, %v7390
  %s7394 = scalar_lea.vmem %s0, 2059
  %s7395 = smov 3
  %v7396 = vld [vmem:[%s7394] ss:$16 sm:%s7395]
  %s7397 = scalar_lea.vmem %s0, 2059
  %s7398 = smov 12
  %v7399 = vld [vmem:[%s7397] ss:$16 sm:%s7398]
  %vm7400 = vcmask 1043458
  %v7401 = vsel %vm7400, %v7399, %v7396
  %s7402 = scalar_lea.vmem %s0, 2059
  %s7403 = smov 48
  %v7404 = vld [vmem:[%s7402] ss:$16 sm:%s7403]
  %vm7405 = vcmask 1045508
  %v7406 = vsel %vm7405, %v7404, %v7401
  %s7407 = scalar_lea.vmem %s0, 2059
  %s7408 = smov 192
  %v7409 = vld [vmem:[%s7407] ss:$16 sm:%s7408]
  %vm7410 = vcmask 1047558
  %v7411 = vsel %vm7410, %v7409, %v7406
  %7412 = vrot.lane.b32.xlu0 %v7411, 48
  %v7413 = vpop.permute.xlu0 %7412
  %vm7414 = vcmask 523648
  %s7415 = scalar_lea.vmem %s1, 264
  %7416 = vst.msk [vmem:[%s7415] sm:$0xff] %vm7414, %v7413
  %s7417 = scalar_lea.vmem %s0, 2315
  %s7418 = smov 3
  %v7419 = vld [vmem:[%s7417] ss:$16 sm:%s7418]
  %s7420 = scalar_lea.vmem %s0, 2315
  %s7421 = smov 12
  %v7422 = vld [vmem:[%s7420] ss:$16 sm:%s7421]
  %vm7423 = vcmask 1043458
  %v7424 = vsel %vm7423, %v7422, %v7419
  %s7425 = scalar_lea.vmem %s0, 2315
  %s7426 = smov 48
  %v7427 = vld [vmem:[%s7425] ss:$16 sm:%s7426]
  %vm7428 = vcmask 1045508
  %v7429 = vsel %vm7428, %v7427, %v7424
  %s7430 = scalar_lea.vmem %s0, 2315
  %s7431 = smov 192
  %v7432 = vld [vmem:[%s7430] ss:$16 sm:%s7431]
  %vm7433 = vcmask 1047558
  %v7434 = vsel %vm7433, %v7432, %v7429
  %7435 = vrot.lane.b32.xlu0 %v7434, 48
  %v7436 = vpop.permute.xlu0 %7435
  %vm7437 = vcmask 523648
  %s7438 = scalar_lea.vmem %s1, 296
  %7439 = vst.msk [vmem:[%s7438] sm:$0xff] %vm7437, %v7436
  %s7440 = scalar_lea.vmem %s0, 2571
  %s7441 = smov 3
  %v7442 = vld [vmem:[%s7440] ss:$16 sm:%s7441]
  %s7443 = scalar_lea.vmem %s0, 2571
  %s7444 = smov 12
  %v7445 = vld [vmem:[%s7443] ss:$16 sm:%s7444]
  %vm7446 = vcmask 1043458
  %v7447 = vsel %vm7446, %v7445, %v7442
  %s7448 = scalar_lea.vmem %s0, 2571
  %s7449 = smov 48
  %v7450 = vld [vmem:[%s7448] ss:$16 sm:%s7449]
  %vm7451 = vcmask 1045508
  %v7452 = vsel %vm7451, %v7450, %v7447
  %s7453 = scalar_lea.vmem %s0, 2571
  %s7454 = smov 192
  %v7455 = vld [vmem:[%s7453] ss:$16 sm:%s7454]
  %vm7456 = vcmask 1047558
  %v7457 = vsel %vm7456, %v7455, %v7452
  %7458 = vrot.lane.b32.xlu0 %v7457, 48
  %v7459 = vpop.permute.xlu0 %7458
  %vm7460 = vcmask 523648
  %s7461 = scalar_lea.vmem %s1, 328
  %7462 = vst.msk [vmem:[%s7461] sm:$0xff] %vm7460, %v7459
  %s7463 = scalar_lea.vmem %s0, 2827
  %s7464 = smov 3
  %v7465 = vld [vmem:[%s7463] ss:$16 sm:%s7464]
  %s7466 = scalar_lea.vmem %s0, 2827
  %s7467 = smov 12
  %v7468 = vld [vmem:[%s7466] ss:$16 sm:%s7467]
  %vm7469 = vcmask 1043458
  %v7470 = vsel %vm7469, %v7468, %v7465
  %s7471 = scalar_lea.vmem %s0, 2827
  %s7472 = smov 48
  %v7473 = vld [vmem:[%s7471] ss:$16 sm:%s7472]
  %vm7474 = vcmask 1045508
  %v7475 = vsel %vm7474, %v7473, %v7470
  %s7476 = scalar_lea.vmem %s0, 2827
  %s7477 = smov 192
  %v7478 = vld [vmem:[%s7476] ss:$16 sm:%s7477]
  %vm7479 = vcmask 1047558
  %v7480 = vsel %vm7479, %v7478, %v7475
  %7481 = vrot.lane.b32.xlu0 %v7480, 48
  %v7482 = vpop.permute.xlu0 %7481
  %vm7483 = vcmask 523648
  %s7484 = scalar_lea.vmem %s1, 360
  %7485 = vst.msk [vmem:[%s7484] sm:$0xff] %vm7483, %v7482
  %s7486 = scalar_lea.vmem %s0, 3083
  %s7487 = smov 3
  %v7488 = vld [vmem:[%s7486] ss:$16 sm:%s7487]
  %s7489 = scalar_lea.vmem %s0, 3083
  %s7490 = smov 12
  %v7491 = vld [vmem:[%s7489] ss:$16 sm:%s7490]
  %vm7492 = vcmask 1043458
  %v7493 = vsel %vm7492, %v7491, %v7488
  %s7494 = scalar_lea.vmem %s0, 3083
  %s7495 = smov 48
  %v7496 = vld [vmem:[%s7494] ss:$16 sm:%s7495]
  %vm7497 = vcmask 1045508
  %v7498 = vsel %vm7497, %v7496, %v7493
  %s7499 = scalar_lea.vmem %s0, 3083
  %s7500 = smov 192
  %v7501 = vld [vmem:[%s7499] ss:$16 sm:%s7500]
  %vm7502 = vcmask 1047558
  %v7503 = vsel %vm7502, %v7501, %v7498
  %7504 = vrot.lane.b32.xlu0 %v7503, 48
  %v7505 = vpop.permute.xlu0 %7504
  %vm7506 = vcmask 523648
  %s7507 = scalar_lea.vmem %s1, 392
  %7508 = vst.msk [vmem:[%s7507] sm:$0xff] %vm7506, %v7505
  %s7509 = scalar_lea.vmem %s0, 3339
  %s7510 = smov 3
  %v7511 = vld [vmem:[%s7509] ss:$16 sm:%s7510]
  %s7512 = scalar_lea.vmem %s0, 3339
  %s7513 = smov 12
  %v7514 = vld [vmem:[%s7512] ss:$16 sm:%s7513]
  %vm7515 = vcmask 1043458
  %v7516 = vsel %vm7515, %v7514, %v7511
  %s7517 = scalar_lea.vmem %s0, 3339
  %s7518 = smov 48
  %v7519 = vld [vmem:[%s7517] ss:$16 sm:%s7518]
  %vm7520 = vcmask 1045508
  %v7521 = vsel %vm7520, %v7519, %v7516
  %s7522 = scalar_lea.vmem %s0, 3339
  %s7523 = smov 192
  %v7524 = vld [vmem:[%s7522] ss:$16 sm:%s7523]
  %vm7525 = vcmask 1047558
  %v7526 = vsel %vm7525, %v7524, %v7521
  %7527 = vrot.lane.b32.xlu0 %v7526, 48
  %v7528 = vpop.permute.xlu0 %7527
  %vm7529 = vcmask 523648
  %s7530 = scalar_lea.vmem %s1, 424
  %7531 = vst.msk [vmem:[%s7530] sm:$0xff] %vm7529, %v7528
  %s7532 = scalar_lea.vmem %s0, 3595
  %s7533 = smov 3
  %v7534 = vld [vmem:[%s7532] ss:$16 sm:%s7533]
  %s7535 = scalar_lea.vmem %s0, 3595
  %s7536 = smov 12
  %v7537 = vld [vmem:[%s7535] ss:$16 sm:%s7536]
  %vm7538 = vcmask 1043458
  %v7539 = vsel %vm7538, %v7537, %v7534
  %s7540 = scalar_lea.vmem %s0, 3595
  %s7541 = smov 48
  %v7542 = vld [vmem:[%s7540] ss:$16 sm:%s7541]
  %vm7543 = vcmask 1045508
  %v7544 = vsel %vm7543, %v7542, %v7539
  %s7545 = scalar_lea.vmem %s0, 3595
  %s7546 = smov 192
  %v7547 = vld [vmem:[%s7545] ss:$16 sm:%s7546]
  %vm7548 = vcmask 1047558
  %v7549 = vsel %vm7548, %v7547, %v7544
  %7550 = vrot.lane.b32.xlu0 %v7549, 48
  %v7551 = vpop.permute.xlu0 %7550
  %vm7552 = vcmask 523648
  %s7553 = scalar_lea.vmem %s1, 456
  %7554 = vst.msk [vmem:[%s7553] sm:$0xff] %vm7552, %v7551
  %s7555 = scalar_lea.vmem %s0, 3851
  %s7556 = smov 3
  %v7557 = vld [vmem:[%s7555] ss:$16 sm:%s7556]
  %s7558 = scalar_lea.vmem %s0, 3851
  %s7559 = smov 12
  %v7560 = vld [vmem:[%s7558] ss:$16 sm:%s7559]
  %vm7561 = vcmask 1043458
  %v7562 = vsel %vm7561, %v7560, %v7557
  %s7563 = scalar_lea.vmem %s0, 3851
  %s7564 = smov 48
  %v7565 = vld [vmem:[%s7563] ss:$16 sm:%s7564]
  %vm7566 = vcmask 1045508
  %v7567 = vsel %vm7566, %v7565, %v7562
  %s7568 = scalar_lea.vmem %s0, 3851
  %s7569 = smov 192
  %v7570 = vld [vmem:[%s7568] ss:$16 sm:%s7569]
  %vm7571 = vcmask 1047558
  %v7572 = vsel %vm7571, %v7570, %v7567
  %7573 = vrot.lane.b32.xlu0 %v7572, 48
  %v7574 = vpop.permute.xlu0 %7573
  %vm7575 = vcmask 523648
  %s7576 = scalar_lea.vmem %s1, 488
  %7577 = vst.msk [vmem:[%s7576] sm:$0xff] %vm7575, %v7574
  %s7578 = scalar_lea.vmem %s0, 131
  %s7579 = smov 3
  %v7580 = vld [vmem:[%s7578] ss:$16 sm:%s7579]
  %s7581 = scalar_lea.vmem %s0, 131
  %s7582 = smov 12
  %v7583 = vld [vmem:[%s7581] ss:$16 sm:%s7582]
  %vm7584 = vcmask 1043458
  %v7585 = vsel %vm7584, %v7583, %v7580
  %s7586 = scalar_lea.vmem %s0, 131
  %s7587 = smov 48
  %v7588 = vld [vmem:[%s7586] ss:$16 sm:%s7587]
  %vm7589 = vcmask 1045508
  %v7590 = vsel %vm7589, %v7588, %v7585
  %s7591 = scalar_lea.vmem %s0, 131
  %s7592 = smov 192
  %v7593 = vld [vmem:[%s7591] ss:$16 sm:%s7592]
  %vm7594 = vcmask 1047558
  %v7595 = vsel %vm7594, %v7593, %v7590
  %7596 = vrot.lane.b32.xlu0 %v7595, 48
  %v7597 = vpop.permute.xlu0 %7596
  %vm7598 = vcmask 523648
  %s7599 = scalar_lea.vmem %s1, 16
  %7600 = vst.msk [vmem:[%s7599] sm:$0xff] %vm7598, %v7597
  %s7601 = scalar_lea.vmem %s0, 387
  %s7602 = smov 3
  %v7603 = vld [vmem:[%s7601] ss:$16 sm:%s7602]
  %s7604 = scalar_lea.vmem %s0, 387
  %s7605 = smov 12
  %v7606 = vld [vmem:[%s7604] ss:$16 sm:%s7605]
  %vm7607 = vcmask 1043458
  %v7608 = vsel %vm7607, %v7606, %v7603
  %s7609 = scalar_lea.vmem %s0, 387
  %s7610 = smov 48
  %v7611 = vld [vmem:[%s7609] ss:$16 sm:%s7610]
  %vm7612 = vcmask 1045508
  %v7613 = vsel %vm7612, %v7611, %v7608
  %s7614 = scalar_lea.vmem %s0, 387
  %s7615 = smov 192
  %v7616 = vld [vmem:[%s7614] ss:$16 sm:%s7615]
  %vm7617 = vcmask 1047558
  %v7618 = vsel %vm7617, %v7616, %v7613
  %7619 = vrot.lane.b32.xlu0 %v7618, 48
  %v7620 = vpop.permute.xlu0 %7619
  %vm7621 = vcmask 523648
  %s7622 = scalar_lea.vmem %s1, 48
  %7623 = vst.msk [vmem:[%s7622] sm:$0xff] %vm7621, %v7620
  %s7624 = scalar_lea.vmem %s0, 643
  %s7625 = smov 3
  %v7626 = vld [vmem:[%s7624] ss:$16 sm:%s7625]
  %s7627 = scalar_lea.vmem %s0, 643
  %s7628 = smov 12
  %v7629 = vld [vmem:[%s7627] ss:$16 sm:%s7628]
  %vm7630 = vcmask 1043458
  %v7631 = vsel %vm7630, %v7629, %v7626
  %s7632 = scalar_lea.vmem %s0, 643
  %s7633 = smov 48
  %v7634 = vld [vmem:[%s7632] ss:$16 sm:%s7633]
  %vm7635 = vcmask 1045508
  %v7636 = vsel %vm7635, %v7634, %v7631
  %s7637 = scalar_lea.vmem %s0, 643
  %s7638 = smov 192
  %v7639 = vld [vmem:[%s7637] ss:$16 sm:%s7638]
  %vm7640 = vcmask 1047558
  %v7641 = vsel %vm7640, %v7639, %v7636
  %7642 = vrot.lane.b32.xlu0 %v7641, 48
  %v7643 = vpop.permute.xlu0 %7642
  %vm7644 = vcmask 523648
  %s7645 = scalar_lea.vmem %s1, 80
  %7646 = vst.msk [vmem:[%s7645] sm:$0xff] %vm7644, %v7643
  %s7647 = scalar_lea.vmem %s0, 899
  %s7648 = smov 3
  %v7649 = vld [vmem:[%s7647] ss:$16 sm:%s7648]
  %s7650 = scalar_lea.vmem %s0, 899
  %s7651 = smov 12
  %v7652 = vld [vmem:[%s7650] ss:$16 sm:%s7651]
  %vm7653 = vcmask 1043458
  %v7654 = vsel %vm7653, %v7652, %v7649
  %s7655 = scalar_lea.vmem %s0, 899
  %s7656 = smov 48
  %v7657 = vld [vmem:[%s7655] ss:$16 sm:%s7656]
  %vm7658 = vcmask 1045508
  %v7659 = vsel %vm7658, %v7657, %v7654
  %s7660 = scalar_lea.vmem %s0, 899
  %s7661 = smov 192
  %v7662 = vld [vmem:[%s7660] ss:$16 sm:%s7661]
  %vm7663 = vcmask 1047558
  %v7664 = vsel %vm7663, %v7662, %v7659
  %7665 = vrot.lane.b32.xlu0 %v7664, 48
  %v7666 = vpop.permute.xlu0 %7665
  %vm7667 = vcmask 523648
  %s7668 = scalar_lea.vmem %s1, 112
  %7669 = vst.msk [vmem:[%s7668] sm:$0xff] %vm7667, %v7666
  %s7670 = scalar_lea.vmem %s0, 1155
  %s7671 = smov 3
  %v7672 = vld [vmem:[%s7670] ss:$16 sm:%s7671]
  %s7673 = scalar_lea.vmem %s0, 1155
  %s7674 = smov 12
  %v7675 = vld [vmem:[%s7673] ss:$16 sm:%s7674]
  %vm7676 = vcmask 1043458
  %v7677 = vsel %vm7676, %v7675, %v7672
  %s7678 = scalar_lea.vmem %s0, 1155
  %s7679 = smov 48
  %v7680 = vld [vmem:[%s7678] ss:$16 sm:%s7679]
  %vm7681 = vcmask 1045508
  %v7682 = vsel %vm7681, %v7680, %v7677
  %s7683 = scalar_lea.vmem %s0, 1155
  %s7684 = smov 192
  %v7685 = vld [vmem:[%s7683] ss:$16 sm:%s7684]
  %vm7686 = vcmask 1047558
  %v7687 = vsel %vm7686, %v7685, %v7682
  %7688 = vrot.lane.b32.xlu0 %v7687, 48
  %v7689 = vpop.permute.xlu0 %7688
  %vm7690 = vcmask 523648
  %s7691 = scalar_lea.vmem %s1, 144
  %7692 = vst.msk [vmem:[%s7691] sm:$0xff] %vm7690, %v7689
  %s7693 = scalar_lea.vmem %s0, 1411
  %s7694 = smov 3
  %v7695 = vld [vmem:[%s7693] ss:$16 sm:%s7694]
  %s7696 = scalar_lea.vmem %s0, 1411
  %s7697 = smov 12
  %v7698 = vld [vmem:[%s7696] ss:$16 sm:%s7697]
  %vm7699 = vcmask 1043458
  %v7700 = vsel %vm7699, %v7698, %v7695
  %s7701 = scalar_lea.vmem %s0, 1411
  %s7702 = smov 48
  %v7703 = vld [vmem:[%s7701] ss:$16 sm:%s7702]
  %vm7704 = vcmask 1045508
  %v7705 = vsel %vm7704, %v7703, %v7700
  %s7706 = scalar_lea.vmem %s0, 1411
  %s7707 = smov 192
  %v7708 = vld [vmem:[%s7706] ss:$16 sm:%s7707]
  %vm7709 = vcmask 1047558
  %v7710 = vsel %vm7709, %v7708, %v7705
  %7711 = vrot.lane.b32.xlu0 %v7710, 48
  %v7712 = vpop.permute.xlu0 %7711
  %vm7713 = vcmask 523648
  %s7714 = scalar_lea.vmem %s1, 176
  %7715 = vst.msk [vmem:[%s7714] sm:$0xff] %vm7713, %v7712
  %s7716 = scalar_lea.vmem %s0, 1667
  %s7717 = smov 3
  %v7718 = vld [vmem:[%s7716] ss:$16 sm:%s7717]
  %s7719 = scalar_lea.vmem %s0, 1667
  %s7720 = smov 12
  %v7721 = vld [vmem:[%s7719] ss:$16 sm:%s7720]
  %vm7722 = vcmask 1043458
  %v7723 = vsel %vm7722, %v7721, %v7718
  %s7724 = scalar_lea.vmem %s0, 1667
  %s7725 = smov 48
  %v7726 = vld [vmem:[%s7724] ss:$16 sm:%s7725]
  %vm7727 = vcmask 1045508
  %v7728 = vsel %vm7727, %v7726, %v7723
  %s7729 = scalar_lea.vmem %s0, 1667
  %s7730 = smov 192
  %v7731 = vld [vmem:[%s7729] ss:$16 sm:%s7730]
  %vm7732 = vcmask 1047558
  %v7733 = vsel %vm7732, %v7731, %v7728
  %7734 = vrot.lane.b32.xlu0 %v7733, 48
  %v7735 = vpop.permute.xlu0 %7734
  %vm7736 = vcmask 523648
  %s7737 = scalar_lea.vmem %s1, 208
  %7738 = vst.msk [vmem:[%s7737] sm:$0xff] %vm7736, %v7735
  %s7739 = scalar_lea.vmem %s0, 1923
  %s7740 = smov 3
  %v7741 = vld [vmem:[%s7739] ss:$16 sm:%s7740]
  %s7742 = scalar_lea.vmem %s0, 1923
  %s7743 = smov 12
  %v7744 = vld [vmem:[%s7742] ss:$16 sm:%s7743]
  %vm7745 = vcmask 1043458
  %v7746 = vsel %vm7745, %v7744, %v7741
  %s7747 = scalar_lea.vmem %s0, 1923
  %s7748 = smov 48
  %v7749 = vld [vmem:[%s7747] ss:$16 sm:%s7748]
  %vm7750 = vcmask 1045508
  %v7751 = vsel %vm7750, %v7749, %v7746
  %s7752 = scalar_lea.vmem %s0, 1923
  %s7753 = smov 192
  %v7754 = vld [vmem:[%s7752] ss:$16 sm:%s7753]
  %vm7755 = vcmask 1047558
  %v7756 = vsel %vm7755, %v7754, %v7751
  %7757 = vrot.lane.b32.xlu0 %v7756, 48
  %v7758 = vpop.permute.xlu0 %7757
  %vm7759 = vcmask 523648
  %s7760 = scalar_lea.vmem %s1, 240
  %7761 = vst.msk [vmem:[%s7760] sm:$0xff] %vm7759, %v7758
  %s7762 = scalar_lea.vmem %s0, 2179
  %s7763 = smov 3
  %v7764 = vld [vmem:[%s7762] ss:$16 sm:%s7763]
  %s7765 = scalar_lea.vmem %s0, 2179
  %s7766 = smov 12
  %v7767 = vld [vmem:[%s7765] ss:$16 sm:%s7766]
  %vm7768 = vcmask 1043458
  %v7769 = vsel %vm7768, %v7767, %v7764
  %s7770 = scalar_lea.vmem %s0, 2179
  %s7771 = smov 48
  %v7772 = vld [vmem:[%s7770] ss:$16 sm:%s7771]
  %vm7773 = vcmask 1045508
  %v7774 = vsel %vm7773, %v7772, %v7769
  %s7775 = scalar_lea.vmem %s0, 2179
  %s7776 = smov 192
  %v7777 = vld [vmem:[%s7775] ss:$16 sm:%s7776]
  %vm7778 = vcmask 1047558
  %v7779 = vsel %vm7778, %v7777, %v7774
  %7780 = vrot.lane.b32.xlu0 %v7779, 48
  %v7781 = vpop.permute.xlu0 %7780
  %vm7782 = vcmask 523648
  %s7783 = scalar_lea.vmem %s1, 272
  %7784 = vst.msk [vmem:[%s7783] sm:$0xff] %vm7782, %v7781
  %s7785 = scalar_lea.vmem %s0, 2435
  %s7786 = smov 3
  %v7787 = vld [vmem:[%s7785] ss:$16 sm:%s7786]
  %s7788 = scalar_lea.vmem %s0, 2435
  %s7789 = smov 12
  %v7790 = vld [vmem:[%s7788] ss:$16 sm:%s7789]
  %vm7791 = vcmask 1043458
  %v7792 = vsel %vm7791, %v7790, %v7787
  %s7793 = scalar_lea.vmem %s0, 2435
  %s7794 = smov 48
  %v7795 = vld [vmem:[%s7793] ss:$16 sm:%s7794]
  %vm7796 = vcmask 1045508
  %v7797 = vsel %vm7796, %v7795, %v7792
  %s7798 = scalar_lea.vmem %s0, 2435
  %s7799 = smov 192
  %v7800 = vld [vmem:[%s7798] ss:$16 sm:%s7799]
  %vm7801 = vcmask 1047558
  %v7802 = vsel %vm7801, %v7800, %v7797
  %7803 = vrot.lane.b32.xlu0 %v7802, 48
  %v7804 = vpop.permute.xlu0 %7803
  %vm7805 = vcmask 523648
  %s7806 = scalar_lea.vmem %s1, 304
  %7807 = vst.msk [vmem:[%s7806] sm:$0xff] %vm7805, %v7804
  %s7808 = scalar_lea.vmem %s0, 2691
  %s7809 = smov 3
  %v7810 = vld [vmem:[%s7808] ss:$16 sm:%s7809]
  %s7811 = scalar_lea.vmem %s0, 2691
  %s7812 = smov 12
  %v7813 = vld [vmem:[%s7811] ss:$16 sm:%s7812]
  %vm7814 = vcmask 1043458
  %v7815 = vsel %vm7814, %v7813, %v7810
  %s7816 = scalar_lea.vmem %s0, 2691
  %s7817 = smov 48
  %v7818 = vld [vmem:[%s7816] ss:$16 sm:%s7817]
  %vm7819 = vcmask 1045508
  %v7820 = vsel %vm7819, %v7818, %v7815
  %s7821 = scalar_lea.vmem %s0, 2691
  %s7822 = smov 192
  %v7823 = vld [vmem:[%s7821] ss:$16 sm:%s7822]
  %vm7824 = vcmask 1047558
  %v7825 = vsel %vm7824, %v7823, %v7820
  %7826 = vrot.lane.b32.xlu0 %v7825, 48
  %v7827 = vpop.permute.xlu0 %7826
  %vm7828 = vcmask 523648
  %s7829 = scalar_lea.vmem %s1, 336
  %7830 = vst.msk [vmem:[%s7829] sm:$0xff] %vm7828, %v7827
  %s7831 = scalar_lea.vmem %s0, 2947
  %s7832 = smov 3
  %v7833 = vld [vmem:[%s7831] ss:$16 sm:%s7832]
  %s7834 = scalar_lea.vmem %s0, 2947
  %s7835 = smov 12
  %v7836 = vld [vmem:[%s7834] ss:$16 sm:%s7835]
  %vm7837 = vcmask 1043458
  %v7838 = vsel %vm7837, %v7836, %v7833
  %s7839 = scalar_lea.vmem %s0, 2947
  %s7840 = smov 48
  %v7841 = vld [vmem:[%s7839] ss:$16 sm:%s7840]
  %vm7842 = vcmask 1045508
  %v7843 = vsel %vm7842, %v7841, %v7838
  %s7844 = scalar_lea.vmem %s0, 2947
  %s7845 = smov 192
  %v7846 = vld [vmem:[%s7844] ss:$16 sm:%s7845]
  %vm7847 = vcmask 1047558
  %v7848 = vsel %vm7847, %v7846, %v7843
  %7849 = vrot.lane.b32.xlu0 %v7848, 48
  %v7850 = vpop.permute.xlu0 %7849
  %vm7851 = vcmask 523648
  %s7852 = scalar_lea.vmem %s1, 368
  %7853 = vst.msk [vmem:[%s7852] sm:$0xff] %vm7851, %v7850
  %s7854 = scalar_lea.vmem %s0, 3203
  %s7855 = smov 3
  %v7856 = vld [vmem:[%s7854] ss:$16 sm:%s7855]
  %s7857 = scalar_lea.vmem %s0, 3203
  %s7858 = smov 12
  %v7859 = vld [vmem:[%s7857] ss:$16 sm:%s7858]
  %vm7860 = vcmask 1043458
  %v7861 = vsel %vm7860, %v7859, %v7856
  %s7862 = scalar_lea.vmem %s0, 3203
  %s7863 = smov 48
  %v7864 = vld [vmem:[%s7862] ss:$16 sm:%s7863]
  %vm7865 = vcmask 1045508
  %v7866 = vsel %vm7865, %v7864, %v7861
  %s7867 = scalar_lea.vmem %s0, 3203
  %s7868 = smov 192
  %v7869 = vld [vmem:[%s7867] ss:$16 sm:%s7868]
  %vm7870 = vcmask 1047558
  %v7871 = vsel %vm7870, %v7869, %v7866
  %7872 = vrot.lane.b32.xlu0 %v7871, 48
  %v7873 = vpop.permute.xlu0 %7872
  %vm7874 = vcmask 523648
  %s7875 = scalar_lea.vmem %s1, 400
  %7876 = vst.msk [vmem:[%s7875] sm:$0xff] %vm7874, %v7873
  %s7877 = scalar_lea.vmem %s0, 3459
  %s7878 = smov 3
  %v7879 = vld [vmem:[%s7877] ss:$16 sm:%s7878]
  %s7880 = scalar_lea.vmem %s0, 3459
  %s7881 = smov 12
  %v7882 = vld [vmem:[%s7880] ss:$16 sm:%s7881]
  %vm7883 = vcmask 1043458
  %v7884 = vsel %vm7883, %v7882, %v7879
  %s7885 = scalar_lea.vmem %s0, 3459
  %s7886 = smov 48
  %v7887 = vld [vmem:[%s7885] ss:$16 sm:%s7886]
  %vm7888 = vcmask 1045508
  %v7889 = vsel %vm7888, %v7887, %v7884
  %s7890 = scalar_lea.vmem %s0, 3459
  %s7891 = smov 192
  %v7892 = vld [vmem:[%s7890] ss:$16 sm:%s7891]
  %vm7893 = vcmask 1047558
  %v7894 = vsel %vm7893, %v7892, %v7889
  %7895 = vrot.lane.b32.xlu0 %v7894, 48
  %v7896 = vpop.permute.xlu0 %7895
  %vm7897 = vcmask 523648
  %s7898 = scalar_lea.vmem %s1, 432
  %7899 = vst.msk [vmem:[%s7898] sm:$0xff] %vm7897, %v7896
  %s7900 = scalar_lea.vmem %s0, 3715
  %s7901 = smov 3
  %v7902 = vld [vmem:[%s7900] ss:$16 sm:%s7901]
  %s7903 = scalar_lea.vmem %s0, 3715
  %s7904 = smov 12
  %v7905 = vld [vmem:[%s7903] ss:$16 sm:%s7904]
  %vm7906 = vcmask 1043458
  %v7907 = vsel %vm7906, %v7905, %v7902
  %s7908 = scalar_lea.vmem %s0, 3715
  %s7909 = smov 48
  %v7910 = vld [vmem:[%s7908] ss:$16 sm:%s7909]
  %vm7911 = vcmask 1045508
  %v7912 = vsel %vm7911, %v7910, %v7907
  %s7913 = scalar_lea.vmem %s0, 3715
  %s7914 = smov 192
  %v7915 = vld [vmem:[%s7913] ss:$16 sm:%s7914]
  %vm7916 = vcmask 1047558
  %v7917 = vsel %vm7916, %v7915, %v7912
  %7918 = vrot.lane.b32.xlu0 %v7917, 48
  %v7919 = vpop.permute.xlu0 %7918
  %vm7920 = vcmask 523648
  %s7921 = scalar_lea.vmem %s1, 464
  %7922 = vst.msk [vmem:[%s7921] sm:$0xff] %vm7920, %v7919
  %s7923 = scalar_lea.vmem %s0, 3971
  %s7924 = smov 3
  %v7925 = vld [vmem:[%s7923] ss:$16 sm:%s7924]
  %s7926 = scalar_lea.vmem %s0, 3971
  %s7927 = smov 12
  %v7928 = vld [vmem:[%s7926] ss:$16 sm:%s7927]
  %vm7929 = vcmask 1043458
  %v7930 = vsel %vm7929, %v7928, %v7925
  %s7931 = scalar_lea.vmem %s0, 3971
  %s7932 = smov 48
  %v7933 = vld [vmem:[%s7931] ss:$16 sm:%s7932]
  %vm7934 = vcmask 1045508
  %v7935 = vsel %vm7934, %v7933, %v7930
  %s7936 = scalar_lea.vmem %s0, 3971
  %s7937 = smov 192
  %v7938 = vld [vmem:[%s7936] ss:$16 sm:%s7937]
  %vm7939 = vcmask 1047558
  %v7940 = vsel %vm7939, %v7938, %v7935
  %7941 = vrot.lane.b32.xlu0 %v7940, 48
  %v7942 = vpop.permute.xlu0 %7941
  %vm7943 = vcmask 523648
  %s7944 = scalar_lea.vmem %s1, 496
  %7945 = vst.msk [vmem:[%s7944] sm:$0xff] %vm7943, %v7942
  %s7946 = scalar_lea.vmem %s0, 139
  %s7947 = smov 3
  %v7948 = vld [vmem:[%s7946] ss:$16 sm:%s7947]
  %s7949 = scalar_lea.vmem %s0, 139
  %s7950 = smov 12
  %v7951 = vld [vmem:[%s7949] ss:$16 sm:%s7950]
  %vm7952 = vcmask 1043458
  %v7953 = vsel %vm7952, %v7951, %v7948
  %s7954 = scalar_lea.vmem %s0, 139
  %s7955 = smov 48
  %v7956 = vld [vmem:[%s7954] ss:$16 sm:%s7955]
  %vm7957 = vcmask 1045508
  %v7958 = vsel %vm7957, %v7956, %v7953
  %s7959 = scalar_lea.vmem %s0, 139
  %s7960 = smov 192
  %v7961 = vld [vmem:[%s7959] ss:$16 sm:%s7960]
  %vm7962 = vcmask 1047558
  %v7963 = vsel %vm7962, %v7961, %v7958
  %7964 = vrot.lane.b32.xlu0 %v7963, 48
  %v7965 = vpop.permute.xlu0 %7964
  %vm7966 = vcmask 523648
  %s7967 = scalar_lea.vmem %s1, 24
  %7968 = vst.msk [vmem:[%s7967] sm:$0xff] %vm7966, %v7965
  %s7969 = scalar_lea.vmem %s0, 395
  %s7970 = smov 3
  %v7971 = vld [vmem:[%s7969] ss:$16 sm:%s7970]
  %s7972 = scalar_lea.vmem %s0, 395
  %s7973 = smov 12
  %v7974 = vld [vmem:[%s7972] ss:$16 sm:%s7973]
  %vm7975 = vcmask 1043458
  %v7976 = vsel %vm7975, %v7974, %v7971
  %s7977 = scalar_lea.vmem %s0, 395
  %s7978 = smov 48
  %v7979 = vld [vmem:[%s7977] ss:$16 sm:%s7978]
  %vm7980 = vcmask 1045508
  %v7981 = vsel %vm7980, %v7979, %v7976
  %s7982 = scalar_lea.vmem %s0, 395
  %s7983 = smov 192
  %v7984 = vld [vmem:[%s7982] ss:$16 sm:%s7983]
  %vm7985 = vcmask 1047558
  %v7986 = vsel %vm7985, %v7984, %v7981
  %7987 = vrot.lane.b32.xlu0 %v7986, 48
  %v7988 = vpop.permute.xlu0 %7987
  %vm7989 = vcmask 523648
  %s7990 = scalar_lea.vmem %s1, 56
  %7991 = vst.msk [vmem:[%s7990] sm:$0xff] %vm7989, %v7988
  %s7992 = scalar_lea.vmem %s0, 651
  %s7993 = smov 3
  %v7994 = vld [vmem:[%s7992] ss:$16 sm:%s7993]
  %s7995 = scalar_lea.vmem %s0, 651
  %s7996 = smov 12
  %v7997 = vld [vmem:[%s7995] ss:$16 sm:%s7996]
  %vm7998 = vcmask 1043458
  %v7999 = vsel %vm7998, %v7997, %v7994
  %s8000 = scalar_lea.vmem %s0, 651
  %s8001 = smov 48
  %v8002 = vld [vmem:[%s8000] ss:$16 sm:%s8001]
  %vm8003 = vcmask 1045508
  %v8004 = vsel %vm8003, %v8002, %v7999
  %s8005 = scalar_lea.vmem %s0, 651
  %s8006 = smov 192
  %v8007 = vld [vmem:[%s8005] ss:$16 sm:%s8006]
  %vm8008 = vcmask 1047558
  %v8009 = vsel %vm8008, %v8007, %v8004
  %8010 = vrot.lane.b32.xlu0 %v8009, 48
  %v8011 = vpop.permute.xlu0 %8010
  %vm8012 = vcmask 523648
  %s8013 = scalar_lea.vmem %s1, 88
  %8014 = vst.msk [vmem:[%s8013] sm:$0xff] %vm8012, %v8011
  %s8015 = scalar_lea.vmem %s0, 907
  %s8016 = smov 3
  %v8017 = vld [vmem:[%s8015] ss:$16 sm:%s8016]
  %s8018 = scalar_lea.vmem %s0, 907
  %s8019 = smov 12
  %v8020 = vld [vmem:[%s8018] ss:$16 sm:%s8019]
  %vm8021 = vcmask 1043458
  %v8022 = vsel %vm8021, %v8020, %v8017
  %s8023 = scalar_lea.vmem %s0, 907
  %s8024 = smov 48
  %v8025 = vld [vmem:[%s8023] ss:$16 sm:%s8024]
  %vm8026 = vcmask 1045508
  %v8027 = vsel %vm8026, %v8025, %v8022
  %s8028 = scalar_lea.vmem %s0, 907
  %s8029 = smov 192
  %v8030 = vld [vmem:[%s8028] ss:$16 sm:%s8029]
  %vm8031 = vcmask 1047558
  %v8032 = vsel %vm8031, %v8030, %v8027
  %8033 = vrot.lane.b32.xlu0 %v8032, 48
  %v8034 = vpop.permute.xlu0 %8033
  %vm8035 = vcmask 523648
  %s8036 = scalar_lea.vmem %s1, 120
  %8037 = vst.msk [vmem:[%s8036] sm:$0xff] %vm8035, %v8034
  %s8038 = scalar_lea.vmem %s0, 1163
  %s8039 = smov 3
  %v8040 = vld [vmem:[%s8038] ss:$16 sm:%s8039]
  %s8041 = scalar_lea.vmem %s0, 1163
  %s8042 = smov 12
  %v8043 = vld [vmem:[%s8041] ss:$16 sm:%s8042]
  %vm8044 = vcmask 1043458
  %v8045 = vsel %vm8044, %v8043, %v8040
  %s8046 = scalar_lea.vmem %s0, 1163
  %s8047 = smov 48
  %v8048 = vld [vmem:[%s8046] ss:$16 sm:%s8047]
  %vm8049 = vcmask 1045508
  %v8050 = vsel %vm8049, %v8048, %v8045
  %s8051 = scalar_lea.vmem %s0, 1163
  %s8052 = smov 192
  %v8053 = vld [vmem:[%s8051] ss:$16 sm:%s8052]
  %vm8054 = vcmask 1047558
  %v8055 = vsel %vm8054, %v8053, %v8050
  %8056 = vrot.lane.b32.xlu0 %v8055, 48
  %v8057 = vpop.permute.xlu0 %8056
  %vm8058 = vcmask 523648
  %s8059 = scalar_lea.vmem %s1, 152
  %8060 = vst.msk [vmem:[%s8059] sm:$0xff] %vm8058, %v8057
  %s8061 = scalar_lea.vmem %s0, 1419
  %s8062 = smov 3
  %v8063 = vld [vmem:[%s8061] ss:$16 sm:%s8062]
  %s8064 = scalar_lea.vmem %s0, 1419
  %s8065 = smov 12
  %v8066 = vld [vmem:[%s8064] ss:$16 sm:%s8065]
  %vm8067 = vcmask 1043458
  %v8068 = vsel %vm8067, %v8066, %v8063
  %s8069 = scalar_lea.vmem %s0, 1419
  %s8070 = smov 48
  %v8071 = vld [vmem:[%s8069] ss:$16 sm:%s8070]
  %vm8072 = vcmask 1045508
  %v8073 = vsel %vm8072, %v8071, %v8068
  %s8074 = scalar_lea.vmem %s0, 1419
  %s8075 = smov 192
  %v8076 = vld [vmem:[%s8074] ss:$16 sm:%s8075]
  %vm8077 = vcmask 1047558
  %v8078 = vsel %vm8077, %v8076, %v8073
  %8079 = vrot.lane.b32.xlu0 %v8078, 48
  %v8080 = vpop.permute.xlu0 %8079
  %vm8081 = vcmask 523648
  %s8082 = scalar_lea.vmem %s1, 184
  %8083 = vst.msk [vmem:[%s8082] sm:$0xff] %vm8081, %v8080
  %s8084 = scalar_lea.vmem %s0, 1675
  %s8085 = smov 3
  %v8086 = vld [vmem:[%s8084] ss:$16 sm:%s8085]
  %s8087 = scalar_lea.vmem %s0, 1675
  %s8088 = smov 12
  %v8089 = vld [vmem:[%s8087] ss:$16 sm:%s8088]
  %vm8090 = vcmask 1043458
  %v8091 = vsel %vm8090, %v8089, %v8086
  %s8092 = scalar_lea.vmem %s0, 1675
  %s8093 = smov 48
  %v8094 = vld [vmem:[%s8092] ss:$16 sm:%s8093]
  %vm8095 = vcmask 1045508
  %v8096 = vsel %vm8095, %v8094, %v8091
  %s8097 = scalar_lea.vmem %s0, 1675
  %s8098 = smov 192
  %v8099 = vld [vmem:[%s8097] ss:$16 sm:%s8098]
  %vm8100 = vcmask 1047558
  %v8101 = vsel %vm8100, %v8099, %v8096
  %8102 = vrot.lane.b32.xlu0 %v8101, 48
  %v8103 = vpop.permute.xlu0 %8102
  %vm8104 = vcmask 523648
  %s8105 = scalar_lea.vmem %s1, 216
  %8106 = vst.msk [vmem:[%s8105] sm:$0xff] %vm8104, %v8103
  %s8107 = scalar_lea.vmem %s0, 1931
  %s8108 = smov 3
  %v8109 = vld [vmem:[%s8107] ss:$16 sm:%s8108]
  %s8110 = scalar_lea.vmem %s0, 1931
  %s8111 = smov 12
  %v8112 = vld [vmem:[%s8110] ss:$16 sm:%s8111]
  %vm8113 = vcmask 1043458
  %v8114 = vsel %vm8113, %v8112, %v8109
  %s8115 = scalar_lea.vmem %s0, 1931
  %s8116 = smov 48
  %v8117 = vld [vmem:[%s8115] ss:$16 sm:%s8116]
  %vm8118 = vcmask 1045508
  %v8119 = vsel %vm8118, %v8117, %v8114
  %s8120 = scalar_lea.vmem %s0, 1931
  %s8121 = smov 192
  %v8122 = vld [vmem:[%s8120] ss:$16 sm:%s8121]
  %vm8123 = vcmask 1047558
  %v8124 = vsel %vm8123, %v8122, %v8119
  %8125 = vrot.lane.b32.xlu0 %v8124, 48
  %v8126 = vpop.permute.xlu0 %8125
  %vm8127 = vcmask 523648
  %s8128 = scalar_lea.vmem %s1, 248
  %8129 = vst.msk [vmem:[%s8128] sm:$0xff] %vm8127, %v8126
  %s8130 = scalar_lea.vmem %s0, 2187
  %s8131 = smov 3
  %v8132 = vld [vmem:[%s8130] ss:$16 sm:%s8131]
  %s8133 = scalar_lea.vmem %s0, 2187
  %s8134 = smov 12
  %v8135 = vld [vmem:[%s8133] ss:$16 sm:%s8134]
  %vm8136 = vcmask 1043458
  %v8137 = vsel %vm8136, %v8135, %v8132
  %s8138 = scalar_lea.vmem %s0, 2187
  %s8139 = smov 48
  %v8140 = vld [vmem:[%s8138] ss:$16 sm:%s8139]
  %vm8141 = vcmask 1045508
  %v8142 = vsel %vm8141, %v8140, %v8137
  %s8143 = scalar_lea.vmem %s0, 2187
  %s8144 = smov 192
  %v8145 = vld [vmem:[%s8143] ss:$16 sm:%s8144]
  %vm8146 = vcmask 1047558
  %v8147 = vsel %vm8146, %v8145, %v8142
  %8148 = vrot.lane.b32.xlu0 %v8147, 48
  %v8149 = vpop.permute.xlu0 %8148
  %vm8150 = vcmask 523648
  %s8151 = scalar_lea.vmem %s1, 280
  %8152 = vst.msk [vmem:[%s8151] sm:$0xff] %vm8150, %v8149
  %s8153 = scalar_lea.vmem %s0, 2443
  %s8154 = smov 3
  %v8155 = vld [vmem:[%s8153] ss:$16 sm:%s8154]
  %s8156 = scalar_lea.vmem %s0, 2443
  %s8157 = smov 12
  %v8158 = vld [vmem:[%s8156] ss:$16 sm:%s8157]
  %vm8159 = vcmask 1043458
  %v8160 = vsel %vm8159, %v8158, %v8155
  %s8161 = scalar_lea.vmem %s0, 2443
  %s8162 = smov 48
  %v8163 = vld [vmem:[%s8161] ss:$16 sm:%s8162]
  %vm8164 = vcmask 1045508
  %v8165 = vsel %vm8164, %v8163, %v8160
  %s8166 = scalar_lea.vmem %s0, 2443
  %s8167 = smov 192
  %v8168 = vld [vmem:[%s8166] ss:$16 sm:%s8167]
  %vm8169 = vcmask 1047558
  %v8170 = vsel %vm8169, %v8168, %v8165
  %8171 = vrot.lane.b32.xlu0 %v8170, 48
  %v8172 = vpop.permute.xlu0 %8171
  %vm8173 = vcmask 523648
  %s8174 = scalar_lea.vmem %s1, 312
  %8175 = vst.msk [vmem:[%s8174] sm:$0xff] %vm8173, %v8172
  %s8176 = scalar_lea.vmem %s0, 2699
  %s8177 = smov 3
  %v8178 = vld [vmem:[%s8176] ss:$16 sm:%s8177]
  %s8179 = scalar_lea.vmem %s0, 2699
  %s8180 = smov 12
  %v8181 = vld [vmem:[%s8179] ss:$16 sm:%s8180]
  %vm8182 = vcmask 1043458
  %v8183 = vsel %vm8182, %v8181, %v8178
  %s8184 = scalar_lea.vmem %s0, 2699
  %s8185 = smov 48
  %v8186 = vld [vmem:[%s8184] ss:$16 sm:%s8185]
  %vm8187 = vcmask 1045508
  %v8188 = vsel %vm8187, %v8186, %v8183
  %s8189 = scalar_lea.vmem %s0, 2699
  %s8190 = smov 192
  %v8191 = vld [vmem:[%s8189] ss:$16 sm:%s8190]
  %vm8192 = vcmask 1047558
  %v8193 = vsel %vm8192, %v8191, %v8188
  %8194 = vrot.lane.b32.xlu0 %v8193, 48
  %v8195 = vpop.permute.xlu0 %8194
  %vm8196 = vcmask 523648
  %s8197 = scalar_lea.vmem %s1, 344
  %8198 = vst.msk [vmem:[%s8197] sm:$0xff] %vm8196, %v8195
  %s8199 = scalar_lea.vmem %s0, 2955
  %s8200 = smov 3
  %v8201 = vld [vmem:[%s8199] ss:$16 sm:%s8200]
  %s8202 = scalar_lea.vmem %s0, 2955
  %s8203 = smov 12
  %v8204 = vld [vmem:[%s8202] ss:$16 sm:%s8203]
  %vm8205 = vcmask 1043458
  %v8206 = vsel %vm8205, %v8204, %v8201
  %s8207 = scalar_lea.vmem %s0, 2955
  %s8208 = smov 48
  %v8209 = vld [vmem:[%s8207] ss:$16 sm:%s8208]
  %vm8210 = vcmask 1045508
  %v8211 = vsel %vm8210, %v8209, %v8206
  %s8212 = scalar_lea.vmem %s0, 2955
  %s8213 = smov 192
  %v8214 = vld [vmem:[%s8212] ss:$16 sm:%s8213]
  %vm8215 = vcmask 1047558
  %v8216 = vsel %vm8215, %v8214, %v8211
  %8217 = vrot.lane.b32.xlu0 %v8216, 48
  %v8218 = vpop.permute.xlu0 %8217
  %vm8219 = vcmask 523648
  %s8220 = scalar_lea.vmem %s1, 376
  %8221 = vst.msk [vmem:[%s8220] sm:$0xff] %vm8219, %v8218
  %s8222 = scalar_lea.vmem %s0, 3211
  %s8223 = smov 3
  %v8224 = vld [vmem:[%s8222] ss:$16 sm:%s8223]
  %s8225 = scalar_lea.vmem %s0, 3211
  %s8226 = smov 12
  %v8227 = vld [vmem:[%s8225] ss:$16 sm:%s8226]
  %vm8228 = vcmask 1043458
  %v8229 = vsel %vm8228, %v8227, %v8224
  %s8230 = scalar_lea.vmem %s0, 3211
  %s8231 = smov 48
  %v8232 = vld [vmem:[%s8230] ss:$16 sm:%s8231]
  %vm8233 = vcmask 1045508
  %v8234 = vsel %vm8233, %v8232, %v8229
  %s8235 = scalar_lea.vmem %s0, 3211
  %s8236 = smov 192
  %v8237 = vld [vmem:[%s8235] ss:$16 sm:%s8236]
  %vm8238 = vcmask 1047558
  %v8239 = vsel %vm8238, %v8237, %v8234
  %8240 = vrot.lane.b32.xlu0 %v8239, 48
  %v8241 = vpop.permute.xlu0 %8240
  %vm8242 = vcmask 523648
  %s8243 = scalar_lea.vmem %s1, 408
  %8244 = vst.msk [vmem:[%s8243] sm:$0xff] %vm8242, %v8241
  %s8245 = scalar_lea.vmem %s0, 3467
  %s8246 = smov 3
  %v8247 = vld [vmem:[%s8245] ss:$16 sm:%s8246]
  %s8248 = scalar_lea.vmem %s0, 3467
  %s8249 = smov 12
  %v8250 = vld [vmem:[%s8248] ss:$16 sm:%s8249]
  %vm8251 = vcmask 1043458
  %v8252 = vsel %vm8251, %v8250, %v8247
  %s8253 = scalar_lea.vmem %s0, 3467
  %s8254 = smov 48
  %v8255 = vld [vmem:[%s8253] ss:$16 sm:%s8254]
  %vm8256 = vcmask 1045508
  %v8257 = vsel %vm8256, %v8255, %v8252
  %s8258 = scalar_lea.vmem %s0, 3467
  %s8259 = smov 192
  %v8260 = vld [vmem:[%s8258] ss:$16 sm:%s8259]
  %vm8261 = vcmask 1047558
  %v8262 = vsel %vm8261, %v8260, %v8257
  %8263 = vrot.lane.b32.xlu0 %v8262, 48
  %v8264 = vpop.permute.xlu0 %8263
  %vm8265 = vcmask 523648
  %s8266 = scalar_lea.vmem %s1, 440
  %8267 = vst.msk [vmem:[%s8266] sm:$0xff] %vm8265, %v8264
  %s8268 = scalar_lea.vmem %s0, 3723
  %s8269 = smov 3
  %v8270 = vld [vmem:[%s8268] ss:$16 sm:%s8269]
  %s8271 = scalar_lea.vmem %s0, 3723
  %s8272 = smov 12
  %v8273 = vld [vmem:[%s8271] ss:$16 sm:%s8272]
  %vm8274 = vcmask 1043458
  %v8275 = vsel %vm8274, %v8273, %v8270
  %s8276 = scalar_lea.vmem %s0, 3723
  %s8277 = smov 48
  %v8278 = vld [vmem:[%s8276] ss:$16 sm:%s8277]
  %vm8279 = vcmask 1045508
  %v8280 = vsel %vm8279, %v8278, %v8275
  %s8281 = scalar_lea.vmem %s0, 3723
  %s8282 = smov 192
  %v8283 = vld [vmem:[%s8281] ss:$16 sm:%s8282]
  %vm8284 = vcmask 1047558
  %v8285 = vsel %vm8284, %v8283, %v8280
  %8286 = vrot.lane.b32.xlu0 %v8285, 48
  %v8287 = vpop.permute.xlu0 %8286
  %vm8288 = vcmask 523648
  %s8289 = scalar_lea.vmem %s1, 472
  %8290 = vst.msk [vmem:[%s8289] sm:$0xff] %vm8288, %v8287
  %s8291 = scalar_lea.vmem %s0, 3979
  %s8292 = smov 3
  %v8293 = vld [vmem:[%s8291] ss:$16 sm:%s8292]
  %s8294 = scalar_lea.vmem %s0, 3979
  %s8295 = smov 12
  %v8296 = vld [vmem:[%s8294] ss:$16 sm:%s8295]
  %vm8297 = vcmask 1043458
  %v8298 = vsel %vm8297, %v8296, %v8293
  %s8299 = scalar_lea.vmem %s0, 3979
  %s8300 = smov 48
  %v8301 = vld [vmem:[%s8299] ss:$16 sm:%s8300]
  %vm8302 = vcmask 1045508
  %v8303 = vsel %vm8302, %v8301, %v8298
  %s8304 = scalar_lea.vmem %s0, 3979
  %s8305 = smov 192
  %v8306 = vld [vmem:[%s8304] ss:$16 sm:%s8305]
  %vm8307 = vcmask 1047558
  %v8308 = vsel %vm8307, %v8306, %v8303
  %8309 = vrot.lane.b32.xlu0 %v8308, 48
  %v8310 = vpop.permute.xlu0 %8309
  %vm8311 = vcmask 523648
  %s8312 = scalar_lea.vmem %s1, 504
  %8313 = vst.msk [vmem:[%s8312] sm:$0xff] %vm8311, %v8310
  %s8314 = scalar_lea.vmem %s0, 2
  %s8315 = smov 3
  %v8316 = vld [vmem:[%s8314] ss:$16 sm:%s8315]
  %s8317 = scalar_lea.vmem %s0, 2
  %s8318 = smov 12
  %v8319 = vld [vmem:[%s8317] ss:$16 sm:%s8318]
  %vm8320 = vcmask 1043458
  %v8321 = vsel %vm8320, %v8319, %v8316
  %s8322 = scalar_lea.vmem %s0, 2
  %s8323 = smov 48
  %v8324 = vld [vmem:[%s8322] ss:$16 sm:%s8323]
  %vm8325 = vcmask 1045508
  %v8326 = vsel %vm8325, %v8324, %v8321
  %s8327 = scalar_lea.vmem %s0, 2
  %s8328 = smov 192
  %v8329 = vld [vmem:[%s8327] ss:$16 sm:%s8328]
  %vm8330 = vcmask 1047558
  %v8331 = vsel %vm8330, %v8329, %v8326
  %8332 = vrot.lane.b32.xlu0 %v8331, 32
  %v8333 = vpop.permute.xlu0 %8332
  %vm8334 = vcmask 392448
  %8335 = vst.msk [vmem:[%s1] sm:$0xff] %vm8334, %v8333
  %s8336 = scalar_lea.vmem %s0, 258
  %s8337 = smov 3
  %v8338 = vld [vmem:[%s8336] ss:$16 sm:%s8337]
  %s8339 = scalar_lea.vmem %s0, 258
  %s8340 = smov 12
  %v8341 = vld [vmem:[%s8339] ss:$16 sm:%s8340]
  %vm8342 = vcmask 1043458
  %v8343 = vsel %vm8342, %v8341, %v8338
  %s8344 = scalar_lea.vmem %s0, 258
  %s8345 = smov 48
  %v8346 = vld [vmem:[%s8344] ss:$16 sm:%s8345]
  %vm8347 = vcmask 1045508
  %v8348 = vsel %vm8347, %v8346, %v8343
  %s8349 = scalar_lea.vmem %s0, 258
  %s8350 = smov 192
  %v8351 = vld [vmem:[%s8349] ss:$16 sm:%s8350]
  %vm8352 = vcmask 1047558
  %v8353 = vsel %vm8352, %v8351, %v8348
  %8354 = vrot.lane.b32.xlu0 %v8353, 32
  %v8355 = vpop.permute.xlu0 %8354
  %vm8356 = vcmask 392448
  %s8357 = scalar_lea.vmem %s1, 32
  %8358 = vst.msk [vmem:[%s8357] sm:$0xff] %vm8356, %v8355
  %s8359 = scalar_lea.vmem %s0, 514
  %s8360 = smov 3
  %v8361 = vld [vmem:[%s8359] ss:$16 sm:%s8360]
  %s8362 = scalar_lea.vmem %s0, 514
  %s8363 = smov 12
  %v8364 = vld [vmem:[%s8362] ss:$16 sm:%s8363]
  %vm8365 = vcmask 1043458
  %v8366 = vsel %vm8365, %v8364, %v8361
  %s8367 = scalar_lea.vmem %s0, 514
  %s8368 = smov 48
  %v8369 = vld [vmem:[%s8367] ss:$16 sm:%s8368]
  %vm8370 = vcmask 1045508
  %v8371 = vsel %vm8370, %v8369, %v8366
  %s8372 = scalar_lea.vmem %s0, 514
  %s8373 = smov 192
  %v8374 = vld [vmem:[%s8372] ss:$16 sm:%s8373]
  %vm8375 = vcmask 1047558
  %v8376 = vsel %vm8375, %v8374, %v8371
  %8377 = vrot.lane.b32.xlu0 %v8376, 32
  %v8378 = vpop.permute.xlu0 %8377
  %vm8379 = vcmask 392448
  %s8380 = scalar_lea.vmem %s1, 64
  %8381 = vst.msk [vmem:[%s8380] sm:$0xff] %vm8379, %v8378
  %s8382 = scalar_lea.vmem %s0, 770
  %s8383 = smov 3
  %v8384 = vld [vmem:[%s8382] ss:$16 sm:%s8383]
  %s8385 = scalar_lea.vmem %s0, 770
  %s8386 = smov 12
  %v8387 = vld [vmem:[%s8385] ss:$16 sm:%s8386]
  %vm8388 = vcmask 1043458
  %v8389 = vsel %vm8388, %v8387, %v8384
  %s8390 = scalar_lea.vmem %s0, 770
  %s8391 = smov 48
  %v8392 = vld [vmem:[%s8390] ss:$16 sm:%s8391]
  %vm8393 = vcmask 1045508
  %v8394 = vsel %vm8393, %v8392, %v8389
  %s8395 = scalar_lea.vmem %s0, 770
  %s8396 = smov 192
  %v8397 = vld [vmem:[%s8395] ss:$16 sm:%s8396]
  %vm8398 = vcmask 1047558
  %v8399 = vsel %vm8398, %v8397, %v8394
  %8400 = vrot.lane.b32.xlu0 %v8399, 32
  %v8401 = vpop.permute.xlu0 %8400
  %vm8402 = vcmask 392448
  %s8403 = scalar_lea.vmem %s1, 96
  %8404 = vst.msk [vmem:[%s8403] sm:$0xff] %vm8402, %v8401
  %s8405 = scalar_lea.vmem %s0, 1026
  %s8406 = smov 3
  %v8407 = vld [vmem:[%s8405] ss:$16 sm:%s8406]
  %s8408 = scalar_lea.vmem %s0, 1026
  %s8409 = smov 12
  %v8410 = vld [vmem:[%s8408] ss:$16 sm:%s8409]
  %vm8411 = vcmask 1043458
  %v8412 = vsel %vm8411, %v8410, %v8407
  %s8413 = scalar_lea.vmem %s0, 1026
  %s8414 = smov 48
  %v8415 = vld [vmem:[%s8413] ss:$16 sm:%s8414]
  %vm8416 = vcmask 1045508
  %v8417 = vsel %vm8416, %v8415, %v8412
  %s8418 = scalar_lea.vmem %s0, 1026
  %s8419 = smov 192
  %v8420 = vld [vmem:[%s8418] ss:$16 sm:%s8419]
  %vm8421 = vcmask 1047558
  %v8422 = vsel %vm8421, %v8420, %v8417
  %8423 = vrot.lane.b32.xlu0 %v8422, 32
  %v8424 = vpop.permute.xlu0 %8423
  %vm8425 = vcmask 392448
  %s8426 = scalar_lea.vmem %s1, 128
  %8427 = vst.msk [vmem:[%s8426] sm:$0xff] %vm8425, %v8424
  %s8428 = scalar_lea.vmem %s0, 1282
  %s8429 = smov 3
  %v8430 = vld [vmem:[%s8428] ss:$16 sm:%s8429]
  %s8431 = scalar_lea.vmem %s0, 1282
  %s8432 = smov 12
  %v8433 = vld [vmem:[%s8431] ss:$16 sm:%s8432]
  %vm8434 = vcmask 1043458
  %v8435 = vsel %vm8434, %v8433, %v8430
  %s8436 = scalar_lea.vmem %s0, 1282
  %s8437 = smov 48
  %v8438 = vld [vmem:[%s8436] ss:$16 sm:%s8437]
  %vm8439 = vcmask 1045508
  %v8440 = vsel %vm8439, %v8438, %v8435
  %s8441 = scalar_lea.vmem %s0, 1282
  %s8442 = smov 192
  %v8443 = vld [vmem:[%s8441] ss:$16 sm:%s8442]
  %vm8444 = vcmask 1047558
  %v8445 = vsel %vm8444, %v8443, %v8440
  %8446 = vrot.lane.b32.xlu0 %v8445, 32
  %v8447 = vpop.permute.xlu0 %8446
  %vm8448 = vcmask 392448
  %s8449 = scalar_lea.vmem %s1, 160
  %8450 = vst.msk [vmem:[%s8449] sm:$0xff] %vm8448, %v8447
  %s8451 = scalar_lea.vmem %s0, 1538
  %s8452 = smov 3
  %v8453 = vld [vmem:[%s8451] ss:$16 sm:%s8452]
  %s8454 = scalar_lea.vmem %s0, 1538
  %s8455 = smov 12
  %v8456 = vld [vmem:[%s8454] ss:$16 sm:%s8455]
  %vm8457 = vcmask 1043458
  %v8458 = vsel %vm8457, %v8456, %v8453
  %s8459 = scalar_lea.vmem %s0, 1538
  %s8460 = smov 48
  %v8461 = vld [vmem:[%s8459] ss:$16 sm:%s8460]
  %vm8462 = vcmask 1045508
  %v8463 = vsel %vm8462, %v8461, %v8458
  %s8464 = scalar_lea.vmem %s0, 1538
  %s8465 = smov 192
  %v8466 = vld [vmem:[%s8464] ss:$16 sm:%s8465]
  %vm8467 = vcmask 1047558
  %v8468 = vsel %vm8467, %v8466, %v8463
  %8469 = vrot.lane.b32.xlu0 %v8468, 32
  %v8470 = vpop.permute.xlu0 %8469
  %vm8471 = vcmask 392448
  %s8472 = scalar_lea.vmem %s1, 192
  %8473 = vst.msk [vmem:[%s8472] sm:$0xff] %vm8471, %v8470
  %s8474 = scalar_lea.vmem %s0, 1794
  %s8475 = smov 3
  %v8476 = vld [vmem:[%s8474] ss:$16 sm:%s8475]
  %s8477 = scalar_lea.vmem %s0, 1794
  %s8478 = smov 12
  %v8479 = vld [vmem:[%s8477] ss:$16 sm:%s8478]
  %vm8480 = vcmask 1043458
  %v8481 = vsel %vm8480, %v8479, %v8476
  %s8482 = scalar_lea.vmem %s0, 1794
  %s8483 = smov 48
  %v8484 = vld [vmem:[%s8482] ss:$16 sm:%s8483]
  %vm8485 = vcmask 1045508
  %v8486 = vsel %vm8485, %v8484, %v8481
  %s8487 = scalar_lea.vmem %s0, 1794
  %s8488 = smov 192
  %v8489 = vld [vmem:[%s8487] ss:$16 sm:%s8488]
  %vm8490 = vcmask 1047558
  %v8491 = vsel %vm8490, %v8489, %v8486
  %8492 = vrot.lane.b32.xlu0 %v8491, 32
  %v8493 = vpop.permute.xlu0 %8492
  %vm8494 = vcmask 392448
  %s8495 = scalar_lea.vmem %s1, 224
  %8496 = vst.msk [vmem:[%s8495] sm:$0xff] %vm8494, %v8493
  %s8497 = scalar_lea.vmem %s0, 2050
  %s8498 = smov 3
  %v8499 = vld [vmem:[%s8497] ss:$16 sm:%s8498]
  %s8500 = scalar_lea.vmem %s0, 2050
  %s8501 = smov 12
  %v8502 = vld [vmem:[%s8500] ss:$16 sm:%s8501]
  %vm8503 = vcmask 1043458
  %v8504 = vsel %vm8503, %v8502, %v8499
  %s8505 = scalar_lea.vmem %s0, 2050
  %s8506 = smov 48
  %v8507 = vld [vmem:[%s8505] ss:$16 sm:%s8506]
  %vm8508 = vcmask 1045508
  %v8509 = vsel %vm8508, %v8507, %v8504
  %s8510 = scalar_lea.vmem %s0, 2050
  %s8511 = smov 192
  %v8512 = vld [vmem:[%s8510] ss:$16 sm:%s8511]
  %vm8513 = vcmask 1047558
  %v8514 = vsel %vm8513, %v8512, %v8509
  %8515 = vrot.lane.b32.xlu0 %v8514, 32
  %v8516 = vpop.permute.xlu0 %8515
  %vm8517 = vcmask 392448
  %s8518 = scalar_lea.vmem %s1, 256
  %8519 = vst.msk [vmem:[%s8518] sm:$0xff] %vm8517, %v8516
  %s8520 = scalar_lea.vmem %s0, 2306
  %s8521 = smov 3
  %v8522 = vld [vmem:[%s8520] ss:$16 sm:%s8521]
  %s8523 = scalar_lea.vmem %s0, 2306
  %s8524 = smov 12
  %v8525 = vld [vmem:[%s8523] ss:$16 sm:%s8524]
  %vm8526 = vcmask 1043458
  %v8527 = vsel %vm8526, %v8525, %v8522
  %s8528 = scalar_lea.vmem %s0, 2306
  %s8529 = smov 48
  %v8530 = vld [vmem:[%s8528] ss:$16 sm:%s8529]
  %vm8531 = vcmask 1045508
  %v8532 = vsel %vm8531, %v8530, %v8527
  %s8533 = scalar_lea.vmem %s0, 2306
  %s8534 = smov 192
  %v8535 = vld [vmem:[%s8533] ss:$16 sm:%s8534]
  %vm8536 = vcmask 1047558
  %v8537 = vsel %vm8536, %v8535, %v8532
  %8538 = vrot.lane.b32.xlu0 %v8537, 32
  %v8539 = vpop.permute.xlu0 %8538
  %vm8540 = vcmask 392448
  %s8541 = scalar_lea.vmem %s1, 288
  %8542 = vst.msk [vmem:[%s8541] sm:$0xff] %vm8540, %v8539
  %s8543 = scalar_lea.vmem %s0, 2562
  %s8544 = smov 3
  %v8545 = vld [vmem:[%s8543] ss:$16 sm:%s8544]
  %s8546 = scalar_lea.vmem %s0, 2562
  %s8547 = smov 12
  %v8548 = vld [vmem:[%s8546] ss:$16 sm:%s8547]
  %vm8549 = vcmask 1043458
  %v8550 = vsel %vm8549, %v8548, %v8545
  %s8551 = scalar_lea.vmem %s0, 2562
  %s8552 = smov 48
  %v8553 = vld [vmem:[%s8551] ss:$16 sm:%s8552]
  %vm8554 = vcmask 1045508
  %v8555 = vsel %vm8554, %v8553, %v8550
  %s8556 = scalar_lea.vmem %s0, 2562
  %s8557 = smov 192
  %v8558 = vld [vmem:[%s8556] ss:$16 sm:%s8557]
  %vm8559 = vcmask 1047558
  %v8560 = vsel %vm8559, %v8558, %v8555
  %8561 = vrot.lane.b32.xlu0 %v8560, 32
  %v8562 = vpop.permute.xlu0 %8561
  %vm8563 = vcmask 392448
  %s8564 = scalar_lea.vmem %s1, 320
  %8565 = vst.msk [vmem:[%s8564] sm:$0xff] %vm8563, %v8562
  %s8566 = scalar_lea.vmem %s0, 2818
  %s8567 = smov 3
  %v8568 = vld [vmem:[%s8566] ss:$16 sm:%s8567]
  %s8569 = scalar_lea.vmem %s0, 2818
  %s8570 = smov 12
  %v8571 = vld [vmem:[%s8569] ss:$16 sm:%s8570]
  %vm8572 = vcmask 1043458
  %v8573 = vsel %vm8572, %v8571, %v8568
  %s8574 = scalar_lea.vmem %s0, 2818
  %s8575 = smov 48
  %v8576 = vld [vmem:[%s8574] ss:$16 sm:%s8575]
  %vm8577 = vcmask 1045508
  %v8578 = vsel %vm8577, %v8576, %v8573
  %s8579 = scalar_lea.vmem %s0, 2818
  %s8580 = smov 192
  %v8581 = vld [vmem:[%s8579] ss:$16 sm:%s8580]
  %vm8582 = vcmask 1047558
  %v8583 = vsel %vm8582, %v8581, %v8578
  %8584 = vrot.lane.b32.xlu0 %v8583, 32
  %v8585 = vpop.permute.xlu0 %8584
  %vm8586 = vcmask 392448
  %s8587 = scalar_lea.vmem %s1, 352
  %8588 = vst.msk [vmem:[%s8587] sm:$0xff] %vm8586, %v8585
  %s8589 = scalar_lea.vmem %s0, 3074
  %s8590 = smov 3
  %v8591 = vld [vmem:[%s8589] ss:$16 sm:%s8590]
  %s8592 = scalar_lea.vmem %s0, 3074
  %s8593 = smov 12
  %v8594 = vld [vmem:[%s8592] ss:$16 sm:%s8593]
  %vm8595 = vcmask 1043458
  %v8596 = vsel %vm8595, %v8594, %v8591
  %s8597 = scalar_lea.vmem %s0, 3074
  %s8598 = smov 48
  %v8599 = vld [vmem:[%s8597] ss:$16 sm:%s8598]
  %vm8600 = vcmask 1045508
  %v8601 = vsel %vm8600, %v8599, %v8596
  %s8602 = scalar_lea.vmem %s0, 3074
  %s8603 = smov 192
  %v8604 = vld [vmem:[%s8602] ss:$16 sm:%s8603]
  %vm8605 = vcmask 1047558
  %v8606 = vsel %vm8605, %v8604, %v8601
  %8607 = vrot.lane.b32.xlu0 %v8606, 32
  %v8608 = vpop.permute.xlu0 %8607
  %vm8609 = vcmask 392448
  %s8610 = scalar_lea.vmem %s1, 384
  %8611 = vst.msk [vmem:[%s8610] sm:$0xff] %vm8609, %v8608
  %s8612 = scalar_lea.vmem %s0, 3330
  %s8613 = smov 3
  %v8614 = vld [vmem:[%s8612] ss:$16 sm:%s8613]
  %s8615 = scalar_lea.vmem %s0, 3330
  %s8616 = smov 12
  %v8617 = vld [vmem:[%s8615] ss:$16 sm:%s8616]
  %vm8618 = vcmask 1043458
  %v8619 = vsel %vm8618, %v8617, %v8614
  %s8620 = scalar_lea.vmem %s0, 3330
  %s8621 = smov 48
  %v8622 = vld [vmem:[%s8620] ss:$16 sm:%s8621]
  %vm8623 = vcmask 1045508
  %v8624 = vsel %vm8623, %v8622, %v8619
  %s8625 = scalar_lea.vmem %s0, 3330
  %s8626 = smov 192
  %v8627 = vld [vmem:[%s8625] ss:$16 sm:%s8626]
  %vm8628 = vcmask 1047558
  %v8629 = vsel %vm8628, %v8627, %v8624
  %8630 = vrot.lane.b32.xlu0 %v8629, 32
  %v8631 = vpop.permute.xlu0 %8630
  %vm8632 = vcmask 392448
  %s8633 = scalar_lea.vmem %s1, 416
  %8634 = vst.msk [vmem:[%s8633] sm:$0xff] %vm8632, %v8631
  %s8635 = scalar_lea.vmem %s0, 3586
  %s8636 = smov 3
  %v8637 = vld [vmem:[%s8635] ss:$16 sm:%s8636]
  %s8638 = scalar_lea.vmem %s0, 3586
  %s8639 = smov 12
  %v8640 = vld [vmem:[%s8638] ss:$16 sm:%s8639]
  %vm8641 = vcmask 1043458
  %v8642 = vsel %vm8641, %v8640, %v8637
  %s8643 = scalar_lea.vmem %s0, 3586
  %s8644 = smov 48
  %v8645 = vld [vmem:[%s8643] ss:$16 sm:%s8644]
  %vm8646 = vcmask 1045508
  %v8647 = vsel %vm8646, %v8645, %v8642
  %s8648 = scalar_lea.vmem %s0, 3586
  %s8649 = smov 192
  %v8650 = vld [vmem:[%s8648] ss:$16 sm:%s8649]
  %vm8651 = vcmask 1047558
  %v8652 = vsel %vm8651, %v8650, %v8647
  %8653 = vrot.lane.b32.xlu0 %v8652, 32
  %v8654 = vpop.permute.xlu0 %8653
  %vm8655 = vcmask 392448
  %s8656 = scalar_lea.vmem %s1, 448
  %8657 = vst.msk [vmem:[%s8656] sm:$0xff] %vm8655, %v8654
  %s8658 = scalar_lea.vmem %s0, 3842
  %s8659 = smov 3
  %v8660 = vld [vmem:[%s8658] ss:$16 sm:%s8659]
  %s8661 = scalar_lea.vmem %s0, 3842
  %s8662 = smov 12
  %v8663 = vld [vmem:[%s8661] ss:$16 sm:%s8662]
  %vm8664 = vcmask 1043458
  %v8665 = vsel %vm8664, %v8663, %v8660
  %s8666 = scalar_lea.vmem %s0, 3842
  %s8667 = smov 48
  %v8668 = vld [vmem:[%s8666] ss:$16 sm:%s8667]
  %vm8669 = vcmask 1045508
  %v8670 = vsel %vm8669, %v8668, %v8665
  %s8671 = scalar_lea.vmem %s0, 3842
  %s8672 = smov 192
  %v8673 = vld [vmem:[%s8671] ss:$16 sm:%s8672]
  %vm8674 = vcmask 1047558
  %v8675 = vsel %vm8674, %v8673, %v8670
  %8676 = vrot.lane.b32.xlu0 %v8675, 32
  %v8677 = vpop.permute.xlu0 %8676
  %vm8678 = vcmask 392448
  %s8679 = scalar_lea.vmem %s1, 480
  %8680 = vst.msk [vmem:[%s8679] sm:$0xff] %vm8678, %v8677
  %s8681 = scalar_lea.vmem %s0, 10
  %s8682 = smov 3
  %v8683 = vld [vmem:[%s8681] ss:$16 sm:%s8682]
  %s8684 = scalar_lea.vmem %s0, 10
  %s8685 = smov 12
  %v8686 = vld [vmem:[%s8684] ss:$16 sm:%s8685]
  %vm8687 = vcmask 1043458
  %v8688 = vsel %vm8687, %v8686, %v8683
  %s8689 = scalar_lea.vmem %s0, 10
  %s8690 = smov 48
  %v8691 = vld [vmem:[%s8689] ss:$16 sm:%s8690]
  %vm8692 = vcmask 1045508
  %v8693 = vsel %vm8692, %v8691, %v8688
  %s8694 = scalar_lea.vmem %s0, 10
  %s8695 = smov 192
  %v8696 = vld [vmem:[%s8694] ss:$16 sm:%s8695]
  %vm8697 = vcmask 1047558
  %v8698 = vsel %vm8697, %v8696, %v8693
  %8699 = vrot.lane.b32.xlu0 %v8698, 32
  %v8700 = vpop.permute.xlu0 %8699
  %vm8701 = vcmask 392448
  %s8702 = scalar_lea.vmem %s1, 8
  %8703 = vst.msk [vmem:[%s8702] sm:$0xff] %vm8701, %v8700
  %s8704 = scalar_lea.vmem %s0, 266
  %s8705 = smov 3
  %v8706 = vld [vmem:[%s8704] ss:$16 sm:%s8705]
  %s8707 = scalar_lea.vmem %s0, 266
  %s8708 = smov 12
  %v8709 = vld [vmem:[%s8707] ss:$16 sm:%s8708]
  %vm8710 = vcmask 1043458
  %v8711 = vsel %vm8710, %v8709, %v8706
  %s8712 = scalar_lea.vmem %s0, 266
  %s8713 = smov 48
  %v8714 = vld [vmem:[%s8712] ss:$16 sm:%s8713]
  %vm8715 = vcmask 1045508
  %v8716 = vsel %vm8715, %v8714, %v8711
  %s8717 = scalar_lea.vmem %s0, 266
  %s8718 = smov 192
  %v8719 = vld [vmem:[%s8717] ss:$16 sm:%s8718]
  %vm8720 = vcmask 1047558
  %v8721 = vsel %vm8720, %v8719, %v8716
  %8722 = vrot.lane.b32.xlu0 %v8721, 32
  %v8723 = vpop.permute.xlu0 %8722
  %vm8724 = vcmask 392448
  %s8725 = scalar_lea.vmem %s1, 40
  %8726 = vst.msk [vmem:[%s8725] sm:$0xff] %vm8724, %v8723
  %s8727 = scalar_lea.vmem %s0, 522
  %s8728 = smov 3
  %v8729 = vld [vmem:[%s8727] ss:$16 sm:%s8728]
  %s8730 = scalar_lea.vmem %s0, 522
  %s8731 = smov 12
  %v8732 = vld [vmem:[%s8730] ss:$16 sm:%s8731]
  %vm8733 = vcmask 1043458
  %v8734 = vsel %vm8733, %v8732, %v8729
  %s8735 = scalar_lea.vmem %s0, 522
  %s8736 = smov 48
  %v8737 = vld [vmem:[%s8735] ss:$16 sm:%s8736]
  %vm8738 = vcmask 1045508
  %v8739 = vsel %vm8738, %v8737, %v8734
  %s8740 = scalar_lea.vmem %s0, 522
  %s8741 = smov 192
  %v8742 = vld [vmem:[%s8740] ss:$16 sm:%s8741]
  %vm8743 = vcmask 1047558
  %v8744 = vsel %vm8743, %v8742, %v8739
  %8745 = vrot.lane.b32.xlu0 %v8744, 32
  %v8746 = vpop.permute.xlu0 %8745
  %vm8747 = vcmask 392448
  %s8748 = scalar_lea.vmem %s1, 72
  %8749 = vst.msk [vmem:[%s8748] sm:$0xff] %vm8747, %v8746
  %s8750 = scalar_lea.vmem %s0, 778
  %s8751 = smov 3
  %v8752 = vld [vmem:[%s8750] ss:$16 sm:%s8751]
  %s8753 = scalar_lea.vmem %s0, 778
  %s8754 = smov 12
  %v8755 = vld [vmem:[%s8753] ss:$16 sm:%s8754]
  %vm8756 = vcmask 1043458
  %v8757 = vsel %vm8756, %v8755, %v8752
  %s8758 = scalar_lea.vmem %s0, 778
  %s8759 = smov 48
  %v8760 = vld [vmem:[%s8758] ss:$16 sm:%s8759]
  %vm8761 = vcmask 1045508
  %v8762 = vsel %vm8761, %v8760, %v8757
  %s8763 = scalar_lea.vmem %s0, 778
  %s8764 = smov 192
  %v8765 = vld [vmem:[%s8763] ss:$16 sm:%s8764]
  %vm8766 = vcmask 1047558
  %v8767 = vsel %vm8766, %v8765, %v8762
  %8768 = vrot.lane.b32.xlu0 %v8767, 32
  %v8769 = vpop.permute.xlu0 %8768
  %vm8770 = vcmask 392448
  %s8771 = scalar_lea.vmem %s1, 104
  %8772 = vst.msk [vmem:[%s8771] sm:$0xff] %vm8770, %v8769
  %s8773 = scalar_lea.vmem %s0, 1034
  %s8774 = smov 3
  %v8775 = vld [vmem:[%s8773] ss:$16 sm:%s8774]
  %s8776 = scalar_lea.vmem %s0, 1034
  %s8777 = smov 12
  %v8778 = vld [vmem:[%s8776] ss:$16 sm:%s8777]
  %vm8779 = vcmask 1043458
  %v8780 = vsel %vm8779, %v8778, %v8775
  %s8781 = scalar_lea.vmem %s0, 1034
  %s8782 = smov 48
  %v8783 = vld [vmem:[%s8781] ss:$16 sm:%s8782]
  %vm8784 = vcmask 1045508
  %v8785 = vsel %vm8784, %v8783, %v8780
  %s8786 = scalar_lea.vmem %s0, 1034
  %s8787 = smov 192
  %v8788 = vld [vmem:[%s8786] ss:$16 sm:%s8787]
  %vm8789 = vcmask 1047558
  %v8790 = vsel %vm8789, %v8788, %v8785
  %8791 = vrot.lane.b32.xlu0 %v8790, 32
  %v8792 = vpop.permute.xlu0 %8791
  %vm8793 = vcmask 392448
  %s8794 = scalar_lea.vmem %s1, 136
  %8795 = vst.msk [vmem:[%s8794] sm:$0xff] %vm8793, %v8792
  %s8796 = scalar_lea.vmem %s0, 1290
  %s8797 = smov 3
  %v8798 = vld [vmem:[%s8796] ss:$16 sm:%s8797]
  %s8799 = scalar_lea.vmem %s0, 1290
  %s8800 = smov 12
  %v8801 = vld [vmem:[%s8799] ss:$16 sm:%s8800]
  %vm8802 = vcmask 1043458
  %v8803 = vsel %vm8802, %v8801, %v8798
  %s8804 = scalar_lea.vmem %s0, 1290
  %s8805 = smov 48
  %v8806 = vld [vmem:[%s8804] ss:$16 sm:%s8805]
  %vm8807 = vcmask 1045508
  %v8808 = vsel %vm8807, %v8806, %v8803
  %s8809 = scalar_lea.vmem %s0, 1290
  %s8810 = smov 192
  %v8811 = vld [vmem:[%s8809] ss:$16 sm:%s8810]
  %vm8812 = vcmask 1047558
  %v8813 = vsel %vm8812, %v8811, %v8808
  %8814 = vrot.lane.b32.xlu0 %v8813, 32
  %v8815 = vpop.permute.xlu0 %8814
  %vm8816 = vcmask 392448
  %s8817 = scalar_lea.vmem %s1, 168
  %8818 = vst.msk [vmem:[%s8817] sm:$0xff] %vm8816, %v8815
  %s8819 = scalar_lea.vmem %s0, 1546
  %s8820 = smov 3
  %v8821 = vld [vmem:[%s8819] ss:$16 sm:%s8820]
  %s8822 = scalar_lea.vmem %s0, 1546
  %s8823 = smov 12
  %v8824 = vld [vmem:[%s8822] ss:$16 sm:%s8823]
  %vm8825 = vcmask 1043458
  %v8826 = vsel %vm8825, %v8824, %v8821
  %s8827 = scalar_lea.vmem %s0, 1546
  %s8828 = smov 48
  %v8829 = vld [vmem:[%s8827] ss:$16 sm:%s8828]
  %vm8830 = vcmask 1045508
  %v8831 = vsel %vm8830, %v8829, %v8826
  %s8832 = scalar_lea.vmem %s0, 1546
  %s8833 = smov 192
  %v8834 = vld [vmem:[%s8832] ss:$16 sm:%s8833]
  %vm8835 = vcmask 1047558
  %v8836 = vsel %vm8835, %v8834, %v8831
  %8837 = vrot.lane.b32.xlu0 %v8836, 32
  %v8838 = vpop.permute.xlu0 %8837
  %vm8839 = vcmask 392448
  %s8840 = scalar_lea.vmem %s1, 200
  %8841 = vst.msk [vmem:[%s8840] sm:$0xff] %vm8839, %v8838
  %s8842 = scalar_lea.vmem %s0, 1802
  %s8843 = smov 3
  %v8844 = vld [vmem:[%s8842] ss:$16 sm:%s8843]
  %s8845 = scalar_lea.vmem %s0, 1802
  %s8846 = smov 12
  %v8847 = vld [vmem:[%s8845] ss:$16 sm:%s8846]
  %vm8848 = vcmask 1043458
  %v8849 = vsel %vm8848, %v8847, %v8844
  %s8850 = scalar_lea.vmem %s0, 1802
  %s8851 = smov 48
  %v8852 = vld [vmem:[%s8850] ss:$16 sm:%s8851]
  %vm8853 = vcmask 1045508
  %v8854 = vsel %vm8853, %v8852, %v8849
  %s8855 = scalar_lea.vmem %s0, 1802
  %s8856 = smov 192
  %v8857 = vld [vmem:[%s8855] ss:$16 sm:%s8856]
  %vm8858 = vcmask 1047558
  %v8859 = vsel %vm8858, %v8857, %v8854
  %8860 = vrot.lane.b32.xlu0 %v8859, 32
  %v8861 = vpop.permute.xlu0 %8860
  %vm8862 = vcmask 392448
  %s8863 = scalar_lea.vmem %s1, 232
  %8864 = vst.msk [vmem:[%s8863] sm:$0xff] %vm8862, %v8861
  %s8865 = scalar_lea.vmem %s0, 2058
  %s8866 = smov 3
  %v8867 = vld [vmem:[%s8865] ss:$16 sm:%s8866]
  %s8868 = scalar_lea.vmem %s0, 2058
  %s8869 = smov 12
  %v8870 = vld [vmem:[%s8868] ss:$16 sm:%s8869]
  %vm8871 = vcmask 1043458
  %v8872 = vsel %vm8871, %v8870, %v8867
  %s8873 = scalar_lea.vmem %s0, 2058
  %s8874 = smov 48
  %v8875 = vld [vmem:[%s8873] ss:$16 sm:%s8874]
  %vm8876 = vcmask 1045508
  %v8877 = vsel %vm8876, %v8875, %v8872
  %s8878 = scalar_lea.vmem %s0, 2058
  %s8879 = smov 192
  %v8880 = vld [vmem:[%s8878] ss:$16 sm:%s8879]
  %vm8881 = vcmask 1047558
  %v8882 = vsel %vm8881, %v8880, %v8877
  %8883 = vrot.lane.b32.xlu0 %v8882, 32
  %v8884 = vpop.permute.xlu0 %8883
  %vm8885 = vcmask 392448
  %s8886 = scalar_lea.vmem %s1, 264
  %8887 = vst.msk [vmem:[%s8886] sm:$0xff] %vm8885, %v8884
  %s8888 = scalar_lea.vmem %s0, 2314
  %s8889 = smov 3
  %v8890 = vld [vmem:[%s8888] ss:$16 sm:%s8889]
  %s8891 = scalar_lea.vmem %s0, 2314
  %s8892 = smov 12
  %v8893 = vld [vmem:[%s8891] ss:$16 sm:%s8892]
  %vm8894 = vcmask 1043458
  %v8895 = vsel %vm8894, %v8893, %v8890
  %s8896 = scalar_lea.vmem %s0, 2314
  %s8897 = smov 48
  %v8898 = vld [vmem:[%s8896] ss:$16 sm:%s8897]
  %vm8899 = vcmask 1045508
  %v8900 = vsel %vm8899, %v8898, %v8895
  %s8901 = scalar_lea.vmem %s0, 2314
  %s8902 = smov 192
  %v8903 = vld [vmem:[%s8901] ss:$16 sm:%s8902]
  %vm8904 = vcmask 1047558
  %v8905 = vsel %vm8904, %v8903, %v8900
  %8906 = vrot.lane.b32.xlu0 %v8905, 32
  %v8907 = vpop.permute.xlu0 %8906
  %vm8908 = vcmask 392448
  %s8909 = scalar_lea.vmem %s1, 296
  %8910 = vst.msk [vmem:[%s8909] sm:$0xff] %vm8908, %v8907
  %s8911 = scalar_lea.vmem %s0, 2570
  %s8912 = smov 3
  %v8913 = vld [vmem:[%s8911] ss:$16 sm:%s8912]
  %s8914 = scalar_lea.vmem %s0, 2570
  %s8915 = smov 12
  %v8916 = vld [vmem:[%s8914] ss:$16 sm:%s8915]
  %vm8917 = vcmask 1043458
  %v8918 = vsel %vm8917, %v8916, %v8913
  %s8919 = scalar_lea.vmem %s0, 2570
  %s8920 = smov 48
  %v8921 = vld [vmem:[%s8919] ss:$16 sm:%s8920]
  %vm8922 = vcmask 1045508
  %v8923 = vsel %vm8922, %v8921, %v8918
  %s8924 = scalar_lea.vmem %s0, 2570
  %s8925 = smov 192
  %v8926 = vld [vmem:[%s8924] ss:$16 sm:%s8925]
  %vm8927 = vcmask 1047558
  %v8928 = vsel %vm8927, %v8926, %v8923
  %8929 = vrot.lane.b32.xlu0 %v8928, 32
  %v8930 = vpop.permute.xlu0 %8929
  %vm8931 = vcmask 392448
  %s8932 = scalar_lea.vmem %s1, 328
  %8933 = vst.msk [vmem:[%s8932] sm:$0xff] %vm8931, %v8930
  %s8934 = scalar_lea.vmem %s0, 2826
  %s8935 = smov 3
  %v8936 = vld [vmem:[%s8934] ss:$16 sm:%s8935]
  %s8937 = scalar_lea.vmem %s0, 2826
  %s8938 = smov 12
  %v8939 = vld [vmem:[%s8937] ss:$16 sm:%s8938]
  %vm8940 = vcmask 1043458
  %v8941 = vsel %vm8940, %v8939, %v8936
  %s8942 = scalar_lea.vmem %s0, 2826
  %s8943 = smov 48
  %v8944 = vld [vmem:[%s8942] ss:$16 sm:%s8943]
  %vm8945 = vcmask 1045508
  %v8946 = vsel %vm8945, %v8944, %v8941
  %s8947 = scalar_lea.vmem %s0, 2826
  %s8948 = smov 192
  %v8949 = vld [vmem:[%s8947] ss:$16 sm:%s8948]
  %vm8950 = vcmask 1047558
  %v8951 = vsel %vm8950, %v8949, %v8946
  %8952 = vrot.lane.b32.xlu0 %v8951, 32
  %v8953 = vpop.permute.xlu0 %8952
  %vm8954 = vcmask 392448
  %s8955 = scalar_lea.vmem %s1, 360
  %8956 = vst.msk [vmem:[%s8955] sm:$0xff] %vm8954, %v8953
  %s8957 = scalar_lea.vmem %s0, 3082
  %s8958 = smov 3
  %v8959 = vld [vmem:[%s8957] ss:$16 sm:%s8958]
  %s8960 = scalar_lea.vmem %s0, 3082
  %s8961 = smov 12
  %v8962 = vld [vmem:[%s8960] ss:$16 sm:%s8961]
  %vm8963 = vcmask 1043458
  %v8964 = vsel %vm8963, %v8962, %v8959
  %s8965 = scalar_lea.vmem %s0, 3082
  %s8966 = smov 48
  %v8967 = vld [vmem:[%s8965] ss:$16 sm:%s8966]
  %vm8968 = vcmask 1045508
  %v8969 = vsel %vm8968, %v8967, %v8964
  %s8970 = scalar_lea.vmem %s0, 3082
  %s8971 = smov 192
  %v8972 = vld [vmem:[%s8970] ss:$16 sm:%s8971]
  %vm8973 = vcmask 1047558
  %v8974 = vsel %vm8973, %v8972, %v8969
  %8975 = vrot.lane.b32.xlu0 %v8974, 32
  %v8976 = vpop.permute.xlu0 %8975
  %vm8977 = vcmask 392448
  %s8978 = scalar_lea.vmem %s1, 392
  %8979 = vst.msk [vmem:[%s8978] sm:$0xff] %vm8977, %v8976
  %s8980 = scalar_lea.vmem %s0, 3338
  %s8981 = smov 3
  %v8982 = vld [vmem:[%s8980] ss:$16 sm:%s8981]
  %s8983 = scalar_lea.vmem %s0, 3338
  %s8984 = smov 12
  %v8985 = vld [vmem:[%s8983] ss:$16 sm:%s8984]
  %vm8986 = vcmask 1043458
  %v8987 = vsel %vm8986, %v8985, %v8982
  %s8988 = scalar_lea.vmem %s0, 3338
  %s8989 = smov 48
  %v8990 = vld [vmem:[%s8988] ss:$16 sm:%s8989]
  %vm8991 = vcmask 1045508
  %v8992 = vsel %vm8991, %v8990, %v8987
  %s8993 = scalar_lea.vmem %s0, 3338
  %s8994 = smov 192
  %v8995 = vld [vmem:[%s8993] ss:$16 sm:%s8994]
  %vm8996 = vcmask 1047558
  %v8997 = vsel %vm8996, %v8995, %v8992
  %8998 = vrot.lane.b32.xlu0 %v8997, 32
  %v8999 = vpop.permute.xlu0 %8998
  %vm9000 = vcmask 392448
  %s9001 = scalar_lea.vmem %s1, 424
  %9002 = vst.msk [vmem:[%s9001] sm:$0xff] %vm9000, %v8999
  %s9003 = scalar_lea.vmem %s0, 3594
  %s9004 = smov 3
  %v9005 = vld [vmem:[%s9003] ss:$16 sm:%s9004]
  %s9006 = scalar_lea.vmem %s0, 3594
  %s9007 = smov 12
  %v9008 = vld [vmem:[%s9006] ss:$16 sm:%s9007]
  %vm9009 = vcmask 1043458
  %v9010 = vsel %vm9009, %v9008, %v9005
  %s9011 = scalar_lea.vmem %s0, 3594
  %s9012 = smov 48
  %v9013 = vld [vmem:[%s9011] ss:$16 sm:%s9012]
  %vm9014 = vcmask 1045508
  %v9015 = vsel %vm9014, %v9013, %v9010
  %s9016 = scalar_lea.vmem %s0, 3594
  %s9017 = smov 192
  %v9018 = vld [vmem:[%s9016] ss:$16 sm:%s9017]
  %vm9019 = vcmask 1047558
  %v9020 = vsel %vm9019, %v9018, %v9015
  %9021 = vrot.lane.b32.xlu0 %v9020, 32
  %v9022 = vpop.permute.xlu0 %9021
  %vm9023 = vcmask 392448
  %s9024 = scalar_lea.vmem %s1, 456
  %9025 = vst.msk [vmem:[%s9024] sm:$0xff] %vm9023, %v9022
  %s9026 = scalar_lea.vmem %s0, 3850
  %s9027 = smov 3
  %v9028 = vld [vmem:[%s9026] ss:$16 sm:%s9027]
  %s9029 = scalar_lea.vmem %s0, 3850
  %s9030 = smov 12
  %v9031 = vld [vmem:[%s9029] ss:$16 sm:%s9030]
  %vm9032 = vcmask 1043458
  %v9033 = vsel %vm9032, %v9031, %v9028
  %s9034 = scalar_lea.vmem %s0, 3850
  %s9035 = smov 48
  %v9036 = vld [vmem:[%s9034] ss:$16 sm:%s9035]
  %vm9037 = vcmask 1045508
  %v9038 = vsel %vm9037, %v9036, %v9033
  %s9039 = scalar_lea.vmem %s0, 3850
  %s9040 = smov 192
  %v9041 = vld [vmem:[%s9039] ss:$16 sm:%s9040]
  %vm9042 = vcmask 1047558
  %v9043 = vsel %vm9042, %v9041, %v9038
  %9044 = vrot.lane.b32.xlu0 %v9043, 32
  %v9045 = vpop.permute.xlu0 %9044
  %vm9046 = vcmask 392448
  %s9047 = scalar_lea.vmem %s1, 488
  %9048 = vst.msk [vmem:[%s9047] sm:$0xff] %vm9046, %v9045
  %s9049 = scalar_lea.vmem %s0, 130
  %s9050 = smov 3
  %v9051 = vld [vmem:[%s9049] ss:$16 sm:%s9050]
  %s9052 = scalar_lea.vmem %s0, 130
  %s9053 = smov 12
  %v9054 = vld [vmem:[%s9052] ss:$16 sm:%s9053]
  %vm9055 = vcmask 1043458
  %v9056 = vsel %vm9055, %v9054, %v9051
  %s9057 = scalar_lea.vmem %s0, 130
  %s9058 = smov 48
  %v9059 = vld [vmem:[%s9057] ss:$16 sm:%s9058]
  %vm9060 = vcmask 1045508
  %v9061 = vsel %vm9060, %v9059, %v9056
  %s9062 = scalar_lea.vmem %s0, 130
  %s9063 = smov 192
  %v9064 = vld [vmem:[%s9062] ss:$16 sm:%s9063]
  %vm9065 = vcmask 1047558
  %v9066 = vsel %vm9065, %v9064, %v9061
  %9067 = vrot.lane.b32.xlu0 %v9066, 32
  %v9068 = vpop.permute.xlu0 %9067
  %vm9069 = vcmask 392448
  %s9070 = scalar_lea.vmem %s1, 16
  %9071 = vst.msk [vmem:[%s9070] sm:$0xff] %vm9069, %v9068
  %s9072 = scalar_lea.vmem %s0, 386
  %s9073 = smov 3
  %v9074 = vld [vmem:[%s9072] ss:$16 sm:%s9073]
  %s9075 = scalar_lea.vmem %s0, 386
  %s9076 = smov 12
  %v9077 = vld [vmem:[%s9075] ss:$16 sm:%s9076]
  %vm9078 = vcmask 1043458
  %v9079 = vsel %vm9078, %v9077, %v9074
  %s9080 = scalar_lea.vmem %s0, 386
  %s9081 = smov 48
  %v9082 = vld [vmem:[%s9080] ss:$16 sm:%s9081]
  %vm9083 = vcmask 1045508
  %v9084 = vsel %vm9083, %v9082, %v9079
  %s9085 = scalar_lea.vmem %s0, 386
  %s9086 = smov 192
  %v9087 = vld [vmem:[%s9085] ss:$16 sm:%s9086]
  %vm9088 = vcmask 1047558
  %v9089 = vsel %vm9088, %v9087, %v9084
  %9090 = vrot.lane.b32.xlu0 %v9089, 32
  %v9091 = vpop.permute.xlu0 %9090
  %vm9092 = vcmask 392448
  %s9093 = scalar_lea.vmem %s1, 48
  %9094 = vst.msk [vmem:[%s9093] sm:$0xff] %vm9092, %v9091
  %s9095 = scalar_lea.vmem %s0, 642
  %s9096 = smov 3
  %v9097 = vld [vmem:[%s9095] ss:$16 sm:%s9096]
  %s9098 = scalar_lea.vmem %s0, 642
  %s9099 = smov 12
  %v9100 = vld [vmem:[%s9098] ss:$16 sm:%s9099]
  %vm9101 = vcmask 1043458
  %v9102 = vsel %vm9101, %v9100, %v9097
  %s9103 = scalar_lea.vmem %s0, 642
  %s9104 = smov 48
  %v9105 = vld [vmem:[%s9103] ss:$16 sm:%s9104]
  %vm9106 = vcmask 1045508
  %v9107 = vsel %vm9106, %v9105, %v9102
  %s9108 = scalar_lea.vmem %s0, 642
  %s9109 = smov 192
  %v9110 = vld [vmem:[%s9108] ss:$16 sm:%s9109]
  %vm9111 = vcmask 1047558
  %v9112 = vsel %vm9111, %v9110, %v9107
  %9113 = vrot.lane.b32.xlu0 %v9112, 32
  %v9114 = vpop.permute.xlu0 %9113
  %vm9115 = vcmask 392448
  %s9116 = scalar_lea.vmem %s1, 80
  %9117 = vst.msk [vmem:[%s9116] sm:$0xff] %vm9115, %v9114
  %s9118 = scalar_lea.vmem %s0, 898
  %s9119 = smov 3
  %v9120 = vld [vmem:[%s9118] ss:$16 sm:%s9119]
  %s9121 = scalar_lea.vmem %s0, 898
  %s9122 = smov 12
  %v9123 = vld [vmem:[%s9121] ss:$16 sm:%s9122]
  %vm9124 = vcmask 1043458
  %v9125 = vsel %vm9124, %v9123, %v9120
  %s9126 = scalar_lea.vmem %s0, 898
  %s9127 = smov 48
  %v9128 = vld [vmem:[%s9126] ss:$16 sm:%s9127]
  %vm9129 = vcmask 1045508
  %v9130 = vsel %vm9129, %v9128, %v9125
  %s9131 = scalar_lea.vmem %s0, 898
  %s9132 = smov 192
  %v9133 = vld [vmem:[%s9131] ss:$16 sm:%s9132]
  %vm9134 = vcmask 1047558
  %v9135 = vsel %vm9134, %v9133, %v9130
  %9136 = vrot.lane.b32.xlu0 %v9135, 32
  %v9137 = vpop.permute.xlu0 %9136
  %vm9138 = vcmask 392448
  %s9139 = scalar_lea.vmem %s1, 112
  %9140 = vst.msk [vmem:[%s9139] sm:$0xff] %vm9138, %v9137
  %s9141 = scalar_lea.vmem %s0, 1154
  %s9142 = smov 3
  %v9143 = vld [vmem:[%s9141] ss:$16 sm:%s9142]
  %s9144 = scalar_lea.vmem %s0, 1154
  %s9145 = smov 12
  %v9146 = vld [vmem:[%s9144] ss:$16 sm:%s9145]
  %vm9147 = vcmask 1043458
  %v9148 = vsel %vm9147, %v9146, %v9143
  %s9149 = scalar_lea.vmem %s0, 1154
  %s9150 = smov 48
  %v9151 = vld [vmem:[%s9149] ss:$16 sm:%s9150]
  %vm9152 = vcmask 1045508
  %v9153 = vsel %vm9152, %v9151, %v9148
  %s9154 = scalar_lea.vmem %s0, 1154
  %s9155 = smov 192
  %v9156 = vld [vmem:[%s9154] ss:$16 sm:%s9155]
  %vm9157 = vcmask 1047558
  %v9158 = vsel %vm9157, %v9156, %v9153
  %9159 = vrot.lane.b32.xlu0 %v9158, 32
  %v9160 = vpop.permute.xlu0 %9159
  %vm9161 = vcmask 392448
  %s9162 = scalar_lea.vmem %s1, 144
  %9163 = vst.msk [vmem:[%s9162] sm:$0xff] %vm9161, %v9160
  %s9164 = scalar_lea.vmem %s0, 1410
  %s9165 = smov 3
  %v9166 = vld [vmem:[%s9164] ss:$16 sm:%s9165]
  %s9167 = scalar_lea.vmem %s0, 1410
  %s9168 = smov 12
  %v9169 = vld [vmem:[%s9167] ss:$16 sm:%s9168]
  %vm9170 = vcmask 1043458
  %v9171 = vsel %vm9170, %v9169, %v9166
  %s9172 = scalar_lea.vmem %s0, 1410
  %s9173 = smov 48
  %v9174 = vld [vmem:[%s9172] ss:$16 sm:%s9173]
  %vm9175 = vcmask 1045508
  %v9176 = vsel %vm9175, %v9174, %v9171
  %s9177 = scalar_lea.vmem %s0, 1410
  %s9178 = smov 192
  %v9179 = vld [vmem:[%s9177] ss:$16 sm:%s9178]
  %vm9180 = vcmask 1047558
  %v9181 = vsel %vm9180, %v9179, %v9176
  %9182 = vrot.lane.b32.xlu0 %v9181, 32
  %v9183 = vpop.permute.xlu0 %9182
  %vm9184 = vcmask 392448
  %s9185 = scalar_lea.vmem %s1, 176
  %9186 = vst.msk [vmem:[%s9185] sm:$0xff] %vm9184, %v9183
  %s9187 = scalar_lea.vmem %s0, 1666
  %s9188 = smov 3
  %v9189 = vld [vmem:[%s9187] ss:$16 sm:%s9188]
  %s9190 = scalar_lea.vmem %s0, 1666
  %s9191 = smov 12
  %v9192 = vld [vmem:[%s9190] ss:$16 sm:%s9191]
  %vm9193 = vcmask 1043458
  %v9194 = vsel %vm9193, %v9192, %v9189
  %s9195 = scalar_lea.vmem %s0, 1666
  %s9196 = smov 48
  %v9197 = vld [vmem:[%s9195] ss:$16 sm:%s9196]
  %vm9198 = vcmask 1045508
  %v9199 = vsel %vm9198, %v9197, %v9194
  %s9200 = scalar_lea.vmem %s0, 1666
  %s9201 = smov 192
  %v9202 = vld [vmem:[%s9200] ss:$16 sm:%s9201]
  %vm9203 = vcmask 1047558
  %v9204 = vsel %vm9203, %v9202, %v9199
  %9205 = vrot.lane.b32.xlu0 %v9204, 32
  %v9206 = vpop.permute.xlu0 %9205
  %vm9207 = vcmask 392448
  %s9208 = scalar_lea.vmem %s1, 208
  %9209 = vst.msk [vmem:[%s9208] sm:$0xff] %vm9207, %v9206
  %s9210 = scalar_lea.vmem %s0, 1922
  %s9211 = smov 3
  %v9212 = vld [vmem:[%s9210] ss:$16 sm:%s9211]
  %s9213 = scalar_lea.vmem %s0, 1922
  %s9214 = smov 12
  %v9215 = vld [vmem:[%s9213] ss:$16 sm:%s9214]
  %vm9216 = vcmask 1043458
  %v9217 = vsel %vm9216, %v9215, %v9212
  %s9218 = scalar_lea.vmem %s0, 1922
  %s9219 = smov 48
  %v9220 = vld [vmem:[%s9218] ss:$16 sm:%s9219]
  %vm9221 = vcmask 1045508
  %v9222 = vsel %vm9221, %v9220, %v9217
  %s9223 = scalar_lea.vmem %s0, 1922
  %s9224 = smov 192
  %v9225 = vld [vmem:[%s9223] ss:$16 sm:%s9224]
  %vm9226 = vcmask 1047558
  %v9227 = vsel %vm9226, %v9225, %v9222
  %9228 = vrot.lane.b32.xlu0 %v9227, 32
  %v9229 = vpop.permute.xlu0 %9228
  %vm9230 = vcmask 392448
  %s9231 = scalar_lea.vmem %s1, 240
  %9232 = vst.msk [vmem:[%s9231] sm:$0xff] %vm9230, %v9229
  %s9233 = scalar_lea.vmem %s0, 2178
  %s9234 = smov 3
  %v9235 = vld [vmem:[%s9233] ss:$16 sm:%s9234]
  %s9236 = scalar_lea.vmem %s0, 2178
  %s9237 = smov 12
  %v9238 = vld [vmem:[%s9236] ss:$16 sm:%s9237]
  %vm9239 = vcmask 1043458
  %v9240 = vsel %vm9239, %v9238, %v9235
  %s9241 = scalar_lea.vmem %s0, 2178
  %s9242 = smov 48
  %v9243 = vld [vmem:[%s9241] ss:$16 sm:%s9242]
  %vm9244 = vcmask 1045508
  %v9245 = vsel %vm9244, %v9243, %v9240
  %s9246 = scalar_lea.vmem %s0, 2178
  %s9247 = smov 192
  %v9248 = vld [vmem:[%s9246] ss:$16 sm:%s9247]
  %vm9249 = vcmask 1047558
  %v9250 = vsel %vm9249, %v9248, %v9245
  %9251 = vrot.lane.b32.xlu0 %v9250, 32
  %v9252 = vpop.permute.xlu0 %9251
  %vm9253 = vcmask 392448
  %s9254 = scalar_lea.vmem %s1, 272
  %9255 = vst.msk [vmem:[%s9254] sm:$0xff] %vm9253, %v9252
  %s9256 = scalar_lea.vmem %s0, 2434
  %s9257 = smov 3
  %v9258 = vld [vmem:[%s9256] ss:$16 sm:%s9257]
  %s9259 = scalar_lea.vmem %s0, 2434
  %s9260 = smov 12
  %v9261 = vld [vmem:[%s9259] ss:$16 sm:%s9260]
  %vm9262 = vcmask 1043458
  %v9263 = vsel %vm9262, %v9261, %v9258
  %s9264 = scalar_lea.vmem %s0, 2434
  %s9265 = smov 48
  %v9266 = vld [vmem:[%s9264] ss:$16 sm:%s9265]
  %vm9267 = vcmask 1045508
  %v9268 = vsel %vm9267, %v9266, %v9263
  %s9269 = scalar_lea.vmem %s0, 2434
  %s9270 = smov 192
  %v9271 = vld [vmem:[%s9269] ss:$16 sm:%s9270]
  %vm9272 = vcmask 1047558
  %v9273 = vsel %vm9272, %v9271, %v9268
  %9274 = vrot.lane.b32.xlu0 %v9273, 32
  %v9275 = vpop.permute.xlu0 %9274
  %vm9276 = vcmask 392448
  %s9277 = scalar_lea.vmem %s1, 304
  %9278 = vst.msk [vmem:[%s9277] sm:$0xff] %vm9276, %v9275
  %s9279 = scalar_lea.vmem %s0, 2690
  %s9280 = smov 3
  %v9281 = vld [vmem:[%s9279] ss:$16 sm:%s9280]
  %s9282 = scalar_lea.vmem %s0, 2690
  %s9283 = smov 12
  %v9284 = vld [vmem:[%s9282] ss:$16 sm:%s9283]
  %vm9285 = vcmask 1043458
  %v9286 = vsel %vm9285, %v9284, %v9281
  %s9287 = scalar_lea.vmem %s0, 2690
  %s9288 = smov 48
  %v9289 = vld [vmem:[%s9287] ss:$16 sm:%s9288]
  %vm9290 = vcmask 1045508
  %v9291 = vsel %vm9290, %v9289, %v9286
  %s9292 = scalar_lea.vmem %s0, 2690
  %s9293 = smov 192
  %v9294 = vld [vmem:[%s9292] ss:$16 sm:%s9293]
  %vm9295 = vcmask 1047558
  %v9296 = vsel %vm9295, %v9294, %v9291
  %9297 = vrot.lane.b32.xlu0 %v9296, 32
  %v9298 = vpop.permute.xlu0 %9297
  %vm9299 = vcmask 392448
  %s9300 = scalar_lea.vmem %s1, 336
  %9301 = vst.msk [vmem:[%s9300] sm:$0xff] %vm9299, %v9298
  %s9302 = scalar_lea.vmem %s0, 2946
  %s9303 = smov 3
  %v9304 = vld [vmem:[%s9302] ss:$16 sm:%s9303]
  %s9305 = scalar_lea.vmem %s0, 2946
  %s9306 = smov 12
  %v9307 = vld [vmem:[%s9305] ss:$16 sm:%s9306]
  %vm9308 = vcmask 1043458
  %v9309 = vsel %vm9308, %v9307, %v9304
  %s9310 = scalar_lea.vmem %s0, 2946
  %s9311 = smov 48
  %v9312 = vld [vmem:[%s9310] ss:$16 sm:%s9311]
  %vm9313 = vcmask 1045508
  %v9314 = vsel %vm9313, %v9312, %v9309
  %s9315 = scalar_lea.vmem %s0, 2946
  %s9316 = smov 192
  %v9317 = vld [vmem:[%s9315] ss:$16 sm:%s9316]
  %vm9318 = vcmask 1047558
  %v9319 = vsel %vm9318, %v9317, %v9314
  %9320 = vrot.lane.b32.xlu0 %v9319, 32
  %v9321 = vpop.permute.xlu0 %9320
  %vm9322 = vcmask 392448
  %s9323 = scalar_lea.vmem %s1, 368
  %9324 = vst.msk [vmem:[%s9323] sm:$0xff] %vm9322, %v9321
  %s9325 = scalar_lea.vmem %s0, 3202
  %s9326 = smov 3
  %v9327 = vld [vmem:[%s9325] ss:$16 sm:%s9326]
  %s9328 = scalar_lea.vmem %s0, 3202
  %s9329 = smov 12
  %v9330 = vld [vmem:[%s9328] ss:$16 sm:%s9329]
  %vm9331 = vcmask 1043458
  %v9332 = vsel %vm9331, %v9330, %v9327
  %s9333 = scalar_lea.vmem %s0, 3202
  %s9334 = smov 48
  %v9335 = vld [vmem:[%s9333] ss:$16 sm:%s9334]
  %vm9336 = vcmask 1045508
  %v9337 = vsel %vm9336, %v9335, %v9332
  %s9338 = scalar_lea.vmem %s0, 3202
  %s9339 = smov 192
  %v9340 = vld [vmem:[%s9338] ss:$16 sm:%s9339]
  %vm9341 = vcmask 1047558
  %v9342 = vsel %vm9341, %v9340, %v9337
  %9343 = vrot.lane.b32.xlu0 %v9342, 32
  %v9344 = vpop.permute.xlu0 %9343
  %vm9345 = vcmask 392448
  %s9346 = scalar_lea.vmem %s1, 400
  %9347 = vst.msk [vmem:[%s9346] sm:$0xff] %vm9345, %v9344
  %s9348 = scalar_lea.vmem %s0, 3458
  %s9349 = smov 3
  %v9350 = vld [vmem:[%s9348] ss:$16 sm:%s9349]
  %s9351 = scalar_lea.vmem %s0, 3458
  %s9352 = smov 12
  %v9353 = vld [vmem:[%s9351] ss:$16 sm:%s9352]
  %vm9354 = vcmask 1043458
  %v9355 = vsel %vm9354, %v9353, %v9350
  %s9356 = scalar_lea.vmem %s0, 3458
  %s9357 = smov 48
  %v9358 = vld [vmem:[%s9356] ss:$16 sm:%s9357]
  %vm9359 = vcmask 1045508
  %v9360 = vsel %vm9359, %v9358, %v9355
  %s9361 = scalar_lea.vmem %s0, 3458
  %s9362 = smov 192
  %v9363 = vld [vmem:[%s9361] ss:$16 sm:%s9362]
  %vm9364 = vcmask 1047558
  %v9365 = vsel %vm9364, %v9363, %v9360
  %9366 = vrot.lane.b32.xlu0 %v9365, 32
  %v9367 = vpop.permute.xlu0 %9366
  %vm9368 = vcmask 392448
  %s9369 = scalar_lea.vmem %s1, 432
  %9370 = vst.msk [vmem:[%s9369] sm:$0xff] %vm9368, %v9367
  %s9371 = scalar_lea.vmem %s0, 3714
  %s9372 = smov 3
  %v9373 = vld [vmem:[%s9371] ss:$16 sm:%s9372]
  %s9374 = scalar_lea.vmem %s0, 3714
  %s9375 = smov 12
  %v9376 = vld [vmem:[%s9374] ss:$16 sm:%s9375]
  %vm9377 = vcmask 1043458
  %v9378 = vsel %vm9377, %v9376, %v9373
  %s9379 = scalar_lea.vmem %s0, 3714
  %s9380 = smov 48
  %v9381 = vld [vmem:[%s9379] ss:$16 sm:%s9380]
  %vm9382 = vcmask 1045508
  %v9383 = vsel %vm9382, %v9381, %v9378
  %s9384 = scalar_lea.vmem %s0, 3714
  %s9385 = smov 192
  %v9386 = vld [vmem:[%s9384] ss:$16 sm:%s9385]
  %vm9387 = vcmask 1047558
  %v9388 = vsel %vm9387, %v9386, %v9383
  %9389 = vrot.lane.b32.xlu0 %v9388, 32
  %v9390 = vpop.permute.xlu0 %9389
  %vm9391 = vcmask 392448
  %s9392 = scalar_lea.vmem %s1, 464
  %9393 = vst.msk [vmem:[%s9392] sm:$0xff] %vm9391, %v9390
  %s9394 = scalar_lea.vmem %s0, 3970
  %s9395 = smov 3
  %v9396 = vld [vmem:[%s9394] ss:$16 sm:%s9395]
  %s9397 = scalar_lea.vmem %s0, 3970
  %s9398 = smov 12
  %v9399 = vld [vmem:[%s9397] ss:$16 sm:%s9398]
  %vm9400 = vcmask 1043458
  %v9401 = vsel %vm9400, %v9399, %v9396
  %s9402 = scalar_lea.vmem %s0, 3970
  %s9403 = smov 48
  %v9404 = vld [vmem:[%s9402] ss:$16 sm:%s9403]
  %vm9405 = vcmask 1045508
  %v9406 = vsel %vm9405, %v9404, %v9401
  %s9407 = scalar_lea.vmem %s0, 3970
  %s9408 = smov 192
  %v9409 = vld [vmem:[%s9407] ss:$16 sm:%s9408]
  %vm9410 = vcmask 1047558
  %v9411 = vsel %vm9410, %v9409, %v9406
  %9412 = vrot.lane.b32.xlu0 %v9411, 32
  %v9413 = vpop.permute.xlu0 %9412
  %vm9414 = vcmask 392448
  %s9415 = scalar_lea.vmem %s1, 496
  %9416 = vst.msk [vmem:[%s9415] sm:$0xff] %vm9414, %v9413
  %s9417 = scalar_lea.vmem %s0, 138
  %s9418 = smov 3
  %v9419 = vld [vmem:[%s9417] ss:$16 sm:%s9418]
  %s9420 = scalar_lea.vmem %s0, 138
  %s9421 = smov 12
  %v9422 = vld [vmem:[%s9420] ss:$16 sm:%s9421]
  %vm9423 = vcmask 1043458
  %v9424 = vsel %vm9423, %v9422, %v9419
  %s9425 = scalar_lea.vmem %s0, 138
  %s9426 = smov 48
  %v9427 = vld [vmem:[%s9425] ss:$16 sm:%s9426]
  %vm9428 = vcmask 1045508
  %v9429 = vsel %vm9428, %v9427, %v9424
  %s9430 = scalar_lea.vmem %s0, 138
  %s9431 = smov 192
  %v9432 = vld [vmem:[%s9430] ss:$16 sm:%s9431]
  %vm9433 = vcmask 1047558
  %v9434 = vsel %vm9433, %v9432, %v9429
  %9435 = vrot.lane.b32.xlu0 %v9434, 32
  %v9436 = vpop.permute.xlu0 %9435
  %vm9437 = vcmask 392448
  %s9438 = scalar_lea.vmem %s1, 24
  %9439 = vst.msk [vmem:[%s9438] sm:$0xff] %vm9437, %v9436
  %s9440 = scalar_lea.vmem %s0, 394
  %s9441 = smov 3
  %v9442 = vld [vmem:[%s9440] ss:$16 sm:%s9441]
  %s9443 = scalar_lea.vmem %s0, 394
  %s9444 = smov 12
  %v9445 = vld [vmem:[%s9443] ss:$16 sm:%s9444]
  %vm9446 = vcmask 1043458
  %v9447 = vsel %vm9446, %v9445, %v9442
  %s9448 = scalar_lea.vmem %s0, 394
  %s9449 = smov 48
  %v9450 = vld [vmem:[%s9448] ss:$16 sm:%s9449]
  %vm9451 = vcmask 1045508
  %v9452 = vsel %vm9451, %v9450, %v9447
  %s9453 = scalar_lea.vmem %s0, 394
  %s9454 = smov 192
  %v9455 = vld [vmem:[%s9453] ss:$16 sm:%s9454]
  %vm9456 = vcmask 1047558
  %v9457 = vsel %vm9456, %v9455, %v9452
  %9458 = vrot.lane.b32.xlu0 %v9457, 32
  %v9459 = vpop.permute.xlu0 %9458
  %vm9460 = vcmask 392448
  %s9461 = scalar_lea.vmem %s1, 56
  %9462 = vst.msk [vmem:[%s9461] sm:$0xff] %vm9460, %v9459
  %s9463 = scalar_lea.vmem %s0, 650
  %s9464 = smov 3
  %v9465 = vld [vmem:[%s9463] ss:$16 sm:%s9464]
  %s9466 = scalar_lea.vmem %s0, 650
  %s9467 = smov 12
  %v9468 = vld [vmem:[%s9466] ss:$16 sm:%s9467]
  %vm9469 = vcmask 1043458
  %v9470 = vsel %vm9469, %v9468, %v9465
  %s9471 = scalar_lea.vmem %s0, 650
  %s9472 = smov 48
  %v9473 = vld [vmem:[%s9471] ss:$16 sm:%s9472]
  %vm9474 = vcmask 1045508
  %v9475 = vsel %vm9474, %v9473, %v9470
  %s9476 = scalar_lea.vmem %s0, 650
  %s9477 = smov 192
  %v9478 = vld [vmem:[%s9476] ss:$16 sm:%s9477]
  %vm9479 = vcmask 1047558
  %v9480 = vsel %vm9479, %v9478, %v9475
  %9481 = vrot.lane.b32.xlu0 %v9480, 32
  %v9482 = vpop.permute.xlu0 %9481
  %vm9483 = vcmask 392448
  %s9484 = scalar_lea.vmem %s1, 88
  %9485 = vst.msk [vmem:[%s9484] sm:$0xff] %vm9483, %v9482
  %s9486 = scalar_lea.vmem %s0, 906
  %s9487 = smov 3
  %v9488 = vld [vmem:[%s9486] ss:$16 sm:%s9487]
  %s9489 = scalar_lea.vmem %s0, 906
  %s9490 = smov 12
  %v9491 = vld [vmem:[%s9489] ss:$16 sm:%s9490]
  %vm9492 = vcmask 1043458
  %v9493 = vsel %vm9492, %v9491, %v9488
  %s9494 = scalar_lea.vmem %s0, 906
  %s9495 = smov 48
  %v9496 = vld [vmem:[%s9494] ss:$16 sm:%s9495]
  %vm9497 = vcmask 1045508
  %v9498 = vsel %vm9497, %v9496, %v9493
  %s9499 = scalar_lea.vmem %s0, 906
  %s9500 = smov 192
  %v9501 = vld [vmem:[%s9499] ss:$16 sm:%s9500]
  %vm9502 = vcmask 1047558
  %v9503 = vsel %vm9502, %v9501, %v9498
  %9504 = vrot.lane.b32.xlu0 %v9503, 32
  %v9505 = vpop.permute.xlu0 %9504
  %vm9506 = vcmask 392448
  %s9507 = scalar_lea.vmem %s1, 120
  %9508 = vst.msk [vmem:[%s9507] sm:$0xff] %vm9506, %v9505
  %s9509 = scalar_lea.vmem %s0, 1162
  %s9510 = smov 3
  %v9511 = vld [vmem:[%s9509] ss:$16 sm:%s9510]
  %s9512 = scalar_lea.vmem %s0, 1162
  %s9513 = smov 12
  %v9514 = vld [vmem:[%s9512] ss:$16 sm:%s9513]
  %vm9515 = vcmask 1043458
  %v9516 = vsel %vm9515, %v9514, %v9511
  %s9517 = scalar_lea.vmem %s0, 1162
  %s9518 = smov 48
  %v9519 = vld [vmem:[%s9517] ss:$16 sm:%s9518]
  %vm9520 = vcmask 1045508
  %v9521 = vsel %vm9520, %v9519, %v9516
  %s9522 = scalar_lea.vmem %s0, 1162
  %s9523 = smov 192
  %v9524 = vld [vmem:[%s9522] ss:$16 sm:%s9523]
  %vm9525 = vcmask 1047558
  %v9526 = vsel %vm9525, %v9524, %v9521
  %9527 = vrot.lane.b32.xlu0 %v9526, 32
  %v9528 = vpop.permute.xlu0 %9527
  %vm9529 = vcmask 392448
  %s9530 = scalar_lea.vmem %s1, 152
  %9531 = vst.msk [vmem:[%s9530] sm:$0xff] %vm9529, %v9528
  %s9532 = scalar_lea.vmem %s0, 1418
  %s9533 = smov 3
  %v9534 = vld [vmem:[%s9532] ss:$16 sm:%s9533]
  %s9535 = scalar_lea.vmem %s0, 1418
  %s9536 = smov 12
  %v9537 = vld [vmem:[%s9535] ss:$16 sm:%s9536]
  %vm9538 = vcmask 1043458
  %v9539 = vsel %vm9538, %v9537, %v9534
  %s9540 = scalar_lea.vmem %s0, 1418
  %s9541 = smov 48
  %v9542 = vld [vmem:[%s9540] ss:$16 sm:%s9541]
  %vm9543 = vcmask 1045508
  %v9544 = vsel %vm9543, %v9542, %v9539
  %s9545 = scalar_lea.vmem %s0, 1418
  %s9546 = smov 192
  %v9547 = vld [vmem:[%s9545] ss:$16 sm:%s9546]
  %vm9548 = vcmask 1047558
  %v9549 = vsel %vm9548, %v9547, %v9544
  %9550 = vrot.lane.b32.xlu0 %v9549, 32
  %v9551 = vpop.permute.xlu0 %9550
  %vm9552 = vcmask 392448
  %s9553 = scalar_lea.vmem %s1, 184
  %9554 = vst.msk [vmem:[%s9553] sm:$0xff] %vm9552, %v9551
  %s9555 = scalar_lea.vmem %s0, 1674
  %s9556 = smov 3
  %v9557 = vld [vmem:[%s9555] ss:$16 sm:%s9556]
  %s9558 = scalar_lea.vmem %s0, 1674
  %s9559 = smov 12
  %v9560 = vld [vmem:[%s9558] ss:$16 sm:%s9559]
  %vm9561 = vcmask 1043458
  %v9562 = vsel %vm9561, %v9560, %v9557
  %s9563 = scalar_lea.vmem %s0, 1674
  %s9564 = smov 48
  %v9565 = vld [vmem:[%s9563] ss:$16 sm:%s9564]
  %vm9566 = vcmask 1045508
  %v9567 = vsel %vm9566, %v9565, %v9562
  %s9568 = scalar_lea.vmem %s0, 1674
  %s9569 = smov 192
  %v9570 = vld [vmem:[%s9568] ss:$16 sm:%s9569]
  %vm9571 = vcmask 1047558
  %v9572 = vsel %vm9571, %v9570, %v9567
  %9573 = vrot.lane.b32.xlu0 %v9572, 32
  %v9574 = vpop.permute.xlu0 %9573
  %vm9575 = vcmask 392448
  %s9576 = scalar_lea.vmem %s1, 216
  %9577 = vst.msk [vmem:[%s9576] sm:$0xff] %vm9575, %v9574
  %s9578 = scalar_lea.vmem %s0, 1930
  %s9579 = smov 3
  %v9580 = vld [vmem:[%s9578] ss:$16 sm:%s9579]
  %s9581 = scalar_lea.vmem %s0, 1930
  %s9582 = smov 12
  %v9583 = vld [vmem:[%s9581] ss:$16 sm:%s9582]
  %vm9584 = vcmask 1043458
  %v9585 = vsel %vm9584, %v9583, %v9580
  %s9586 = scalar_lea.vmem %s0, 1930
  %s9587 = smov 48
  %v9588 = vld [vmem:[%s9586] ss:$16 sm:%s9587]
  %vm9589 = vcmask 1045508
  %v9590 = vsel %vm9589, %v9588, %v9585
  %s9591 = scalar_lea.vmem %s0, 1930
  %s9592 = smov 192
  %v9593 = vld [vmem:[%s9591] ss:$16 sm:%s9592]
  %vm9594 = vcmask 1047558
  %v9595 = vsel %vm9594, %v9593, %v9590
  %9596 = vrot.lane.b32.xlu0 %v9595, 32
  %v9597 = vpop.permute.xlu0 %9596
  %vm9598 = vcmask 392448
  %s9599 = scalar_lea.vmem %s1, 248
  %9600 = vst.msk [vmem:[%s9599] sm:$0xff] %vm9598, %v9597
  %s9601 = scalar_lea.vmem %s0, 2186
  %s9602 = smov 3
  %v9603 = vld [vmem:[%s9601] ss:$16 sm:%s9602]
  %s9604 = scalar_lea.vmem %s0, 2186
  %s9605 = smov 12
  %v9606 = vld [vmem:[%s9604] ss:$16 sm:%s9605]
  %vm9607 = vcmask 1043458
  %v9608 = vsel %vm9607, %v9606, %v9603
  %s9609 = scalar_lea.vmem %s0, 2186
  %s9610 = smov 48
  %v9611 = vld [vmem:[%s9609] ss:$16 sm:%s9610]
  %vm9612 = vcmask 1045508
  %v9613 = vsel %vm9612, %v9611, %v9608
  %s9614 = scalar_lea.vmem %s0, 2186
  %s9615 = smov 192
  %v9616 = vld [vmem:[%s9614] ss:$16 sm:%s9615]
  %vm9617 = vcmask 1047558
  %v9618 = vsel %vm9617, %v9616, %v9613
  %9619 = vrot.lane.b32.xlu0 %v9618, 32
  %v9620 = vpop.permute.xlu0 %9619
  %vm9621 = vcmask 392448
  %s9622 = scalar_lea.vmem %s1, 280
  %9623 = vst.msk [vmem:[%s9622] sm:$0xff] %vm9621, %v9620
  %s9624 = scalar_lea.vmem %s0, 2442
  %s9625 = smov 3
  %v9626 = vld [vmem:[%s9624] ss:$16 sm:%s9625]
  %s9627 = scalar_lea.vmem %s0, 2442
  %s9628 = smov 12
  %v9629 = vld [vmem:[%s9627] ss:$16 sm:%s9628]
  %vm9630 = vcmask 1043458
  %v9631 = vsel %vm9630, %v9629, %v9626
  %s9632 = scalar_lea.vmem %s0, 2442
  %s9633 = smov 48
  %v9634 = vld [vmem:[%s9632] ss:$16 sm:%s9633]
  %vm9635 = vcmask 1045508
  %v9636 = vsel %vm9635, %v9634, %v9631
  %s9637 = scalar_lea.vmem %s0, 2442
  %s9638 = smov 192
  %v9639 = vld [vmem:[%s9637] ss:$16 sm:%s9638]
  %vm9640 = vcmask 1047558
  %v9641 = vsel %vm9640, %v9639, %v9636
  %9642 = vrot.lane.b32.xlu0 %v9641, 32
  %v9643 = vpop.permute.xlu0 %9642
  %vm9644 = vcmask 392448
  %s9645 = scalar_lea.vmem %s1, 312
  %9646 = vst.msk [vmem:[%s9645] sm:$0xff] %vm9644, %v9643
  %s9647 = scalar_lea.vmem %s0, 2698
  %s9648 = smov 3
  %v9649 = vld [vmem:[%s9647] ss:$16 sm:%s9648]
  %s9650 = scalar_lea.vmem %s0, 2698
  %s9651 = smov 12
  %v9652 = vld [vmem:[%s9650] ss:$16 sm:%s9651]
  %vm9653 = vcmask 1043458
  %v9654 = vsel %vm9653, %v9652, %v9649
  %s9655 = scalar_lea.vmem %s0, 2698
  %s9656 = smov 48
  %v9657 = vld [vmem:[%s9655] ss:$16 sm:%s9656]
  %vm9658 = vcmask 1045508
  %v9659 = vsel %vm9658, %v9657, %v9654
  %s9660 = scalar_lea.vmem %s0, 2698
  %s9661 = smov 192
  %v9662 = vld [vmem:[%s9660] ss:$16 sm:%s9661]
  %vm9663 = vcmask 1047558
  %v9664 = vsel %vm9663, %v9662, %v9659
  %9665 = vrot.lane.b32.xlu0 %v9664, 32
  %v9666 = vpop.permute.xlu0 %9665
  %vm9667 = vcmask 392448
  %s9668 = scalar_lea.vmem %s1, 344
  %9669 = vst.msk [vmem:[%s9668] sm:$0xff] %vm9667, %v9666
  %s9670 = scalar_lea.vmem %s0, 2954
  %s9671 = smov 3
  %v9672 = vld [vmem:[%s9670] ss:$16 sm:%s9671]
  %s9673 = scalar_lea.vmem %s0, 2954
  %s9674 = smov 12
  %v9675 = vld [vmem:[%s9673] ss:$16 sm:%s9674]
  %vm9676 = vcmask 1043458
  %v9677 = vsel %vm9676, %v9675, %v9672
  %s9678 = scalar_lea.vmem %s0, 2954
  %s9679 = smov 48
  %v9680 = vld [vmem:[%s9678] ss:$16 sm:%s9679]
  %vm9681 = vcmask 1045508
  %v9682 = vsel %vm9681, %v9680, %v9677
  %s9683 = scalar_lea.vmem %s0, 2954
  %s9684 = smov 192
  %v9685 = vld [vmem:[%s9683] ss:$16 sm:%s9684]
  %vm9686 = vcmask 1047558
  %v9687 = vsel %vm9686, %v9685, %v9682
  %9688 = vrot.lane.b32.xlu0 %v9687, 32
  %v9689 = vpop.permute.xlu0 %9688
  %vm9690 = vcmask 392448
  %s9691 = scalar_lea.vmem %s1, 376
  %9692 = vst.msk [vmem:[%s9691] sm:$0xff] %vm9690, %v9689
  %s9693 = scalar_lea.vmem %s0, 3210
  %s9694 = smov 3
  %v9695 = vld [vmem:[%s9693] ss:$16 sm:%s9694]
  %s9696 = scalar_lea.vmem %s0, 3210
  %s9697 = smov 12
  %v9698 = vld [vmem:[%s9696] ss:$16 sm:%s9697]
  %vm9699 = vcmask 1043458
  %v9700 = vsel %vm9699, %v9698, %v9695
  %s9701 = scalar_lea.vmem %s0, 3210
  %s9702 = smov 48
  %v9703 = vld [vmem:[%s9701] ss:$16 sm:%s9702]
  %vm9704 = vcmask 1045508
  %v9705 = vsel %vm9704, %v9703, %v9700
  %s9706 = scalar_lea.vmem %s0, 3210
  %s9707 = smov 192
  %v9708 = vld [vmem:[%s9706] ss:$16 sm:%s9707]
  %vm9709 = vcmask 1047558
  %v9710 = vsel %vm9709, %v9708, %v9705
  %9711 = vrot.lane.b32.xlu0 %v9710, 32
  %v9712 = vpop.permute.xlu0 %9711
  %vm9713 = vcmask 392448
  %s9714 = scalar_lea.vmem %s1, 408
  %9715 = vst.msk [vmem:[%s9714] sm:$0xff] %vm9713, %v9712
  %s9716 = scalar_lea.vmem %s0, 3466
  %s9717 = smov 3
  %v9718 = vld [vmem:[%s9716] ss:$16 sm:%s9717]
  %s9719 = scalar_lea.vmem %s0, 3466
  %s9720 = smov 12
  %v9721 = vld [vmem:[%s9719] ss:$16 sm:%s9720]
  %vm9722 = vcmask 1043458
  %v9723 = vsel %vm9722, %v9721, %v9718
  %s9724 = scalar_lea.vmem %s0, 3466
  %s9725 = smov 48
  %v9726 = vld [vmem:[%s9724] ss:$16 sm:%s9725]
  %vm9727 = vcmask 1045508
  %v9728 = vsel %vm9727, %v9726, %v9723
  %s9729 = scalar_lea.vmem %s0, 3466
  %s9730 = smov 192
  %v9731 = vld [vmem:[%s9729] ss:$16 sm:%s9730]
  %vm9732 = vcmask 1047558
  %v9733 = vsel %vm9732, %v9731, %v9728
  %9734 = vrot.lane.b32.xlu0 %v9733, 32
  %v9735 = vpop.permute.xlu0 %9734
  %vm9736 = vcmask 392448
  %s9737 = scalar_lea.vmem %s1, 440
  %9738 = vst.msk [vmem:[%s9737] sm:$0xff] %vm9736, %v9735
  %s9739 = scalar_lea.vmem %s0, 3722
  %s9740 = smov 3
  %v9741 = vld [vmem:[%s9739] ss:$16 sm:%s9740]
  %s9742 = scalar_lea.vmem %s0, 3722
  %s9743 = smov 12
  %v9744 = vld [vmem:[%s9742] ss:$16 sm:%s9743]
  %vm9745 = vcmask 1043458
  %v9746 = vsel %vm9745, %v9744, %v9741
  %s9747 = scalar_lea.vmem %s0, 3722
  %s9748 = smov 48
  %v9749 = vld [vmem:[%s9747] ss:$16 sm:%s9748]
  %vm9750 = vcmask 1045508
  %v9751 = vsel %vm9750, %v9749, %v9746
  %s9752 = scalar_lea.vmem %s0, 3722
  %s9753 = smov 192
  %v9754 = vld [vmem:[%s9752] ss:$16 sm:%s9753]
  %vm9755 = vcmask 1047558
  %v9756 = vsel %vm9755, %v9754, %v9751
  %9757 = vrot.lane.b32.xlu0 %v9756, 32
  %v9758 = vpop.permute.xlu0 %9757
  %vm9759 = vcmask 392448
  %s9760 = scalar_lea.vmem %s1, 472
  %9761 = vst.msk [vmem:[%s9760] sm:$0xff] %vm9759, %v9758
  %s9762 = scalar_lea.vmem %s0, 3978
  %s9763 = smov 3
  %v9764 = vld [vmem:[%s9762] ss:$16 sm:%s9763]
  %s9765 = scalar_lea.vmem %s0, 3978
  %s9766 = smov 12
  %v9767 = vld [vmem:[%s9765] ss:$16 sm:%s9766]
  %vm9768 = vcmask 1043458
  %v9769 = vsel %vm9768, %v9767, %v9764
  %s9770 = scalar_lea.vmem %s0, 3978
  %s9771 = smov 48
  %v9772 = vld [vmem:[%s9770] ss:$16 sm:%s9771]
  %vm9773 = vcmask 1045508
  %v9774 = vsel %vm9773, %v9772, %v9769
  %s9775 = scalar_lea.vmem %s0, 3978
  %s9776 = smov 192
  %v9777 = vld [vmem:[%s9775] ss:$16 sm:%s9776]
  %vm9778 = vcmask 1047558
  %v9779 = vsel %vm9778, %v9777, %v9774
  %9780 = vrot.lane.b32.xlu0 %v9779, 32
  %v9781 = vpop.permute.xlu0 %9780
  %vm9782 = vcmask 392448
  %s9783 = scalar_lea.vmem %s1, 504
  %9784 = vst.msk [vmem:[%s9783] sm:$0xff] %vm9782, %v9781
  %s9785 = scalar_lea.vmem %s0, 1
  %s9786 = smov 3
  %v9787 = vld [vmem:[%s9785] ss:$16 sm:%s9786]
  %s9788 = scalar_lea.vmem %s0, 1
  %s9789 = smov 12
  %v9790 = vld [vmem:[%s9788] ss:$16 sm:%s9789]
  %vm9791 = vcmask 1043458
  %v9792 = vsel %vm9791, %v9790, %v9787
  %s9793 = scalar_lea.vmem %s0, 1
  %s9794 = smov 48
  %v9795 = vld [vmem:[%s9793] ss:$16 sm:%s9794]
  %vm9796 = vcmask 1045508
  %v9797 = vsel %vm9796, %v9795, %v9792
  %s9798 = scalar_lea.vmem %s0, 1
  %s9799 = smov 192
  %v9800 = vld [vmem:[%s9798] ss:$16 sm:%s9799]
  %vm9801 = vcmask 1047558
  %v9802 = vsel %vm9801, %v9800, %v9797
  %9803 = vrot.lane.b32.xlu0 %v9802, 16
  %v9804 = vpop.permute.xlu0 %9803
  %vm9805 = vcmask 261248
  %9806 = vst.msk [vmem:[%s1] sm:$0xff] %vm9805, %v9804
  %s9807 = scalar_lea.vmem %s0, 257
  %s9808 = smov 3
  %v9809 = vld [vmem:[%s9807] ss:$16 sm:%s9808]
  %s9810 = scalar_lea.vmem %s0, 257
  %s9811 = smov 12
  %v9812 = vld [vmem:[%s9810] ss:$16 sm:%s9811]
  %vm9813 = vcmask 1043458
  %v9814 = vsel %vm9813, %v9812, %v9809
  %s9815 = scalar_lea.vmem %s0, 257
  %s9816 = smov 48
  %v9817 = vld [vmem:[%s9815] ss:$16 sm:%s9816]
  %vm9818 = vcmask 1045508
  %v9819 = vsel %vm9818, %v9817, %v9814
  %s9820 = scalar_lea.vmem %s0, 257
  %s9821 = smov 192
  %v9822 = vld [vmem:[%s9820] ss:$16 sm:%s9821]
  %vm9823 = vcmask 1047558
  %v9824 = vsel %vm9823, %v9822, %v9819
  %9825 = vrot.lane.b32.xlu0 %v9824, 16
  %v9826 = vpop.permute.xlu0 %9825
  %vm9827 = vcmask 261248
  %s9828 = scalar_lea.vmem %s1, 32
  %9829 = vst.msk [vmem:[%s9828] sm:$0xff] %vm9827, %v9826
  %s9830 = scalar_lea.vmem %s0, 513
  %s9831 = smov 3
  %v9832 = vld [vmem:[%s9830] ss:$16 sm:%s9831]
  %s9833 = scalar_lea.vmem %s0, 513
  %s9834 = smov 12
  %v9835 = vld [vmem:[%s9833] ss:$16 sm:%s9834]
  %vm9836 = vcmask 1043458
  %v9837 = vsel %vm9836, %v9835, %v9832
  %s9838 = scalar_lea.vmem %s0, 513
  %s9839 = smov 48
  %v9840 = vld [vmem:[%s9838] ss:$16 sm:%s9839]
  %vm9841 = vcmask 1045508
  %v9842 = vsel %vm9841, %v9840, %v9837
  %s9843 = scalar_lea.vmem %s0, 513
  %s9844 = smov 192
  %v9845 = vld [vmem:[%s9843] ss:$16 sm:%s9844]
  %vm9846 = vcmask 1047558
  %v9847 = vsel %vm9846, %v9845, %v9842
  %9848 = vrot.lane.b32.xlu0 %v9847, 16
  %v9849 = vpop.permute.xlu0 %9848
  %vm9850 = vcmask 261248
  %s9851 = scalar_lea.vmem %s1, 64
  %9852 = vst.msk [vmem:[%s9851] sm:$0xff] %vm9850, %v9849
  %s9853 = scalar_lea.vmem %s0, 769
  %s9854 = smov 3
  %v9855 = vld [vmem:[%s9853] ss:$16 sm:%s9854]
  %s9856 = scalar_lea.vmem %s0, 769
  %s9857 = smov 12
  %v9858 = vld [vmem:[%s9856] ss:$16 sm:%s9857]
  %vm9859 = vcmask 1043458
  %v9860 = vsel %vm9859, %v9858, %v9855
  %s9861 = scalar_lea.vmem %s0, 769
  %s9862 = smov 48
  %v9863 = vld [vmem:[%s9861] ss:$16 sm:%s9862]
  %vm9864 = vcmask 1045508
  %v9865 = vsel %vm9864, %v9863, %v9860
  %s9866 = scalar_lea.vmem %s0, 769
  %s9867 = smov 192
  %v9868 = vld [vmem:[%s9866] ss:$16 sm:%s9867]
  %vm9869 = vcmask 1047558
  %v9870 = vsel %vm9869, %v9868, %v9865
  %9871 = vrot.lane.b32.xlu0 %v9870, 16
  %v9872 = vpop.permute.xlu0 %9871
  %vm9873 = vcmask 261248
  %s9874 = scalar_lea.vmem %s1, 96
  %9875 = vst.msk [vmem:[%s9874] sm:$0xff] %vm9873, %v9872
  %s9876 = scalar_lea.vmem %s0, 1025
  %s9877 = smov 3
  %v9878 = vld [vmem:[%s9876] ss:$16 sm:%s9877]
  %s9879 = scalar_lea.vmem %s0, 1025
  %s9880 = smov 12
  %v9881 = vld [vmem:[%s9879] ss:$16 sm:%s9880]
  %vm9882 = vcmask 1043458
  %v9883 = vsel %vm9882, %v9881, %v9878
  %s9884 = scalar_lea.vmem %s0, 1025
  %s9885 = smov 48
  %v9886 = vld [vmem:[%s9884] ss:$16 sm:%s9885]
  %vm9887 = vcmask 1045508
  %v9888 = vsel %vm9887, %v9886, %v9883
  %s9889 = scalar_lea.vmem %s0, 1025
  %s9890 = smov 192
  %v9891 = vld [vmem:[%s9889] ss:$16 sm:%s9890]
  %vm9892 = vcmask 1047558
  %v9893 = vsel %vm9892, %v9891, %v9888
  %9894 = vrot.lane.b32.xlu0 %v9893, 16
  %v9895 = vpop.permute.xlu0 %9894
  %vm9896 = vcmask 261248
  %s9897 = scalar_lea.vmem %s1, 128
  %9898 = vst.msk [vmem:[%s9897] sm:$0xff] %vm9896, %v9895
  %s9899 = scalar_lea.vmem %s0, 1281
  %s9900 = smov 3
  %v9901 = vld [vmem:[%s9899] ss:$16 sm:%s9900]
  %s9902 = scalar_lea.vmem %s0, 1281
  %s9903 = smov 12
  %v9904 = vld [vmem:[%s9902] ss:$16 sm:%s9903]
  %vm9905 = vcmask 1043458
  %v9906 = vsel %vm9905, %v9904, %v9901
  %s9907 = scalar_lea.vmem %s0, 1281
  %s9908 = smov 48
  %v9909 = vld [vmem:[%s9907] ss:$16 sm:%s9908]
  %vm9910 = vcmask 1045508
  %v9911 = vsel %vm9910, %v9909, %v9906
  %s9912 = scalar_lea.vmem %s0, 1281
  %s9913 = smov 192
  %v9914 = vld [vmem:[%s9912] ss:$16 sm:%s9913]
  %vm9915 = vcmask 1047558
  %v9916 = vsel %vm9915, %v9914, %v9911
  %9917 = vrot.lane.b32.xlu0 %v9916, 16
  %v9918 = vpop.permute.xlu0 %9917
  %vm9919 = vcmask 261248
  %s9920 = scalar_lea.vmem %s1, 160
  %9921 = vst.msk [vmem:[%s9920] sm:$0xff] %vm9919, %v9918
  %s9922 = scalar_lea.vmem %s0, 1537
  %s9923 = smov 3
  %v9924 = vld [vmem:[%s9922] ss:$16 sm:%s9923]
  %s9925 = scalar_lea.vmem %s0, 1537
  %s9926 = smov 12
  %v9927 = vld [vmem:[%s9925] ss:$16 sm:%s9926]
  %vm9928 = vcmask 1043458
  %v9929 = vsel %vm9928, %v9927, %v9924
  %s9930 = scalar_lea.vmem %s0, 1537
  %s9931 = smov 48
  %v9932 = vld [vmem:[%s9930] ss:$16 sm:%s9931]
  %vm9933 = vcmask 1045508
  %v9934 = vsel %vm9933, %v9932, %v9929
  %s9935 = scalar_lea.vmem %s0, 1537
  %s9936 = smov 192
  %v9937 = vld [vmem:[%s9935] ss:$16 sm:%s9936]
  %vm9938 = vcmask 1047558
  %v9939 = vsel %vm9938, %v9937, %v9934
  %9940 = vrot.lane.b32.xlu0 %v9939, 16
  %v9941 = vpop.permute.xlu0 %9940
  %vm9942 = vcmask 261248
  %s9943 = scalar_lea.vmem %s1, 192
  %9944 = vst.msk [vmem:[%s9943] sm:$0xff] %vm9942, %v9941
  %s9945 = scalar_lea.vmem %s0, 1793
  %s9946 = smov 3
  %v9947 = vld [vmem:[%s9945] ss:$16 sm:%s9946]
  %s9948 = scalar_lea.vmem %s0, 1793
  %s9949 = smov 12
  %v9950 = vld [vmem:[%s9948] ss:$16 sm:%s9949]
  %vm9951 = vcmask 1043458
  %v9952 = vsel %vm9951, %v9950, %v9947
  %s9953 = scalar_lea.vmem %s0, 1793
  %s9954 = smov 48
  %v9955 = vld [vmem:[%s9953] ss:$16 sm:%s9954]
  %vm9956 = vcmask 1045508
  %v9957 = vsel %vm9956, %v9955, %v9952
  %s9958 = scalar_lea.vmem %s0, 1793
  %s9959 = smov 192
  %v9960 = vld [vmem:[%s9958] ss:$16 sm:%s9959]
  %vm9961 = vcmask 1047558
  %v9962 = vsel %vm9961, %v9960, %v9957
  %9963 = vrot.lane.b32.xlu0 %v9962, 16
  %v9964 = vpop.permute.xlu0 %9963
  %vm9965 = vcmask 261248
  %s9966 = scalar_lea.vmem %s1, 224
  %9967 = vst.msk [vmem:[%s9966] sm:$0xff] %vm9965, %v9964
  %s9968 = scalar_lea.vmem %s0, 2049
  %s9969 = smov 3
  %v9970 = vld [vmem:[%s9968] ss:$16 sm:%s9969]
  %s9971 = scalar_lea.vmem %s0, 2049
  %s9972 = smov 12
  %v9973 = vld [vmem:[%s9971] ss:$16 sm:%s9972]
  %vm9974 = vcmask 1043458
  %v9975 = vsel %vm9974, %v9973, %v9970
  %s9976 = scalar_lea.vmem %s0, 2049
  %s9977 = smov 48
  %v9978 = vld [vmem:[%s9976] ss:$16 sm:%s9977]
  %vm9979 = vcmask 1045508
  %v9980 = vsel %vm9979, %v9978, %v9975
  %s9981 = scalar_lea.vmem %s0, 2049
  %s9982 = smov 192
  %v9983 = vld [vmem:[%s9981] ss:$16 sm:%s9982]
  %vm9984 = vcmask 1047558
  %v9985 = vsel %vm9984, %v9983, %v9980
  %9986 = vrot.lane.b32.xlu0 %v9985, 16
  %v9987 = vpop.permute.xlu0 %9986
  %vm9988 = vcmask 261248
  %s9989 = scalar_lea.vmem %s1, 256
  %9990 = vst.msk [vmem:[%s9989] sm:$0xff] %vm9988, %v9987
  %s9991 = scalar_lea.vmem %s0, 2305
  %s9992 = smov 3
  %v9993 = vld [vmem:[%s9991] ss:$16 sm:%s9992]
  %s9994 = scalar_lea.vmem %s0, 2305
  %s9995 = smov 12
  %v9996 = vld [vmem:[%s9994] ss:$16 sm:%s9995]
  %vm9997 = vcmask 1043458
  %v9998 = vsel %vm9997, %v9996, %v9993
  %s9999 = scalar_lea.vmem %s0, 2305
  %s10000 = smov 48
  %v10001 = vld [vmem:[%s9999] ss:$16 sm:%s10000]
  %vm10002 = vcmask 1045508
  %v10003 = vsel %vm10002, %v10001, %v9998
  %s10004 = scalar_lea.vmem %s0, 2305
  %s10005 = smov 192
  %v10006 = vld [vmem:[%s10004] ss:$16 sm:%s10005]
  %vm10007 = vcmask 1047558
  %v10008 = vsel %vm10007, %v10006, %v10003
  %10009 = vrot.lane.b32.xlu0 %v10008, 16
  %v10010 = vpop.permute.xlu0 %10009
  %vm10011 = vcmask 261248
  %s10012 = scalar_lea.vmem %s1, 288
  %10013 = vst.msk [vmem:[%s10012] sm:$0xff] %vm10011, %v10010
  %s10014 = scalar_lea.vmem %s0, 2561
  %s10015 = smov 3
  %v10016 = vld [vmem:[%s10014] ss:$16 sm:%s10015]
  %s10017 = scalar_lea.vmem %s0, 2561
  %s10018 = smov 12
  %v10019 = vld [vmem:[%s10017] ss:$16 sm:%s10018]
  %vm10020 = vcmask 1043458
  %v10021 = vsel %vm10020, %v10019, %v10016
  %s10022 = scalar_lea.vmem %s0, 2561
  %s10023 = smov 48
  %v10024 = vld [vmem:[%s10022] ss:$16 sm:%s10023]
  %vm10025 = vcmask 1045508
  %v10026 = vsel %vm10025, %v10024, %v10021
  %s10027 = scalar_lea.vmem %s0, 2561
  %s10028 = smov 192
  %v10029 = vld [vmem:[%s10027] ss:$16 sm:%s10028]
  %vm10030 = vcmask 1047558
  %v10031 = vsel %vm10030, %v10029, %v10026
  %10032 = vrot.lane.b32.xlu0 %v10031, 16
  %v10033 = vpop.permute.xlu0 %10032
  %vm10034 = vcmask 261248
  %s10035 = scalar_lea.vmem %s1, 320
  %10036 = vst.msk [vmem:[%s10035] sm:$0xff] %vm10034, %v10033
  %s10037 = scalar_lea.vmem %s0, 2817
  %s10038 = smov 3
  %v10039 = vld [vmem:[%s10037] ss:$16 sm:%s10038]
  %s10040 = scalar_lea.vmem %s0, 2817
  %s10041 = smov 12
  %v10042 = vld [vmem:[%s10040] ss:$16 sm:%s10041]
  %vm10043 = vcmask 1043458
  %v10044 = vsel %vm10043, %v10042, %v10039
  %s10045 = scalar_lea.vmem %s0, 2817
  %s10046 = smov 48
  %v10047 = vld [vmem:[%s10045] ss:$16 sm:%s10046]
  %vm10048 = vcmask 1045508
  %v10049 = vsel %vm10048, %v10047, %v10044
  %s10050 = scalar_lea.vmem %s0, 2817
  %s10051 = smov 192
  %v10052 = vld [vmem:[%s10050] ss:$16 sm:%s10051]
  %vm10053 = vcmask 1047558
  %v10054 = vsel %vm10053, %v10052, %v10049
  %10055 = vrot.lane.b32.xlu0 %v10054, 16
  %v10056 = vpop.permute.xlu0 %10055
  %vm10057 = vcmask 261248
  %s10058 = scalar_lea.vmem %s1, 352
  %10059 = vst.msk [vmem:[%s10058] sm:$0xff] %vm10057, %v10056
  %s10060 = scalar_lea.vmem %s0, 3073
  %s10061 = smov 3
  %v10062 = vld [vmem:[%s10060] ss:$16 sm:%s10061]
  %s10063 = scalar_lea.vmem %s0, 3073
  %s10064 = smov 12
  %v10065 = vld [vmem:[%s10063] ss:$16 sm:%s10064]
  %vm10066 = vcmask 1043458
  %v10067 = vsel %vm10066, %v10065, %v10062
  %s10068 = scalar_lea.vmem %s0, 3073
  %s10069 = smov 48
  %v10070 = vld [vmem:[%s10068] ss:$16 sm:%s10069]
  %vm10071 = vcmask 1045508
  %v10072 = vsel %vm10071, %v10070, %v10067
  %s10073 = scalar_lea.vmem %s0, 3073
  %s10074 = smov 192
  %v10075 = vld [vmem:[%s10073] ss:$16 sm:%s10074]
  %vm10076 = vcmask 1047558
  %v10077 = vsel %vm10076, %v10075, %v10072
  %10078 = vrot.lane.b32.xlu0 %v10077, 16
  %v10079 = vpop.permute.xlu0 %10078
  %vm10080 = vcmask 261248
  %s10081 = scalar_lea.vmem %s1, 384
  %10082 = vst.msk [vmem:[%s10081] sm:$0xff] %vm10080, %v10079
  %s10083 = scalar_lea.vmem %s0, 3329
  %s10084 = smov 3
  %v10085 = vld [vmem:[%s10083] ss:$16 sm:%s10084]
  %s10086 = scalar_lea.vmem %s0, 3329
  %s10087 = smov 12
  %v10088 = vld [vmem:[%s10086] ss:$16 sm:%s10087]
  %vm10089 = vcmask 1043458
  %v10090 = vsel %vm10089, %v10088, %v10085
  %s10091 = scalar_lea.vmem %s0, 3329
  %s10092 = smov 48
  %v10093 = vld [vmem:[%s10091] ss:$16 sm:%s10092]
  %vm10094 = vcmask 1045508
  %v10095 = vsel %vm10094, %v10093, %v10090
  %s10096 = scalar_lea.vmem %s0, 3329
  %s10097 = smov 192
  %v10098 = vld [vmem:[%s10096] ss:$16 sm:%s10097]
  %vm10099 = vcmask 1047558
  %v10100 = vsel %vm10099, %v10098, %v10095
  %10101 = vrot.lane.b32.xlu0 %v10100, 16
  %v10102 = vpop.permute.xlu0 %10101
  %vm10103 = vcmask 261248
  %s10104 = scalar_lea.vmem %s1, 416
  %10105 = vst.msk [vmem:[%s10104] sm:$0xff] %vm10103, %v10102
  %s10106 = scalar_lea.vmem %s0, 3585
  %s10107 = smov 3
  %v10108 = vld [vmem:[%s10106] ss:$16 sm:%s10107]
  %s10109 = scalar_lea.vmem %s0, 3585
  %s10110 = smov 12
  %v10111 = vld [vmem:[%s10109] ss:$16 sm:%s10110]
  %vm10112 = vcmask 1043458
  %v10113 = vsel %vm10112, %v10111, %v10108
  %s10114 = scalar_lea.vmem %s0, 3585
  %s10115 = smov 48
  %v10116 = vld [vmem:[%s10114] ss:$16 sm:%s10115]
  %vm10117 = vcmask 1045508
  %v10118 = vsel %vm10117, %v10116, %v10113
  %s10119 = scalar_lea.vmem %s0, 3585
  %s10120 = smov 192
  %v10121 = vld [vmem:[%s10119] ss:$16 sm:%s10120]
  %vm10122 = vcmask 1047558
  %v10123 = vsel %vm10122, %v10121, %v10118
  %10124 = vrot.lane.b32.xlu0 %v10123, 16
  %v10125 = vpop.permute.xlu0 %10124
  %vm10126 = vcmask 261248
  %s10127 = scalar_lea.vmem %s1, 448
  %10128 = vst.msk [vmem:[%s10127] sm:$0xff] %vm10126, %v10125
  %s10129 = scalar_lea.vmem %s0, 3841
  %s10130 = smov 3
  %v10131 = vld [vmem:[%s10129] ss:$16 sm:%s10130]
  %s10132 = scalar_lea.vmem %s0, 3841
  %s10133 = smov 12
  %v10134 = vld [vmem:[%s10132] ss:$16 sm:%s10133]
  %vm10135 = vcmask 1043458
  %v10136 = vsel %vm10135, %v10134, %v10131
  %s10137 = scalar_lea.vmem %s0, 3841
  %s10138 = smov 48
  %v10139 = vld [vmem:[%s10137] ss:$16 sm:%s10138]
  %vm10140 = vcmask 1045508
  %v10141 = vsel %vm10140, %v10139, %v10136
  %s10142 = scalar_lea.vmem %s0, 3841
  %s10143 = smov 192
  %v10144 = vld [vmem:[%s10142] ss:$16 sm:%s10143]
  %vm10145 = vcmask 1047558
  %v10146 = vsel %vm10145, %v10144, %v10141
  %10147 = vrot.lane.b32.xlu0 %v10146, 16
  %v10148 = vpop.permute.xlu0 %10147
  %vm10149 = vcmask 261248
  %s10150 = scalar_lea.vmem %s1, 480
  %10151 = vst.msk [vmem:[%s10150] sm:$0xff] %vm10149, %v10148
  %s10152 = scalar_lea.vmem %s0, 9
  %s10153 = smov 3
  %v10154 = vld [vmem:[%s10152] ss:$16 sm:%s10153]
  %s10155 = scalar_lea.vmem %s0, 9
  %s10156 = smov 12
  %v10157 = vld [vmem:[%s10155] ss:$16 sm:%s10156]
  %vm10158 = vcmask 1043458
  %v10159 = vsel %vm10158, %v10157, %v10154
  %s10160 = scalar_lea.vmem %s0, 9
  %s10161 = smov 48
  %v10162 = vld [vmem:[%s10160] ss:$16 sm:%s10161]
  %vm10163 = vcmask 1045508
  %v10164 = vsel %vm10163, %v10162, %v10159
  %s10165 = scalar_lea.vmem %s0, 9
  %s10166 = smov 192
  %v10167 = vld [vmem:[%s10165] ss:$16 sm:%s10166]
  %vm10168 = vcmask 1047558
  %v10169 = vsel %vm10168, %v10167, %v10164
  %10170 = vrot.lane.b32.xlu0 %v10169, 16
  %v10171 = vpop.permute.xlu0 %10170
  %vm10172 = vcmask 261248
  %s10173 = scalar_lea.vmem %s1, 8
  %10174 = vst.msk [vmem:[%s10173] sm:$0xff] %vm10172, %v10171
  %s10175 = scalar_lea.vmem %s0, 265
  %s10176 = smov 3
  %v10177 = vld [vmem:[%s10175] ss:$16 sm:%s10176]
  %s10178 = scalar_lea.vmem %s0, 265
  %s10179 = smov 12
  %v10180 = vld [vmem:[%s10178] ss:$16 sm:%s10179]
  %vm10181 = vcmask 1043458
  %v10182 = vsel %vm10181, %v10180, %v10177
  %s10183 = scalar_lea.vmem %s0, 265
  %s10184 = smov 48
  %v10185 = vld [vmem:[%s10183] ss:$16 sm:%s10184]
  %vm10186 = vcmask 1045508
  %v10187 = vsel %vm10186, %v10185, %v10182
  %s10188 = scalar_lea.vmem %s0, 265
  %s10189 = smov 192
  %v10190 = vld [vmem:[%s10188] ss:$16 sm:%s10189]
  %vm10191 = vcmask 1047558
  %v10192 = vsel %vm10191, %v10190, %v10187
  %10193 = vrot.lane.b32.xlu0 %v10192, 16
  %v10194 = vpop.permute.xlu0 %10193
  %vm10195 = vcmask 261248
  %s10196 = scalar_lea.vmem %s1, 40
  %10197 = vst.msk [vmem:[%s10196] sm:$0xff] %vm10195, %v10194
  %s10198 = scalar_lea.vmem %s0, 521
  %s10199 = smov 3
  %v10200 = vld [vmem:[%s10198] ss:$16 sm:%s10199]
  %s10201 = scalar_lea.vmem %s0, 521
  %s10202 = smov 12
  %v10203 = vld [vmem:[%s10201] ss:$16 sm:%s10202]
  %vm10204 = vcmask 1043458
  %v10205 = vsel %vm10204, %v10203, %v10200
  %s10206 = scalar_lea.vmem %s0, 521
  %s10207 = smov 48
  %v10208 = vld [vmem:[%s10206] ss:$16 sm:%s10207]
  %vm10209 = vcmask 1045508
  %v10210 = vsel %vm10209, %v10208, %v10205
  %s10211 = scalar_lea.vmem %s0, 521
  %s10212 = smov 192
  %v10213 = vld [vmem:[%s10211] ss:$16 sm:%s10212]
  %vm10214 = vcmask 1047558
  %v10215 = vsel %vm10214, %v10213, %v10210
  %10216 = vrot.lane.b32.xlu0 %v10215, 16
  %v10217 = vpop.permute.xlu0 %10216
  %vm10218 = vcmask 261248
  %s10219 = scalar_lea.vmem %s1, 72
  %10220 = vst.msk [vmem:[%s10219] sm:$0xff] %vm10218, %v10217
  %s10221 = scalar_lea.vmem %s0, 777
  %s10222 = smov 3
  %v10223 = vld [vmem:[%s10221] ss:$16 sm:%s10222]
  %s10224 = scalar_lea.vmem %s0, 777
  %s10225 = smov 12
  %v10226 = vld [vmem:[%s10224] ss:$16 sm:%s10225]
  %vm10227 = vcmask 1043458
  %v10228 = vsel %vm10227, %v10226, %v10223
  %s10229 = scalar_lea.vmem %s0, 777
  %s10230 = smov 48
  %v10231 = vld [vmem:[%s10229] ss:$16 sm:%s10230]
  %vm10232 = vcmask 1045508
  %v10233 = vsel %vm10232, %v10231, %v10228
  %s10234 = scalar_lea.vmem %s0, 777
  %s10235 = smov 192
  %v10236 = vld [vmem:[%s10234] ss:$16 sm:%s10235]
  %vm10237 = vcmask 1047558
  %v10238 = vsel %vm10237, %v10236, %v10233
  %10239 = vrot.lane.b32.xlu0 %v10238, 16
  %v10240 = vpop.permute.xlu0 %10239
  %vm10241 = vcmask 261248
  %s10242 = scalar_lea.vmem %s1, 104
  %10243 = vst.msk [vmem:[%s10242] sm:$0xff] %vm10241, %v10240
  %s10244 = scalar_lea.vmem %s0, 1033
  %s10245 = smov 3
  %v10246 = vld [vmem:[%s10244] ss:$16 sm:%s10245]
  %s10247 = scalar_lea.vmem %s0, 1033
  %s10248 = smov 12
  %v10249 = vld [vmem:[%s10247] ss:$16 sm:%s10248]
  %vm10250 = vcmask 1043458
  %v10251 = vsel %vm10250, %v10249, %v10246
  %s10252 = scalar_lea.vmem %s0, 1033
  %s10253 = smov 48
  %v10254 = vld [vmem:[%s10252] ss:$16 sm:%s10253]
  %vm10255 = vcmask 1045508
  %v10256 = vsel %vm10255, %v10254, %v10251
  %s10257 = scalar_lea.vmem %s0, 1033
  %s10258 = smov 192
  %v10259 = vld [vmem:[%s10257] ss:$16 sm:%s10258]
  %vm10260 = vcmask 1047558
  %v10261 = vsel %vm10260, %v10259, %v10256
  %10262 = vrot.lane.b32.xlu0 %v10261, 16
  %v10263 = vpop.permute.xlu0 %10262
  %vm10264 = vcmask 261248
  %s10265 = scalar_lea.vmem %s1, 136
  %10266 = vst.msk [vmem:[%s10265] sm:$0xff] %vm10264, %v10263
  %s10267 = scalar_lea.vmem %s0, 1289
  %s10268 = smov 3
  %v10269 = vld [vmem:[%s10267] ss:$16 sm:%s10268]
  %s10270 = scalar_lea.vmem %s0, 1289
  %s10271 = smov 12
  %v10272 = vld [vmem:[%s10270] ss:$16 sm:%s10271]
  %vm10273 = vcmask 1043458
  %v10274 = vsel %vm10273, %v10272, %v10269
  %s10275 = scalar_lea.vmem %s0, 1289
  %s10276 = smov 48
  %v10277 = vld [vmem:[%s10275] ss:$16 sm:%s10276]
  %vm10278 = vcmask 1045508
  %v10279 = vsel %vm10278, %v10277, %v10274
  %s10280 = scalar_lea.vmem %s0, 1289
  %s10281 = smov 192
  %v10282 = vld [vmem:[%s10280] ss:$16 sm:%s10281]
  %vm10283 = vcmask 1047558
  %v10284 = vsel %vm10283, %v10282, %v10279
  %10285 = vrot.lane.b32.xlu0 %v10284, 16
  %v10286 = vpop.permute.xlu0 %10285
  %vm10287 = vcmask 261248
  %s10288 = scalar_lea.vmem %s1, 168
  %10289 = vst.msk [vmem:[%s10288] sm:$0xff] %vm10287, %v10286
  %s10290 = scalar_lea.vmem %s0, 1545
  %s10291 = smov 3
  %v10292 = vld [vmem:[%s10290] ss:$16 sm:%s10291]
  %s10293 = scalar_lea.vmem %s0, 1545
  %s10294 = smov 12
  %v10295 = vld [vmem:[%s10293] ss:$16 sm:%s10294]
  %vm10296 = vcmask 1043458
  %v10297 = vsel %vm10296, %v10295, %v10292
  %s10298 = scalar_lea.vmem %s0, 1545
  %s10299 = smov 48
  %v10300 = vld [vmem:[%s10298] ss:$16 sm:%s10299]
  %vm10301 = vcmask 1045508
  %v10302 = vsel %vm10301, %v10300, %v10297
  %s10303 = scalar_lea.vmem %s0, 1545
  %s10304 = smov 192
  %v10305 = vld [vmem:[%s10303] ss:$16 sm:%s10304]
  %vm10306 = vcmask 1047558
  %v10307 = vsel %vm10306, %v10305, %v10302
  %10308 = vrot.lane.b32.xlu0 %v10307, 16
  %v10309 = vpop.permute.xlu0 %10308
  %vm10310 = vcmask 261248
  %s10311 = scalar_lea.vmem %s1, 200
  %10312 = vst.msk [vmem:[%s10311] sm:$0xff] %vm10310, %v10309
  %s10313 = scalar_lea.vmem %s0, 1801
  %s10314 = smov 3
  %v10315 = vld [vmem:[%s10313] ss:$16 sm:%s10314]
  %s10316 = scalar_lea.vmem %s0, 1801
  %s10317 = smov 12
  %v10318 = vld [vmem:[%s10316] ss:$16 sm:%s10317]
  %vm10319 = vcmask 1043458
  %v10320 = vsel %vm10319, %v10318, %v10315
  %s10321 = scalar_lea.vmem %s0, 1801
  %s10322 = smov 48
  %v10323 = vld [vmem:[%s10321] ss:$16 sm:%s10322]
  %vm10324 = vcmask 1045508
  %v10325 = vsel %vm10324, %v10323, %v10320
  %s10326 = scalar_lea.vmem %s0, 1801
  %s10327 = smov 192
  %v10328 = vld [vmem:[%s10326] ss:$16 sm:%s10327]
  %vm10329 = vcmask 1047558
  %v10330 = vsel %vm10329, %v10328, %v10325
  %10331 = vrot.lane.b32.xlu0 %v10330, 16
  %v10332 = vpop.permute.xlu0 %10331
  %vm10333 = vcmask 261248
  %s10334 = scalar_lea.vmem %s1, 232
  %10335 = vst.msk [vmem:[%s10334] sm:$0xff] %vm10333, %v10332
  %s10336 = scalar_lea.vmem %s0, 2057
  %s10337 = smov 3
  %v10338 = vld [vmem:[%s10336] ss:$16 sm:%s10337]
  %s10339 = scalar_lea.vmem %s0, 2057
  %s10340 = smov 12
  %v10341 = vld [vmem:[%s10339] ss:$16 sm:%s10340]
  %vm10342 = vcmask 1043458
  %v10343 = vsel %vm10342, %v10341, %v10338
  %s10344 = scalar_lea.vmem %s0, 2057
  %s10345 = smov 48
  %v10346 = vld [vmem:[%s10344] ss:$16 sm:%s10345]
  %vm10347 = vcmask 1045508
  %v10348 = vsel %vm10347, %v10346, %v10343
  %s10349 = scalar_lea.vmem %s0, 2057
  %s10350 = smov 192
  %v10351 = vld [vmem:[%s10349] ss:$16 sm:%s10350]
  %vm10352 = vcmask 1047558
  %v10353 = vsel %vm10352, %v10351, %v10348
  %10354 = vrot.lane.b32.xlu0 %v10353, 16
  %v10355 = vpop.permute.xlu0 %10354
  %vm10356 = vcmask 261248
  %s10357 = scalar_lea.vmem %s1, 264
  %10358 = vst.msk [vmem:[%s10357] sm:$0xff] %vm10356, %v10355
  %s10359 = scalar_lea.vmem %s0, 2313
  %s10360 = smov 3
  %v10361 = vld [vmem:[%s10359] ss:$16 sm:%s10360]
  %s10362 = scalar_lea.vmem %s0, 2313
  %s10363 = smov 12
  %v10364 = vld [vmem:[%s10362] ss:$16 sm:%s10363]
  %vm10365 = vcmask 1043458
  %v10366 = vsel %vm10365, %v10364, %v10361
  %s10367 = scalar_lea.vmem %s0, 2313
  %s10368 = smov 48
  %v10369 = vld [vmem:[%s10367] ss:$16 sm:%s10368]
  %vm10370 = vcmask 1045508
  %v10371 = vsel %vm10370, %v10369, %v10366
  %s10372 = scalar_lea.vmem %s0, 2313
  %s10373 = smov 192
  %v10374 = vld [vmem:[%s10372] ss:$16 sm:%s10373]
  %vm10375 = vcmask 1047558
  %v10376 = vsel %vm10375, %v10374, %v10371
  %10377 = vrot.lane.b32.xlu0 %v10376, 16
  %v10378 = vpop.permute.xlu0 %10377
  %vm10379 = vcmask 261248
  %s10380 = scalar_lea.vmem %s1, 296
  %10381 = vst.msk [vmem:[%s10380] sm:$0xff] %vm10379, %v10378
  %s10382 = scalar_lea.vmem %s0, 2569
  %s10383 = smov 3
  %v10384 = vld [vmem:[%s10382] ss:$16 sm:%s10383]
  %s10385 = scalar_lea.vmem %s0, 2569
  %s10386 = smov 12
  %v10387 = vld [vmem:[%s10385] ss:$16 sm:%s10386]
  %vm10388 = vcmask 1043458
  %v10389 = vsel %vm10388, %v10387, %v10384
  %s10390 = scalar_lea.vmem %s0, 2569
  %s10391 = smov 48
  %v10392 = vld [vmem:[%s10390] ss:$16 sm:%s10391]
  %vm10393 = vcmask 1045508
  %v10394 = vsel %vm10393, %v10392, %v10389
  %s10395 = scalar_lea.vmem %s0, 2569
  %s10396 = smov 192
  %v10397 = vld [vmem:[%s10395] ss:$16 sm:%s10396]
  %vm10398 = vcmask 1047558
  %v10399 = vsel %vm10398, %v10397, %v10394
  %10400 = vrot.lane.b32.xlu0 %v10399, 16
  %v10401 = vpop.permute.xlu0 %10400
  %vm10402 = vcmask 261248
  %s10403 = scalar_lea.vmem %s1, 328
  %10404 = vst.msk [vmem:[%s10403] sm:$0xff] %vm10402, %v10401
  %s10405 = scalar_lea.vmem %s0, 2825
  %s10406 = smov 3
  %v10407 = vld [vmem:[%s10405] ss:$16 sm:%s10406]
  %s10408 = scalar_lea.vmem %s0, 2825
  %s10409 = smov 12
  %v10410 = vld [vmem:[%s10408] ss:$16 sm:%s10409]
  %vm10411 = vcmask 1043458
  %v10412 = vsel %vm10411, %v10410, %v10407
  %s10413 = scalar_lea.vmem %s0, 2825
  %s10414 = smov 48
  %v10415 = vld [vmem:[%s10413] ss:$16 sm:%s10414]
  %vm10416 = vcmask 1045508
  %v10417 = vsel %vm10416, %v10415, %v10412
  %s10418 = scalar_lea.vmem %s0, 2825
  %s10419 = smov 192
  %v10420 = vld [vmem:[%s10418] ss:$16 sm:%s10419]
  %vm10421 = vcmask 1047558
  %v10422 = vsel %vm10421, %v10420, %v10417
  %10423 = vrot.lane.b32.xlu0 %v10422, 16
  %v10424 = vpop.permute.xlu0 %10423
  %vm10425 = vcmask 261248
  %s10426 = scalar_lea.vmem %s1, 360
  %10427 = vst.msk [vmem:[%s10426] sm:$0xff] %vm10425, %v10424
  %s10428 = scalar_lea.vmem %s0, 3081
  %s10429 = smov 3
  %v10430 = vld [vmem:[%s10428] ss:$16 sm:%s10429]
  %s10431 = scalar_lea.vmem %s0, 3081
  %s10432 = smov 12
  %v10433 = vld [vmem:[%s10431] ss:$16 sm:%s10432]
  %vm10434 = vcmask 1043458
  %v10435 = vsel %vm10434, %v10433, %v10430
  %s10436 = scalar_lea.vmem %s0, 3081
  %s10437 = smov 48
  %v10438 = vld [vmem:[%s10436] ss:$16 sm:%s10437]
  %vm10439 = vcmask 1045508
  %v10440 = vsel %vm10439, %v10438, %v10435
  %s10441 = scalar_lea.vmem %s0, 3081
  %s10442 = smov 192
  %v10443 = vld [vmem:[%s10441] ss:$16 sm:%s10442]
  %vm10444 = vcmask 1047558
  %v10445 = vsel %vm10444, %v10443, %v10440
  %10446 = vrot.lane.b32.xlu0 %v10445, 16
  %v10447 = vpop.permute.xlu0 %10446
  %vm10448 = vcmask 261248
  %s10449 = scalar_lea.vmem %s1, 392
  %10450 = vst.msk [vmem:[%s10449] sm:$0xff] %vm10448, %v10447
  %s10451 = scalar_lea.vmem %s0, 3337
  %s10452 = smov 3
  %v10453 = vld [vmem:[%s10451] ss:$16 sm:%s10452]
  %s10454 = scalar_lea.vmem %s0, 3337
  %s10455 = smov 12
  %v10456 = vld [vmem:[%s10454] ss:$16 sm:%s10455]
  %vm10457 = vcmask 1043458
  %v10458 = vsel %vm10457, %v10456, %v10453
  %s10459 = scalar_lea.vmem %s0, 3337
  %s10460 = smov 48
  %v10461 = vld [vmem:[%s10459] ss:$16 sm:%s10460]
  %vm10462 = vcmask 1045508
  %v10463 = vsel %vm10462, %v10461, %v10458
  %s10464 = scalar_lea.vmem %s0, 3337
  %s10465 = smov 192
  %v10466 = vld [vmem:[%s10464] ss:$16 sm:%s10465]
  %vm10467 = vcmask 1047558
  %v10468 = vsel %vm10467, %v10466, %v10463
  %10469 = vrot.lane.b32.xlu0 %v10468, 16
  %v10470 = vpop.permute.xlu0 %10469
  %vm10471 = vcmask 261248
  %s10472 = scalar_lea.vmem %s1, 424
  %10473 = vst.msk [vmem:[%s10472] sm:$0xff] %vm10471, %v10470
  %s10474 = scalar_lea.vmem %s0, 3593
  %s10475 = smov 3
  %v10476 = vld [vmem:[%s10474] ss:$16 sm:%s10475]
  %s10477 = scalar_lea.vmem %s0, 3593
  %s10478 = smov 12
  %v10479 = vld [vmem:[%s10477] ss:$16 sm:%s10478]
  %vm10480 = vcmask 1043458
  %v10481 = vsel %vm10480, %v10479, %v10476
  %s10482 = scalar_lea.vmem %s0, 3593
  %s10483 = smov 48
  %v10484 = vld [vmem:[%s10482] ss:$16 sm:%s10483]
  %vm10485 = vcmask 1045508
  %v10486 = vsel %vm10485, %v10484, %v10481
  %s10487 = scalar_lea.vmem %s0, 3593
  %s10488 = smov 192
  %v10489 = vld [vmem:[%s10487] ss:$16 sm:%s10488]
  %vm10490 = vcmask 1047558
  %v10491 = vsel %vm10490, %v10489, %v10486
  %10492 = vrot.lane.b32.xlu0 %v10491, 16
  %v10493 = vpop.permute.xlu0 %10492
  %vm10494 = vcmask 261248
  %s10495 = scalar_lea.vmem %s1, 456
  %10496 = vst.msk [vmem:[%s10495] sm:$0xff] %vm10494, %v10493
  %s10497 = scalar_lea.vmem %s0, 3849
  %s10498 = smov 3
  %v10499 = vld [vmem:[%s10497] ss:$16 sm:%s10498]
  %s10500 = scalar_lea.vmem %s0, 3849
  %s10501 = smov 12
  %v10502 = vld [vmem:[%s10500] ss:$16 sm:%s10501]
  %vm10503 = vcmask 1043458
  %v10504 = vsel %vm10503, %v10502, %v10499
  %s10505 = scalar_lea.vmem %s0, 3849
  %s10506 = smov 48
  %v10507 = vld [vmem:[%s10505] ss:$16 sm:%s10506]
  %vm10508 = vcmask 1045508
  %v10509 = vsel %vm10508, %v10507, %v10504
  %s10510 = scalar_lea.vmem %s0, 3849
  %s10511 = smov 192
  %v10512 = vld [vmem:[%s10510] ss:$16 sm:%s10511]
  %vm10513 = vcmask 1047558
  %v10514 = vsel %vm10513, %v10512, %v10509
  %10515 = vrot.lane.b32.xlu0 %v10514, 16
  %v10516 = vpop.permute.xlu0 %10515
  %vm10517 = vcmask 261248
  %s10518 = scalar_lea.vmem %s1, 488
  %10519 = vst.msk [vmem:[%s10518] sm:$0xff] %vm10517, %v10516
  %s10520 = scalar_lea.vmem %s0, 129
  %s10521 = smov 3
  %v10522 = vld [vmem:[%s10520] ss:$16 sm:%s10521]
  %s10523 = scalar_lea.vmem %s0, 129
  %s10524 = smov 12
  %v10525 = vld [vmem:[%s10523] ss:$16 sm:%s10524]
  %vm10526 = vcmask 1043458
  %v10527 = vsel %vm10526, %v10525, %v10522
  %s10528 = scalar_lea.vmem %s0, 129
  %s10529 = smov 48
  %v10530 = vld [vmem:[%s10528] ss:$16 sm:%s10529]
  %vm10531 = vcmask 1045508
  %v10532 = vsel %vm10531, %v10530, %v10527
  %s10533 = scalar_lea.vmem %s0, 129
  %s10534 = smov 192
  %v10535 = vld [vmem:[%s10533] ss:$16 sm:%s10534]
  %vm10536 = vcmask 1047558
  %v10537 = vsel %vm10536, %v10535, %v10532
  %10538 = vrot.lane.b32.xlu0 %v10537, 16
  %v10539 = vpop.permute.xlu0 %10538
  %vm10540 = vcmask 261248
  %s10541 = scalar_lea.vmem %s1, 16
  %10542 = vst.msk [vmem:[%s10541] sm:$0xff] %vm10540, %v10539
  %s10543 = scalar_lea.vmem %s0, 385
  %s10544 = smov 3
  %v10545 = vld [vmem:[%s10543] ss:$16 sm:%s10544]
  %s10546 = scalar_lea.vmem %s0, 385
  %s10547 = smov 12
  %v10548 = vld [vmem:[%s10546] ss:$16 sm:%s10547]
  %vm10549 = vcmask 1043458
  %v10550 = vsel %vm10549, %v10548, %v10545
  %s10551 = scalar_lea.vmem %s0, 385
  %s10552 = smov 48
  %v10553 = vld [vmem:[%s10551] ss:$16 sm:%s10552]
  %vm10554 = vcmask 1045508
  %v10555 = vsel %vm10554, %v10553, %v10550
  %s10556 = scalar_lea.vmem %s0, 385
  %s10557 = smov 192
  %v10558 = vld [vmem:[%s10556] ss:$16 sm:%s10557]
  %vm10559 = vcmask 1047558
  %v10560 = vsel %vm10559, %v10558, %v10555
  %10561 = vrot.lane.b32.xlu0 %v10560, 16
  %v10562 = vpop.permute.xlu0 %10561
  %vm10563 = vcmask 261248
  %s10564 = scalar_lea.vmem %s1, 48
  %10565 = vst.msk [vmem:[%s10564] sm:$0xff] %vm10563, %v10562
  %s10566 = scalar_lea.vmem %s0, 641
  %s10567 = smov 3
  %v10568 = vld [vmem:[%s10566] ss:$16 sm:%s10567]
  %s10569 = scalar_lea.vmem %s0, 641
  %s10570 = smov 12
  %v10571 = vld [vmem:[%s10569] ss:$16 sm:%s10570]
  %vm10572 = vcmask 1043458
  %v10573 = vsel %vm10572, %v10571, %v10568
  %s10574 = scalar_lea.vmem %s0, 641
  %s10575 = smov 48
  %v10576 = vld [vmem:[%s10574] ss:$16 sm:%s10575]
  %vm10577 = vcmask 1045508
  %v10578 = vsel %vm10577, %v10576, %v10573
  %s10579 = scalar_lea.vmem %s0, 641
  %s10580 = smov 192
  %v10581 = vld [vmem:[%s10579] ss:$16 sm:%s10580]
  %vm10582 = vcmask 1047558
  %v10583 = vsel %vm10582, %v10581, %v10578
  %10584 = vrot.lane.b32.xlu0 %v10583, 16
  %v10585 = vpop.permute.xlu0 %10584
  %vm10586 = vcmask 261248
  %s10587 = scalar_lea.vmem %s1, 80
  %10588 = vst.msk [vmem:[%s10587] sm:$0xff] %vm10586, %v10585
  %s10589 = scalar_lea.vmem %s0, 897
  %s10590 = smov 3
  %v10591 = vld [vmem:[%s10589] ss:$16 sm:%s10590]
  %s10592 = scalar_lea.vmem %s0, 897
  %s10593 = smov 12
  %v10594 = vld [vmem:[%s10592] ss:$16 sm:%s10593]
  %vm10595 = vcmask 1043458
  %v10596 = vsel %vm10595, %v10594, %v10591
  %s10597 = scalar_lea.vmem %s0, 897
  %s10598 = smov 48
  %v10599 = vld [vmem:[%s10597] ss:$16 sm:%s10598]
  %vm10600 = vcmask 1045508
  %v10601 = vsel %vm10600, %v10599, %v10596
  %s10602 = scalar_lea.vmem %s0, 897
  %s10603 = smov 192
  %v10604 = vld [vmem:[%s10602] ss:$16 sm:%s10603]
  %vm10605 = vcmask 1047558
  %v10606 = vsel %vm10605, %v10604, %v10601
  %10607 = vrot.lane.b32.xlu0 %v10606, 16
  %v10608 = vpop.permute.xlu0 %10607
  %vm10609 = vcmask 261248
  %s10610 = scalar_lea.vmem %s1, 112
  %10611 = vst.msk [vmem:[%s10610] sm:$0xff] %vm10609, %v10608
  %s10612 = scalar_lea.vmem %s0, 1153
  %s10613 = smov 3
  %v10614 = vld [vmem:[%s10612] ss:$16 sm:%s10613]
  %s10615 = scalar_lea.vmem %s0, 1153
  %s10616 = smov 12
  %v10617 = vld [vmem:[%s10615] ss:$16 sm:%s10616]
  %vm10618 = vcmask 1043458
  %v10619 = vsel %vm10618, %v10617, %v10614
  %s10620 = scalar_lea.vmem %s0, 1153
  %s10621 = smov 48
  %v10622 = vld [vmem:[%s10620] ss:$16 sm:%s10621]
  %vm10623 = vcmask 1045508
  %v10624 = vsel %vm10623, %v10622, %v10619
  %s10625 = scalar_lea.vmem %s0, 1153
  %s10626 = smov 192
  %v10627 = vld [vmem:[%s10625] ss:$16 sm:%s10626]
  %vm10628 = vcmask 1047558
  %v10629 = vsel %vm10628, %v10627, %v10624
  %10630 = vrot.lane.b32.xlu0 %v10629, 16
  %v10631 = vpop.permute.xlu0 %10630
  %vm10632 = vcmask 261248
  %s10633 = scalar_lea.vmem %s1, 144
  %10634 = vst.msk [vmem:[%s10633] sm:$0xff] %vm10632, %v10631
  %s10635 = scalar_lea.vmem %s0, 1409
  %s10636 = smov 3
  %v10637 = vld [vmem:[%s10635] ss:$16 sm:%s10636]
  %s10638 = scalar_lea.vmem %s0, 1409
  %s10639 = smov 12
  %v10640 = vld [vmem:[%s10638] ss:$16 sm:%s10639]
  %vm10641 = vcmask 1043458
  %v10642 = vsel %vm10641, %v10640, %v10637
  %s10643 = scalar_lea.vmem %s0, 1409
  %s10644 = smov 48
  %v10645 = vld [vmem:[%s10643] ss:$16 sm:%s10644]
  %vm10646 = vcmask 1045508
  %v10647 = vsel %vm10646, %v10645, %v10642
  %s10648 = scalar_lea.vmem %s0, 1409
  %s10649 = smov 192
  %v10650 = vld [vmem:[%s10648] ss:$16 sm:%s10649]
  %vm10651 = vcmask 1047558
  %v10652 = vsel %vm10651, %v10650, %v10647
  %10653 = vrot.lane.b32.xlu0 %v10652, 16
  %v10654 = vpop.permute.xlu0 %10653
  %vm10655 = vcmask 261248
  %s10656 = scalar_lea.vmem %s1, 176
  %10657 = vst.msk [vmem:[%s10656] sm:$0xff] %vm10655, %v10654
  %s10658 = scalar_lea.vmem %s0, 1665
  %s10659 = smov 3
  %v10660 = vld [vmem:[%s10658] ss:$16 sm:%s10659]
  %s10661 = scalar_lea.vmem %s0, 1665
  %s10662 = smov 12
  %v10663 = vld [vmem:[%s10661] ss:$16 sm:%s10662]
  %vm10664 = vcmask 1043458
  %v10665 = vsel %vm10664, %v10663, %v10660
  %s10666 = scalar_lea.vmem %s0, 1665
  %s10667 = smov 48
  %v10668 = vld [vmem:[%s10666] ss:$16 sm:%s10667]
  %vm10669 = vcmask 1045508
  %v10670 = vsel %vm10669, %v10668, %v10665
  %s10671 = scalar_lea.vmem %s0, 1665
  %s10672 = smov 192
  %v10673 = vld [vmem:[%s10671] ss:$16 sm:%s10672]
  %vm10674 = vcmask 1047558
  %v10675 = vsel %vm10674, %v10673, %v10670
  %10676 = vrot.lane.b32.xlu0 %v10675, 16
  %v10677 = vpop.permute.xlu0 %10676
  %vm10678 = vcmask 261248
  %s10679 = scalar_lea.vmem %s1, 208
  %10680 = vst.msk [vmem:[%s10679] sm:$0xff] %vm10678, %v10677
  %s10681 = scalar_lea.vmem %s0, 1921
  %s10682 = smov 3
  %v10683 = vld [vmem:[%s10681] ss:$16 sm:%s10682]
  %s10684 = scalar_lea.vmem %s0, 1921
  %s10685 = smov 12
  %v10686 = vld [vmem:[%s10684] ss:$16 sm:%s10685]
  %vm10687 = vcmask 1043458
  %v10688 = vsel %vm10687, %v10686, %v10683
  %s10689 = scalar_lea.vmem %s0, 1921
  %s10690 = smov 48
  %v10691 = vld [vmem:[%s10689] ss:$16 sm:%s10690]
  %vm10692 = vcmask 1045508
  %v10693 = vsel %vm10692, %v10691, %v10688
  %s10694 = scalar_lea.vmem %s0, 1921
  %s10695 = smov 192
  %v10696 = vld [vmem:[%s10694] ss:$16 sm:%s10695]
  %vm10697 = vcmask 1047558
  %v10698 = vsel %vm10697, %v10696, %v10693
  %10699 = vrot.lane.b32.xlu0 %v10698, 16
  %v10700 = vpop.permute.xlu0 %10699
  %vm10701 = vcmask 261248
  %s10702 = scalar_lea.vmem %s1, 240
  %10703 = vst.msk [vmem:[%s10702] sm:$0xff] %vm10701, %v10700
  %s10704 = scalar_lea.vmem %s0, 2177
  %s10705 = smov 3
  %v10706 = vld [vmem:[%s10704] ss:$16 sm:%s10705]
  %s10707 = scalar_lea.vmem %s0, 2177
  %s10708 = smov 12
  %v10709 = vld [vmem:[%s10707] ss:$16 sm:%s10708]
  %vm10710 = vcmask 1043458
  %v10711 = vsel %vm10710, %v10709, %v10706
  %s10712 = scalar_lea.vmem %s0, 2177
  %s10713 = smov 48
  %v10714 = vld [vmem:[%s10712] ss:$16 sm:%s10713]
  %vm10715 = vcmask 1045508
  %v10716 = vsel %vm10715, %v10714, %v10711
  %s10717 = scalar_lea.vmem %s0, 2177
  %s10718 = smov 192
  %v10719 = vld [vmem:[%s10717] ss:$16 sm:%s10718]
  %vm10720 = vcmask 1047558
  %v10721 = vsel %vm10720, %v10719, %v10716
  %10722 = vrot.lane.b32.xlu0 %v10721, 16
  %v10723 = vpop.permute.xlu0 %10722
  %vm10724 = vcmask 261248
  %s10725 = scalar_lea.vmem %s1, 272
  %10726 = vst.msk [vmem:[%s10725] sm:$0xff] %vm10724, %v10723
  %s10727 = scalar_lea.vmem %s0, 2433
  %s10728 = smov 3
  %v10729 = vld [vmem:[%s10727] ss:$16 sm:%s10728]
  %s10730 = scalar_lea.vmem %s0, 2433
  %s10731 = smov 12
  %v10732 = vld [vmem:[%s10730] ss:$16 sm:%s10731]
  %vm10733 = vcmask 1043458
  %v10734 = vsel %vm10733, %v10732, %v10729
  %s10735 = scalar_lea.vmem %s0, 2433
  %s10736 = smov 48
  %v10737 = vld [vmem:[%s10735] ss:$16 sm:%s10736]
  %vm10738 = vcmask 1045508
  %v10739 = vsel %vm10738, %v10737, %v10734
  %s10740 = scalar_lea.vmem %s0, 2433
  %s10741 = smov 192
  %v10742 = vld [vmem:[%s10740] ss:$16 sm:%s10741]
  %vm10743 = vcmask 1047558
  %v10744 = vsel %vm10743, %v10742, %v10739
  %10745 = vrot.lane.b32.xlu0 %v10744, 16
  %v10746 = vpop.permute.xlu0 %10745
  %vm10747 = vcmask 261248
  %s10748 = scalar_lea.vmem %s1, 304
  %10749 = vst.msk [vmem:[%s10748] sm:$0xff] %vm10747, %v10746
  %s10750 = scalar_lea.vmem %s0, 2689
  %s10751 = smov 3
  %v10752 = vld [vmem:[%s10750] ss:$16 sm:%s10751]
  %s10753 = scalar_lea.vmem %s0, 2689
  %s10754 = smov 12
  %v10755 = vld [vmem:[%s10753] ss:$16 sm:%s10754]
  %vm10756 = vcmask 1043458
  %v10757 = vsel %vm10756, %v10755, %v10752
  %s10758 = scalar_lea.vmem %s0, 2689
  %s10759 = smov 48
  %v10760 = vld [vmem:[%s10758] ss:$16 sm:%s10759]
  %vm10761 = vcmask 1045508
  %v10762 = vsel %vm10761, %v10760, %v10757
  %s10763 = scalar_lea.vmem %s0, 2689
  %s10764 = smov 192
  %v10765 = vld [vmem:[%s10763] ss:$16 sm:%s10764]
  %vm10766 = vcmask 1047558
  %v10767 = vsel %vm10766, %v10765, %v10762
  %10768 = vrot.lane.b32.xlu0 %v10767, 16
  %v10769 = vpop.permute.xlu0 %10768
  %vm10770 = vcmask 261248
  %s10771 = scalar_lea.vmem %s1, 336
  %10772 = vst.msk [vmem:[%s10771] sm:$0xff] %vm10770, %v10769
  %s10773 = scalar_lea.vmem %s0, 2945
  %s10774 = smov 3
  %v10775 = vld [vmem:[%s10773] ss:$16 sm:%s10774]
  %s10776 = scalar_lea.vmem %s0, 2945
  %s10777 = smov 12
  %v10778 = vld [vmem:[%s10776] ss:$16 sm:%s10777]
  %vm10779 = vcmask 1043458
  %v10780 = vsel %vm10779, %v10778, %v10775
  %s10781 = scalar_lea.vmem %s0, 2945
  %s10782 = smov 48
  %v10783 = vld [vmem:[%s10781] ss:$16 sm:%s10782]
  %vm10784 = vcmask 1045508
  %v10785 = vsel %vm10784, %v10783, %v10780
  %s10786 = scalar_lea.vmem %s0, 2945
  %s10787 = smov 192
  %v10788 = vld [vmem:[%s10786] ss:$16 sm:%s10787]
  %vm10789 = vcmask 1047558
  %v10790 = vsel %vm10789, %v10788, %v10785
  %10791 = vrot.lane.b32.xlu0 %v10790, 16
  %v10792 = vpop.permute.xlu0 %10791
  %vm10793 = vcmask 261248
  %s10794 = scalar_lea.vmem %s1, 368
  %10795 = vst.msk [vmem:[%s10794] sm:$0xff] %vm10793, %v10792
  %s10796 = scalar_lea.vmem %s0, 3201
  %s10797 = smov 3
  %v10798 = vld [vmem:[%s10796] ss:$16 sm:%s10797]
  %s10799 = scalar_lea.vmem %s0, 3201
  %s10800 = smov 12
  %v10801 = vld [vmem:[%s10799] ss:$16 sm:%s10800]
  %vm10802 = vcmask 1043458
  %v10803 = vsel %vm10802, %v10801, %v10798
  %s10804 = scalar_lea.vmem %s0, 3201
  %s10805 = smov 48
  %v10806 = vld [vmem:[%s10804] ss:$16 sm:%s10805]
  %vm10807 = vcmask 1045508
  %v10808 = vsel %vm10807, %v10806, %v10803
  %s10809 = scalar_lea.vmem %s0, 3201
  %s10810 = smov 192
  %v10811 = vld [vmem:[%s10809] ss:$16 sm:%s10810]
  %vm10812 = vcmask 1047558
  %v10813 = vsel %vm10812, %v10811, %v10808
  %10814 = vrot.lane.b32.xlu0 %v10813, 16
  %v10815 = vpop.permute.xlu0 %10814
  %vm10816 = vcmask 261248
  %s10817 = scalar_lea.vmem %s1, 400
  %10818 = vst.msk [vmem:[%s10817] sm:$0xff] %vm10816, %v10815
  %s10819 = scalar_lea.vmem %s0, 3457
  %s10820 = smov 3
  %v10821 = vld [vmem:[%s10819] ss:$16 sm:%s10820]
  %s10822 = scalar_lea.vmem %s0, 3457
  %s10823 = smov 12
  %v10824 = vld [vmem:[%s10822] ss:$16 sm:%s10823]
  %vm10825 = vcmask 1043458
  %v10826 = vsel %vm10825, %v10824, %v10821
  %s10827 = scalar_lea.vmem %s0, 3457
  %s10828 = smov 48
  %v10829 = vld [vmem:[%s10827] ss:$16 sm:%s10828]
  %vm10830 = vcmask 1045508
  %v10831 = vsel %vm10830, %v10829, %v10826
  %s10832 = scalar_lea.vmem %s0, 3457
  %s10833 = smov 192
  %v10834 = vld [vmem:[%s10832] ss:$16 sm:%s10833]
  %vm10835 = vcmask 1047558
  %v10836 = vsel %vm10835, %v10834, %v10831
  %10837 = vrot.lane.b32.xlu0 %v10836, 16
  %v10838 = vpop.permute.xlu0 %10837
  %vm10839 = vcmask 261248
  %s10840 = scalar_lea.vmem %s1, 432
  %10841 = vst.msk [vmem:[%s10840] sm:$0xff] %vm10839, %v10838
  %s10842 = scalar_lea.vmem %s0, 3713
  %s10843 = smov 3
  %v10844 = vld [vmem:[%s10842] ss:$16 sm:%s10843]
  %s10845 = scalar_lea.vmem %s0, 3713
  %s10846 = smov 12
  %v10847 = vld [vmem:[%s10845] ss:$16 sm:%s10846]
  %vm10848 = vcmask 1043458
  %v10849 = vsel %vm10848, %v10847, %v10844
  %s10850 = scalar_lea.vmem %s0, 3713
  %s10851 = smov 48
  %v10852 = vld [vmem:[%s10850] ss:$16 sm:%s10851]
  %vm10853 = vcmask 1045508
  %v10854 = vsel %vm10853, %v10852, %v10849
  %s10855 = scalar_lea.vmem %s0, 3713
  %s10856 = smov 192
  %v10857 = vld [vmem:[%s10855] ss:$16 sm:%s10856]
  %vm10858 = vcmask 1047558
  %v10859 = vsel %vm10858, %v10857, %v10854
  %10860 = vrot.lane.b32.xlu0 %v10859, 16
  %v10861 = vpop.permute.xlu0 %10860
  %vm10862 = vcmask 261248
  %s10863 = scalar_lea.vmem %s1, 464
  %10864 = vst.msk [vmem:[%s10863] sm:$0xff] %vm10862, %v10861
  %s10865 = scalar_lea.vmem %s0, 3969
  %s10866 = smov 3
  %v10867 = vld [vmem:[%s10865] ss:$16 sm:%s10866]
  %s10868 = scalar_lea.vmem %s0, 3969
  %s10869 = smov 12
  %v10870 = vld [vmem:[%s10868] ss:$16 sm:%s10869]
  %vm10871 = vcmask 1043458
  %v10872 = vsel %vm10871, %v10870, %v10867
  %s10873 = scalar_lea.vmem %s0, 3969
  %s10874 = smov 48
  %v10875 = vld [vmem:[%s10873] ss:$16 sm:%s10874]
  %vm10876 = vcmask 1045508
  %v10877 = vsel %vm10876, %v10875, %v10872
  %s10878 = scalar_lea.vmem %s0, 3969
  %s10879 = smov 192
  %v10880 = vld [vmem:[%s10878] ss:$16 sm:%s10879]
  %vm10881 = vcmask 1047558
  %v10882 = vsel %vm10881, %v10880, %v10877
  %10883 = vrot.lane.b32.xlu0 %v10882, 16
  %v10884 = vpop.permute.xlu0 %10883
  %vm10885 = vcmask 261248
  %s10886 = scalar_lea.vmem %s1, 496
  %10887 = vst.msk [vmem:[%s10886] sm:$0xff] %vm10885, %v10884
  %s10888 = scalar_lea.vmem %s0, 137
  %s10889 = smov 3
  %v10890 = vld [vmem:[%s10888] ss:$16 sm:%s10889]
  %s10891 = scalar_lea.vmem %s0, 137
  %s10892 = smov 12
  %v10893 = vld [vmem:[%s10891] ss:$16 sm:%s10892]
  %vm10894 = vcmask 1043458
  %v10895 = vsel %vm10894, %v10893, %v10890
  %s10896 = scalar_lea.vmem %s0, 137
  %s10897 = smov 48
  %v10898 = vld [vmem:[%s10896] ss:$16 sm:%s10897]
  %vm10899 = vcmask 1045508
  %v10900 = vsel %vm10899, %v10898, %v10895
  %s10901 = scalar_lea.vmem %s0, 137
  %s10902 = smov 192
  %v10903 = vld [vmem:[%s10901] ss:$16 sm:%s10902]
  %vm10904 = vcmask 1047558
  %v10905 = vsel %vm10904, %v10903, %v10900
  %10906 = vrot.lane.b32.xlu0 %v10905, 16
  %v10907 = vpop.permute.xlu0 %10906
  %vm10908 = vcmask 261248
  %s10909 = scalar_lea.vmem %s1, 24
  %10910 = vst.msk [vmem:[%s10909] sm:$0xff] %vm10908, %v10907
  %s10911 = scalar_lea.vmem %s0, 393
  %s10912 = smov 3
  %v10913 = vld [vmem:[%s10911] ss:$16 sm:%s10912]
  %s10914 = scalar_lea.vmem %s0, 393
  %s10915 = smov 12
  %v10916 = vld [vmem:[%s10914] ss:$16 sm:%s10915]
  %vm10917 = vcmask 1043458
  %v10918 = vsel %vm10917, %v10916, %v10913
  %s10919 = scalar_lea.vmem %s0, 393
  %s10920 = smov 48
  %v10921 = vld [vmem:[%s10919] ss:$16 sm:%s10920]
  %vm10922 = vcmask 1045508
  %v10923 = vsel %vm10922, %v10921, %v10918
  %s10924 = scalar_lea.vmem %s0, 393
  %s10925 = smov 192
  %v10926 = vld [vmem:[%s10924] ss:$16 sm:%s10925]
  %vm10927 = vcmask 1047558
  %v10928 = vsel %vm10927, %v10926, %v10923
  %10929 = vrot.lane.b32.xlu0 %v10928, 16
  %v10930 = vpop.permute.xlu0 %10929
  %vm10931 = vcmask 261248
  %s10932 = scalar_lea.vmem %s1, 56
  %10933 = vst.msk [vmem:[%s10932] sm:$0xff] %vm10931, %v10930
  %s10934 = scalar_lea.vmem %s0, 649
  %s10935 = smov 3
  %v10936 = vld [vmem:[%s10934] ss:$16 sm:%s10935]
  %s10937 = scalar_lea.vmem %s0, 649
  %s10938 = smov 12
  %v10939 = vld [vmem:[%s10937] ss:$16 sm:%s10938]
  %vm10940 = vcmask 1043458
  %v10941 = vsel %vm10940, %v10939, %v10936
  %s10942 = scalar_lea.vmem %s0, 649
  %s10943 = smov 48
  %v10944 = vld [vmem:[%s10942] ss:$16 sm:%s10943]
  %vm10945 = vcmask 1045508
  %v10946 = vsel %vm10945, %v10944, %v10941
  %s10947 = scalar_lea.vmem %s0, 649
  %s10948 = smov 192
  %v10949 = vld [vmem:[%s10947] ss:$16 sm:%s10948]
  %vm10950 = vcmask 1047558
  %v10951 = vsel %vm10950, %v10949, %v10946
  %10952 = vrot.lane.b32.xlu0 %v10951, 16
  %v10953 = vpop.permute.xlu0 %10952
  %vm10954 = vcmask 261248
  %s10955 = scalar_lea.vmem %s1, 88
  %10956 = vst.msk [vmem:[%s10955] sm:$0xff] %vm10954, %v10953
  %s10957 = scalar_lea.vmem %s0, 905
  %s10958 = smov 3
  %v10959 = vld [vmem:[%s10957] ss:$16 sm:%s10958]
  %s10960 = scalar_lea.vmem %s0, 905
  %s10961 = smov 12
  %v10962 = vld [vmem:[%s10960] ss:$16 sm:%s10961]
  %vm10963 = vcmask 1043458
  %v10964 = vsel %vm10963, %v10962, %v10959
  %s10965 = scalar_lea.vmem %s0, 905
  %s10966 = smov 48
  %v10967 = vld [vmem:[%s10965] ss:$16 sm:%s10966]
  %vm10968 = vcmask 1045508
  %v10969 = vsel %vm10968, %v10967, %v10964
  %s10970 = scalar_lea.vmem %s0, 905
  %s10971 = smov 192
  %v10972 = vld [vmem:[%s10970] ss:$16 sm:%s10971]
  %vm10973 = vcmask 1047558
  %v10974 = vsel %vm10973, %v10972, %v10969
  %10975 = vrot.lane.b32.xlu0 %v10974, 16
  %v10976 = vpop.permute.xlu0 %10975
  %vm10977 = vcmask 261248
  %s10978 = scalar_lea.vmem %s1, 120
  %10979 = vst.msk [vmem:[%s10978] sm:$0xff] %vm10977, %v10976
  %s10980 = scalar_lea.vmem %s0, 1161
  %s10981 = smov 3
  %v10982 = vld [vmem:[%s10980] ss:$16 sm:%s10981]
  %s10983 = scalar_lea.vmem %s0, 1161
  %s10984 = smov 12
  %v10985 = vld [vmem:[%s10983] ss:$16 sm:%s10984]
  %vm10986 = vcmask 1043458
  %v10987 = vsel %vm10986, %v10985, %v10982
  %s10988 = scalar_lea.vmem %s0, 1161
  %s10989 = smov 48
  %v10990 = vld [vmem:[%s10988] ss:$16 sm:%s10989]
  %vm10991 = vcmask 1045508
  %v10992 = vsel %vm10991, %v10990, %v10987
  %s10993 = scalar_lea.vmem %s0, 1161
  %s10994 = smov 192
  %v10995 = vld [vmem:[%s10993] ss:$16 sm:%s10994]
  %vm10996 = vcmask 1047558
  %v10997 = vsel %vm10996, %v10995, %v10992
  %10998 = vrot.lane.b32.xlu0 %v10997, 16
  %v10999 = vpop.permute.xlu0 %10998
  %vm11000 = vcmask 261248
  %s11001 = scalar_lea.vmem %s1, 152
  %11002 = vst.msk [vmem:[%s11001] sm:$0xff] %vm11000, %v10999
  %s11003 = scalar_lea.vmem %s0, 1417
  %s11004 = smov 3
  %v11005 = vld [vmem:[%s11003] ss:$16 sm:%s11004]
  %s11006 = scalar_lea.vmem %s0, 1417
  %s11007 = smov 12
  %v11008 = vld [vmem:[%s11006] ss:$16 sm:%s11007]
  %vm11009 = vcmask 1043458
  %v11010 = vsel %vm11009, %v11008, %v11005
  %s11011 = scalar_lea.vmem %s0, 1417
  %s11012 = smov 48
  %v11013 = vld [vmem:[%s11011] ss:$16 sm:%s11012]
  %vm11014 = vcmask 1045508
  %v11015 = vsel %vm11014, %v11013, %v11010
  %s11016 = scalar_lea.vmem %s0, 1417
  %s11017 = smov 192
  %v11018 = vld [vmem:[%s11016] ss:$16 sm:%s11017]
  %vm11019 = vcmask 1047558
  %v11020 = vsel %vm11019, %v11018, %v11015
  %11021 = vrot.lane.b32.xlu0 %v11020, 16
  %v11022 = vpop.permute.xlu0 %11021
  %vm11023 = vcmask 261248
  %s11024 = scalar_lea.vmem %s1, 184
  %11025 = vst.msk [vmem:[%s11024] sm:$0xff] %vm11023, %v11022
  %s11026 = scalar_lea.vmem %s0, 1673
  %s11027 = smov 3
  %v11028 = vld [vmem:[%s11026] ss:$16 sm:%s11027]
  %s11029 = scalar_lea.vmem %s0, 1673
  %s11030 = smov 12
  %v11031 = vld [vmem:[%s11029] ss:$16 sm:%s11030]
  %vm11032 = vcmask 1043458
  %v11033 = vsel %vm11032, %v11031, %v11028
  %s11034 = scalar_lea.vmem %s0, 1673
  %s11035 = smov 48
  %v11036 = vld [vmem:[%s11034] ss:$16 sm:%s11035]
  %vm11037 = vcmask 1045508
  %v11038 = vsel %vm11037, %v11036, %v11033
  %s11039 = scalar_lea.vmem %s0, 1673
  %s11040 = smov 192
  %v11041 = vld [vmem:[%s11039] ss:$16 sm:%s11040]
  %vm11042 = vcmask 1047558
  %v11043 = vsel %vm11042, %v11041, %v11038
  %11044 = vrot.lane.b32.xlu0 %v11043, 16
  %v11045 = vpop.permute.xlu0 %11044
  %vm11046 = vcmask 261248
  %s11047 = scalar_lea.vmem %s1, 216
  %11048 = vst.msk [vmem:[%s11047] sm:$0xff] %vm11046, %v11045
  %s11049 = scalar_lea.vmem %s0, 1929
  %s11050 = smov 3
  %v11051 = vld [vmem:[%s11049] ss:$16 sm:%s11050]
  %s11052 = scalar_lea.vmem %s0, 1929
  %s11053 = smov 12
  %v11054 = vld [vmem:[%s11052] ss:$16 sm:%s11053]
  %vm11055 = vcmask 1043458
  %v11056 = vsel %vm11055, %v11054, %v11051
  %s11057 = scalar_lea.vmem %s0, 1929
  %s11058 = smov 48
  %v11059 = vld [vmem:[%s11057] ss:$16 sm:%s11058]
  %vm11060 = vcmask 1045508
  %v11061 = vsel %vm11060, %v11059, %v11056
  %s11062 = scalar_lea.vmem %s0, 1929
  %s11063 = smov 192
  %v11064 = vld [vmem:[%s11062] ss:$16 sm:%s11063]
  %vm11065 = vcmask 1047558
  %v11066 = vsel %vm11065, %v11064, %v11061
  %11067 = vrot.lane.b32.xlu0 %v11066, 16
  %v11068 = vpop.permute.xlu0 %11067
  %vm11069 = vcmask 261248
  %s11070 = scalar_lea.vmem %s1, 248
  %11071 = vst.msk [vmem:[%s11070] sm:$0xff] %vm11069, %v11068
  %s11072 = scalar_lea.vmem %s0, 2185
  %s11073 = smov 3
  %v11074 = vld [vmem:[%s11072] ss:$16 sm:%s11073]
  %s11075 = scalar_lea.vmem %s0, 2185
  %s11076 = smov 12
  %v11077 = vld [vmem:[%s11075] ss:$16 sm:%s11076]
  %vm11078 = vcmask 1043458
  %v11079 = vsel %vm11078, %v11077, %v11074
  %s11080 = scalar_lea.vmem %s0, 2185
  %s11081 = smov 48
  %v11082 = vld [vmem:[%s11080] ss:$16 sm:%s11081]
  %vm11083 = vcmask 1045508
  %v11084 = vsel %vm11083, %v11082, %v11079
  %s11085 = scalar_lea.vmem %s0, 2185
  %s11086 = smov 192
  %v11087 = vld [vmem:[%s11085] ss:$16 sm:%s11086]
  %vm11088 = vcmask 1047558
  %v11089 = vsel %vm11088, %v11087, %v11084
  %11090 = vrot.lane.b32.xlu0 %v11089, 16
  %v11091 = vpop.permute.xlu0 %11090
  %vm11092 = vcmask 261248
  %s11093 = scalar_lea.vmem %s1, 280
  %11094 = vst.msk [vmem:[%s11093] sm:$0xff] %vm11092, %v11091
  %s11095 = scalar_lea.vmem %s0, 2441
  %s11096 = smov 3
  %v11097 = vld [vmem:[%s11095] ss:$16 sm:%s11096]
  %s11098 = scalar_lea.vmem %s0, 2441
  %s11099 = smov 12
  %v11100 = vld [vmem:[%s11098] ss:$16 sm:%s11099]
  %vm11101 = vcmask 1043458
  %v11102 = vsel %vm11101, %v11100, %v11097
  %s11103 = scalar_lea.vmem %s0, 2441
  %s11104 = smov 48
  %v11105 = vld [vmem:[%s11103] ss:$16 sm:%s11104]
  %vm11106 = vcmask 1045508
  %v11107 = vsel %vm11106, %v11105, %v11102
  %s11108 = scalar_lea.vmem %s0, 2441
  %s11109 = smov 192
  %v11110 = vld [vmem:[%s11108] ss:$16 sm:%s11109]
  %vm11111 = vcmask 1047558
  %v11112 = vsel %vm11111, %v11110, %v11107
  %11113 = vrot.lane.b32.xlu0 %v11112, 16
  %v11114 = vpop.permute.xlu0 %11113
  %vm11115 = vcmask 261248
  %s11116 = scalar_lea.vmem %s1, 312
  %11117 = vst.msk [vmem:[%s11116] sm:$0xff] %vm11115, %v11114
  %s11118 = scalar_lea.vmem %s0, 2697
  %s11119 = smov 3
  %v11120 = vld [vmem:[%s11118] ss:$16 sm:%s11119]
  %s11121 = scalar_lea.vmem %s0, 2697
  %s11122 = smov 12
  %v11123 = vld [vmem:[%s11121] ss:$16 sm:%s11122]
  %vm11124 = vcmask 1043458
  %v11125 = vsel %vm11124, %v11123, %v11120
  %s11126 = scalar_lea.vmem %s0, 2697
  %s11127 = smov 48
  %v11128 = vld [vmem:[%s11126] ss:$16 sm:%s11127]
  %vm11129 = vcmask 1045508
  %v11130 = vsel %vm11129, %v11128, %v11125
  %s11131 = scalar_lea.vmem %s0, 2697
  %s11132 = smov 192
  %v11133 = vld [vmem:[%s11131] ss:$16 sm:%s11132]
  %vm11134 = vcmask 1047558
  %v11135 = vsel %vm11134, %v11133, %v11130
  %11136 = vrot.lane.b32.xlu0 %v11135, 16
  %v11137 = vpop.permute.xlu0 %11136
  %vm11138 = vcmask 261248
  %s11139 = scalar_lea.vmem %s1, 344
  %11140 = vst.msk [vmem:[%s11139] sm:$0xff] %vm11138, %v11137
  %s11141 = scalar_lea.vmem %s0, 2953
  %s11142 = smov 3
  %v11143 = vld [vmem:[%s11141] ss:$16 sm:%s11142]
  %s11144 = scalar_lea.vmem %s0, 2953
  %s11145 = smov 12
  %v11146 = vld [vmem:[%s11144] ss:$16 sm:%s11145]
  %vm11147 = vcmask 1043458
  %v11148 = vsel %vm11147, %v11146, %v11143
  %s11149 = scalar_lea.vmem %s0, 2953
  %s11150 = smov 48
  %v11151 = vld [vmem:[%s11149] ss:$16 sm:%s11150]
  %vm11152 = vcmask 1045508
  %v11153 = vsel %vm11152, %v11151, %v11148
  %s11154 = scalar_lea.vmem %s0, 2953
  %s11155 = smov 192
  %v11156 = vld [vmem:[%s11154] ss:$16 sm:%s11155]
  %vm11157 = vcmask 1047558
  %v11158 = vsel %vm11157, %v11156, %v11153
  %11159 = vrot.lane.b32.xlu0 %v11158, 16
  %v11160 = vpop.permute.xlu0 %11159
  %vm11161 = vcmask 261248
  %s11162 = scalar_lea.vmem %s1, 376
  %11163 = vst.msk [vmem:[%s11162] sm:$0xff] %vm11161, %v11160
  %s11164 = scalar_lea.vmem %s0, 3209
  %s11165 = smov 3
  %v11166 = vld [vmem:[%s11164] ss:$16 sm:%s11165]
  %s11167 = scalar_lea.vmem %s0, 3209
  %s11168 = smov 12
  %v11169 = vld [vmem:[%s11167] ss:$16 sm:%s11168]
  %vm11170 = vcmask 1043458
  %v11171 = vsel %vm11170, %v11169, %v11166
  %s11172 = scalar_lea.vmem %s0, 3209
  %s11173 = smov 48
  %v11174 = vld [vmem:[%s11172] ss:$16 sm:%s11173]
  %vm11175 = vcmask 1045508
  %v11176 = vsel %vm11175, %v11174, %v11171
  %s11177 = scalar_lea.vmem %s0, 3209
  %s11178 = smov 192
  %v11179 = vld [vmem:[%s11177] ss:$16 sm:%s11178]
  %vm11180 = vcmask 1047558
  %v11181 = vsel %vm11180, %v11179, %v11176
  %11182 = vrot.lane.b32.xlu0 %v11181, 16
  %v11183 = vpop.permute.xlu0 %11182
  %vm11184 = vcmask 261248
  %s11185 = scalar_lea.vmem %s1, 408
  %11186 = vst.msk [vmem:[%s11185] sm:$0xff] %vm11184, %v11183
  %s11187 = scalar_lea.vmem %s0, 3465
  %s11188 = smov 3
  %v11189 = vld [vmem:[%s11187] ss:$16 sm:%s11188]
  %s11190 = scalar_lea.vmem %s0, 3465
  %s11191 = smov 12
  %v11192 = vld [vmem:[%s11190] ss:$16 sm:%s11191]
  %vm11193 = vcmask 1043458
  %v11194 = vsel %vm11193, %v11192, %v11189
  %s11195 = scalar_lea.vmem %s0, 3465
  %s11196 = smov 48
  %v11197 = vld [vmem:[%s11195] ss:$16 sm:%s11196]
  %vm11198 = vcmask 1045508
  %v11199 = vsel %vm11198, %v11197, %v11194
  %s11200 = scalar_lea.vmem %s0, 3465
  %s11201 = smov 192
  %v11202 = vld [vmem:[%s11200] ss:$16 sm:%s11201]
  %vm11203 = vcmask 1047558
  %v11204 = vsel %vm11203, %v11202, %v11199
  %11205 = vrot.lane.b32.xlu0 %v11204, 16
  %v11206 = vpop.permute.xlu0 %11205
  %vm11207 = vcmask 261248
  %s11208 = scalar_lea.vmem %s1, 440
  %11209 = vst.msk [vmem:[%s11208] sm:$0xff] %vm11207, %v11206
  %s11210 = scalar_lea.vmem %s0, 3721
  %s11211 = smov 3
  %v11212 = vld [vmem:[%s11210] ss:$16 sm:%s11211]
  %s11213 = scalar_lea.vmem %s0, 3721
  %s11214 = smov 12
  %v11215 = vld [vmem:[%s11213] ss:$16 sm:%s11214]
  %vm11216 = vcmask 1043458
  %v11217 = vsel %vm11216, %v11215, %v11212
  %s11218 = scalar_lea.vmem %s0, 3721
  %s11219 = smov 48
  %v11220 = vld [vmem:[%s11218] ss:$16 sm:%s11219]
  %vm11221 = vcmask 1045508
  %v11222 = vsel %vm11221, %v11220, %v11217
  %s11223 = scalar_lea.vmem %s0, 3721
  %s11224 = smov 192
  %v11225 = vld [vmem:[%s11223] ss:$16 sm:%s11224]
  %vm11226 = vcmask 1047558
  %v11227 = vsel %vm11226, %v11225, %v11222
  %11228 = vrot.lane.b32.xlu0 %v11227, 16
  %v11229 = vpop.permute.xlu0 %11228
  %vm11230 = vcmask 261248
  %s11231 = scalar_lea.vmem %s1, 472
  %11232 = vst.msk [vmem:[%s11231] sm:$0xff] %vm11230, %v11229
  %s11233 = scalar_lea.vmem %s0, 3977
  %s11234 = smov 3
  %v11235 = vld [vmem:[%s11233] ss:$16 sm:%s11234]
  %s11236 = scalar_lea.vmem %s0, 3977
  %s11237 = smov 12
  %v11238 = vld [vmem:[%s11236] ss:$16 sm:%s11237]
  %vm11239 = vcmask 1043458
  %v11240 = vsel %vm11239, %v11238, %v11235
  %s11241 = scalar_lea.vmem %s0, 3977
  %s11242 = smov 48
  %v11243 = vld [vmem:[%s11241] ss:$16 sm:%s11242]
  %vm11244 = vcmask 1045508
  %v11245 = vsel %vm11244, %v11243, %v11240
  %s11246 = scalar_lea.vmem %s0, 3977
  %s11247 = smov 192
  %v11248 = vld [vmem:[%s11246] ss:$16 sm:%s11247]
  %vm11249 = vcmask 1047558
  %v11250 = vsel %vm11249, %v11248, %v11245
  %11251 = vrot.lane.b32.xlu0 %v11250, 16
  %v11252 = vpop.permute.xlu0 %11251
  %vm11253 = vcmask 261248
  %s11254 = scalar_lea.vmem %s1, 504
  %11255 = vst.msk [vmem:[%s11254] sm:$0xff] %vm11253, %v11252

// kernel: cbam_pallas.1
$region0: #{cbam_pallas.1}
  #allocation0 [shape = 'u32[]', space=smem, size = 0x4, offset = 0x4, fixed_abs, tag = 'smem constant byte address 0x4 - core index']
  #allocation1 [shape = 'u32[72,128]{1,0:T(1,128)}', space=vmem, size = 0x9000, scoped, tag = 'internal scratch']
  %s0 = inlined_call_operand.vmem [shape: f32[2,32,256], index: 0, kind: input, shape index: {}]
  %s1 = inlined_call_operand.vmem [shape: f32[32,2], index: 1, kind: input, shape index: {}]
  %s2 = inlined_call_operand.vmem [shape: f32[32,2], index: 2, kind: input, shape index: {}]
  %s3 = inlined_call_operand.vmem [shape: f32[256,256], index: 3, kind: input, shape index: {}]
  %s4 = inlined_call_operand.vmem [shape: f32[256,256], index: 4, kind: input, shape index: {}]
  %s5 = inlined_call_operand.vmem [shape: f32[2,32,256], index: 5, kind: output, shape index: {}]
  %s6 = sld [smem:[#allocation0]]
  $region53: #{cbam_pallas.1} parent=0
    _
  %s8 = ssub.s32 1, %s6
  %s9 = scalar_select 0, %s8, %s6
  loop: start=0, step=1, limit=4
  $region2: #{cbam_pallas.1} parent=0 // loop_pre_header
    _
  $region3: #{cbam_pallas.1} parent=0 // loop_header
    %s11 = sphi 0, %s15
    %p12 = scmp.ge.s32.totalorder %s11, 4
    %s21 = sphi 0, %s23
    %s24 = sphi 0, %s21
    %s25 = sphi 0, %s24
    %s41 = sphi 0, %s25
    %s45 = sphi 0, %s45
    %s47 = sphi 0, %s45
    %s48 = sphi 0, %s47
    %s62 = sphi 0, %s48
    %s66 = sphi 0, %s66
    %s68 = sphi 0, %s66
    %s69 = sphi 0, %s68
    %s83 = sphi 0, %s69
    %s87 = sphi 0, %s87
    %s89 = sphi 0, %s87
    %s90 = sphi 0, %s89
    %s104 = sphi 0, %s90
    %s108 = sphi 0, %s108
    %s110 = sphi 0, %s108
    %s111 = sphi 0, %s110
    %s125 = sphi 0, %s111
    %s131 = sphi 0, %s133
    %s134 = sphi 0, %s131
    %s135 = sphi 0, %s134
    %s151 = sphi 0, %s135
  $region4: #{cbam_pallas.1} parent=0 // loop_header_branch
    %14 = sbr.rel (%p12) target = $region8
  $region5: #{cbam_pallas.1} parent=0 // loop_body
    %s16 = ssub.s32 %s11, 1
    %s17 = ssub.s32 %s11, 2
    %s18 = sadd.s32 %s11, 1
    %s19 = ssub.s32 %s11, %s18
    %p20 = scmp.eq.s32.totalorder %s19, 0
    %s22 = sadd.s32 %s21, 1
    %s23 = scalar_select %p20, %s21, %s22
    %p26 = pneg %p20
    %p27 = scmp.eq.s32.totalorder %s11, 1
    %p28 = por %p26, %p27
    %p29 = scmp.ne.s32.totalorder %s21, %s24
    %p30 = scmp.eq.s32.totalorder %s11, 0
    %p31 = por %p29, %p30
    %p32 = scmp.ne.s32.totalorder %s21, %s24
    %p33 = scmp.eq.s32.totalorder %s16, 1
    %p34 = por %p32, %p33
    %p35 = scmp.ne.s32.totalorder %s24, %s25
    %p36 = scmp.eq.s32.totalorder %s16, 0
    %p37 = por %p35, %p36
    %p38 = scmp.ne.s32.totalorder %s24, %s25
    %p39 = scmp.eq.s32.totalorder %s17, 1
    %p40 = por %p38, %p39
    %p42 = scmp.ne.s32.totalorder %s25, %s41
    %p43 = scmp.eq.s32.totalorder %s17, 0
    %p44 = por %p42, %p43
    %s46 = sadd.s32 %s45, 1
    %p49 = scmp.eq.s32.totalorder %s11, 1
    %p50 = scmp.ne.s32.totalorder %s45, %s47
    %p51 = scmp.eq.s32.totalorder %s11, 0
    %p52 = por %p50, %p51
    %p53 = scmp.ne.s32.totalorder %s45, %s47
    %p54 = scmp.eq.s32.totalorder %s16, 1
    %p55 = por %p53, %p54
    %p56 = scmp.ne.s32.totalorder %s47, %s48
    %p57 = scmp.eq.s32.totalorder %s16, 0
    %p58 = por %p56, %p57
    %p59 = scmp.ne.s32.totalorder %s47, %s48
    %p60 = scmp.eq.s32.totalorder %s17, 1
    %p61 = por %p59, %p60
    %p63 = scmp.ne.s32.totalorder %s48, %s62
    %p64 = scmp.eq.s32.totalorder %s17, 0
    %p65 = por %p63, %p64
    %s67 = sadd.s32 %s66, 1
    %p70 = scmp.eq.s32.totalorder %s11, 1
    %p71 = scmp.ne.s32.totalorder %s66, %s68
    %p72 = scmp.eq.s32.totalorder %s11, 0
    %p73 = por %p71, %p72
    %p74 = scmp.ne.s32.totalorder %s66, %s68
    %p75 = scmp.eq.s32.totalorder %s16, 1
    %p76 = por %p74, %p75
    %p77 = scmp.ne.s32.totalorder %s68, %s69
    %p78 = scmp.eq.s32.totalorder %s16, 0
    %p79 = por %p77, %p78
    %p80 = scmp.ne.s32.totalorder %s68, %s69
    %p81 = scmp.eq.s32.totalorder %s17, 1
    %p82 = por %p80, %p81
    %p84 = scmp.ne.s32.totalorder %s69, %s83
    %p85 = scmp.eq.s32.totalorder %s17, 0
    %p86 = por %p84, %p85
    %s88 = sadd.s32 %s87, 1
    %p91 = scmp.eq.s32.totalorder %s11, 1
    %p92 = scmp.ne.s32.totalorder %s87, %s89
    %p93 = scmp.eq.s32.totalorder %s11, 0
    %p94 = por %p92, %p93
    %p95 = scmp.ne.s32.totalorder %s87, %s89
    %p96 = scmp.eq.s32.totalorder %s16, 1
    %p97 = por %p95, %p96
    %p98 = scmp.ne.s32.totalorder %s89, %s90
    %p99 = scmp.eq.s32.totalorder %s16, 0
    %p100 = por %p98, %p99
    %p101 = scmp.ne.s32.totalorder %s89, %s90
    %p102 = scmp.eq.s32.totalorder %s17, 1
    %p103 = por %p101, %p102
    %p105 = scmp.ne.s32.totalorder %s90, %s104
    %p106 = scmp.eq.s32.totalorder %s17, 0
    %p107 = por %p105, %p106
    %s109 = sadd.s32 %s108, 1
    %p112 = scmp.eq.s32.totalorder %s11, 1
    %p113 = scmp.ne.s32.totalorder %s108, %s110
    %p114 = scmp.eq.s32.totalorder %s11, 0
    %p115 = por %p113, %p114
    %p116 = scmp.ne.s32.totalorder %s108, %s110
    %p117 = scmp.eq.s32.totalorder %s16, 1
    %p118 = por %p116, %p117
    %p119 = scmp.ne.s32.totalorder %s110, %s111
    %p120 = scmp.eq.s32.totalorder %s16, 0
    %p121 = por %p119, %p120
    %p122 = scmp.ne.s32.totalorder %s110, %s111
    %p123 = scmp.eq.s32.totalorder %s17, 1
    %p124 = por %p122, %p123
    %p126 = scmp.ne.s32.totalorder %s111, %s125
    %p127 = scmp.eq.s32.totalorder %s17, 0
    %p128 = por %p126, %p127
    %s129 = ssub.s32 %s11, %s18
    %p130 = scmp.eq.s32.totalorder %s129, 0
    %s132 = sadd.s32 %s131, 1
    %s133 = scalar_select %p130, %s131, %s132
    %p136 = pneg %p130
    %p137 = scmp.eq.s32.totalorder %s11, 1
    %p138 = por %p136, %p137
    %p139 = scmp.ne.s32.totalorder %s131, %s134
    %p140 = scmp.eq.s32.totalorder %s11, 0
    %p141 = por %p139, %p140
    %p142 = scmp.ne.s32.totalorder %s131, %s134
    %p143 = scmp.eq.s32.totalorder %s16, 1
    %p144 = por %p142, %p143
    %p145 = scmp.ne.s32.totalorder %s134, %s135
    %p146 = scmp.eq.s32.totalorder %s16, 0
    %p147 = por %p145, %p146
    %p148 = scmp.ne.s32.totalorder %s134, %s135
    %p149 = scmp.eq.s32.totalorder %s17, 1
    %p150 = por %p148, %p149
    %p152 = scmp.ne.s32.totalorder %s135, %s151
    %p153 = scmp.eq.s32.totalorder %s17, 0
    %p154 = por %p152, %p153
    %p155 = scmp.le.s32.totalorder 1, %s11
    %p156 = scmp.lt.s32.totalorder %s11, 3
    %p157 = pnand %p155, %p156
    %p158 = pneg %p157
    // Predicated region
    $region9: #{cbam_pallas.1} parent=5 // pred_check
      _
    $region10: #{cbam_pallas.1} parent=5 // pred_check_branch
      %160 = sbr.rel (%p157) target = $region12
    $region11: #{cbam_pallas.1} parent=5 // pred_region
      %s161 = ssub.s32 %s11, 1
      // Predicated region
      $region13: #{cbam_pallas.1} parent=11 // pred_check
        %p162 = pneg %p58
      $region14: #{cbam_pallas.1} parent=11 // pred_check_branch
        %164 = sbr.rel (%p162) target = $region16
      $region15: #{cbam_pallas.1} parent=11 // pred_region
        _
      $region16: #{cbam_pallas.1} parent=11 // pred_fallthru
        _
      // Predicated region
      $region17: #{cbam_pallas.1} parent=11 // pred_check
        %p165 = pneg %p79
      $region18: #{cbam_pallas.1} parent=11 // pred_check_branch
        %167 = sbr.rel (%p165) target = $region20
      $region19: #{cbam_pallas.1} parent=11 // pred_region
        _
      $region20: #{cbam_pallas.1} parent=11 // pred_fallthru
        _
      // Predicated region
      $region21: #{cbam_pallas.1} parent=11 // pred_check
        %p168 = pneg %p100
      $region22: #{cbam_pallas.1} parent=11 // pred_check_branch
        %170 = sbr.rel (%p168) target = $region24
      $region23: #{cbam_pallas.1} parent=11 // pred_region
        _
      $region24: #{cbam_pallas.1} parent=11 // pred_fallthru
        _
      // Predicated region
      $region25: #{cbam_pallas.1} parent=11 // pred_check
        %p171 = pneg %p121
      $region26: #{cbam_pallas.1} parent=11 // pred_check_branch
        %173 = sbr.rel (%p171) target = $region28
      $region27: #{cbam_pallas.1} parent=11 // pred_region
        _
      $region28: #{cbam_pallas.1} parent=11 // pred_fallthru
        _
    $region12: #{cbam_pallas.1} parent=5 // pred_fallthru
      _
    %p174 = scmp.lt.s32.totalorder %s11, 2
    // Predicated region
    $region29: #{cbam_pallas.1} parent=5 // pred_check
      %p175 = pneg %p174
    $region30: #{cbam_pallas.1} parent=5 // pred_check_branch
      %177 = sbr.rel (%p175) target = $region32
    $region31: #{cbam_pallas.1} parent=5 // pred_region
      // Predicated region
      $region33: #{cbam_pallas.1} parent=31 // pred_check
        %p178 = pneg %p31
      $region34: #{cbam_pallas.1} parent=31 // pred_check_branch
        %180 = sbr.rel (%p178) target = $region36
      $region35: #{cbam_pallas.1} parent=31 // pred_region
        %p181 = scmp.lt.s32.totalorder %s11, 1
        %s182 = scalar_select %p181, %s11, 1
        %s183 = smul.addr %s182, 8
        %s184 = smul.addr %s183, 8
        %s185 = scalar_lea.vmem %s0, %s184
      $region36: #{cbam_pallas.1} parent=31 // pred_fallthru
        _
    $region32: #{cbam_pallas.1} parent=5 // pred_fallthru
      _
    %p186 = scmp.le.s32.totalorder 1, %s11
    %p187 = scmp.lt.s32.totalorder %s11, 3
    %p188 = pnand %p186, %p187
    %p189 = pneg %p188
    // Predicated region
    $region37: #{cbam_pallas.1} parent=5 // pred_check
      _
    $region38: #{cbam_pallas.1} parent=5 // pred_check_branch
      %191 = sbr.rel (%p188) target = $region40
    $region39: #{cbam_pallas.1} parent=5 // pred_region
      %s192 = ssub.s32 %s11, 1
      %p193 = scmp.lt.s32.totalorder %s16, 1
      %s194 = scalar_select %p193, %s16, 1
      %s195 = smul.addr %s194, 8
      %s196 = smul.addr %s195, 8
      %s197 = scalar_lea.vmem %s0, %s196
      %p198 = pneg %p37
      %p199 = pneg %p34
      %p200 = pneg %p58
      %p201 = pneg %p55
      %p202 = pneg %p79
      %p203 = pneg %p76
      %p204 = pneg %p100
      %p205 = pneg %p97
      %p206 = pneg %p121
      %p207 = pneg %p118
      %p208 = pneg %p147
      %p209 = pneg %p144
      %p210 = scmp.lt.s32.totalorder %s16, 1
      %s211 = scalar_select %p210, %s16, 1
      %s212 = smul.addr %s211, 8
      %s213 = smul.addr %s212, 8
      %s214 = scalar_lea.vmem %s5, %s213
      %p215 = scmp.lt.s32.totalorder %s16, 1
      %s216 = scalar_select %p215, %s16, 1
      %s217 = smul.addr %s216, 8
      %s218 = smul.addr %s217, 8
      %s219 = scalar_lea.vmem %s0, %s218
      %p220 = scmp.lt.s32.totalorder %s16, 1
      %s221 = scalar_select %p220, %s16, 1
      %s222 = smul.addr %s221, 8
      %s223 = smul.addr %s222, 8
      %s224 = scalar_lea.vmem %s5, %s223
      %v225 = vld [vmem:[%s219] sm:$0xff]
      %v226 = vld [vmem:[%s219 + $0x8] sm:$0xff]
      %v227 = vld [vmem:[%s219 + $0x10] sm:$0xff]
      %v228 = vld [vmem:[%s219 + $0x18] sm:$0xff]
      %v229 = vld [vmem:[%s219 + $0x20] sm:$0xff]
      %v230 = vld [vmem:[%s219 + $0x28] sm:$0xff]
      %v231 = vld [vmem:[%s219 + $0x30] sm:$0xff]
      %v232 = vld [vmem:[%s219 + $0x38] sm:$0xff]
      %v233 = vadd.f32 %v225, %v226
      %234 = vadd.xlane.f32.xlu0 %v233
      %v235 = vpop.xlane.xlu0 %234
      %v236 = vadd.f32 %v227, %v228
      %237 = vadd.xlane.f32.xlu0 %v236
      %v238 = vpop.xlane.xlu0 %237
      %v239 = vadd.f32 %v229, %v230
      %240 = vadd.xlane.f32.xlu0 %v239
      %v241 = vpop.xlane.xlu0 %240
      %v242 = vadd.f32 %v231, %v232
      %243 = vadd.xlane.f32.xlu0 %v242
      %v244 = vpop.xlane.xlu0 %243
      %v245 = vrcp.pop 256.0
      %v246 = vmul.f32 256.0, %v245
      %v247 = vsub.f32 1.0, %v246
      %v248 = vmul.f32 %v245, %v247
      %v249 = vadd.f32 %v245, %v248
      %vm250 = vweird.f32 %v245
      %v251 = vsel %vm250, %v245, %v249
      %v252 = vmul.f32 %v235, %v251
      %v253 = vmul.f32 %v238, %v251
      %v254 = vmul.f32 %v241, %v251
      %v255 = vmul.f32 %v244, %v251
      %v256 = vld [vmem:[%s1] sm:$0xff]
      %v257 = vld [vmem:[%s1 + $0x8] sm:$0xff]
      %v258 = vld [vmem:[%s1 + $0x10] sm:$0xff]
      %v259 = vld [vmem:[%s1 + $0x18] sm:$0xff]
      %v260 = vmul.f32 %v256, %v252
      %v261 = vmul.f32 %v257, %v253
      %v262 = vmul.f32 %v258, %v254
      %v263 = vmul.f32 %v259, %v255
      %vm264 = vcmask 15360
      %v265 = vsel %vm264, %v260, 0.0
      %v266 = vsel %vm264, %v261, 0.0
      %v267 = vadd.f32 %v265, %v266
      %v268 = vsel %vm264, %v262, 0.0
      %v269 = vadd.f32 %v267, %v268
      %v270 = vsel %vm264, %v263, 0.0
      %v271 = vadd.f32 %v269, %v270
      %v272 = vrot.slane %v271, 4
      %v273 = vadd.f32 %v271, %v272
      %v274 = vrot.slane %v273, 2
      %v275 = vadd.f32 %v273, %v274
      %v276 = vrot.slane %v275, 1
      %v277 = vadd.f32 %v275, %v276
      %v278 = vmax.f32 %v277, 0.0
      %v279 = vld [vmem:[%s2] sm:$0xff]
      %v280 = vld [vmem:[%s2 + $0x8] sm:$0xff]
      %v281 = vld [vmem:[%s2 + $0x10] sm:$0xff]
      %v282 = vld [vmem:[%s2 + $0x18] sm:$0xff]
      %v283 = vmul.f32 %v279, %v278
      %v284 = vmul.f32 %v280, %v278
      %v285 = vmul.f32 %v281, %v278
      %v286 = vmul.f32 %v282, %v278
      %v287 = vsel %vm264, %v283, 0.0
      %288 = vadd.xlane.f32.xlu0 %v287
      %v289 = vpop.xlane.xlu0 %288
      %v290 = vsel %vm264, %v284, 0.0
      %291 = vadd.xlane.f32.xlu0 %v290
      %v292 = vpop.xlane.xlu0 %291
      %v293 = vsel %vm264, %v285, 0.0
      %294 = vadd.xlane.f32.xlu0 %v293
      %v295 = vpop.xlane.xlu0 %294
      %v296 = vsel %vm264, %v286, 0.0
      %297 = vadd.xlane.f32.xlu0 %v296
      %v298 = vpop.xlane.xlu0 %297
      %v299 = vxor.u32 %v289, 2147483648
      %v300 = vxor.u32 %v292, 2147483648
      %v301 = vxor.u32 %v295, 2147483648
      %v302 = vxor.u32 %v298, 2147483648
      %v303 = vmul.f32 %v299, 1.442695
      %v304 = vpow.pop %v303
      %v305 = vmul.f32 %v300, 1.442695
      %v306 = vpow.pop %v305
      %v307 = vmul.f32 %v301, 1.442695
      %v308 = vpow.pop %v307
      %v309 = vmul.f32 %v302, 1.442695
      %v310 = vpow.pop %v309
      %v311 = vadd.f32 %v304, 1.0
      %v312 = vadd.f32 %v306, 1.0
      %v313 = vadd.f32 %v308, 1.0
      %v314 = vadd.f32 %v310, 1.0
      %v315 = vrcp.pop %v311
      %v316 = vmul.f32 %v311, %v315
      %v317 = vsub.f32 1.0, %v316
      %v318 = vmul.f32 %v315, %v317
      %v319 = vadd.f32 %v315, %v318
      %vm320 = vweird.f32 %v311
      %vm321 = vweird.f32 %v315
      %vm322 = vmor %vm320, %vm321
      %v323 = vsel %vm322, %v315, %v319
      %v324 = vand.u32 2147483647, %v311
      %vm325 = vcmp.eq.f32.partialorder %v324, 8.507059e+37
      %v326 = vand.u32 %v311, 2147483648
      %v327 = vor.u32 1.1754944e-38, %v326
      %v328 = vsel %vm325, %v327, %v323
      %v329 = vmul.f32 1.0, %v328
      %v330 = vrcp.pop %v312
      %v331 = vmul.f32 %v312, %v330
      %v332 = vsub.f32 1.0, %v331
      %v333 = vmul.f32 %v330, %v332
      %v334 = vadd.f32 %v330, %v333
      %vm335 = vweird.f32 %v312
      %vm336 = vweird.f32 %v330
      %vm337 = vmor %vm335, %vm336
      %v338 = vsel %vm337, %v330, %v334
      %v339 = vand.u32 2147483647, %v312
      %vm340 = vcmp.eq.f32.partialorder %v339, 8.507059e+37
      %v341 = vand.u32 %v312, 2147483648
      %v342 = vor.u32 1.1754944e-38, %v341
      %v343 = vsel %vm340, %v342, %v338
      %v344 = vmul.f32 1.0, %v343
      %v345 = vrcp.pop %v313
      %v346 = vmul.f32 %v313, %v345
      %v347 = vsub.f32 1.0, %v346
      %v348 = vmul.f32 %v345, %v347
      %v349 = vadd.f32 %v345, %v348
      %vm350 = vweird.f32 %v313
      %vm351 = vweird.f32 %v345
      %vm352 = vmor %vm350, %vm351
      %v353 = vsel %vm352, %v345, %v349
      %v354 = vand.u32 2147483647, %v313
      %vm355 = vcmp.eq.f32.partialorder %v354, 8.507059e+37
      %v356 = vand.u32 %v313, 2147483648
      %v357 = vor.u32 1.1754944e-38, %v356
      %v358 = vsel %vm355, %v357, %v353
      %v359 = vmul.f32 1.0, %v358
      %v360 = vrcp.pop %v314
      %v361 = vmul.f32 %v314, %v360
      %v362 = vsub.f32 1.0, %v361
      %v363 = vmul.f32 %v360, %v362
      %v364 = vadd.f32 %v360, %v363
      %vm365 = vweird.f32 %v314
      %vm366 = vweird.f32 %v360
      %vm367 = vmor %vm365, %vm366
      %v368 = vsel %vm367, %v360, %v364
      %v369 = vand.u32 2147483647, %v314
      %vm370 = vcmp.eq.f32.partialorder %v369, 8.507059e+37
      %v371 = vand.u32 %v314, 2147483648
      %v372 = vor.u32 1.1754944e-38, %v371
      %v373 = vsel %vm370, %v372, %v368
      %v374 = vmul.f32 1.0, %v373
      %v375 = vmul.f32 %v225, %v329
      %v376 = vmul.f32 %v226, %v329
      %v377 = vmul.f32 %v227, %v344
      %v378 = vmul.f32 %v228, %v344
      %v379 = vmul.f32 %v229, %v359
      %v380 = vmul.f32 %v230, %v359
      %v381 = vmul.f32 %v231, %v374
      %v382 = vmul.f32 %v232, %v374
      %v383 = vadd.f32 %v375, %v377
      %v384 = vadd.f32 %v383, %v379
      %v385 = vadd.f32 %v384, %v381
      %v386 = vrot.slane %v385, 4
      %v387 = vadd.f32 %v385, %v386
      %v388 = vrot.slane %v387, 2
      %v389 = vadd.f32 %v387, %v388
      %v390 = vrot.slane %v389, 1
      %v391 = vadd.f32 %v389, %v390
      %v392 = vadd.f32 %v376, %v378
      %v393 = vadd.f32 %v392, %v380
      %v394 = vadd.f32 %v393, %v382
      %v395 = vrot.slane %v394, 4
      %v396 = vadd.f32 %v394, %v395
      %v397 = vrot.slane %v396, 2
      %v398 = vadd.f32 %v396, %v397
      %v399 = vrot.slane %v398, 1
      %v400 = vadd.f32 %v398, %v399
      %v401 = vrcp.pop 32.0
      %v402 = vmul.f32 32.0, %v401
      %v403 = vsub.f32 1.0, %v402
      %v404 = vmul.f32 %v401, %v403
      %v405 = vadd.f32 %v401, %v404
      %vm406 = vweird.f32 %v401
      %v407 = vsel %vm406, %v401, %v405
      %v408 = vmul.f32 %v391, %v407
      %v409 = vmul.f32 %v400, %v407
      %v410 = vmax.f32 %v375, %v379
      %v411 = vmax.f32 %v377, %v381
      %v412 = vmax.f32 %v410, %v411
      %v413 = vrot.slane %v412, 4
      %v414 = vmax.f32 %v412, %v413
      %v415 = vrot.slane %v414, 2
      %v416 = vmax.f32 %v414, %v415
      %v417 = vrot.slane %v416, 1
      %v418 = vmax.f32 %v416, %v417
      %v419 = vmax.f32 %v376, %v380
      %v420 = vmax.f32 %v378, %v382
      %v421 = vmax.f32 %v419, %v420
      %v422 = vrot.slane %v421, 4
      %v423 = vmax.f32 %v421, %v422
      %v424 = vrot.slane %v423, 2
      %v425 = vmax.f32 %v423, %v424
      %v426 = vrot.slane %v425, 1
      %v427 = vmax.f32 %v425, %v426
      %v428 = vld [vmem:[%s3] sm:$0xff]
      %v429 = vld [vmem:[%s3 + $0x8] sm:$0xff]
      %v430 = vld [vmem:[%s3 + $0x10] sm:$0xff]
      %v431 = vld [vmem:[%s3 + $0x18] sm:$0xff]
      %v432 = vld [vmem:[%s3 + $0x20] sm:$0xff]
      %v433 = vld [vmem:[%s3 + $0x28] sm:$0xff]
      %v434 = vld [vmem:[%s3 + $0x30] sm:$0xff]
      %v435 = vld [vmem:[%s3 + $0x38] sm:$0xff]
      %v436 = vld [vmem:[%s3 + $0x40] sm:$0xff]
      %v437 = vld [vmem:[%s3 + $0x48] sm:$0xff]
      %v438 = vld [vmem:[%s3 + $0x50] sm:$0xff]
      %v439 = vld [vmem:[%s3 + $0x58] sm:$0xff]
      %v440 = vld [vmem:[%s3 + $0x60] sm:$0xff]
      %v441 = vld [vmem:[%s3 + $0x68] sm:$0xff]
      %v442 = vld [vmem:[%s3 + $0x70] sm:$0xff]
      %v443 = vld [vmem:[%s3 + $0x78] sm:$0xff]
      %v444 = vld [vmem:[%s3 + $0x80] sm:$0xff]
      %v445 = vld [vmem:[%s3 + $0x88] sm:$0xff]
      %v446 = vld [vmem:[%s3 + $0x90] sm:$0xff]
      %v447 = vld [vmem:[%s3 + $0x98] sm:$0xff]
      %v448 = vld [vmem:[%s3 + $0xa0] sm:$0xff]
      %v449 = vld [vmem:[%s3 + $0xa8] sm:$0xff]
      %v450 = vld [vmem:[%s3 + $0xb0] sm:$0xff]
      %v451 = vld [vmem:[%s3 + $0xb8] sm:$0xff]
      %v452 = vld [vmem:[%s3 + $0xc0] sm:$0xff]
      %v453 = vld [vmem:[%s3 + $0xc8] sm:$0xff]
      %v454 = vld [vmem:[%s3 + $0xd0] sm:$0xff]
      %v455 = vld [vmem:[%s3 + $0xd8] sm:$0xff]
      %v456 = vld [vmem:[%s3 + $0xe0] sm:$0xff]
      %v457 = vld [vmem:[%s3 + $0xe8] sm:$0xff]
      %v458 = vld [vmem:[%s3 + $0xf0] sm:$0xff]
      %v459 = vld [vmem:[%s3 + $0xf8] sm:$0xff]
      %v460 = vld [vmem:[%s3 + $0x100] sm:$0xff]
      %v461 = vld [vmem:[%s3 + $0x108] sm:$0xff]
      %v462 = vld [vmem:[%s3 + $0x110] sm:$0xff]
      %v463 = vld [vmem:[%s3 + $0x118] sm:$0xff]
      %v464 = vld [vmem:[%s3 + $0x120] sm:$0xff]
      %v465 = vld [vmem:[%s3 + $0x128] sm:$0xff]
      %v466 = vld [vmem:[%s3 + $0x130] sm:$0xff]
      %v467 = vld [vmem:[%s3 + $0x138] sm:$0xff]
      %v468 = vld [vmem:[%s3 + $0x140] sm:$0xff]
      %v469 = vld [vmem:[%s3 + $0x148] sm:$0xff]
      %v470 = vld [vmem:[%s3 + $0x150] sm:$0xff]
      %v471 = vld [vmem:[%s3 + $0x158] sm:$0xff]
      %v472 = vld [vmem:[%s3 + $0x160] sm:$0xff]
      %v473 = vld [vmem:[%s3 + $0x168] sm:$0xff]
      %v474 = vld [vmem:[%s3 + $0x170] sm:$0xff]
      %v475 = vld [vmem:[%s3 + $0x178] sm:$0xff]
      %v476 = vld [vmem:[%s3 + $0x180] sm:$0xff]
      %v477 = vld [vmem:[%s3 + $0x188] sm:$0xff]
      %v478 = vld [vmem:[%s3 + $0x190] sm:$0xff]
      %v479 = vld [vmem:[%s3 + $0x198] sm:$0xff]
      %v480 = vld [vmem:[%s3 + $0x1a0] sm:$0xff]
      %v481 = vld [vmem:[%s3 + $0x1a8] sm:$0xff]
      %v482 = vld [vmem:[%s3 + $0x1b0] sm:$0xff]
      %v483 = vld [vmem:[%s3 + $0x1b8] sm:$0xff]
      %v484 = vld [vmem:[%s3 + $0x1c0] sm:$0xff]
      %v485 = vld [vmem:[%s3 + $0x1c8] sm:$0xff]
      %v486 = vld [vmem:[%s3 + $0x1d0] sm:$0xff]
      %v487 = vld [vmem:[%s3 + $0x1d8] sm:$0xff]
      %v488 = vld [vmem:[%s3 + $0x1e0] sm:$0xff]
      %v489 = vld [vmem:[%s3 + $0x1e8] sm:$0xff]
      %v490 = vld [vmem:[%s3 + $0x1f0] sm:$0xff]
      %v491 = vld [vmem:[%s3 + $0x1f8] sm:$0xff]
      %v492 = vld [vmem:[%s4] sm:$0xff]
      %v493 = vld [vmem:[%s4 + $0x8] sm:$0xff]
      %v494 = vld [vmem:[%s4 + $0x10] sm:$0xff]
      %v495 = vld [vmem:[%s4 + $0x18] sm:$0xff]
      %v496 = vld [vmem:[%s4 + $0x20] sm:$0xff]
      %v497 = vld [vmem:[%s4 + $0x28] sm:$0xff]
      %v498 = vld [vmem:[%s4 + $0x30] sm:$0xff]
      %v499 = vld [vmem:[%s4 + $0x38] sm:$0xff]
      %v500 = vld [vmem:[%s4 + $0x40] sm:$0xff]
      %v501 = vld [vmem:[%s4 + $0x48] sm:$0xff]
      %v502 = vld [vmem:[%s4 + $0x50] sm:$0xff]
      %v503 = vld [vmem:[%s4 + $0x58] sm:$0xff]
      %v504 = vld [vmem:[%s4 + $0x60] sm:$0xff]
      %v505 = vld [vmem:[%s4 + $0x68] sm:$0xff]
      %v506 = vld [vmem:[%s4 + $0x70] sm:$0xff]
      %v507 = vld [vmem:[%s4 + $0x78] sm:$0xff]
      %v508 = vld [vmem:[%s4 + $0x80] sm:$0xff]
      %v509 = vld [vmem:[%s4 + $0x88] sm:$0xff]
      %v510 = vld [vmem:[%s4 + $0x90] sm:$0xff]
      %v511 = vld [vmem:[%s4 + $0x98] sm:$0xff]
      %v512 = vld [vmem:[%s4 + $0xa0] sm:$0xff]
      %v513 = vld [vmem:[%s4 + $0xa8] sm:$0xff]
      %v514 = vld [vmem:[%s4 + $0xb0] sm:$0xff]
      %v515 = vld [vmem:[%s4 + $0xb8] sm:$0xff]
      %v516 = vld [vmem:[%s4 + $0xc0] sm:$0xff]
      %v517 = vld [vmem:[%s4 + $0xc8] sm:$0xff]
      %v518 = vld [vmem:[%s4 + $0xd0] sm:$0xff]
      %v519 = vld [vmem:[%s4 + $0xd8] sm:$0xff]
      %v520 = vld [vmem:[%s4 + $0xe0] sm:$0xff]
      %v521 = vld [vmem:[%s4 + $0xe8] sm:$0xff]
      %v522 = vld [vmem:[%s4 + $0xf0] sm:$0xff]
      %v523 = vld [vmem:[%s4 + $0xf8] sm:$0xff]
      %v524 = vld [vmem:[%s4 + $0x100] sm:$0xff]
      %v525 = vld [vmem:[%s4 + $0x108] sm:$0xff]
      %v526 = vld [vmem:[%s4 + $0x110] sm:$0xff]
      %v527 = vld [vmem:[%s4 + $0x118] sm:$0xff]
      %v528 = vld [vmem:[%s4 + $0x120] sm:$0xff]
      %v529 = vld [vmem:[%s4 + $0x128] sm:$0xff]
      %v530 = vld [vmem:[%s4 + $0x130] sm:$0xff]
      %v531 = vld [vmem:[%s4 + $0x138] sm:$0xff]
      %v532 = vld [vmem:[%s4 + $0x140] sm:$0xff]
      %v533 = vld [vmem:[%s4 + $0x148] sm:$0xff]
      %v534 = vld [vmem:[%s4 + $0x150] sm:$0xff]
      %v535 = vld [vmem:[%s4 + $0x158] sm:$0xff]
      %v536 = vld [vmem:[%s4 + $0x160] sm:$0xff]
      %v537 = vld [vmem:[%s4 + $0x168] sm:$0xff]
      %v538 = vld [vmem:[%s4 + $0x170] sm:$0xff]
      %v539 = vld [vmem:[%s4 + $0x178] sm:$0xff]
      %v540 = vld [vmem:[%s4 + $0x180] sm:$0xff]
      %v541 = vld [vmem:[%s4 + $0x188] sm:$0xff]
      %v542 = vld [vmem:[%s4 + $0x190] sm:$0xff]
      %v543 = vld [vmem:[%s4 + $0x198] sm:$0xff]
      %v544 = vld [vmem:[%s4 + $0x1a0] sm:$0xff]
      %v545 = vld [vmem:[%s4 + $0x1a8] sm:$0xff]
      %v546 = vld [vmem:[%s4 + $0x1b0] sm:$0xff]
      %v547 = vld [vmem:[%s4 + $0x1b8] sm:$0xff]
      %v548 = vld [vmem:[%s4 + $0x1c0] sm:$0xff]
      %v549 = vld [vmem:[%s4 + $0x1c8] sm:$0xff]
      %v550 = vld [vmem:[%s4 + $0x1d0] sm:$0xff]
      %v551 = vld [vmem:[%s4 + $0x1d8] sm:$0xff]
      %v552 = vld [vmem:[%s4 + $0x1e0] sm:$0xff]
      %v553 = vld [vmem:[%s4 + $0x1e8] sm:$0xff]
      %v554 = vld [vmem:[%s4 + $0x1f0] sm:$0xff]
      %v555 = vld [vmem:[%s4 + $0x1f8] sm:$0xff]
      %556 = vmatpush.msra.mxu0 %v522
      %557 = vmatpush.msra.mxu0 %v520
      %558 = vmatpush.msra.mxu0 %v518
      %559 = vmatpush.msra.mxu0 %v516
      %560 = vmatpush.msra.mxu0 %v514
      %561 = vmatpush.msra.mxu0 %v512
      %562 = vmatpush.msra.mxu0 %v510
      %563 = vmatpush.msra.mxu0 %v508
      %564 = vmatpush.msra.mxu0 %v506
      %565 = vmatpush.msra.mxu0 %v504
      %566 = vmatpush.msra.mxu0 %v502
      %567 = vmatpush.msra.mxu0 %v500
      %568 = vmatpush.msra.mxu0 %v498
      %569 = vmatpush.msra.mxu0 %v496
      %570 = vmatpush.msra.mxu0 %v494
      %571 = vmatpush.msra.mxu0 %v492
      %572 = vmatmul.f32.gmra.mxu0 %v418
      %v573 = vpop.f32.mrf.mxu0
      %v574 = vadd.f32 0.0, %v573
      %575 = vdwg.mxu0
      %576 = vmatpush.msra.mxu0 %v554
      %577 = vmatpush.msra.mxu0 %v552
      %578 = vmatpush.msra.mxu0 %v550
      %579 = vmatpush.msra.mxu0 %v548
      %580 = vmatpush.msra.mxu0 %v546
      %581 = vmatpush.msra.mxu0 %v544
      %582 = vmatpush.msra.mxu0 %v542
      %583 = vmatpush.msra.mxu0 %v540
      %584 = vmatpush.msra.mxu0 %v538
      %585 = vmatpush.msra.mxu0 %v536
      %586 = vmatpush.msra.mxu0 %v534
      %587 = vmatpush.msra.mxu0 %v532
      %588 = vmatpush.msra.mxu0 %v530
      %589 = vmatpush.msra.mxu0 %v528
      %590 = vmatpush.msra.mxu0 %v526
      %591 = vmatpush.msra.mxu0 %v524
      %592 = vmatmul.f32.gmra.mxu0 %v427
      %v593 = vpop.f32.mrf.mxu0
      %v594 = vadd.f32 %v574, %v593
      %595 = vdwg.mxu0
      %596 = vmatpush.msra.mxu0 %v523
      %597 = vmatpush.msra.mxu0 %v521
      %598 = vmatpush.msra.mxu0 %v519
      %599 = vmatpush.msra.mxu0 %v517
      %600 = vmatpush.msra.mxu0 %v515
      %601 = vmatpush.msra.mxu0 %v513
      %602 = vmatpush.msra.mxu0 %v511
      %603 = vmatpush.msra.mxu0 %v509
      %604 = vmatpush.msra.mxu0 %v507
      %605 = vmatpush.msra.mxu0 %v505
      %606 = vmatpush.msra.mxu0 %v503
      %607 = vmatpush.msra.mxu0 %v501
      %608 = vmatpush.msra.mxu0 %v499
      %609 = vmatpush.msra.mxu0 %v497
      %610 = vmatpush.msra.mxu0 %v495
      %611 = vmatpush.msra.mxu0 %v493
      %612 = vmatmul.f32.gmra.mxu0 %v418
      %v613 = vpop.f32.mrf.mxu0
      %v614 = vadd.f32 0.0, %v613
      %615 = vdwg.mxu0
      %616 = vmatpush.msra.mxu0 %v555
      %617 = vmatpush.msra.mxu0 %v553
      %618 = vmatpush.msra.mxu0 %v551
      %619 = vmatpush.msra.mxu0 %v549
      %620 = vmatpush.msra.mxu0 %v547
      %621 = vmatpush.msra.mxu0 %v545
      %622 = vmatpush.msra.mxu0 %v543
      %623 = vmatpush.msra.mxu0 %v541
      %624 = vmatpush.msra.mxu0 %v539
      %625 = vmatpush.msra.mxu0 %v537
      %626 = vmatpush.msra.mxu0 %v535
      %627 = vmatpush.msra.mxu0 %v533
      %628 = vmatpush.msra.mxu0 %v531
      %629 = vmatpush.msra.mxu0 %v529
      %630 = vmatpush.msra.mxu0 %v527
      %631 = vmatpush.msra.mxu0 %v525
      %632 = vmatmul.f32.gmra.mxu0 %v427
      %v633 = vpop.f32.mrf.mxu0
      %v634 = vadd.f32 %v614, %v633
      %635 = vdwg.mxu0
      %636 = vmatpush.msra.mxu0 %v458
      %637 = vmatpush.msra.mxu0 %v456
      %638 = vmatpush.msra.mxu0 %v454
      %639 = vmatpush.msra.mxu0 %v452
      %640 = vmatpush.msra.mxu0 %v450
      %641 = vmatpush.msra.mxu0 %v448
      %642 = vmatpush.msra.mxu0 %v446
      %643 = vmatpush.msra.mxu0 %v444
      %644 = vmatpush.msra.mxu0 %v442
      %645 = vmatpush.msra.mxu0 %v440
      %646 = vmatpush.msra.mxu0 %v438
      %647 = vmatpush.msra.mxu0 %v436
      %648 = vmatpush.msra.mxu0 %v434
      %649 = vmatpush.msra.mxu0 %v432
      %650 = vmatpush.msra.mxu0 %v430
      %651 = vmatpush.msra.mxu0 %v428
      %652 = vmatmul.f32.gmra.mxu0 %v408
      %v653 = vpop.f32.mrf.mxu0
      %v654 = vadd.f32 %v594, %v653
      %655 = vdwg.mxu0
      %656 = vmatpush.msra.mxu0 %v490
      %657 = vmatpush.msra.mxu0 %v488
      %658 = vmatpush.msra.mxu0 %v486
      %659 = vmatpush.msra.mxu0 %v484
      %660 = vmatpush.msra.mxu0 %v482
      %661 = vmatpush.msra.mxu0 %v480
      %662 = vmatpush.msra.mxu0 %v478
      %663 = vmatpush.msra.mxu0 %v476
      %664 = vmatpush.msra.mxu0 %v474
      %665 = vmatpush.msra.mxu0 %v472
      %666 = vmatpush.msra.mxu0 %v470
      %667 = vmatpush.msra.mxu0 %v468
      %668 = vmatpush.msra.mxu0 %v466
      %669 = vmatpush.msra.mxu0 %v464
      %670 = vmatpush.msra.mxu0 %v462
      %671 = vmatpush.msra.mxu0 %v460
      %672 = vmatmul.f32.gmra.mxu0 %v409
      %v673 = vpop.f32.mrf.mxu0
      %v674 = vadd.f32 %v654, %v673
      %675 = vdwg.mxu0
      %676 = vmatpush.msra.mxu0 %v459
      %677 = vmatpush.msra.mxu0 %v457
      %678 = vmatpush.msra.mxu0 %v455
      %679 = vmatpush.msra.mxu0 %v453
      %680 = vmatpush.msra.mxu0 %v451
      %681 = vmatpush.msra.mxu0 %v449
      %682 = vmatpush.msra.mxu0 %v447
      %683 = vmatpush.msra.mxu0 %v445
      %684 = vmatpush.msra.mxu0 %v443
      %685 = vmatpush.msra.mxu0 %v441
      %686 = vmatpush.msra.mxu0 %v439
      %687 = vmatpush.msra.mxu0 %v437
      %688 = vmatpush.msra.mxu0 %v435
      %689 = vmatpush.msra.mxu0 %v433
      %690 = vmatpush.msra.mxu0 %v431
      %691 = vmatpush.msra.mxu0 %v429
      %692 = vmatmul.f32.gmra.mxu0 %v408
      %v693 = vpop.f32.mrf.mxu0
      %v694 = vadd.f32 %v634, %v693
      %695 = vdwg.mxu0
      %696 = vmatpush.msra.mxu0 %v491
      %697 = vmatpush.msra.mxu0 %v489
      %698 = vmatpush.msra.mxu0 %v487
      %699 = vmatpush.msra.mxu0 %v485
      %700 = vmatpush.msra.mxu0 %v483
      %701 = vmatpush.msra.mxu0 %v481
      %702 = vmatpush.msra.mxu0 %v479
      %703 = vmatpush.msra.mxu0 %v477
      %704 = vmatpush.msra.mxu0 %v475
      %705 = vmatpush.msra.mxu0 %v473
      %706 = vmatpush.msra.mxu0 %v471
      %707 = vmatpush.msra.mxu0 %v469
      %708 = vmatpush.msra.mxu0 %v467
      %709 = vmatpush.msra.mxu0 %v465
      %710 = vmatpush.msra.mxu0 %v463
      %711 = vmatpush.msra.mxu0 %v461
      %712 = vmatmul.f32.gmra.mxu0 %v409
      %v713 = vpop.f32.mrf.mxu0
      %v714 = vadd.f32 %v694, %v713
      %715 = vdwg.mxu0
      %v716 = vxor.u32 %v674, 2147483648
      %v717 = vxor.u32 %v714, 2147483648
      %v718 = vmul.f32 %v716, 1.442695
      %v719 = vpow.pop %v718
      %v720 = vmul.f32 %v717, 1.442695
      %v721 = vpow.pop %v720
      %v722 = vadd.f32 %v719, 1.0
      %v723 = vadd.f32 %v721, 1.0
      %v724 = vrcp.pop %v722
      %v725 = vmul.f32 %v722, %v724
      %v726 = vsub.f32 1.0, %v725
      %v727 = vmul.f32 %v724, %v726
      %v728 = vadd.f32 %v724, %v727
      %vm729 = vweird.f32 %v722
      %vm730 = vweird.f32 %v724
      %vm731 = vmor %vm729, %vm730
      %v732 = vsel %vm731, %v724, %v728
      %v733 = vand.u32 2147483647, %v722
      %vm734 = vcmp.eq.f32.partialorder %v733, 8.507059e+37
      %v735 = vand.u32 %v722, 2147483648
      %v736 = vor.u32 1.1754944e-38, %v735
      %v737 = vsel %vm734, %v736, %v732
      %v738 = vmul.f32 1.0, %v737
      %v739 = vrcp.pop %v723
      %v740 = vmul.f32 %v723, %v739
      %v741 = vsub.f32 1.0, %v740
      %v742 = vmul.f32 %v739, %v741
      %v743 = vadd.f32 %v739, %v742
      %vm744 = vweird.f32 %v723
      %vm745 = vweird.f32 %v739
      %vm746 = vmor %vm744, %vm745
      %v747 = vsel %vm746, %v739, %v743
      %v748 = vand.u32 2147483647, %v723
      %vm749 = vcmp.eq.f32.partialorder %v748, 8.507059e+37
      %v750 = vand.u32 %v723, 2147483648
      %v751 = vor.u32 1.1754944e-38, %v750
      %v752 = vsel %vm749, %v751, %v747
      %v753 = vmul.f32 1.0, %v752
      %v754 = vperm.slane %v738, 0
      %v755 = vperm.slane %v753, 0
      %v756 = vmul.f32 %v375, %v754
      %v757 = vmul.f32 %v376, %v755
      %v758 = vmul.f32 %v377, %v754
      %v759 = vmul.f32 %v378, %v755
      %v760 = vmul.f32 %v379, %v754
      %v761 = vmul.f32 %v380, %v755
      %v762 = vmul.f32 %v381, %v754
      %v763 = vmul.f32 %v382, %v755
      %764 = vst [vmem:[%s224] sm:$0xff] %v756
      %765 = vst [vmem:[%s224 + $0x8] sm:$0xff] %v757
      %766 = vst [vmem:[%s224 + $0x10] sm:$0xff] %v758
      %767 = vst [vmem:[%s224 + $0x18] sm:$0xff] %v759
      %768 = vst [vmem:[%s224 + $0x20] sm:$0xff] %v760
      %769 = vst [vmem:[%s224 + $0x28] sm:$0xff] %v761
      %770 = vst [vmem:[%s224 + $0x30] sm:$0xff] %v762
      %771 = vst [vmem:[%s224 + $0x38] sm:$0xff] %v763
      %p772 = scmp.lt.s32.totalorder %s16, 1
      %s773 = scalar_select %p772, %s16, 1
      %s774 = smul.addr %s773, 8
      %s775 = smul.addr %s774, 8
      %s776 = scalar_lea.vmem %s5, %s775
      // Predicated region
      $region41: #{cbam_pallas.1} parent=39 // pred_check
        %p777 = pneg %p144
      $region42: #{cbam_pallas.1} parent=39 // pred_check_branch
        %779 = sbr.rel (%p777) target = $region44
      $region43: #{cbam_pallas.1} parent=39 // pred_region
        _
      $region44: #{cbam_pallas.1} parent=39 // pred_fallthru
        _
    $region40: #{cbam_pallas.1} parent=5 // pred_fallthru
      _
    %p780 = scmp.le.s32.totalorder 2, %s11
    // Predicated region
    $region45: #{cbam_pallas.1} parent=5 // pred_check
      %p781 = pneg %p780
    $region46: #{cbam_pallas.1} parent=5 // pred_check_branch
      %783 = sbr.rel (%p781) target = $region48
    $region47: #{cbam_pallas.1} parent=5 // pred_region
      %s784 = ssub.s32 %s11, 2
      // Predicated region
      $region49: #{cbam_pallas.1} parent=47 // pred_check
        %p785 = pneg %p150
      $region50: #{cbam_pallas.1} parent=47 // pred_check_branch
        %787 = sbr.rel (%p785) target = $region52
      $region51: #{cbam_pallas.1} parent=47 // pred_region
        %p788 = scmp.lt.s32.totalorder %s17, 1
        %s789 = scalar_select %p788, %s17, 1
        %s790 = smul.addr %s789, 8
        %s791 = smul.addr %s790, 8
        %s792 = scalar_lea.vmem %s5, %s791
      $region52: #{cbam_pallas.1} parent=47 // pred_fallthru
        _
    $region48: #{cbam_pallas.1} parent=5 // pred_fallthru
      _
  $region6: #{cbam_pallas.1} parent=0 // loop_footer
    %s15 = sadd.s32 1, %s11
  $region7: #{cbam_pallas.1} parent=0 // loop_footer_branch
    %10 = sbr.rel target = $region3
  $region8: #{cbam_pallas.1} parent=0 // loop_exit
    _

</llo_original>
